<compile_context>
chip_gen: v6e
topology: v6e:2x2x1
jax: 0.10.0
libtpu: 0.0.40
codegen_flags: <defaults>
</compile_context>

<pallas_src>
import jax
import jax.numpy as jnp
from jax.experimental import pallas as pl
from jax.experimental.pallas import tpu as pltpu


def _pad_hw(x):
    """Zero-pad (H, W, C) -> (H+2, W+2, C) in registers (no scratch stores)."""
    H, W, C = x.shape
    zc = jnp.zeros((H, 1, C), x.dtype)
    x = jnp.concatenate([zc, x, zc], axis=1)          # (H, W+2, C)
    zr = jnp.zeros((1, W + 2, C), x.dtype)
    return jnp.concatenate([zr, x, zr], axis=0)       # (H+2, W+2, C)


def _conv3x3(xp, w_flat, b):
    """3x3 'same' conv as a single im2col MXU matmul.

    xp:     (H+2, W+2, Cin) bf16, zero borders
    w_flat: (9*Cin, Cout)   bf16, rows ordered (dy, dx, cin) row-major
    b:      (1, Cout)       f32
    returns (H, W, Cout)    f32
    """
    Hp, Wp, Cin = xp.shape
    H, W = Hp - 2, Wp - 2
    # 3 dx (sublane) shifted windows, each reshaped ONCE; the dy pieces are then
    # 8-row-aligned row ranges (W % 8 == 0) -> no further relayout copies.
    flat = [xp[:, dx:dx + W, :].reshape(Hp * W, Cin) for dx in range(3)]
    pieces = [flat[dx][dy * W: dy * W + H * W]
              for dy in range(3) for dx in range(3)]
    patch = jnp.concatenate(pieces, axis=-1)                       # (H*W, 9*Cin) bf16
    acc = jnp.dot(patch, w_flat, preferred_element_type=jnp.float32)
    return (acc + b).reshape(H, W, -1)                             # f32


def _feature_extractor_kernel(x_ref, wh_ref, bh_ref, wb_ref, bb_ref,
                              wt_ref, bt_ref, o_ref):
    nb = wb_ref.shape[0]

    x = x_ref[0]                                                   # (H, W, cin_p) bf16

    # ---- head conv (f32 accumulation + bias) ----
    h = _conv3x3(_pad_hw(x), wh_ref[...], bh_ref[...])             # (H, W, nc) f32

    # ---- body: nb ResBlocks, h = h + Conv(ReLU(Conv(ReLU(h)))) ----
    # Static unroll is fine for nb=3; switch to lax.fori_loop if nb grows.
    for blk in range(nb):
        # ReLU in f32 (v5e has no bf16 VPU), cast to bf16 only at the im2col boundary.
        a1 = jnp.maximum(h, 0.0).astype(jnp.bfloat16)
        c1 = _conv3x3(_pad_hw(a1), wb_ref[blk, 0], bb_ref[blk, 0])
        a2 = jnp.maximum(c1, 0.0).astype(jnp.bfloat16)
        c2 = _conv3x3(_pad_hw(a2), wb_ref[blk, 1], bb_ref[blk, 1])
        h = h + c2                                                 # residual, f32

    # ---- tail conv: only out_nc channels are computed and stored ----
    out = _conv3x3(_pad_hw(h.astype(jnp.bfloat16)), wt_ref[...], bt_ref[...])
    o_ref[0] = out.astype(o_ref.dtype)                             # (H, W, out_nc)


@jax.jit
def feature_extractor(x_nchw, wh, bh, wb, bb, wt, bt):
    """x_nchw: (N, Cin, H, W) -> (N, out_nc, H, W).

    Weight layouts ("HWIO"-style, matching the reference):
      wh (3,3,Cin,nc)  bh (nc,)  wb (nb,2,3,3,nc,nc)  bb (nb,2,nc)
      wt (3,3,nc,out_nc)  bt (out_nc,)
    """
    N, Cin, H, W = x_nchw.shape
    nb = wb.shape[0]
    nc = wh.shape[-1]
    out_nc = wt.shape[-1]
    assert W % 8 == 0, "aligned im2col piece extraction requires W % 8 == 0"
    cin_p = ((Cin + 31) // 32) * 32              # uniform 32-lane im2col pieces

    # ---- weight prep: im2col-flattened (dy, dx, cin) rows, bf16 matmul operands,
    #      f32 biases.  Tail weights are NOT channel-padded: only out_nc output
    #      columns are computed and stored.
    wh_f = jnp.pad(wh, ((0, 0), (0, 0), (0, cin_p - Cin), (0, 0)))
    wh_f = wh_f.reshape(9 * cin_p, nc).astype(jnp.bfloat16)
    bh_f = bh.reshape(1, nc).astype(jnp.float32)
    wb_f = wb.reshape(nb, 2, 9 * nc, nc).astype(jnp.bfloat16)
    bb_f = bb.reshape(nb, 2, 1, nc).astype(jnp.float32)
    wt_f = wt.reshape(9 * nc, out_nc).astype(jnp.bfloat16)
    bt_f = bt.reshape(1, out_nc).astype(jnp.float32)

    # NHWC bf16 input: channels on lanes, zero-padded to cin_p (zero channels hit
    # zero weight rows -> exact). bf16 staging halves input DMA and all im2col
    # marshaling; the matmul already consumes bf16, so numerics are unchanged.
    x_nhwc = jnp.transpose(x_nchw, (0, 2, 3, 1))
    x_nhwc = jnp.pad(x_nhwc, ((0, 0), (0, 0), (0, 0), (0, cin_p - Cin)))
    x_nhwc = x_nhwc.astype(jnp.bfloat16)

    out = pl.pallas_call(
        _feature_extractor_kernel,
        out_shape=jax.ShapeDtypeStruct((N, H, W, out_nc), x_nchw.dtype),
        grid_spec=pltpu.PrefetchScalarGridSpec(
            num_scalar_prefetch=0,
            grid=(N,),
            in_specs=[
                pl.BlockSpec((1, H, W, cin_p), lambda n: (n, 0, 0, 0)),
                pl.BlockSpec(wh_f.shape, lambda n: (0, 0)),
                pl.BlockSpec(bh_f.shape, lambda n: (0, 0)),
                pl.BlockSpec(wb_f.shape, lambda n: (0, 0, 0, 0)),
                pl.BlockSpec(bb_f.shape, lambda n: (0, 0, 0, 0)),
                pl.BlockSpec(wt_f.shape, lambda n: (0, 0)),
                pl.BlockSpec(bt_f.shape, lambda n: (0, 0)),
            ],
            out_specs=pl.BlockSpec((1, H, W, out_nc), lambda n: (n, 0, 0, 0)),
        ),
        compiler_params=pltpu.CompilerParams(
            dimension_semantics=("parallel",),
            # explicit so v5e's 16 MiB default never binds; plenty at this size
            vmem_limit_bytes=32 * 1024 * 1024),
    )(x_nhwc, wh_f, bh_f, wb_f, bb_f, wt_f, bt_f)

    # TODO(synk): production sizes (e.g. 512x512, nc=64) need (a) row-band tiling
    # grid=(N, bands) with an 8-row halo (2 + 2*nb fused convs): ~32-row bands /
    # ~56 MiB vmem_limit on v7x (64 MiB VMEM), 96-128-row bands / ~100 MiB on
    # v5e/v6e, both grid axes "parallel" so v7x's two TensorCores stay busy even
    # at N=1; and (b) W padded to a multiple of 128 with NCHW emitted directly
    # from the kernel so the final store is lane-dense and this transpose goes away.
    return jnp.transpose(out, (0, 3, 1, 2))                        # NHWC -> NCHW


# ------------------------- pure-JAX reference --------------------------------
def _ref_forward(x_nchw, wh, bh, wb, bb, wt, bt):
    def conv(x, w, b):
        w_oihw = jnp.transpose(w, (3, 2, 0, 1))                    # (Cout,Cin,3,3)
        y = jax.lax.conv_general_dilated(
            x, w_oihw, window_strides=(1, 1), padding=((1, 1), (1, 1)),
            dimension_numbers=("NCHW", "OIHW", "NCHW"))
        return y + b.reshape(1, -1, 1, 1)

    h = conv(x_nchw, wh, bh)
    for blk in range(wb.shape[0]):
        r = conv(jax.nn.relu(h), wb[blk, 0], bb[blk, 0])
        r = conv(jax.nn.relu(r), wb[blk, 1], bb[blk, 1])
        h = h + r
    return conv(h, wt, bt)


# --------------------------------- main ---------------------------------------
if __name__ == "__main__":
    in_nc, out_nc, nc, nb = 3, 3, 32, 3
    N, H, W = 2, 16, 16

    key = jax.random.PRNGKey(0)
    ks = jax.random.split(key, 7)

    # Deterministic synthetic parameters; kernel weight layout is (kh, kw, Cin, Cout).
    wh = 0.05 * jax.random.normal(ks[0], (3, 3, in_nc, nc), jnp.float32)
    bh = 0.05 * jax.random.normal(ks[1], (nc,), jnp.float32)
    wb = 0.05 * jax.random.normal(ks[2], (nb, 2, 3, 3, nc, nc), jnp.float32)
    bb = 0.05 * jax.random.normal(ks[3], (nb, 2, nc), jnp.float32)
    wt = 0.05 * jax.random.normal(ks[4], (3, 3, nc, out_nc), jnp.float32)
    bt = 0.05 * jax.random.normal(ks[5], (out_nc,), jnp.float32)

    x = jax.random.normal(ks[6], (N, in_nc, H, W), jnp.float32)

    y = jax.block_until_ready(feature_extractor(x, wh, bh, wb, bb, wt, bt))
    y_ref = jax.block_until_ready(_ref_forward(x, wh, bh, wb, bb, wt, bt))

    assert y.shape == (N, out_nc, H, W), y.shape
    max_err = float(jnp.max(jnp.abs(y - y_ref)))
    # bf16 matmul operands / f32 accumulation over 8 chained convs: expected
    # error is a few 1e-3; a layout/ordering bug would be O(1e-1). Tightened
    # 3x vs the previous 3e-2 while keeping margin over worst-case rounding.
    assert jnp.allclose(y, y_ref, rtol=1e-2, atol=1e-2), max_err

    print("KERNEL_OK")
</pallas_src>

<mosaic_0001>
module attributes {stable_mosaic.version = 11 : i64} {
  func.func @_feature_extractor_kernel(%arg0: i32, %arg1: memref<1x16x16x32xbf16, #tpu.memory_space<vmem>>, %arg2: memref<288x32xbf16, #tpu.memory_space<vmem>>, %arg3: memref<1x32xf32, #tpu.memory_space<vmem>>, %arg4: memref<3x2x288x32xbf16, #tpu.memory_space<vmem>>, %arg5: memref<3x2x1x32xf32, #tpu.memory_space<vmem>>, %arg6: memref<288x3xbf16, #tpu.memory_space<vmem>>, %arg7: memref<1x3xf32, #tpu.memory_space<vmem>>, %arg8: memref<1x16x16x3xf32, #tpu.memory_space<vmem>>) attributes {dimension_semantics = [#tpu.dimension_semantics<parallel>], iteration_bounds = array<i64: 2>, scalar_prefetch = 0 : i64, scratch_operands = 0 : i64, tpu.core_type = #tpu.core_type<tc>, window_params = [{transform_indices = @transform_0, window_bounds = array<i64: 1, 16, 16, 32>}, {pipeline_mode = #tpu.pipeline_mode<synchronous>, transform_indices = @transform_1, window_bounds = array<i64: 288, 32>}, {pipeline_mode = #tpu.pipeline_mode<synchronous>, transform_indices = @transform_2, window_bounds = array<i64: 1, 32>}, {pipeline_mode = #tpu.pipeline_mode<synchronous>, transform_indices = @transform_3, window_bounds = array<i64: 3, 2, 288, 32>}, {pipeline_mode = #tpu.pipeline_mode<synchronous>, transform_indices = @transform_4, window_bounds = array<i64: 3, 2, 1, 32>}, {pipeline_mode = #tpu.pipeline_mode<synchronous>, transform_indices = @transform_5, window_bounds = array<i64: 288, 3>}, {pipeline_mode = #tpu.pipeline_mode<synchronous>, transform_indices = @transform_6, window_bounds = array<i64: 1, 3>}, {transform_indices = @transform_7, window_bounds = array<i64: 1, 16, 16, 3>}]} {
    %c0 = arith.constant 0 : index
    %c0_0 = arith.constant 0 : index
    %c0_1 = arith.constant 0 : index
    %c0_2 = arith.constant 0 : index
    %0 = vector.load %arg1[%c0, %c0_0, %c0_1, %c0_2] : memref<1x16x16x32xbf16, #tpu.memory_space<vmem>>, vector<1x16x16x32xbf16>
    %1 = vector.shape_cast %0 : vector<1x16x16x32xbf16> to vector<16x16x32xbf16>
    %cst = arith.constant 0.000000e+00 : bf16
    %2 = vector.broadcast %cst : bf16 to vector<16x1x32xbf16>
    %3 = tpu.concatenate %2, %1, %2 in 1 : vector<16x1x32xbf16>, vector<16x16x32xbf16>, vector<16x1x32xbf16> -> vector<16x18x32xbf16>
    %cst_3 = arith.constant 0.000000e+00 : bf16
    %4 = vector.broadcast %cst_3 : bf16 to vector<1x18x32xbf16>
    %5 = tpu.concatenate %4, %3, %4 in 0 : vector<1x18x32xbf16>, vector<16x18x32xbf16>, vector<1x18x32xbf16> -> vector<18x18x32xbf16>
    %c0_4 = arith.constant 0 : index
    %c0_5 = arith.constant 0 : index
    %6 = vector.load %arg2[%c0_4, %c0_5] : memref<288x32xbf16, #tpu.memory_space<vmem>>, vector<288x32xbf16>
    %c0_6 = arith.constant 0 : index
    %c0_7 = arith.constant 0 : index
    %7 = vector.load %arg3[%c0_6, %c0_7] : memref<1x32xf32, #tpu.memory_space<vmem>>, vector<1x32xf32>
    %8 = vector.extract_strided_slice %5 {offsets = [0, 0, 0], sizes = [18, 16, 32], strides = [1, 1, 1]} : vector<18x18x32xbf16> to vector<18x16x32xbf16>
    %9 = vector.shape_cast %8 : vector<18x16x32xbf16> to vector<288x32xbf16>
    %10 = vector.extract_strided_slice %5 {offsets = [0, 1, 0], sizes = [18, 16, 32], strides = [1, 1, 1]} : vector<18x18x32xbf16> to vector<18x16x32xbf16>
    %11 = vector.shape_cast %10 : vector<18x16x32xbf16> to vector<288x32xbf16>
    %12 = vector.extract_strided_slice %5 {offsets = [0, 2, 0], sizes = [18, 16, 32], strides = [1, 1, 1]} : vector<18x18x32xbf16> to vector<18x16x32xbf16>
    %13 = vector.shape_cast %12 : vector<18x16x32xbf16> to vector<288x32xbf16>
    %14 = vector.extract_strided_slice %9 {offsets = [0, 0], sizes = [256, 32], strides = [1, 1]} : vector<288x32xbf16> to vector<256x32xbf16>
    %15 = vector.extract_strided_slice %11 {offsets = [0, 0], sizes = [256, 32], strides = [1, 1]} : vector<288x32xbf16> to vector<256x32xbf16>
    %16 = vector.extract_strided_slice %13 {offsets = [0, 0], sizes = [256, 32], strides = [1, 1]} : vector<288x32xbf16> to vector<256x32xbf16>
    %17 = vector.extract_strided_slice %9 {offsets = [16, 0], sizes = [256, 32], strides = [1, 1]} : vector<288x32xbf16> to vector<256x32xbf16>
    %18 = vector.extract_strided_slice %11 {offsets = [16, 0], sizes = [256, 32], strides = [1, 1]} : vector<288x32xbf16> to vector<256x32xbf16>
    %19 = vector.extract_strided_slice %13 {offsets = [16, 0], sizes = [256, 32], strides = [1, 1]} : vector<288x32xbf16> to vector<256x32xbf16>
    %20 = vector.extract_strided_slice %9 {offsets = [32, 0], sizes = [256, 32], strides = [1, 1]} : vector<288x32xbf16> to vector<256x32xbf16>
    %21 = vector.extract_strided_slice %11 {offsets = [32, 0], sizes = [256, 32], strides = [1, 1]} : vector<288x32xbf16> to vector<256x32xbf16>
    %22 = vector.extract_strided_slice %13 {offsets = [32, 0], sizes = [256, 32], strides = [1, 1]} : vector<288x32xbf16> to vector<256x32xbf16>
    %23 = tpu.concatenate %14, %15, %16, %17, %18, %19, %20, %21, %22 in 1 : vector<256x32xbf16>, vector<256x32xbf16>, vector<256x32xbf16>, vector<256x32xbf16>, vector<256x32xbf16>, vector<256x32xbf16>, vector<256x32xbf16>, vector<256x32xbf16>, vector<256x32xbf16> -> vector<256x288xbf16>
    %cst_8 = arith.constant dense<0.000000e+00> : vector<256x32xf32>
    %24 = tpu.matmul %23, %6, %cst_8 {dimension_numbers = #tpu.dot_dimension_numbers<[1], [0], [0], [1], [0, 0, 1, 1], [], []>} : vector<256x288xbf16>, vector<288x32xbf16>, vector<256x32xf32> -> vector<256x32xf32>
    %25 = vector.broadcast %7 : vector<1x32xf32> to vector<256x32xf32>
    %26 = arith.addf %24, %25 : vector<256x32xf32>
    %27 = vector.shape_cast %26 : vector<256x32xf32> to vector<16x16x32xf32>
    %cst_9 = arith.constant 0.000000e+00 : f32
    %28 = vector.broadcast %cst_9 : f32 to vector<16x16x32xf32>
    %29 = arith.maximumf %27, %28 : vector<16x16x32xf32>
    %30 = arith.truncf %29 : vector<16x16x32xf32> to vector<16x16x32xbf16>
    %cst_10 = arith.constant 0.000000e+00 : bf16
    %31 = vector.broadcast %cst_10 : bf16 to vector<16x1x32xbf16>
    %32 = tpu.concatenate %31, %30, %31 in 1 : vector<16x1x32xbf16>, vector<16x16x32xbf16>, vector<16x1x32xbf16> -> vector<16x18x32xbf16>
    %cst_11 = arith.constant 0.000000e+00 : bf16
    %33 = vector.broadcast %cst_11 : bf16 to vector<1x18x32xbf16>
    %34 = tpu.concatenate %33, %32, %33 in 0 : vector<1x18x32xbf16>, vector<16x18x32xbf16>, vector<1x18x32xbf16> -> vector<18x18x32xbf16>
    %c0_12 = arith.constant 0 : index
    %c0_13 = arith.constant 0 : index
    %c0_14 = arith.constant 0 : index
    %c0_15 = arith.constant 0 : index
    %35 = vector.load %arg4[%c0_12, %c0_13, %c0_14, %c0_15] : memref<3x2x288x32xbf16, #tpu.memory_space<vmem>>, vector<1x1x288x32xbf16>
    %36 = vector.shape_cast %35 : vector<1x1x288x32xbf16> to vector<288x32xbf16>
    %c0_16 = arith.constant 0 : index
    %c0_17 = arith.constant 0 : index
    %c0_18 = arith.constant 0 : index
    %c0_19 = arith.constant 0 : index
    %37 = vector.load %arg5[%c0_16, %c0_17, %c0_18, %c0_19] : memref<3x2x1x32xf32, #tpu.memory_space<vmem>>, vector<1x1x1x32xf32>
    %38 = vector.shape_cast %37 : vector<1x1x1x32xf32> to vector<1x32xf32>
    %39 = vector.extract_strided_slice %34 {offsets = [0, 0, 0], sizes = [18, 16, 32], strides = [1, 1, 1]} : vector<18x18x32xbf16> to vector<18x16x32xbf16>
    %40 = vector.shape_cast %39 : vector<18x16x32xbf16> to vector<288x32xbf16>
    %41 = vector.extract_strided_slice %34 {offsets = [0, 1, 0], sizes = [18, 16, 32], strides = [1, 1, 1]} : vector<18x18x32xbf16> to vector<18x16x32xbf16>
    %42 = vector.shape_cast %41 : vector<18x16x32xbf16> to vector<288x32xbf16>
    %43 = vector.extract_strided_slice %34 {offsets = [0, 2, 0], sizes = [18, 16, 32], strides = [1, 1, 1]} : vector<18x18x32xbf16> to vector<18x16x32xbf16>
    %44 = vector.shape_cast %43 : vector<18x16x32xbf16> to vector<288x32xbf16>
    %45 = vector.extract_strided_slice %40 {offsets = [0, 0], sizes = [256, 32], strides = [1, 1]} : vector<288x32xbf16> to vector<256x32xbf16>
    %46 = vector.extract_strided_slice %42 {offsets = [0, 0], sizes = [256, 32], strides = [1, 1]} : vector<288x32xbf16> to vector<256x32xbf16>
    %47 = vector.extract_strided_slice %44 {offsets = [0, 0], sizes = [256, 32], strides = [1, 1]} : vector<288x32xbf16> to vector<256x32xbf16>
    %48 = vector.extract_strided_slice %40 {offsets = [16, 0], sizes = [256, 32], strides = [1, 1]} : vector<288x32xbf16> to vector<256x32xbf16>
    %49 = vector.extract_strided_slice %42 {offsets = [16, 0], sizes = [256, 32], strides = [1, 1]} : vector<288x32xbf16> to vector<256x32xbf16>
    %50 = vector.extract_strided_slice %44 {offsets = [16, 0], sizes = [256, 32], strides = [1, 1]} : vector<288x32xbf16> to vector<256x32xbf16>
    %51 = vector.extract_strided_slice %40 {offsets = [32, 0], sizes = [256, 32], strides = [1, 1]} : vector<288x32xbf16> to vector<256x32xbf16>
    %52 = vector.extract_strided_slice %42 {offsets = [32, 0], sizes = [256, 32], strides = [1, 1]} : vector<288x32xbf16> to vector<256x32xbf16>
    %53 = vector.extract_strided_slice %44 {offsets = [32, 0], sizes = [256, 32], strides = [1, 1]} : vector<288x32xbf16> to vector<256x32xbf16>
    %54 = tpu.concatenate %45, %46, %47, %48, %49, %50, %51, %52, %53 in 1 : vector<256x32xbf16>, vector<256x32xbf16>, vector<256x32xbf16>, vector<256x32xbf16>, vector<256x32xbf16>, vector<256x32xbf16>, vector<256x32xbf16>, vector<256x32xbf16>, vector<256x32xbf16> -> vector<256x288xbf16>
    %cst_20 = arith.constant dense<0.000000e+00> : vector<256x32xf32>
    %55 = tpu.matmul %54, %36, %cst_20 {dimension_numbers = #tpu.dot_dimension_numbers<[1], [0], [0], [1], [0, 0, 1, 1], [], []>} : vector<256x288xbf16>, vector<288x32xbf16>, vector<256x32xf32> -> vector<256x32xf32>
    %56 = vector.broadcast %38 : vector<1x32xf32> to vector<256x32xf32>
    %57 = arith.addf %55, %56 : vector<256x32xf32>
    %58 = vector.shape_cast %57 : vector<256x32xf32> to vector<16x16x32xf32>
    %cst_21 = arith.constant 0.000000e+00 : f32
    %59 = vector.broadcast %cst_21 : f32 to vector<16x16x32xf32>
    %60 = arith.maximumf %58, %59 : vector<16x16x32xf32>
    %61 = arith.truncf %60 : vector<16x16x32xf32> to vector<16x16x32xbf16>
    %cst_22 = arith.constant 0.000000e+00 : bf16
    %62 = vector.broadcast %cst_22 : bf16 to vector<16x1x32xbf16>
    %63 = tpu.concatenate %62, %61, %62 in 1 : vector<16x1x32xbf16>, vector<16x16x32xbf16>, vector<16x1x32xbf16> -> vector<16x18x32xbf16>
    %cst_23 = arith.constant 0.000000e+00 : bf16
    %64 = vector.broadcast %cst_23 : bf16 to vector<1x18x32xbf16>
    %65 = tpu.concatenate %64, %63, %64 in 0 : vector<1x18x32xbf16>, vector<16x18x32xbf16>, vector<1x18x32xbf16> -> vector<18x18x32xbf16>
    %c0_24 = arith.constant 0 : index
    %c1 = arith.constant 1 : index
    %c0_25 = arith.constant 0 : index
    %c0_26 = arith.constant 0 : index
    %66 = vector.load %arg4[%c0_24, %c1, %c0_25, %c0_26] : memref<3x2x288x32xbf16, #tpu.memory_space<vmem>>, vector<1x1x288x32xbf16>
    %67 = vector.shape_cast %66 : vector<1x1x288x32xbf16> to vector<288x32xbf16>
    %c0_27 = arith.constant 0 : index
    %c1_28 = arith.constant 1 : index
    %c0_29 = arith.constant 0 : index
    %c0_30 = arith.constant 0 : index
    %68 = vector.load %arg5[%c0_27, %c1_28, %c0_29, %c0_30] : memref<3x2x1x32xf32, #tpu.memory_space<vmem>>, vector<1x1x1x32xf32>
    %69 = vector.shape_cast %68 : vector<1x1x1x32xf32> to vector<1x32xf32>
    %70 = vector.extract_strided_slice %65 {offsets = [0, 0, 0], sizes = [18, 16, 32], strides = [1, 1, 1]} : vector<18x18x32xbf16> to vector<18x16x32xbf16>
    %71 = vector.shape_cast %70 : vector<18x16x32xbf16> to vector<288x32xbf16>
    %72 = vector.extract_strided_slice %65 {offsets = [0, 1, 0], sizes = [18, 16, 32], strides = [1, 1, 1]} : vector<18x18x32xbf16> to vector<18x16x32xbf16>
    %73 = vector.shape_cast %72 : vector<18x16x32xbf16> to vector<288x32xbf16>
    %74 = vector.extract_strided_slice %65 {offsets = [0, 2, 0], sizes = [18, 16, 32], strides = [1, 1, 1]} : vector<18x18x32xbf16> to vector<18x16x32xbf16>
    %75 = vector.shape_cast %74 : vector<18x16x32xbf16> to vector<288x32xbf16>
    %76 = vector.extract_strided_slice %71 {offsets = [0, 0], sizes = [256, 32], strides = [1, 1]} : vector<288x32xbf16> to vector<256x32xbf16>
    %77 = vector.extract_strided_slice %73 {offsets = [0, 0], sizes = [256, 32], strides = [1, 1]} : vector<288x32xbf16> to vector<256x32xbf16>
    %78 = vector.extract_strided_slice %75 {offsets = [0, 0], sizes = [256, 32], strides = [1, 1]} : vector<288x32xbf16> to vector<256x32xbf16>
    %79 = vector.extract_strided_slice %71 {offsets = [16, 0], sizes = [256, 32], strides = [1, 1]} : vector<288x32xbf16> to vector<256x32xbf16>
    %80 = vector.extract_strided_slice %73 {offsets = [16, 0], sizes = [256, 32], strides = [1, 1]} : vector<288x32xbf16> to vector<256x32xbf16>
    %81 = vector.extract_strided_slice %75 {offsets = [16, 0], sizes = [256, 32], strides = [1, 1]} : vector<288x32xbf16> to vector<256x32xbf16>
    %82 = vector.extract_strided_slice %71 {offsets = [32, 0], sizes = [256, 32], strides = [1, 1]} : vector<288x32xbf16> to vector<256x32xbf16>
    %83 = vector.extract_strided_slice %73 {offsets = [32, 0], sizes = [256, 32], strides = [1, 1]} : vector<288x32xbf16> to vector<256x32xbf16>
    %84 = vector.extract_strided_slice %75 {offsets = [32, 0], sizes = [256, 32], strides = [1, 1]} : vector<288x32xbf16> to vector<256x32xbf16>
    %85 = tpu.concatenate %76, %77, %78, %79, %80, %81, %82, %83, %84 in 1 : vector<256x32xbf16>, vector<256x32xbf16>, vector<256x32xbf16>, vector<256x32xbf16>, vector<256x32xbf16>, vector<256x32xbf16>, vector<256x32xbf16>, vector<256x32xbf16>, vector<256x32xbf16> -> vector<256x288xbf16>
    %cst_31 = arith.constant dense<0.000000e+00> : vector<256x32xf32>
    %86 = tpu.matmul %85, %67, %cst_31 {dimension_numbers = #tpu.dot_dimension_numbers<[1], [0], [0], [1], [0, 0, 1, 1], [], []>} : vector<256x288xbf16>, vector<288x32xbf16>, vector<256x32xf32> -> vector<256x32xf32>
    %87 = vector.broadcast %69 : vector<1x32xf32> to vector<256x32xf32>
    %88 = arith.addf %86, %87 : vector<256x32xf32>
    %89 = vector.shape_cast %88 : vector<256x32xf32> to vector<16x16x32xf32>
    %90 = arith.addf %27, %89 : vector<16x16x32xf32>
    %cst_32 = arith.constant 0.000000e+00 : f32
    %91 = vector.broadcast %cst_32 : f32 to vector<16x16x32xf32>
    %92 = arith.maximumf %90, %91 : vector<16x16x32xf32>
    %93 = arith.truncf %92 : vector<16x16x32xf32> to vector<16x16x32xbf16>
    %cst_33 = arith.constant 0.000000e+00 : bf16
    %94 = vector.broadcast %cst_33 : bf16 to vector<16x1x32xbf16>
    %95 = tpu.concatenate %94, %93, %94 in 1 : vector<16x1x32xbf16>, vector<16x16x32xbf16>, vector<16x1x32xbf16> -> vector<16x18x32xbf16>
    %cst_34 = arith.constant 0.000000e+00 : bf16
    %96 = vector.broadcast %cst_34 : bf16 to vector<1x18x32xbf16>
    %97 = tpu.concatenate %96, %95, %96 in 0 : vector<1x18x32xbf16>, vector<16x18x32xbf16>, vector<1x18x32xbf16> -> vector<18x18x32xbf16>
    %c1_35 = arith.constant 1 : index
    %c0_36 = arith.constant 0 : index
    %c0_37 = arith.constant 0 : index
    %c0_38 = arith.constant 0 : index
    %98 = vector.load %arg4[%c1_35, %c0_36, %c0_37, %c0_38] : memref<3x2x288x32xbf16, #tpu.memory_space<vmem>>, vector<1x1x288x32xbf16>
    %99 = vector.shape_cast %98 : vector<1x1x288x32xbf16> to vector<288x32xbf16>
    %c1_39 = arith.constant 1 : index
    %c0_40 = arith.constant 0 : index
    %c0_41 = arith.constant 0 : index
    %c0_42 = arith.constant 0 : index
    %100 = vector.load %arg5[%c1_39, %c0_40, %c0_41, %c0_42] : memref<3x2x1x32xf32, #tpu.memory_space<vmem>>, vector<1x1x1x32xf32>
    %101 = vector.shape_cast %100 : vector<1x1x1x32xf32> to vector<1x32xf32>
    %102 = vector.extract_strided_slice %97 {offsets = [0, 0, 0], sizes = [18, 16, 32], strides = [1, 1, 1]} : vector<18x18x32xbf16> to vector<18x16x32xbf16>
    %103 = vector.shape_cast %102 : vector<18x16x32xbf16> to vector<288x32xbf16>
    %104 = vector.extract_strided_slice %97 {offsets = [0, 1, 0], sizes = [18, 16, 32], strides = [1, 1, 1]} : vector<18x18x32xbf16> to vector<18x16x32xbf16>
    %105 = vector.shape_cast %104 : vector<18x16x32xbf16> to vector<288x32xbf16>
    %106 = vector.extract_strided_slice %97 {offsets = [0, 2, 0], sizes = [18, 16, 32], strides = [1, 1, 1]} : vector<18x18x32xbf16> to vector<18x16x32xbf16>
    %107 = vector.shape_cast %106 : vector<18x16x32xbf16> to vector<288x32xbf16>
    %108 = vector.extract_strided_slice %103 {offsets = [0, 0], sizes = [256, 32], strides = [1, 1]} : vector<288x32xbf16> to vector<256x32xbf16>
    %109 = vector.extract_strided_slice %105 {offsets = [0, 0], sizes = [256, 32], strides = [1, 1]} : vector<288x32xbf16> to vector<256x32xbf16>
    %110 = vector.extract_strided_slice %107 {offsets = [0, 0], sizes = [256, 32], strides = [1, 1]} : vector<288x32xbf16> to vector<256x32xbf16>
    %111 = vector.extract_strided_slice %103 {offsets = [16, 0], sizes = [256, 32], strides = [1, 1]} : vector<288x32xbf16> to vector<256x32xbf16>
    %112 = vector.extract_strided_slice %105 {offsets = [16, 0], sizes = [256, 32], strides = [1, 1]} : vector<288x32xbf16> to vector<256x32xbf16>
    %113 = vector.extract_strided_slice %107 {offsets = [16, 0], sizes = [256, 32], strides = [1, 1]} : vector<288x32xbf16> to vector<256x32xbf16>
    %114 = vector.extract_strided_slice %103 {offsets = [32, 0], sizes = [256, 32], strides = [1, 1]} : vector<288x32xbf16> to vector<256x32xbf16>
    %115 = vector.extract_strided_slice %105 {offsets = [32, 0], sizes = [256, 32], strides = [1, 1]} : vector<288x32xbf16> to vector<256x32xbf16>
    %116 = vector.extract_strided_slice %107 {offsets = [32, 0], sizes = [256, 32], strides = [1, 1]} : vector<288x32xbf16> to vector<256x32xbf16>
    %117 = tpu.concatenate %108, %109, %110, %111, %112, %113, %114, %115, %116 in 1 : vector<256x32xbf16>, vector<256x32xbf16>, vector<256x32xbf16>, vector<256x32xbf16>, vector<256x32xbf16>, vector<256x32xbf16>, vector<256x32xbf16>, vector<256x32xbf16>, vector<256x32xbf16> -> vector<256x288xbf16>
    %cst_43 = arith.constant dense<0.000000e+00> : vector<256x32xf32>
    %118 = tpu.matmul %117, %99, %cst_43 {dimension_numbers = #tpu.dot_dimension_numbers<[1], [0], [0], [1], [0, 0, 1, 1], [], []>} : vector<256x288xbf16>, vector<288x32xbf16>, vector<256x32xf32> -> vector<256x32xf32>
    %119 = vector.broadcast %101 : vector<1x32xf32> to vector<256x32xf32>
    %120 = arith.addf %118, %119 : vector<256x32xf32>
    %121 = vector.shape_cast %120 : vector<256x32xf32> to vector<16x16x32xf32>
    %cst_44 = arith.constant 0.000000e+00 : f32
    %122 = vector.broadcast %cst_44 : f32 to vector<16x16x32xf32>
    %123 = arith.maximumf %121, %122 : vector<16x16x32xf32>
    %124 = arith.truncf %123 : vector<16x16x32xf32> to vector<16x16x32xbf16>
    %cst_45 = arith.constant 0.000000e+00 : bf16
    %125 = vector.broadcast %cst_45 : bf16 to vector<16x1x32xbf16>
    %126 = tpu.concatenate %125, %124, %125 in 1 : vector<16x1x32xbf16>, vector<16x16x32xbf16>, vector<16x1x32xbf16> -> vector<16x18x32xbf16>
    %cst_46 = arith.constant 0.000000e+00 : bf16
    %127 = vector.broadcast %cst_46 : bf16 to vector<1x18x32xbf16>
    %128 = tpu.concatenate %127, %126, %127 in 0 : vector<1x18x32xbf16>, vector<16x18x32xbf16>, vector<1x18x32xbf16> -> vector<18x18x32xbf16>
    %c1_47 = arith.constant 1 : index
    %c1_48 = arith.constant 1 : index
    %c0_49 = arith.constant 0 : index
    %c0_50 = arith.constant 0 : index
    %129 = vector.load %arg4[%c1_47, %c1_48, %c0_49, %c0_50] : memref<3x2x288x32xbf16, #tpu.memory_space<vmem>>, vector<1x1x288x32xbf16>
    %130 = vector.shape_cast %129 : vector<1x1x288x32xbf16> to vector<288x32xbf16>
    %c1_51 = arith.constant 1 : index
    %c1_52 = arith.constant 1 : index
    %c0_53 = arith.constant 0 : index
    %c0_54 = arith.constant 0 : index
    %131 = vector.load %arg5[%c1_51, %c1_52, %c0_53, %c0_54] : memref<3x2x1x32xf32, #tpu.memory_space<vmem>>, vector<1x1x1x32xf32>
    %132 = vector.shape_cast %131 : vector<1x1x1x32xf32> to vector<1x32xf32>
    %133 = vector.extract_strided_slice %128 {offsets = [0, 0, 0], sizes = [18, 16, 32], strides = [1, 1, 1]} : vector<18x18x32xbf16> to vector<18x16x32xbf16>
    %134 = vector.shape_cast %133 : vector<18x16x32xbf16> to vector<288x32xbf16>
    %135 = vector.extract_strided_slice %128 {offsets = [0, 1, 0], sizes = [18, 16, 32], strides = [1, 1, 1]} : vector<18x18x32xbf16> to vector<18x16x32xbf16>
    %136 = vector.shape_cast %135 : vector<18x16x32xbf16> to vector<288x32xbf16>
    %137 = vector.extract_strided_slice %128 {offsets = [0, 2, 0], sizes = [18, 16, 32], strides = [1, 1, 1]} : vector<18x18x32xbf16> to vector<18x16x32xbf16>
    %138 = vector.shape_cast %137 : vector<18x16x32xbf16> to vector<288x32xbf16>
    %139 = vector.extract_strided_slice %134 {offsets = [0, 0], sizes = [256, 32], strides = [1, 1]} : vector<288x32xbf16> to vector<256x32xbf16>
    %140 = vector.extract_strided_slice %136 {offsets = [0, 0], sizes = [256, 32], strides = [1, 1]} : vector<288x32xbf16> to vector<256x32xbf16>
    %141 = vector.extract_strided_slice %138 {offsets = [0, 0], sizes = [256, 32], strides = [1, 1]} : vector<288x32xbf16> to vector<256x32xbf16>
    %142 = vector.extract_strided_slice %134 {offsets = [16, 0], sizes = [256, 32], strides = [1, 1]} : vector<288x32xbf16> to vector<256x32xbf16>
    %143 = vector.extract_strided_slice %136 {offsets = [16, 0], sizes = [256, 32], strides = [1, 1]} : vector<288x32xbf16> to vector<256x32xbf16>
    %144 = vector.extract_strided_slice %138 {offsets = [16, 0], sizes = [256, 32], strides = [1, 1]} : vector<288x32xbf16> to vector<256x32xbf16>
    %145 = vector.extract_strided_slice %134 {offsets = [32, 0], sizes = [256, 32], strides = [1, 1]} : vector<288x32xbf16> to vector<256x32xbf16>
    %146 = vector.extract_strided_slice %136 {offsets = [32, 0], sizes = [256, 32], strides = [1, 1]} : vector<288x32xbf16> to vector<256x32xbf16>
    %147 = vector.extract_strided_slice %138 {offsets = [32, 0], sizes = [256, 32], strides = [1, 1]} : vector<288x32xbf16> to vector<256x32xbf16>
    %148 = tpu.concatenate %139, %140, %141, %142, %143, %144, %145, %146, %147 in 1 : vector<256x32xbf16>, vector<256x32xbf16>, vector<256x32xbf16>, vector<256x32xbf16>, vector<256x32xbf16>, vector<256x32xbf16>, vector<256x32xbf16>, vector<256x32xbf16>, vector<256x32xbf16> -> vector<256x288xbf16>
    %cst_55 = arith.constant dense<0.000000e+00> : vector<256x32xf32>
    %149 = tpu.matmul %148, %130, %cst_55 {dimension_numbers = #tpu.dot_dimension_numbers<[1], [0], [0], [1], [0, 0, 1, 1], [], []>} : vector<256x288xbf16>, vector<288x32xbf16>, vector<256x32xf32> -> vector<256x32xf32>
    %150 = vector.broadcast %132 : vector<1x32xf32> to vector<256x32xf32>
    %151 = arith.addf %149, %150 : vector<256x32xf32>
    %152 = vector.shape_cast %151 : vector<256x32xf32> to vector<16x16x32xf32>
    %153 = arith.addf %90, %152 : vector<16x16x32xf32>
    %cst_56 = arith.constant 0.000000e+00 : f32
    %154 = vector.broadcast %cst_56 : f32 to vector<16x16x32xf32>
    %155 = arith.maximumf %153, %154 : vector<16x16x32xf32>
    %156 = arith.truncf %155 : vector<16x16x32xf32> to vector<16x16x32xbf16>
    %cst_57 = arith.constant 0.000000e+00 : bf16
    %157 = vector.broadcast %cst_57 : bf16 to vector<16x1x32xbf16>
    %158 = tpu.concatenate %157, %156, %157 in 1 : vector<16x1x32xbf16>, vector<16x16x32xbf16>, vector<16x1x32xbf16> -> vector<16x18x32xbf16>
    %cst_58 = arith.constant 0.000000e+00 : bf16
    %159 = vector.broadcast %cst_58 : bf16 to vector<1x18x32xbf16>
    %160 = tpu.concatenate %159, %158, %159 in 0 : vector<1x18x32xbf16>, vector<16x18x32xbf16>, vector<1x18x32xbf16> -> vector<18x18x32xbf16>
    %c2 = arith.constant 2 : index
    %c0_59 = arith.constant 0 : index
    %c0_60 = arith.constant 0 : index
    %c0_61 = arith.constant 0 : index
    %161 = vector.load %arg4[%c2, %c0_59, %c0_60, %c0_61] : memref<3x2x288x32xbf16, #tpu.memory_space<vmem>>, vector<1x1x288x32xbf16>
    %162 = vector.shape_cast %161 : vector<1x1x288x32xbf16> to vector<288x32xbf16>
    %c2_62 = arith.constant 2 : index
    %c0_63 = arith.constant 0 : index
    %c0_64 = arith.constant 0 : index
    %c0_65 = arith.constant 0 : index
    %163 = vector.load %arg5[%c2_62, %c0_63, %c0_64, %c0_65] : memref<3x2x1x32xf32, #tpu.memory_space<vmem>>, vector<1x1x1x32xf32>
    %164 = vector.shape_cast %163 : vector<1x1x1x32xf32> to vector<1x32xf32>
    %165 = vector.extract_strided_slice %160 {offsets = [0, 0, 0], sizes = [18, 16, 32], strides = [1, 1, 1]} : vector<18x18x32xbf16> to vector<18x16x32xbf16>
    %166 = vector.shape_cast %165 : vector<18x16x32xbf16> to vector<288x32xbf16>
    %167 = vector.extract_strided_slice %160 {offsets = [0, 1, 0], sizes = [18, 16, 32], strides = [1, 1, 1]} : vector<18x18x32xbf16> to vector<18x16x32xbf16>
    %168 = vector.shape_cast %167 : vector<18x16x32xbf16> to vector<288x32xbf16>
    %169 = vector.extract_strided_slice %160 {offsets = [0, 2, 0], sizes = [18, 16, 32], strides = [1, 1, 1]} : vector<18x18x32xbf16> to vector<18x16x32xbf16>
    %170 = vector.shape_cast %169 : vector<18x16x32xbf16> to vector<288x32xbf16>
    %171 = vector.extract_strided_slice %166 {offsets = [0, 0], sizes = [256, 32], strides = [1, 1]} : vector<288x32xbf16> to vector<256x32xbf16>
    %172 = vector.extract_strided_slice %168 {offsets = [0, 0], sizes = [256, 32], strides = [1, 1]} : vector<288x32xbf16> to vector<256x32xbf16>
    %173 = vector.extract_strided_slice %170 {offsets = [0, 0], sizes = [256, 32], strides = [1, 1]} : vector<288x32xbf16> to vector<256x32xbf16>
    %174 = vector.extract_strided_slice %166 {offsets = [16, 0], sizes = [256, 32], strides = [1, 1]} : vector<288x32xbf16> to vector<256x32xbf16>
    %175 = vector.extract_strided_slice %168 {offsets = [16, 0], sizes = [256, 32], strides = [1, 1]} : vector<288x32xbf16> to vector<256x32xbf16>
    %176 = vector.extract_strided_slice %170 {offsets = [16, 0], sizes = [256, 32], strides = [1, 1]} : vector<288x32xbf16> to vector<256x32xbf16>
    %177 = vector.extract_strided_slice %166 {offsets = [32, 0], sizes = [256, 32], strides = [1, 1]} : vector<288x32xbf16> to vector<256x32xbf16>
    %178 = vector.extract_strided_slice %168 {offsets = [32, 0], sizes = [256, 32], strides = [1, 1]} : vector<288x32xbf16> to vector<256x32xbf16>
    %179 = vector.extract_strided_slice %170 {offsets = [32, 0], sizes = [256, 32], strides = [1, 1]} : vector<288x32xbf16> to vector<256x32xbf16>
    %180 = tpu.concatenate %171, %172, %173, %174, %175, %176, %177, %178, %179 in 1 : vector<256x32xbf16>, vector<256x32xbf16>, vector<256x32xbf16>, vector<256x32xbf16>, vector<256x32xbf16>, vector<256x32xbf16>, vector<256x32xbf16>, vector<256x32xbf16>, vector<256x32xbf16> -> vector<256x288xbf16>
    %cst_66 = arith.constant dense<0.000000e+00> : vector<256x32xf32>
    %181 = tpu.matmul %180, %162, %cst_66 {dimension_numbers = #tpu.dot_dimension_numbers<[1], [0], [0], [1], [0, 0, 1, 1], [], []>} : vector<256x288xbf16>, vector<288x32xbf16>, vector<256x32xf32> -> vector<256x32xf32>
    %182 = vector.broadcast %164 : vector<1x32xf32> to vector<256x32xf32>
    %183 = arith.addf %181, %182 : vector<256x32xf32>
    %184 = vector.shape_cast %183 : vector<256x32xf32> to vector<16x16x32xf32>
    %cst_67 = arith.constant 0.000000e+00 : f32
    %185 = vector.broadcast %cst_67 : f32 to vector<16x16x32xf32>
    %186 = arith.maximumf %184, %185 : vector<16x16x32xf32>
    %187 = arith.truncf %186 : vector<16x16x32xf32> to vector<16x16x32xbf16>
    %cst_68 = arith.constant 0.000000e+00 : bf16
    %188 = vector.broadcast %cst_68 : bf16 to vector<16x1x32xbf16>
    %189 = tpu.concatenate %188, %187, %188 in 1 : vector<16x1x32xbf16>, vector<16x16x32xbf16>, vector<16x1x32xbf16> -> vector<16x18x32xbf16>
    %cst_69 = arith.constant 0.000000e+00 : bf16
    %190 = vector.broadcast %cst_69 : bf16 to vector<1x18x32xbf16>
    %191 = tpu.concatenate %190, %189, %190 in 0 : vector<1x18x32xbf16>, vector<16x18x32xbf16>, vector<1x18x32xbf16> -> vector<18x18x32xbf16>
    %c2_70 = arith.constant 2 : index
    %c1_71 = arith.constant 1 : index
    %c0_72 = arith.constant 0 : index
    %c0_73 = arith.constant 0 : index
    %192 = vector.load %arg4[%c2_70, %c1_71, %c0_72, %c0_73] : memref<3x2x288x32xbf16, #tpu.memory_space<vmem>>, vector<1x1x288x32xbf16>
    %193 = vector.shape_cast %192 : vector<1x1x288x32xbf16> to vector<288x32xbf16>
    %c2_74 = arith.constant 2 : index
    %c1_75 = arith.constant 1 : index
    %c0_76 = arith.constant 0 : index
    %c0_77 = arith.constant 0 : index
    %194 = vector.load %arg5[%c2_74, %c1_75, %c0_76, %c0_77] : memref<3x2x1x32xf32, #tpu.memory_space<vmem>>, vector<1x1x1x32xf32>
    %195 = vector.shape_cast %194 : vector<1x1x1x32xf32> to vector<1x32xf32>
    %196 = vector.extract_strided_slice %191 {offsets = [0, 0, 0], sizes = [18, 16, 32], strides = [1, 1, 1]} : vector<18x18x32xbf16> to vector<18x16x32xbf16>
    %197 = vector.shape_cast %196 : vector<18x16x32xbf16> to vector<288x32xbf16>
    %198 = vector.extract_strided_slice %191 {offsets = [0, 1, 0], sizes = [18, 16, 32], strides = [1, 1, 1]} : vector<18x18x32xbf16> to vector<18x16x32xbf16>
    %199 = vector.shape_cast %198 : vector<18x16x32xbf16> to vector<288x32xbf16>
    %200 = vector.extract_strided_slice %191 {offsets = [0, 2, 0], sizes = [18, 16, 32], strides = [1, 1, 1]} : vector<18x18x32xbf16> to vector<18x16x32xbf16>
    %201 = vector.shape_cast %200 : vector<18x16x32xbf16> to vector<288x32xbf16>
    %202 = vector.extract_strided_slice %197 {offsets = [0, 0], sizes = [256, 32], strides = [1, 1]} : vector<288x32xbf16> to vector<256x32xbf16>
    %203 = vector.extract_strided_slice %199 {offsets = [0, 0], sizes = [256, 32], strides = [1, 1]} : vector<288x32xbf16> to vector<256x32xbf16>
    %204 = vector.extract_strided_slice %201 {offsets = [0, 0], sizes = [256, 32], strides = [1, 1]} : vector<288x32xbf16> to vector<256x32xbf16>
    %205 = vector.extract_strided_slice %197 {offsets = [16, 0], sizes = [256, 32], strides = [1, 1]} : vector<288x32xbf16> to vector<256x32xbf16>
    %206 = vector.extract_strided_slice %199 {offsets = [16, 0], sizes = [256, 32], strides = [1, 1]} : vector<288x32xbf16> to vector<256x32xbf16>
    %207 = vector.extract_strided_slice %201 {offsets = [16, 0], sizes = [256, 32], strides = [1, 1]} : vector<288x32xbf16> to vector<256x32xbf16>
    %208 = vector.extract_strided_slice %197 {offsets = [32, 0], sizes = [256, 32], strides = [1, 1]} : vector<288x32xbf16> to vector<256x32xbf16>
    %209 = vector.extract_strided_slice %199 {offsets = [32, 0], sizes = [256, 32], strides = [1, 1]} : vector<288x32xbf16> to vector<256x32xbf16>
    %210 = vector.extract_strided_slice %201 {offsets = [32, 0], sizes = [256, 32], strides = [1, 1]} : vector<288x32xbf16> to vector<256x32xbf16>
    %211 = tpu.concatenate %202, %203, %204, %205, %206, %207, %208, %209, %210 in 1 : vector<256x32xbf16>, vector<256x32xbf16>, vector<256x32xbf16>, vector<256x32xbf16>, vector<256x32xbf16>, vector<256x32xbf16>, vector<256x32xbf16>, vector<256x32xbf16>, vector<256x32xbf16> -> vector<256x288xbf16>
    %cst_78 = arith.constant dense<0.000000e+00> : vector<256x32xf32>
    %212 = tpu.matmul %211, %193, %cst_78 {dimension_numbers = #tpu.dot_dimension_numbers<[1], [0], [0], [1], [0, 0, 1, 1], [], []>} : vector<256x288xbf16>, vector<288x32xbf16>, vector<256x32xf32> -> vector<256x32xf32>
    %213 = vector.broadcast %195 : vector<1x32xf32> to vector<256x32xf32>
    %214 = arith.addf %212, %213 : vector<256x32xf32>
    %215 = vector.shape_cast %214 : vector<256x32xf32> to vector<16x16x32xf32>
    %216 = arith.addf %153, %215 : vector<16x16x32xf32>
    %217 = arith.truncf %216 : vector<16x16x32xf32> to vector<16x16x32xbf16>
    %cst_79 = arith.constant 0.000000e+00 : bf16
    %218 = vector.broadcast %cst_79 : bf16 to vector<16x1x32xbf16>
    %219 = tpu.concatenate %218, %217, %218 in 1 : vector<16x1x32xbf16>, vector<16x16x32xbf16>, vector<16x1x32xbf16> -> vector<16x18x32xbf16>
    %cst_80 = arith.constant 0.000000e+00 : bf16
    %220 = vector.broadcast %cst_80 : bf16 to vector<1x18x32xbf16>
    %221 = tpu.concatenate %220, %219, %220 in 0 : vector<1x18x32xbf16>, vector<16x18x32xbf16>, vector<1x18x32xbf16> -> vector<18x18x32xbf16>
    %c0_81 = arith.constant 0 : index
    %c0_82 = arith.constant 0 : index
    %222 = vector.load %arg6[%c0_81, %c0_82] : memref<288x3xbf16, #tpu.memory_space<vmem>>, vector<288x3xbf16>
    %c0_83 = arith.constant 0 : index
    %c0_84 = arith.constant 0 : index
    %223 = vector.load %arg7[%c0_83, %c0_84] : memref<1x3xf32, #tpu.memory_space<vmem>>, vector<1x3xf32>
    %224 = vector.extract_strided_slice %221 {offsets = [0, 0, 0], sizes = [18, 16, 32], strides = [1, 1, 1]} : vector<18x18x32xbf16> to vector<18x16x32xbf16>
    %225 = vector.shape_cast %224 : vector<18x16x32xbf16> to vector<288x32xbf16>
    %226 = vector.extract_strided_slice %221 {offsets = [0, 1, 0], sizes = [18, 16, 32], strides = [1, 1, 1]} : vector<18x18x32xbf16> to vector<18x16x32xbf16>
    %227 = vector.shape_cast %226 : vector<18x16x32xbf16> to vector<288x32xbf16>
    %228 = vector.extract_strided_slice %221 {offsets = [0, 2, 0], sizes = [18, 16, 32], strides = [1, 1, 1]} : vector<18x18x32xbf16> to vector<18x16x32xbf16>
    %229 = vector.shape_cast %228 : vector<18x16x32xbf16> to vector<288x32xbf16>
    %230 = vector.extract_strided_slice %225 {offsets = [0, 0], sizes = [256, 32], strides = [1, 1]} : vector<288x32xbf16> to vector<256x32xbf16>
    %231 = vector.extract_strided_slice %227 {offsets = [0, 0], sizes = [256, 32], strides = [1, 1]} : vector<288x32xbf16> to vector<256x32xbf16>
    %232 = vector.extract_strided_slice %229 {offsets = [0, 0], sizes = [256, 32], strides = [1, 1]} : vector<288x32xbf16> to vector<256x32xbf16>
    %233 = vector.extract_strided_slice %225 {offsets = [16, 0], sizes = [256, 32], strides = [1, 1]} : vector<288x32xbf16> to vector<256x32xbf16>
    %234 = vector.extract_strided_slice %227 {offsets = [16, 0], sizes = [256, 32], strides = [1, 1]} : vector<288x32xbf16> to vector<256x32xbf16>
    %235 = vector.extract_strided_slice %229 {offsets = [16, 0], sizes = [256, 32], strides = [1, 1]} : vector<288x32xbf16> to vector<256x32xbf16>
    %236 = vector.extract_strided_slice %225 {offsets = [32, 0], sizes = [256, 32], strides = [1, 1]} : vector<288x32xbf16> to vector<256x32xbf16>
    %237 = vector.extract_strided_slice %227 {offsets = [32, 0], sizes = [256, 32], strides = [1, 1]} : vector<288x32xbf16> to vector<256x32xbf16>
    %238 = vector.extract_strided_slice %229 {offsets = [32, 0], sizes = [256, 32], strides = [1, 1]} : vector<288x32xbf16> to vector<256x32xbf16>
    %239 = tpu.concatenate %230, %231, %232, %233, %234, %235, %236, %237, %238 in 1 : vector<256x32xbf16>, vector<256x32xbf16>, vector<256x32xbf16>, vector<256x32xbf16>, vector<256x32xbf16>, vector<256x32xbf16>, vector<256x32xbf16>, vector<256x32xbf16>, vector<256x32xbf16> -> vector<256x288xbf16>
    %cst_85 = arith.constant dense<0.000000e+00> : vector<256x3xf32>
    %240 = tpu.matmul %239, %222, %cst_85 {dimension_numbers = #tpu.dot_dimension_numbers<[1], [0], [0], [1], [0, 0, 1, 1], [], []>} : vector<256x288xbf16>, vector<288x3xbf16>, vector<256x3xf32> -> vector<256x3xf32>
    %241 = vector.broadcast %223 : vector<1x3xf32> to vector<256x3xf32>
    %242 = arith.addf %240, %241 : vector<256x3xf32>
    %243 = vector.shape_cast %242 : vector<256x3xf32> to vector<16x16x3xf32>
    %c0_86 = arith.constant 0 : index
    %c0_87 = arith.constant 0 : index
    %c0_88 = arith.constant 0 : index
    %c0_89 = arith.constant 0 : index
    %244 = vector.load %arg8[%c0_86, %c0_87, %c0_88, %c0_89] : memref<1x16x16x3xf32, #tpu.memory_space<vmem>>, vector<1x16x16x3xf32>
    %245 = vector.shape_cast %244 : vector<1x16x16x3xf32> to vector<16x16x3xf32>
    %246 = vector.shape_cast %243 : vector<16x16x3xf32> to vector<1x16x16x3xf32>
    tpu.vector_store %arg8[%c0_86, %c0_87, %c0_88, %c0_89], %246 {strides = array<i32>} : memref<1x16x16x3xf32, #tpu.memory_space<vmem>>, vector<1x16x16x3xf32>,
    return
  }
  func.func @transform_0(%arg0: i32) -> (i32, i32, i32, i32) {
    %c0_i32 = arith.constant 0 : i32
    %c0_i32_0 = arith.constant 0 : i32
    %c0_i32_1 = arith.constant 0 : i32
    %c0_i32_2 = arith.constant 0 : i32
    return %arg0, %c0_i32, %c0_i32_0, %c0_i32_1 : i32, i32, i32, i32
  }
  func.func @transform_1(%arg0: i32) -> (i32, i32) {
    %c0_i32 = arith.constant 0 : i32
    %c0_i32_0 = arith.constant 0 : i32
    %c0_i32_1 = arith.constant 0 : i32
    return %c0_i32, %c0_i32_0 : i32, i32
  }
  func.func @transform_2(%arg0: i32) -> (i32, i32) {
    %c0_i32 = arith.constant 0 : i32
    %c0_i32_0 = arith.constant 0 : i32
    %c0_i32_1 = arith.constant 0 : i32
    return %c0_i32, %c0_i32_0 : i32, i32
  }
  func.func @transform_3(%arg0: i32) -> (i32, i32, i32, i32) {
    %c0_i32 = arith.constant 0 : i32
    %c0_i32_0 = arith.constant 0 : i32
    %c0_i32_1 = arith.constant 0 : i32
    %c0_i32_2 = arith.constant 0 : i32
    %c0_i32_3 = arith.constant 0 : i32
    return %c0_i32, %c0_i32_0, %c0_i32_1, %c0_i32_2 : i32, i32, i32, i32
  }
  func.func @transform_4(%arg0: i32) -> (i32, i32, i32, i32) {
    %c0_i32 = arith.constant 0 : i32
    %c0_i32_0 = arith.constant 0 : i32
    %c0_i32_1 = arith.constant 0 : i32
    %c0_i32_2 = arith.constant 0 : i32
    %c0_i32_3 = arith.constant 0 : i32
    return %c0_i32, %c0_i32_0, %c0_i32_1, %c0_i32_2 : i32, i32, i32, i32
  }
  func.func @transform_5(%arg0: i32) -> (i32, i32) {
    %c0_i32 = arith.constant 0 : i32
    %c0_i32_0 = arith.constant 0 : i32
    %c0_i32_1 = arith.constant 0 : i32
    return %c0_i32, %c0_i32_0 : i32, i32
  }
  func.func @transform_6(%arg0: i32) -> (i32, i32) {
    %c0_i32 = arith.constant 0 : i32
    %c0_i32_0 = arith.constant 0 : i32
    %c0_i32_1 = arith.constant 0 : i32
    return %c0_i32, %c0_i32_0 : i32, i32
  }
  func.func @transform_7(%arg0: i32) -> (i32, i32, i32, i32) {
    %c0_i32 = arith.constant 0 : i32
    %c0_i32_0 = arith.constant 0 : i32
    %c0_i32_1 = arith.constant 0 : i32
    %c0_i32_2 = arith.constant 0 : i32
    return %arg0, %c0_i32, %c0_i32_0, %c0_i32_1 : i32, i32, i32, i32
  }
}

</mosaic_0001>

<llo_original>
// kernel: feature_extractor.1
$region0: #{feature_extractor.1}
  #allocation0 [shape = 'u32[]', space=smem, size = 0x4, offset = 0x4, fixed_abs, tag = 'smem constant byte address 0x4 - core index']
  #allocation1 [shape = 'u32[144,128]{1,0:T(1,128)}', space=vmem, size = 0x12000, scoped, tag = 'internal scratch']
  %s0 = inlined_call_operand.vmem [shape: bf16[2,16,16,32], index: 0, kind: input, shape index: {}]
  %s1 = inlined_call_operand.vmem [shape: bf16[288,32], index: 1, kind: input, shape index: {}]
  %s2 = inlined_call_operand.vmem [shape: f32[1,32], index: 2, kind: input, shape index: {}]
  %s3 = inlined_call_operand.vmem [shape: bf16[3,2,288,32], index: 3, kind: input, shape index: {}]
  %s4 = inlined_call_operand.vmem [shape: f32[3,2,1,32], index: 4, kind: input, shape index: {}]
  %s5 = inlined_call_operand.vmem [shape: bf16[288,3], index: 5, kind: input, shape index: {}]
  %s6 = inlined_call_operand.vmem [shape: f32[1,3], index: 6, kind: input, shape index: {}]
  %s7 = inlined_call_operand.vmem [shape: f32[2,16,16,3], index: 7, kind: output, shape index: {}]
  %s8 = sld [smem:[#allocation0]]
  $region61: #{feature_extractor.1} parent=0
    _
  %s10 = ssub.s32 1, %s8
  %s11 = scalar_select 0, %s10, %s8
  loop: start=0, step=1, limit=4
  $region2: #{feature_extractor.1} parent=0 // loop_pre_header
    _
  $region3: #{feature_extractor.1} parent=0 // loop_header
    %s13 = sphi 0, %s17
    %p14 = scmp.ge.s32.totalorder %s13, 4
    %s23 = sphi 0, %s25
    %s26 = sphi 0, %s23
    %s27 = sphi 0, %s26
    %s43 = sphi 0, %s27
    %s47 = sphi 0, %s47
    %s49 = sphi 0, %s47
    %s50 = sphi 0, %s49
    %s64 = sphi 0, %s50
    %s68 = sphi 0, %s68
    %s70 = sphi 0, %s68
    %s71 = sphi 0, %s70
    %s85 = sphi 0, %s71
    %s89 = sphi 0, %s89
    %s91 = sphi 0, %s89
    %s92 = sphi 0, %s91
    %s106 = sphi 0, %s92
    %s110 = sphi 0, %s110
    %s112 = sphi 0, %s110
    %s113 = sphi 0, %s112
    %s127 = sphi 0, %s113
    %s131 = sphi 0, %s131
    %s133 = sphi 0, %s131
    %s134 = sphi 0, %s133
    %s148 = sphi 0, %s134
    %s152 = sphi 0, %s152
    %s154 = sphi 0, %s152
    %s155 = sphi 0, %s154
    %s169 = sphi 0, %s155
    %s175 = sphi 0, %s177
    %s178 = sphi 0, %s175
    %s179 = sphi 0, %s178
    %s195 = sphi 0, %s179
  $region4: #{feature_extractor.1} parent=0 // loop_header_branch
    %16 = sbr.rel (%p14) target = $region8
  $region5: #{feature_extractor.1} parent=0 // loop_body
    %s18 = ssub.s32 %s13, 1
    %s19 = ssub.s32 %s13, 2
    %s20 = sadd.s32 %s13, 1
    %s21 = ssub.s32 %s13, %s20
    %p22 = scmp.eq.s32.totalorder %s21, 0
    %s24 = sadd.s32 %s23, 1
    %s25 = scalar_select %p22, %s23, %s24
    %p28 = pneg %p22
    %p29 = scmp.eq.s32.totalorder %s13, 1
    %p30 = por %p28, %p29
    %p31 = scmp.ne.s32.totalorder %s23, %s26
    %p32 = scmp.eq.s32.totalorder %s13, 0
    %p33 = por %p31, %p32
    %p34 = scmp.ne.s32.totalorder %s23, %s26
    %p35 = scmp.eq.s32.totalorder %s18, 1
    %p36 = por %p34, %p35
    %p37 = scmp.ne.s32.totalorder %s26, %s27
    %p38 = scmp.eq.s32.totalorder %s18, 0
    %p39 = por %p37, %p38
    %p40 = scmp.ne.s32.totalorder %s26, %s27
    %p41 = scmp.eq.s32.totalorder %s19, 1
    %p42 = por %p40, %p41
    %p44 = scmp.ne.s32.totalorder %s27, %s43
    %p45 = scmp.eq.s32.totalorder %s19, 0
    %p46 = por %p44, %p45
    %s48 = sadd.s32 %s47, 1
    %p51 = scmp.eq.s32.totalorder %s13, 1
    %p52 = scmp.ne.s32.totalorder %s47, %s49
    %p53 = scmp.eq.s32.totalorder %s13, 0
    %p54 = por %p52, %p53
    %p55 = scmp.ne.s32.totalorder %s47, %s49
    %p56 = scmp.eq.s32.totalorder %s18, 1
    %p57 = por %p55, %p56
    %p58 = scmp.ne.s32.totalorder %s49, %s50
    %p59 = scmp.eq.s32.totalorder %s18, 0
    %p60 = por %p58, %p59
    %p61 = scmp.ne.s32.totalorder %s49, %s50
    %p62 = scmp.eq.s32.totalorder %s19, 1
    %p63 = por %p61, %p62
    %p65 = scmp.ne.s32.totalorder %s50, %s64
    %p66 = scmp.eq.s32.totalorder %s19, 0
    %p67 = por %p65, %p66
    %s69 = sadd.s32 %s68, 1
    %p72 = scmp.eq.s32.totalorder %s13, 1
    %p73 = scmp.ne.s32.totalorder %s68, %s70
    %p74 = scmp.eq.s32.totalorder %s13, 0
    %p75 = por %p73, %p74
    %p76 = scmp.ne.s32.totalorder %s68, %s70
    %p77 = scmp.eq.s32.totalorder %s18, 1
    %p78 = por %p76, %p77
    %p79 = scmp.ne.s32.totalorder %s70, %s71
    %p80 = scmp.eq.s32.totalorder %s18, 0
    %p81 = por %p79, %p80
    %p82 = scmp.ne.s32.totalorder %s70, %s71
    %p83 = scmp.eq.s32.totalorder %s19, 1
    %p84 = por %p82, %p83
    %p86 = scmp.ne.s32.totalorder %s71, %s85
    %p87 = scmp.eq.s32.totalorder %s19, 0
    %p88 = por %p86, %p87
    %s90 = sadd.s32 %s89, 1
    %p93 = scmp.eq.s32.totalorder %s13, 1
    %p94 = scmp.ne.s32.totalorder %s89, %s91
    %p95 = scmp.eq.s32.totalorder %s13, 0
    %p96 = por %p94, %p95
    %p97 = scmp.ne.s32.totalorder %s89, %s91
    %p98 = scmp.eq.s32.totalorder %s18, 1
    %p99 = por %p97, %p98
    %p100 = scmp.ne.s32.totalorder %s91, %s92
    %p101 = scmp.eq.s32.totalorder %s18, 0
    %p102 = por %p100, %p101
    %p103 = scmp.ne.s32.totalorder %s91, %s92
    %p104 = scmp.eq.s32.totalorder %s19, 1
    %p105 = por %p103, %p104
    %p107 = scmp.ne.s32.totalorder %s92, %s106
    %p108 = scmp.eq.s32.totalorder %s19, 0
    %p109 = por %p107, %p108
    %s111 = sadd.s32 %s110, 1
    %p114 = scmp.eq.s32.totalorder %s13, 1
    %p115 = scmp.ne.s32.totalorder %s110, %s112
    %p116 = scmp.eq.s32.totalorder %s13, 0
    %p117 = por %p115, %p116
    %p118 = scmp.ne.s32.totalorder %s110, %s112
    %p119 = scmp.eq.s32.totalorder %s18, 1
    %p120 = por %p118, %p119
    %p121 = scmp.ne.s32.totalorder %s112, %s113
    %p122 = scmp.eq.s32.totalorder %s18, 0
    %p123 = por %p121, %p122
    %p124 = scmp.ne.s32.totalorder %s112, %s113
    %p125 = scmp.eq.s32.totalorder %s19, 1
    %p126 = por %p124, %p125
    %p128 = scmp.ne.s32.totalorder %s113, %s127
    %p129 = scmp.eq.s32.totalorder %s19, 0
    %p130 = por %p128, %p129
    %s132 = sadd.s32 %s131, 1
    %p135 = scmp.eq.s32.totalorder %s13, 1
    %p136 = scmp.ne.s32.totalorder %s131, %s133
    %p137 = scmp.eq.s32.totalorder %s13, 0
    %p138 = por %p136, %p137
    %p139 = scmp.ne.s32.totalorder %s131, %s133
    %p140 = scmp.eq.s32.totalorder %s18, 1
    %p141 = por %p139, %p140
    %p142 = scmp.ne.s32.totalorder %s133, %s134
    %p143 = scmp.eq.s32.totalorder %s18, 0
    %p144 = por %p142, %p143
    %p145 = scmp.ne.s32.totalorder %s133, %s134
    %p146 = scmp.eq.s32.totalorder %s19, 1
    %p147 = por %p145, %p146
    %p149 = scmp.ne.s32.totalorder %s134, %s148
    %p150 = scmp.eq.s32.totalorder %s19, 0
    %p151 = por %p149, %p150
    %s153 = sadd.s32 %s152, 1
    %p156 = scmp.eq.s32.totalorder %s13, 1
    %p157 = scmp.ne.s32.totalorder %s152, %s154
    %p158 = scmp.eq.s32.totalorder %s13, 0
    %p159 = por %p157, %p158
    %p160 = scmp.ne.s32.totalorder %s152, %s154
    %p161 = scmp.eq.s32.totalorder %s18, 1
    %p162 = por %p160, %p161
    %p163 = scmp.ne.s32.totalorder %s154, %s155
    %p164 = scmp.eq.s32.totalorder %s18, 0
    %p165 = por %p163, %p164
    %p166 = scmp.ne.s32.totalorder %s154, %s155
    %p167 = scmp.eq.s32.totalorder %s19, 1
    %p168 = por %p166, %p167
    %p170 = scmp.ne.s32.totalorder %s155, %s169
    %p171 = scmp.eq.s32.totalorder %s19, 0
    %p172 = por %p170, %p171
    %s173 = ssub.s32 %s13, %s20
    %p174 = scmp.eq.s32.totalorder %s173, 0
    %s176 = sadd.s32 %s175, 1
    %s177 = scalar_select %p174, %s175, %s176
    %p180 = pneg %p174
    %p181 = scmp.eq.s32.totalorder %s13, 1
    %p182 = por %p180, %p181
    %p183 = scmp.ne.s32.totalorder %s175, %s178
    %p184 = scmp.eq.s32.totalorder %s13, 0
    %p185 = por %p183, %p184
    %p186 = scmp.ne.s32.totalorder %s175, %s178
    %p187 = scmp.eq.s32.totalorder %s18, 1
    %p188 = por %p186, %p187
    %p189 = scmp.ne.s32.totalorder %s178, %s179
    %p190 = scmp.eq.s32.totalorder %s18, 0
    %p191 = por %p189, %p190
    %p192 = scmp.ne.s32.totalorder %s178, %s179
    %p193 = scmp.eq.s32.totalorder %s19, 1
    %p194 = por %p192, %p193
    %p196 = scmp.ne.s32.totalorder %s179, %s195
    %p197 = scmp.eq.s32.totalorder %s19, 0
    %p198 = por %p196, %p197
    %p199 = scmp.le.s32.totalorder 1, %s13
    %p200 = scmp.lt.s32.totalorder %s13, 3
    %p201 = pnand %p199, %p200
    %p202 = pneg %p201
    // Predicated region
    $region9: #{feature_extractor.1} parent=5 // pred_check
      _
    $region10: #{feature_extractor.1} parent=5 // pred_check_branch
      %204 = sbr.rel (%p201) target = $region12
    $region11: #{feature_extractor.1} parent=5 // pred_region
      %s205 = ssub.s32 %s13, 1
      // Predicated region
      $region13: #{feature_extractor.1} parent=11 // pred_check
        %p206 = pneg %p60
      $region14: #{feature_extractor.1} parent=11 // pred_check_branch
        %208 = sbr.rel (%p206) target = $region16
      $region15: #{feature_extractor.1} parent=11 // pred_region
        _
      $region16: #{feature_extractor.1} parent=11 // pred_fallthru
        _
      // Predicated region
      $region17: #{feature_extractor.1} parent=11 // pred_check
        %p209 = pneg %p81
      $region18: #{feature_extractor.1} parent=11 // pred_check_branch
        %211 = sbr.rel (%p209) target = $region20
      $region19: #{feature_extractor.1} parent=11 // pred_region
        _
      $region20: #{feature_extractor.1} parent=11 // pred_fallthru
        _
      // Predicated region
      $region21: #{feature_extractor.1} parent=11 // pred_check
        %p212 = pneg %p102
      $region22: #{feature_extractor.1} parent=11 // pred_check_branch
        %214 = sbr.rel (%p212) target = $region24
      $region23: #{feature_extractor.1} parent=11 // pred_region
        _
      $region24: #{feature_extractor.1} parent=11 // pred_fallthru
        _
      // Predicated region
      $region25: #{feature_extractor.1} parent=11 // pred_check
        %p215 = pneg %p123
      $region26: #{feature_extractor.1} parent=11 // pred_check_branch
        %217 = sbr.rel (%p215) target = $region28
      $region27: #{feature_extractor.1} parent=11 // pred_region
        _
      $region28: #{feature_extractor.1} parent=11 // pred_fallthru
        _
      // Predicated region
      $region29: #{feature_extractor.1} parent=11 // pred_check
        %p218 = pneg %p144
      $region30: #{feature_extractor.1} parent=11 // pred_check_branch
        %220 = sbr.rel (%p218) target = $region32
      $region31: #{feature_extractor.1} parent=11 // pred_region
        _
      $region32: #{feature_extractor.1} parent=11 // pred_fallthru
        _
      // Predicated region
      $region33: #{feature_extractor.1} parent=11 // pred_check
        %p221 = pneg %p165
      $region34: #{feature_extractor.1} parent=11 // pred_check_branch
        %223 = sbr.rel (%p221) target = $region36
      $region35: #{feature_extractor.1} parent=11 // pred_region
        _
      $region36: #{feature_extractor.1} parent=11 // pred_fallthru
        _
    $region12: #{feature_extractor.1} parent=5 // pred_fallthru
      _
    %p224 = scmp.lt.s32.totalorder %s13, 2
    // Predicated region
    $region37: #{feature_extractor.1} parent=5 // pred_check
      %p225 = pneg %p224
    $region38: #{feature_extractor.1} parent=5 // pred_check_branch
      %227 = sbr.rel (%p225) target = $region40
    $region39: #{feature_extractor.1} parent=5 // pred_region
      // Predicated region
      $region41: #{feature_extractor.1} parent=39 // pred_check
        %p228 = pneg %p33
      $region42: #{feature_extractor.1} parent=39 // pred_check_branch
        %230 = sbr.rel (%p228) target = $region44
      $region43: #{feature_extractor.1} parent=39 // pred_region
        %p231 = scmp.lt.s32.totalorder %s13, 1
        %s232 = scalar_select %p231, %s13, 1
        %s233 = smul.addr %s232, 32
        %s234 = smul.addr %s233, 4
        %s235 = scalar_lea.vmem %s0, %s234
      $region44: #{feature_extractor.1} parent=39 // pred_fallthru
        _
    $region40: #{feature_extractor.1} parent=5 // pred_fallthru
      _
    %p236 = scmp.le.s32.totalorder 1, %s13
    %p237 = scmp.lt.s32.totalorder %s13, 3
    %p238 = pnand %p236, %p237
    %p239 = pneg %p238
    // Predicated region
    $region45: #{feature_extractor.1} parent=5 // pred_check
      _
    $region46: #{feature_extractor.1} parent=5 // pred_check_branch
      %241 = sbr.rel (%p238) target = $region48
    $region47: #{feature_extractor.1} parent=5 // pred_region
      %s242 = ssub.s32 %s13, 1
      %p243 = scmp.lt.s32.totalorder %s18, 1
      %s244 = scalar_select %p243, %s18, 1
      %s245 = smul.addr %s244, 32
      %s246 = smul.addr %s245, 4
      %s247 = scalar_lea.vmem %s0, %s246
      %p248 = pneg %p39
      %p249 = pneg %p36
      %p250 = pneg %p60
      %p251 = pneg %p57
      %p252 = pneg %p81
      %p253 = pneg %p78
      %p254 = pneg %p102
      %p255 = pneg %p99
      %p256 = pneg %p123
      %p257 = pneg %p120
      %p258 = pneg %p144
      %p259 = pneg %p141
      %p260 = pneg %p165
      %p261 = pneg %p162
      %p262 = pneg %p191
      %p263 = pneg %p188
      %p264 = scmp.lt.s32.totalorder %s18, 1
      %s265 = scalar_select %p264, %s18, 1
      %s266 = smul.addr %s265, 32
      %s267 = smul.addr %s266, 8
      %s268 = scalar_lea.vmem %s7, %s267
      %p269 = scmp.lt.s32.totalorder %s18, 1
      %s270 = scalar_select %p269, %s18, 1
      %s271 = smul.addr %s270, 32
      %s272 = smul.addr %s271, 4
      %s273 = scalar_lea.vmem %s0, %s272
      %p274 = scmp.lt.s32.totalorder %s18, 1
      %s275 = scalar_select %p274, %s18, 1
      %s276 = smul.addr %s275, 32
      %s277 = smul.addr %s276, 8
      %s278 = scalar_lea.vmem %s7, %s277
      %v280 = vld [vmem:[%s273] sm:$0xf]
      %v281 = vld [vmem:[%s273 + $0x4] sm:$0xf]
      %v282 = vld [vmem:[%s273 + $0x8] sm:$0xf]
      %v283 = vld [vmem:[%s273 + $0xc] sm:$0xf]
      %v284 = vld [vmem:[%s273 + $0x10] sm:$0xf]
      %v285 = vld [vmem:[%s273 + $0x14] sm:$0xf]
      %v286 = vld [vmem:[%s273 + $0x18] sm:$0xf]
      %v287 = vld [vmem:[%s273 + $0x1c] sm:$0xf]
      %v288 = vld [vmem:[%s273 + $0x20] sm:$0xf]
      %v289 = vld [vmem:[%s273 + $0x24] sm:$0xf]
      %v290 = vld [vmem:[%s273 + $0x28] sm:$0xf]
      %v291 = vld [vmem:[%s273 + $0x2c] sm:$0xf]
      %v292 = vld [vmem:[%s273 + $0x30] sm:$0xf]
      %v293 = vld [vmem:[%s273 + $0x34] sm:$0xf]
      %v294 = vld [vmem:[%s273 + $0x38] sm:$0xf]
      %v295 = vld [vmem:[%s273 + $0x3c] sm:$0xf]
      %v296 = vld [vmem:[%s273 + $0x40] sm:$0xf]
      %v297 = vld [vmem:[%s273 + $0x44] sm:$0xf]
      %v298 = vld [vmem:[%s273 + $0x48] sm:$0xf]
      %v299 = vld [vmem:[%s273 + $0x4c] sm:$0xf]
      %v300 = vld [vmem:[%s273 + $0x50] sm:$0xf]
      %v301 = vld [vmem:[%s273 + $0x54] sm:$0xf]
      %v302 = vld [vmem:[%s273 + $0x58] sm:$0xf]
      %v303 = vld [vmem:[%s273 + $0x5c] sm:$0xf]
      %v304 = vld [vmem:[%s273 + $0x60] sm:$0xf]
      %v305 = vld [vmem:[%s273 + $0x64] sm:$0xf]
      %v306 = vld [vmem:[%s273 + $0x68] sm:$0xf]
      %v307 = vld [vmem:[%s273 + $0x6c] sm:$0xf]
      %v308 = vld [vmem:[%s273 + $0x70] sm:$0xf]
      %v309 = vld [vmem:[%s273 + $0x74] sm:$0xf]
      %v310 = vld [vmem:[%s273 + $0x78] sm:$0xf]
      %v311 = vld [vmem:[%s273 + $0x7c] sm:$0xf]
      %v344 = vunpack.c.l.b16 %v280
      %v345 = vunpack.c.l.b16 %v281
      %v346 = vunpack.c.l.b16 %v282
      %v347 = vunpack.c.l.b16 %v283
      %v348 = vunpack.c.l.b16 %v284
      %v349 = vunpack.c.l.b16 %v285
      %v350 = vunpack.c.l.b16 %v286
      %v351 = vunpack.c.l.b16 %v287
      %v352 = vunpack.c.l.b16 %v288
      %v353 = vunpack.c.l.b16 %v289
      %v354 = vunpack.c.l.b16 %v290
      %v355 = vunpack.c.l.b16 %v291
      %v356 = vunpack.c.l.b16 %v292
      %v357 = vunpack.c.l.b16 %v293
      %v358 = vunpack.c.l.b16 %v294
      %v359 = vunpack.c.l.b16 %v295
      %v360 = vunpack.c.l.b16 %v296
      %v361 = vunpack.c.l.b16 %v297
      %v362 = vunpack.c.l.b16 %v298
      %v363 = vunpack.c.l.b16 %v299
      %v364 = vunpack.c.l.b16 %v300
      %v365 = vunpack.c.l.b16 %v301
      %v366 = vunpack.c.l.b16 %v302
      %v367 = vunpack.c.l.b16 %v303
      %v368 = vunpack.c.l.b16 %v304
      %v369 = vunpack.c.l.b16 %v305
      %v370 = vunpack.c.l.b16 %v306
      %v371 = vunpack.c.l.b16 %v307
      %v372 = vunpack.c.l.b16 %v308
      %v373 = vunpack.c.l.b16 %v309
      %v374 = vunpack.c.l.b16 %v310
      %v375 = vunpack.c.l.b16 %v311
      %v376 = vpack.c.b16 %v345, %v344
      %v377 = vpack.c.b16 %v347, %v346
      %v378 = vpack.c.b16 %v349, %v348
      %v379 = vpack.c.b16 %v351, %v350
      %v380 = vpack.c.b16 %v353, %v352
      %v381 = vpack.c.b16 %v355, %v354
      %v382 = vpack.c.b16 %v357, %v356
      %v383 = vpack.c.b16 %v359, %v358
      %v384 = vpack.c.b16 %v361, %v360
      %v385 = vpack.c.b16 %v363, %v362
      %v386 = vpack.c.b16 %v365, %v364
      %v387 = vpack.c.b16 %v367, %v366
      %v388 = vpack.c.b16 %v369, %v368
      %v389 = vpack.c.b16 %v371, %v370
      %v390 = vpack.c.b16 %v373, %v372
      %v391 = vpack.c.b16 %v375, %v374
      %v393 = vshrl.u32 %v376, 16
      %v395 = vrot.slane %v393, 7
      %v396 = vshll.u32 %v376, 16
      %v398 = vor.u32 %v395, %v396
      %v400 = vshrl.u32 %v377, 16
      %v402 = vrot.slane %v400, 7
      %v403 = vshll.u32 %v377, 16
      %v405 = vor.u32 %v402, %v403
      %v407 = vshrl.u32 %v378, 16
      %v409 = vrot.slane %v407, 7
      %v410 = vshll.u32 %v378, 16
      %v412 = vor.u32 %v409, %v410
      %v414 = vshrl.u32 %v379, 16
      %v416 = vrot.slane %v414, 7
      %v417 = vshll.u32 %v379, 16
      %v419 = vor.u32 %v416, %v417
      %v421 = vshrl.u32 %v380, 16
      %v423 = vrot.slane %v421, 7
      %v424 = vshll.u32 %v380, 16
      %v426 = vor.u32 %v423, %v424
      %v428 = vshrl.u32 %v381, 16
      %v430 = vrot.slane %v428, 7
      %v431 = vshll.u32 %v381, 16
      %v433 = vor.u32 %v430, %v431
      %v435 = vshrl.u32 %v382, 16
      %v437 = vrot.slane %v435, 7
      %v438 = vshll.u32 %v382, 16
      %v440 = vor.u32 %v437, %v438
      %v442 = vshrl.u32 %v383, 16
      %v444 = vrot.slane %v442, 7
      %v445 = vshll.u32 %v383, 16
      %v447 = vor.u32 %v444, %v445
      %v449 = vshrl.u32 %v384, 16
      %v451 = vrot.slane %v449, 7
      %v452 = vshll.u32 %v384, 16
      %v454 = vor.u32 %v451, %v452
      %v456 = vshrl.u32 %v385, 16
      %v458 = vrot.slane %v456, 7
      %v459 = vshll.u32 %v385, 16
      %v461 = vor.u32 %v458, %v459
      %v463 = vshrl.u32 %v386, 16
      %v465 = vrot.slane %v463, 7
      %v466 = vshll.u32 %v386, 16
      %v468 = vor.u32 %v465, %v466
      %v470 = vshrl.u32 %v387, 16
      %v472 = vrot.slane %v470, 7
      %v473 = vshll.u32 %v387, 16
      %v475 = vor.u32 %v472, %v473
      %v477 = vshrl.u32 %v388, 16
      %v479 = vrot.slane %v477, 7
      %v480 = vshll.u32 %v388, 16
      %v482 = vor.u32 %v479, %v480
      %v484 = vshrl.u32 %v389, 16
      %v486 = vrot.slane %v484, 7
      %v487 = vshll.u32 %v389, 16
      %v489 = vor.u32 %v486, %v487
      %v491 = vshrl.u32 %v390, 16
      %v493 = vrot.slane %v491, 7
      %v494 = vshll.u32 %v390, 16
      %v496 = vor.u32 %v493, %v494
      %v498 = vshrl.u32 %v391, 16
      %v500 = vrot.slane %v498, 7
      %v501 = vshll.u32 %v391, 16
      %v503 = vor.u32 %v500, %v501
      %vm536 = vcmask 1040384
      %vm537 = vsmask.f32 256
      %vm538 = vmand %vm536, %vm537
      %v539 = vsel %vm538, 0, %v398
      %v540 = vsel %vm538, 0, %v405
      %v541 = vsel %vm538, 0, %v412
      %v542 = vsel %vm538, 0, %v419
      %v543 = vsel %vm538, 0, %v426
      %v544 = vsel %vm538, 0, %v433
      %v545 = vsel %vm538, 0, %v440
      %v546 = vsel %vm538, 0, %v447
      %v547 = vsel %vm538, 0, %v454
      %v548 = vsel %vm538, 0, %v461
      %v549 = vsel %vm538, 0, %v468
      %v550 = vsel %vm538, 0, %v475
      %v551 = vsel %vm538, 0, %v482
      %v552 = vsel %vm538, 0, %v489
      %v553 = vsel %vm538, 0, %v496
      %v554 = vsel %vm538, 0, %v503
      %v555 = vsel %vm538, %v395, 0
      %v556 = vsel %vm538, %v402, 0
      %v557 = vsel %vm538, %v409, 0
      %v558 = vsel %vm538, %v416, 0
      %v559 = vsel %vm538, %v423, 0
      %v560 = vsel %vm538, %v430, 0
      %v561 = vsel %vm538, %v437, 0
      %v562 = vsel %vm538, %v444, 0
      %v563 = vsel %vm538, %v451, 0
      %v564 = vsel %vm538, %v458, 0
      %v565 = vsel %vm538, %v465, 0
      %v566 = vsel %vm538, %v472, 0
      %v567 = vsel %vm538, %v479, 0
      %v568 = vsel %vm538, %v486, 0
      %v569 = vsel %vm538, %v493, 0
      %v570 = vsel %vm538, %v500, 0
      %v571 = vld [vmem:[%s1] sm:$0xf]
      %v572 = vld [vmem:[%s1 + $0x4] sm:$0xf]
      %v573 = vld [vmem:[%s1 + $0x8] sm:$0xf]
      %v574 = vld [vmem:[%s1 + $0xc] sm:$0xf]
      %v575 = vld [vmem:[%s1 + $0x10] sm:$0xf]
      %v576 = vld [vmem:[%s1 + $0x14] sm:$0xf]
      %v577 = vld [vmem:[%s1 + $0x18] sm:$0xf]
      %v578 = vld [vmem:[%s1 + $0x1c] sm:$0xf]
      %v579 = vld [vmem:[%s1 + $0x20] sm:$0xf]
      %v580 = vld [vmem:[%s1 + $0x24] sm:$0xf]
      %v581 = vld [vmem:[%s1 + $0x28] sm:$0xf]
      %v582 = vld [vmem:[%s1 + $0x2c] sm:$0xf]
      %v583 = vld [vmem:[%s1 + $0x30] sm:$0xf]
      %v584 = vld [vmem:[%s1 + $0x34] sm:$0xf]
      %v585 = vld [vmem:[%s1 + $0x38] sm:$0xf]
      %v586 = vld [vmem:[%s1 + $0x3c] sm:$0xf]
      %v587 = vld [vmem:[%s1 + $0x40] sm:$0xf]
      %v588 = vld [vmem:[%s1 + $0x44] sm:$0xf]
      %v589 = vld [vmem:[%s1 + $0x48] sm:$0xf]
      %v590 = vld [vmem:[%s1 + $0x4c] sm:$0xf]
      %v591 = vld [vmem:[%s1 + $0x50] sm:$0xf]
      %v592 = vld [vmem:[%s1 + $0x54] sm:$0xf]
      %v593 = vld [vmem:[%s1 + $0x58] sm:$0xf]
      %v594 = vld [vmem:[%s1 + $0x5c] sm:$0xf]
      %v595 = vld [vmem:[%s1 + $0x60] sm:$0xf]
      %v596 = vld [vmem:[%s1 + $0x64] sm:$0xf]
      %v597 = vld [vmem:[%s1 + $0x68] sm:$0xf]
      %v598 = vld [vmem:[%s1 + $0x6c] sm:$0xf]
      %v599 = vld [vmem:[%s1 + $0x70] sm:$0xf]
      %v600 = vld [vmem:[%s1 + $0x74] sm:$0xf]
      %v601 = vld [vmem:[%s1 + $0x78] sm:$0xf]
      %v602 = vld [vmem:[%s1 + $0x7c] sm:$0xf]
      %v603 = vld [vmem:[%s1 + $0x80] sm:$0xf]
      %v604 = vld [vmem:[%s1 + $0x84] sm:$0xf]
      %v605 = vld [vmem:[%s1 + $0x88] sm:$0xf]
      %v606 = vld [vmem:[%s1 + $0x8c] sm:$0xf]
      %v607 = vld [vmem:[%s2] sm:$0x1]
      %vm608 = vsmask.f32 7424
      %v610 = vshrl.u32 0, 16
      %v612 = vshll.u32 0, 16
      %v614 = vrot.slane %v612, 1
      %v615 = vor.u32 %v610, %v614
      %v616 = vsel %vm608, %v615, %v614
      %v618 = vshrl.u32 %v539, 16
      %v620 = vshll.u32 %v539, 16
      %v622 = vrot.slane %v620, 1
      %v623 = vor.u32 %v618, %v622
      %v625 = vshll.u32 %v555, 16
      %v627 = vrot.slane %v625, 1
      %v628 = vsel %vm608, %v623, %v627
      %v630 = vshrl.u32 %v540, 16
      %v632 = vshll.u32 %v540, 16
      %v634 = vrot.slane %v632, 1
      %v635 = vor.u32 %v630, %v634
      %v637 = vshll.u32 %v556, 16
      %v639 = vrot.slane %v637, 1
      %v640 = vsel %vm608, %v635, %v639
      %v642 = vshrl.u32 %v541, 16
      %v644 = vshll.u32 %v541, 16
      %v646 = vrot.slane %v644, 1
      %v647 = vor.u32 %v642, %v646
      %v649 = vshll.u32 %v557, 16
      %v651 = vrot.slane %v649, 1
      %v652 = vsel %vm608, %v647, %v651
      %v654 = vshrl.u32 %v542, 16
      %v656 = vshll.u32 %v542, 16
      %v658 = vrot.slane %v656, 1
      %v659 = vor.u32 %v654, %v658
      %v661 = vshll.u32 %v558, 16
      %v663 = vrot.slane %v661, 1
      %v664 = vsel %vm608, %v659, %v663
      %v666 = vshrl.u32 %v543, 16
      %v668 = vshll.u32 %v543, 16
      %v670 = vrot.slane %v668, 1
      %v671 = vor.u32 %v666, %v670
      %v673 = vshll.u32 %v559, 16
      %v675 = vrot.slane %v673, 1
      %v676 = vsel %vm608, %v671, %v675
      %v678 = vshrl.u32 %v544, 16
      %v680 = vshll.u32 %v544, 16
      %v682 = vrot.slane %v680, 1
      %v683 = vor.u32 %v678, %v682
      %v685 = vshll.u32 %v560, 16
      %v687 = vrot.slane %v685, 1
      %v688 = vsel %vm608, %v683, %v687
      %v690 = vshrl.u32 %v545, 16
      %v692 = vshll.u32 %v545, 16
      %v694 = vrot.slane %v692, 1
      %v695 = vor.u32 %v690, %v694
      %v697 = vshll.u32 %v561, 16
      %v699 = vrot.slane %v697, 1
      %v700 = vsel %vm608, %v695, %v699
      %v702 = vshrl.u32 %v546, 16
      %v704 = vshll.u32 %v546, 16
      %v706 = vrot.slane %v704, 1
      %v707 = vor.u32 %v702, %v706
      %v709 = vshll.u32 %v562, 16
      %v711 = vrot.slane %v709, 1
      %v712 = vsel %vm608, %v707, %v711
      %v714 = vshrl.u32 %v547, 16
      %v716 = vshll.u32 %v547, 16
      %v718 = vrot.slane %v716, 1
      %v719 = vor.u32 %v714, %v718
      %v721 = vshll.u32 %v563, 16
      %v723 = vrot.slane %v721, 1
      %v724 = vsel %vm608, %v719, %v723
      %v726 = vshrl.u32 %v548, 16
      %v728 = vshll.u32 %v548, 16
      %v730 = vrot.slane %v728, 1
      %v731 = vor.u32 %v726, %v730
      %v733 = vshll.u32 %v564, 16
      %v735 = vrot.slane %v733, 1
      %v736 = vsel %vm608, %v731, %v735
      %v738 = vshrl.u32 %v549, 16
      %v740 = vshll.u32 %v549, 16
      %v742 = vrot.slane %v740, 1
      %v743 = vor.u32 %v738, %v742
      %v745 = vshll.u32 %v565, 16
      %v747 = vrot.slane %v745, 1
      %v748 = vsel %vm608, %v743, %v747
      %v750 = vshrl.u32 %v550, 16
      %v752 = vshll.u32 %v550, 16
      %v754 = vrot.slane %v752, 1
      %v755 = vor.u32 %v750, %v754
      %v757 = vshll.u32 %v566, 16
      %v759 = vrot.slane %v757, 1
      %v760 = vsel %vm608, %v755, %v759
      %v762 = vshrl.u32 %v551, 16
      %v764 = vshll.u32 %v551, 16
      %v766 = vrot.slane %v764, 1
      %v767 = vor.u32 %v762, %v766
      %v769 = vshll.u32 %v567, 16
      %v771 = vrot.slane %v769, 1
      %v772 = vsel %vm608, %v767, %v771
      %v774 = vshrl.u32 %v552, 16
      %v776 = vshll.u32 %v552, 16
      %v778 = vrot.slane %v776, 1
      %v779 = vor.u32 %v774, %v778
      %v781 = vshll.u32 %v568, 16
      %v783 = vrot.slane %v781, 1
      %v784 = vsel %vm608, %v779, %v783
      %v786 = vshrl.u32 %v553, 16
      %v788 = vshll.u32 %v553, 16
      %v790 = vrot.slane %v788, 1
      %v791 = vor.u32 %v786, %v790
      %v793 = vshll.u32 %v569, 16
      %v795 = vrot.slane %v793, 1
      %v796 = vsel %vm608, %v791, %v795
      %v798 = vshrl.u32 %v554, 16
      %v800 = vshll.u32 %v554, 16
      %v802 = vrot.slane %v800, 1
      %v803 = vor.u32 %v798, %v802
      %v805 = vshll.u32 %v570, 16
      %v807 = vrot.slane %v805, 1
      %v808 = vsel %vm608, %v803, %v807
      %vm842 = vcmask 1046528
      %v843 = vrot.slane 0, 1
      %v844 = vsel %vm842, %v843, %v843
      %v845 = vrot.slane %v539, 1
      %v846 = vrot.slane %v555, 1
      %v847 = vsel %vm842, %v845, %v846
      %v848 = vrot.slane %v540, 1
      %v849 = vrot.slane %v556, 1
      %v850 = vsel %vm842, %v848, %v849
      %v851 = vrot.slane %v541, 1
      %v852 = vrot.slane %v557, 1
      %v853 = vsel %vm842, %v851, %v852
      %v854 = vrot.slane %v542, 1
      %v855 = vrot.slane %v558, 1
      %v856 = vsel %vm842, %v854, %v855
      %v857 = vrot.slane %v543, 1
      %v858 = vrot.slane %v559, 1
      %v859 = vsel %vm842, %v857, %v858
      %v860 = vrot.slane %v544, 1
      %v861 = vrot.slane %v560, 1
      %v862 = vsel %vm842, %v860, %v861
      %v863 = vrot.slane %v545, 1
      %v864 = vrot.slane %v561, 1
      %v865 = vsel %vm842, %v863, %v864
      %v866 = vrot.slane %v546, 1
      %v867 = vrot.slane %v562, 1
      %v868 = vsel %vm842, %v866, %v867
      %v869 = vrot.slane %v547, 1
      %v870 = vrot.slane %v563, 1
      %v871 = vsel %vm842, %v869, %v870
      %v872 = vrot.slane %v548, 1
      %v873 = vrot.slane %v564, 1
      %v874 = vsel %vm842, %v872, %v873
      %v875 = vrot.slane %v549, 1
      %v876 = vrot.slane %v565, 1
      %v877 = vsel %vm842, %v875, %v876
      %v878 = vrot.slane %v550, 1
      %v879 = vrot.slane %v566, 1
      %v880 = vsel %vm842, %v878, %v879
      %v881 = vrot.slane %v551, 1
      %v882 = vrot.slane %v567, 1
      %v883 = vsel %vm842, %v881, %v882
      %v884 = vrot.slane %v552, 1
      %v885 = vrot.slane %v568, 1
      %v886 = vsel %vm842, %v884, %v885
      %v887 = vrot.slane %v553, 1
      %v888 = vrot.slane %v569, 1
      %v889 = vsel %vm842, %v887, %v888
      %v890 = vrot.slane %v554, 1
      %v891 = vrot.slane %v570, 1
      %v892 = vsel %vm842, %v890, %v891
      %893 = vrot.lane.b32.xlu0 %v616, 32
      %v894 = vpop.permute.xlu0 %893
      %895 = vrot.lane.b32.xlu0 %v628, 32
      %v896 = vpop.permute.xlu0 %895
      %897 = vrot.lane.b32.xlu0 %v640, 32
      %v898 = vpop.permute.xlu0 %897
      %899 = vrot.lane.b32.xlu0 %v652, 32
      %v900 = vpop.permute.xlu0 %899
      %901 = vrot.lane.b32.xlu0 %v664, 32
      %v902 = vpop.permute.xlu0 %901
      %903 = vrot.lane.b32.xlu0 %v676, 32
      %v904 = vpop.permute.xlu0 %903
      %905 = vrot.lane.b32.xlu0 %v688, 32
      %v906 = vpop.permute.xlu0 %905
      %907 = vrot.lane.b32.xlu0 %v700, 32
      %v908 = vpop.permute.xlu0 %907
      %909 = vrot.lane.b32.xlu0 %v712, 32
      %v910 = vpop.permute.xlu0 %909
      %911 = vrot.lane.b32.xlu0 %v724, 32
      %v912 = vpop.permute.xlu0 %911
      %913 = vrot.lane.b32.xlu0 %v736, 32
      %v914 = vpop.permute.xlu0 %913
      %915 = vrot.lane.b32.xlu0 %v748, 32
      %v916 = vpop.permute.xlu0 %915
      %917 = vrot.lane.b32.xlu0 %v760, 32
      %v918 = vpop.permute.xlu0 %917
      %919 = vrot.lane.b32.xlu0 %v772, 32
      %v920 = vpop.permute.xlu0 %919
      %921 = vrot.lane.b32.xlu0 %v784, 32
      %v922 = vpop.permute.xlu0 %921
      %923 = vrot.lane.b32.xlu0 %v796, 32
      %v924 = vpop.permute.xlu0 %923
      %925 = vrot.lane.b32.xlu0 %v844, 64
      %v926 = vpop.permute.xlu0 %925
      %927 = vrot.lane.b32.xlu0 %v847, 64
      %v928 = vpop.permute.xlu0 %927
      %929 = vrot.lane.b32.xlu0 %v850, 64
      %v930 = vpop.permute.xlu0 %929
      %931 = vrot.lane.b32.xlu0 %v853, 64
      %v932 = vpop.permute.xlu0 %931
      %933 = vrot.lane.b32.xlu0 %v856, 64
      %v934 = vpop.permute.xlu0 %933
      %935 = vrot.lane.b32.xlu0 %v859, 64
      %v936 = vpop.permute.xlu0 %935
      %937 = vrot.lane.b32.xlu0 %v862, 64
      %v938 = vpop.permute.xlu0 %937
      %939 = vrot.lane.b32.xlu0 %v865, 64
      %v940 = vpop.permute.xlu0 %939
      %941 = vrot.lane.b32.xlu0 %v868, 64
      %v942 = vpop.permute.xlu0 %941
      %943 = vrot.lane.b32.xlu0 %v871, 64
      %v944 = vpop.permute.xlu0 %943
      %945 = vrot.lane.b32.xlu0 %v874, 64
      %v946 = vpop.permute.xlu0 %945
      %947 = vrot.lane.b32.xlu0 %v877, 64
      %v948 = vpop.permute.xlu0 %947
      %949 = vrot.lane.b32.xlu0 %v880, 64
      %v950 = vpop.permute.xlu0 %949
      %951 = vrot.lane.b32.xlu0 %v883, 64
      %v952 = vpop.permute.xlu0 %951
      %953 = vrot.lane.b32.xlu0 %v886, 64
      %v954 = vpop.permute.xlu0 %953
      %955 = vrot.lane.b32.xlu0 %v889, 64
      %v956 = vpop.permute.xlu0 %955
      %957 = vrot.lane.b32.xlu0 %v539, 96
      %v958 = vpop.permute.xlu0 %957
      %959 = vrot.lane.b32.xlu0 %v540, 96
      %v960 = vpop.permute.xlu0 %959
      %961 = vrot.lane.b32.xlu0 %v541, 96
      %v962 = vpop.permute.xlu0 %961
      %963 = vrot.lane.b32.xlu0 %v542, 96
      %v964 = vpop.permute.xlu0 %963
      %965 = vrot.lane.b32.xlu0 %v543, 96
      %v966 = vpop.permute.xlu0 %965
      %967 = vrot.lane.b32.xlu0 %v544, 96
      %v968 = vpop.permute.xlu0 %967
      %969 = vrot.lane.b32.xlu0 %v545, 96
      %v970 = vpop.permute.xlu0 %969
      %971 = vrot.lane.b32.xlu0 %v546, 96
      %v972 = vpop.permute.xlu0 %971
      %973 = vrot.lane.b32.xlu0 %v547, 96
      %v974 = vpop.permute.xlu0 %973
      %975 = vrot.lane.b32.xlu0 %v548, 96
      %v976 = vpop.permute.xlu0 %975
      %977 = vrot.lane.b32.xlu0 %v549, 96
      %v978 = vpop.permute.xlu0 %977
      %979 = vrot.lane.b32.xlu0 %v550, 96
      %v980 = vpop.permute.xlu0 %979
      %981 = vrot.lane.b32.xlu0 %v551, 96
      %v982 = vpop.permute.xlu0 %981
      %983 = vrot.lane.b32.xlu0 %v552, 96
      %v984 = vpop.permute.xlu0 %983
      %985 = vrot.lane.b32.xlu0 %v553, 96
      %v986 = vpop.permute.xlu0 %985
      %987 = vrot.lane.b32.xlu0 %v554, 96
      %v988 = vpop.permute.xlu0 %987
      %989 = vrot.lane.b32.xlu0 %v847, 32
      %v990 = vpop.permute.xlu0 %989
      %991 = vrot.lane.b32.xlu0 %v850, 32
      %v992 = vpop.permute.xlu0 %991
      %993 = vrot.lane.b32.xlu0 %v853, 32
      %v994 = vpop.permute.xlu0 %993
      %995 = vrot.lane.b32.xlu0 %v856, 32
      %v996 = vpop.permute.xlu0 %995
      %997 = vrot.lane.b32.xlu0 %v859, 32
      %v998 = vpop.permute.xlu0 %997
      %999 = vrot.lane.b32.xlu0 %v862, 32
      %v1000 = vpop.permute.xlu0 %999
      %1001 = vrot.lane.b32.xlu0 %v865, 32
      %v1002 = vpop.permute.xlu0 %1001
      %1003 = vrot.lane.b32.xlu0 %v868, 32
      %v1004 = vpop.permute.xlu0 %1003
      %1005 = vrot.lane.b32.xlu0 %v871, 32
      %v1006 = vpop.permute.xlu0 %1005
      %1007 = vrot.lane.b32.xlu0 %v874, 32
      %v1008 = vpop.permute.xlu0 %1007
      %1009 = vrot.lane.b32.xlu0 %v877, 32
      %v1010 = vpop.permute.xlu0 %1009
      %1011 = vrot.lane.b32.xlu0 %v880, 32
      %v1012 = vpop.permute.xlu0 %1011
      %1013 = vrot.lane.b32.xlu0 %v883, 32
      %v1014 = vpop.permute.xlu0 %1013
      %1015 = vrot.lane.b32.xlu0 %v886, 32
      %v1016 = vpop.permute.xlu0 %1015
      %1017 = vrot.lane.b32.xlu0 %v889, 32
      %v1018 = vpop.permute.xlu0 %1017
      %1019 = vrot.lane.b32.xlu0 %v892, 32
      %v1020 = vpop.permute.xlu0 %1019
      %1021 = vrot.lane.b32.xlu0 %v540, 64
      %v1022 = vpop.permute.xlu0 %1021
      %1023 = vrot.lane.b32.xlu0 %v541, 64
      %v1024 = vpop.permute.xlu0 %1023
      %1025 = vrot.lane.b32.xlu0 %v542, 64
      %v1026 = vpop.permute.xlu0 %1025
      %1027 = vrot.lane.b32.xlu0 %v543, 64
      %v1028 = vpop.permute.xlu0 %1027
      %1029 = vrot.lane.b32.xlu0 %v544, 64
      %v1030 = vpop.permute.xlu0 %1029
      %1031 = vrot.lane.b32.xlu0 %v545, 64
      %v1032 = vpop.permute.xlu0 %1031
      %1033 = vrot.lane.b32.xlu0 %v546, 64
      %v1034 = vpop.permute.xlu0 %1033
      %1035 = vrot.lane.b32.xlu0 %v547, 64
      %v1036 = vpop.permute.xlu0 %1035
      %1037 = vrot.lane.b32.xlu0 %v548, 64
      %v1038 = vpop.permute.xlu0 %1037
      %1039 = vrot.lane.b32.xlu0 %v549, 64
      %v1040 = vpop.permute.xlu0 %1039
      %1041 = vrot.lane.b32.xlu0 %v550, 64
      %v1042 = vpop.permute.xlu0 %1041
      %1043 = vrot.lane.b32.xlu0 %v551, 64
      %v1044 = vpop.permute.xlu0 %1043
      %1045 = vrot.lane.b32.xlu0 %v552, 64
      %v1046 = vpop.permute.xlu0 %1045
      %1047 = vrot.lane.b32.xlu0 %v553, 64
      %v1048 = vpop.permute.xlu0 %1047
      %1049 = vrot.lane.b32.xlu0 %v554, 64
      %v1050 = vpop.permute.xlu0 %1049
      %1051 = vrot.lane.b32.xlu0 0, 64
      %v1052 = vpop.permute.xlu0 %1051
      %1053 = vrot.lane.b32.xlu0 %v640, 96
      %v1054 = vpop.permute.xlu0 %1053
      %1055 = vrot.lane.b32.xlu0 %v652, 96
      %v1056 = vpop.permute.xlu0 %1055
      %1057 = vrot.lane.b32.xlu0 %v664, 96
      %v1058 = vpop.permute.xlu0 %1057
      %1059 = vrot.lane.b32.xlu0 %v676, 96
      %v1060 = vpop.permute.xlu0 %1059
      %1061 = vrot.lane.b32.xlu0 %v688, 96
      %v1062 = vpop.permute.xlu0 %1061
      %1063 = vrot.lane.b32.xlu0 %v700, 96
      %v1064 = vpop.permute.xlu0 %1063
      %1065 = vrot.lane.b32.xlu0 %v712, 96
      %v1066 = vpop.permute.xlu0 %1065
      %1067 = vrot.lane.b32.xlu0 %v724, 96
      %v1068 = vpop.permute.xlu0 %1067
      %1069 = vrot.lane.b32.xlu0 %v736, 96
      %v1070 = vpop.permute.xlu0 %1069
      %1071 = vrot.lane.b32.xlu0 %v748, 96
      %v1072 = vpop.permute.xlu0 %1071
      %1073 = vrot.lane.b32.xlu0 %v760, 96
      %v1074 = vpop.permute.xlu0 %1073
      %1075 = vrot.lane.b32.xlu0 %v772, 96
      %v1076 = vpop.permute.xlu0 %1075
      %1077 = vrot.lane.b32.xlu0 %v784, 96
      %v1078 = vpop.permute.xlu0 %1077
      %1079 = vrot.lane.b32.xlu0 %v796, 96
      %v1080 = vpop.permute.xlu0 %1079
      %1081 = vrot.lane.b32.xlu0 %v808, 96
      %v1082 = vpop.permute.xlu0 %1081
      %1083 = vrot.lane.b32.xlu0 %v616, 96
      %v1084 = vpop.permute.xlu0 %1083
      %vm1085 = vcmask 261120
      %v1087 = vsel %vm1085, 0, %v894
      %v1089 = vsel %vm1085, %v539, %v896
      %v1091 = vsel %vm1085, %v540, %v898
      %v1093 = vsel %vm1085, %v541, %v900
      %v1095 = vsel %vm1085, %v542, %v902
      %v1097 = vsel %vm1085, %v543, %v904
      %v1099 = vsel %vm1085, %v544, %v906
      %v1101 = vsel %vm1085, %v545, %v908
      %v1103 = vsel %vm1085, %v546, %v910
      %v1105 = vsel %vm1085, %v547, %v912
      %v1107 = vsel %vm1085, %v548, %v914
      %v1109 = vsel %vm1085, %v549, %v916
      %v1111 = vsel %vm1085, %v550, %v918
      %v1113 = vsel %vm1085, %v551, %v920
      %v1115 = vsel %vm1085, %v552, %v922
      %v1117 = vsel %vm1085, %v553, %v924
      %vm1118 = vcmask 523264
      %v1120 = vsel %vm1118, %v1087, %v926
      %v1122 = vsel %vm1118, %v1089, %v928
      %v1124 = vsel %vm1118, %v1091, %v930
      %v1126 = vsel %vm1118, %v1093, %v932
      %v1128 = vsel %vm1118, %v1095, %v934
      %v1130 = vsel %vm1118, %v1097, %v936
      %v1132 = vsel %vm1118, %v1099, %v938
      %v1134 = vsel %vm1118, %v1101, %v940
      %v1136 = vsel %vm1118, %v1103, %v942
      %v1138 = vsel %vm1118, %v1105, %v944
      %v1140 = vsel %vm1118, %v1107, %v946
      %v1142 = vsel %vm1118, %v1109, %v948
      %v1144 = vsel %vm1118, %v1111, %v950
      %v1146 = vsel %vm1118, %v1113, %v952
      %v1148 = vsel %vm1118, %v1115, %v954
      %v1150 = vsel %vm1118, %v1117, %v956
      %vm1151 = vcmask 785408
      %v1153 = vsel %vm1151, %v1120, %v958
      %v1156 = vsel %vm1151, %v1122, %v960
      %v1159 = vsel %vm1151, %v1124, %v962
      %v1162 = vsel %vm1151, %v1126, %v964
      %v1165 = vsel %vm1151, %v1128, %v966
      %v1168 = vsel %vm1151, %v1130, %v968
      %v1171 = vsel %vm1151, %v1132, %v970
      %v1174 = vsel %vm1151, %v1134, %v972
      %v1177 = vsel %vm1151, %v1136, %v974
      %v1180 = vsel %vm1151, %v1138, %v976
      %v1183 = vsel %vm1151, %v1140, %v978
      %v1186 = vsel %vm1151, %v1142, %v980
      %v1189 = vsel %vm1151, %v1144, %v982
      %v1192 = vsel %vm1151, %v1146, %v984
      %v1195 = vsel %vm1151, %v1148, %v986
      %v1198 = vsel %vm1151, %v1150, %v988
      %v1202 = vsel %vm1085, %v628, %v990
      %v1205 = vsel %vm1085, %v640, %v992
      %v1208 = vsel %vm1085, %v652, %v994
      %v1211 = vsel %vm1085, %v664, %v996
      %v1214 = vsel %vm1085, %v676, %v998
      %v1217 = vsel %vm1085, %v688, %v1000
      %v1220 = vsel %vm1085, %v700, %v1002
      %v1223 = vsel %vm1085, %v712, %v1004
      %v1226 = vsel %vm1085, %v724, %v1006
      %v1229 = vsel %vm1085, %v736, %v1008
      %v1232 = vsel %vm1085, %v748, %v1010
      %v1235 = vsel %vm1085, %v760, %v1012
      %v1238 = vsel %vm1085, %v772, %v1014
      %v1241 = vsel %vm1085, %v784, %v1016
      %v1244 = vsel %vm1085, %v796, %v1018
      %v1247 = vsel %vm1085, %v808, %v1020
      %v1249 = vsel %vm1118, %v1202, %v1022
      %v1251 = vsel %vm1118, %v1205, %v1024
      %v1253 = vsel %vm1118, %v1208, %v1026
      %v1255 = vsel %vm1118, %v1211, %v1028
      %v1257 = vsel %vm1118, %v1214, %v1030
      %v1259 = vsel %vm1118, %v1217, %v1032
      %v1261 = vsel %vm1118, %v1220, %v1034
      %v1263 = vsel %vm1118, %v1223, %v1036
      %v1265 = vsel %vm1118, %v1226, %v1038
      %v1267 = vsel %vm1118, %v1229, %v1040
      %v1269 = vsel %vm1118, %v1232, %v1042
      %v1271 = vsel %vm1118, %v1235, %v1044
      %v1273 = vsel %vm1118, %v1238, %v1046
      %v1275 = vsel %vm1118, %v1241, %v1048
      %v1277 = vsel %vm1118, %v1244, %v1050
      %v1279 = vsel %vm1118, %v1247, %v1052
      %v1281 = vsel %vm1151, %v1249, %v1054
      %v1284 = vsel %vm1151, %v1251, %v1056
      %v1287 = vsel %vm1151, %v1253, %v1058
      %v1290 = vsel %vm1151, %v1255, %v1060
      %v1293 = vsel %vm1151, %v1257, %v1062
      %v1296 = vsel %vm1151, %v1259, %v1064
      %v1299 = vsel %vm1151, %v1261, %v1066
      %v1302 = vsel %vm1151, %v1263, %v1068
      %v1305 = vsel %vm1151, %v1265, %v1070
      %v1308 = vsel %vm1151, %v1267, %v1072
      %v1311 = vsel %vm1151, %v1269, %v1074
      %v1314 = vsel %vm1151, %v1271, %v1076
      %v1317 = vsel %vm1151, %v1273, %v1078
      %v1320 = vsel %vm1151, %v1275, %v1080
      %v1323 = vsel %vm1151, %v1277, %v1082
      %v1326 = vsel %vm1151, %v1279, %v1084
      %v1329 = vlaneseq
      %v1330 = vshrl.u32 %v1329, 7
      %v1331 = vsub.s32 0, %v1330
      %v1332 = vrot.slane %v607, %v1331
      %v1370 = vunpack.c.l.b16 %v571
      %v1371 = vunpack.c.l.b16 %v572
      %v1372 = vunpack.c.l.b16 %v573
      %v1373 = vunpack.c.l.b16 %v574
      %v1374 = vunpack.c.l.b16 %v575
      %v1375 = vunpack.c.l.b16 %v576
      %v1376 = vunpack.c.l.b16 %v577
      %v1377 = vunpack.c.l.b16 %v578
      %v1378 = vunpack.c.l.b16 %v579
      %v1379 = vunpack.c.l.b16 %v580
      %v1380 = vunpack.c.l.b16 %v581
      %v1381 = vunpack.c.l.b16 %v582
      %v1382 = vunpack.c.l.b16 %v583
      %v1383 = vunpack.c.l.b16 %v584
      %v1384 = vunpack.c.l.b16 %v585
      %v1385 = vunpack.c.l.b16 %v586
      %v1386 = vunpack.c.l.b16 %v587
      %v1387 = vunpack.c.l.b16 %v588
      %v1388 = vunpack.c.l.b16 %v589
      %v1389 = vunpack.c.l.b16 %v590
      %v1390 = vunpack.c.l.b16 %v591
      %v1391 = vunpack.c.l.b16 %v592
      %v1392 = vunpack.c.l.b16 %v593
      %v1393 = vunpack.c.l.b16 %v594
      %v1394 = vunpack.c.l.b16 %v595
      %v1395 = vunpack.c.l.b16 %v596
      %v1396 = vunpack.c.l.b16 %v597
      %v1397 = vunpack.c.l.b16 %v598
      %v1398 = vunpack.c.l.b16 %v599
      %v1399 = vunpack.c.l.b16 %v600
      %v1400 = vunpack.c.l.b16 %v601
      %v1401 = vunpack.c.l.b16 %v602
      %v1402 = vunpack.c.l.b16 %v603
      %v1403 = vunpack.c.l.b16 %v604
      %v1404 = vunpack.c.l.b16 %v605
      %v1405 = vunpack.c.l.b16 %v606
      %v1406 = vpack.c.b16 %v1371, %v1370
      %v1407 = vpack.c.b16 %v1373, %v1372
      %v1408 = vpack.c.b16 %v1375, %v1374
      %v1409 = vpack.c.b16 %v1377, %v1376
      %v1410 = vpack.c.b16 %v1379, %v1378
      %v1411 = vpack.c.b16 %v1381, %v1380
      %v1412 = vpack.c.b16 %v1383, %v1382
      %v1413 = vpack.c.b16 %v1385, %v1384
      %v1414 = vpack.c.b16 %v1387, %v1386
      %v1415 = vpack.c.b16 %v1389, %v1388
      %v1416 = vpack.c.b16 %v1391, %v1390
      %v1417 = vpack.c.b16 %v1393, %v1392
      %v1418 = vpack.c.b16 %v1395, %v1394
      %v1419 = vpack.c.b16 %v1397, %v1396
      %v1420 = vpack.c.b16 %v1399, %v1398
      %v1421 = vpack.c.b16 %v1401, %v1400
      %v1422 = vpack.c.b16 %v1403, %v1402
      %v1423 = vpack.c.b16 %v1405, %v1404
      %v1443 = vsel %vm1085, %v850, 0
      %v1446 = vsel %vm1085, %v853, 0
      %v1449 = vsel %vm1085, %v856, 0
      %v1452 = vsel %vm1085, %v859, 0
      %v1455 = vsel %vm1085, %v862, 0
      %v1458 = vsel %vm1085, %v865, 0
      %v1461 = vsel %vm1085, %v868, 0
      %v1464 = vsel %vm1085, %v871, 0
      %v1467 = vsel %vm1085, %v874, 0
      %v1470 = vsel %vm1085, %v877, 0
      %v1473 = vsel %vm1085, %v880, 0
      %v1476 = vsel %vm1085, %v883, 0
      %v1479 = vsel %vm1085, %v886, 0
      %v1482 = vsel %vm1085, %v889, 0
      %v1485 = vsel %vm1085, %v892, 0
      %v1488 = vsel %vm1085, %v844, 0
      %1490 = vmatprep.subr.bf16.mxu0 0
      %1491 = vmatpush1.bf16.msra.mxu0 %v1413
      %1492 = vmatprep.subr.bf16.mxu0 0
      %1493 = vmatpush1.bf16.msra.mxu0 %v1412
      %1494 = vmatprep.subr.bf16.mxu0 0
      %1495 = vmatpush1.bf16.msra.mxu0 %v1411
      %1496 = vmatprep.subr.bf16.mxu0 0
      %1497 = vmatpush1.bf16.msra.mxu0 %v1410
      %1498 = vmatprep.subr.bf16.mxu0 0
      %1499 = vmatpush1.bf16.msra.mxu0 %v1409
      %1500 = vmatprep.subr.bf16.mxu0 0
      %1501 = vmatpush1.bf16.msra.mxu0 %v1408
      %1502 = vmatprep.subr.bf16.mxu0 0
      %1503 = vmatpush1.bf16.msra.mxu0 %v1407
      %1504 = vmatprep.subr.bf16.mxu0 0
      %1505 = vmatpush1.bf16.msra.mxu0 %v1406
      %1506 = vmatprep.subr.bf16.mxu0 0
      %1507 = vmatpush2.bf16.msra.mxu0 %v1421
      %1508 = vmatprep.subr.bf16.mxu0 0
      %1509 = vmatpush2.bf16.msra.mxu0 %v1420
      %1510 = vmatprep.subr.bf16.mxu0 0
      %1511 = vmatpush2.bf16.msra.mxu0 %v1419
      %1512 = vmatprep.subr.bf16.mxu0 0
      %1513 = vmatpush2.bf16.msra.mxu0 %v1418
      %1514 = vmatprep.subr.bf16.mxu0 0
      %1515 = vmatpush2.bf16.msra.mxu0 %v1417
      %1516 = vmatprep.subr.bf16.mxu0 0
      %1517 = vmatpush2.bf16.msra.mxu0 %v1416
      %1518 = vmatprep.subr.bf16.mxu0 0
      %1519 = vmatpush2.bf16.msra.mxu0 %v1415
      %1520 = vmatprep.subr.bf16.mxu0 0
      %1521 = vmatpush2.bf16.msra.mxu0 %v1414
      %1522 = vmatprep.mubr.bf16.mxu0 %v1281
      %1523 = vmatmul.mubr.bf16.gmra.mxu0 %v1153
      %v1524 = vpop.f32.mrf.mxu0
      %v1525 = vadd.f32 %v1332, %v1524
      %v1526 = vpop.f32.mrf.mxu0
      %v1527 = vpop.f32.mrf.mxu0
      %v1528 = vadd.f32 %v1332, %v1527
      %v1529 = vpop.f32.mrf.mxu0
      %1530 = vmatprep.mubr.bf16.mxu0 %v1284
      %1531 = vmatmul.mubr.bf16.gmra.mxu0 %v1156
      %v1532 = vpop.f32.mrf.mxu0
      %v1533 = vadd.f32 %v1332, %v1532
      %v1534 = vpop.f32.mrf.mxu0
      %v1535 = vpop.f32.mrf.mxu0
      %v1536 = vadd.f32 %v1332, %v1535
      %v1537 = vpop.f32.mrf.mxu0
      %1538 = vmatprep.mubr.bf16.mxu0 %v1287
      %1539 = vmatmul.mubr.bf16.gmra.mxu0 %v1159
      %v1540 = vpop.f32.mrf.mxu0
      %v1541 = vadd.f32 %v1332, %v1540
      %v1542 = vpop.f32.mrf.mxu0
      %v1543 = vpop.f32.mrf.mxu0
      %v1544 = vadd.f32 %v1332, %v1543
      %v1545 = vpop.f32.mrf.mxu0
      %1546 = vmatprep.mubr.bf16.mxu0 %v1290
      %1547 = vmatmul.mubr.bf16.gmra.mxu0 %v1162
      %v1548 = vpop.f32.mrf.mxu0
      %v1549 = vadd.f32 %v1332, %v1548
      %v1550 = vpop.f32.mrf.mxu0
      %v1551 = vpop.f32.mrf.mxu0
      %v1552 = vadd.f32 %v1332, %v1551
      %v1553 = vpop.f32.mrf.mxu0
      %1554 = vmatprep.mubr.bf16.mxu0 %v1293
      %1555 = vmatmul.mubr.bf16.gmra.mxu0 %v1165
      %v1556 = vpop.f32.mrf.mxu0
      %v1557 = vadd.f32 %v1332, %v1556
      %v1558 = vpop.f32.mrf.mxu0
      %v1559 = vpop.f32.mrf.mxu0
      %v1560 = vadd.f32 %v1332, %v1559
      %v1561 = vpop.f32.mrf.mxu0
      %1562 = vmatprep.mubr.bf16.mxu0 %v1296
      %1563 = vmatmul.mubr.bf16.gmra.mxu0 %v1168
      %v1564 = vpop.f32.mrf.mxu0
      %v1565 = vadd.f32 %v1332, %v1564
      %v1566 = vpop.f32.mrf.mxu0
      %v1567 = vpop.f32.mrf.mxu0
      %v1568 = vadd.f32 %v1332, %v1567
      %v1569 = vpop.f32.mrf.mxu0
      %1570 = vmatprep.mubr.bf16.mxu0 %v1299
      %1571 = vmatmul.mubr.bf16.gmra.mxu0 %v1171
      %v1572 = vpop.f32.mrf.mxu0
      %v1573 = vadd.f32 %v1332, %v1572
      %v1574 = vpop.f32.mrf.mxu0
      %v1575 = vpop.f32.mrf.mxu0
      %v1576 = vadd.f32 %v1332, %v1575
      %v1577 = vpop.f32.mrf.mxu0
      %1578 = vmatprep.mubr.bf16.mxu0 %v1302
      %1579 = vmatmul.mubr.bf16.gmra.mxu0 %v1174
      %v1580 = vpop.f32.mrf.mxu0
      %v1581 = vadd.f32 %v1332, %v1580
      %v1582 = vpop.f32.mrf.mxu0
      %v1583 = vpop.f32.mrf.mxu0
      %v1584 = vadd.f32 %v1332, %v1583
      %v1585 = vpop.f32.mrf.mxu0
      %1586 = vmatprep.mubr.bf16.mxu0 %v1305
      %1587 = vmatmul.mubr.bf16.gmra.mxu0 %v1177
      %v1588 = vpop.f32.mrf.mxu0
      %v1589 = vadd.f32 %v1332, %v1588
      %v1590 = vpop.f32.mrf.mxu0
      %v1591 = vpop.f32.mrf.mxu0
      %v1592 = vadd.f32 %v1332, %v1591
      %v1593 = vpop.f32.mrf.mxu0
      %1594 = vmatprep.mubr.bf16.mxu0 %v1308
      %1595 = vmatmul.mubr.bf16.gmra.mxu0 %v1180
      %v1596 = vpop.f32.mrf.mxu0
      %v1597 = vadd.f32 %v1332, %v1596
      %v1598 = vpop.f32.mrf.mxu0
      %v1599 = vpop.f32.mrf.mxu0
      %v1600 = vadd.f32 %v1332, %v1599
      %v1601 = vpop.f32.mrf.mxu0
      %1602 = vmatprep.mubr.bf16.mxu0 %v1311
      %1603 = vmatmul.mubr.bf16.gmra.mxu0 %v1183
      %v1604 = vpop.f32.mrf.mxu0
      %v1605 = vadd.f32 %v1332, %v1604
      %v1606 = vpop.f32.mrf.mxu0
      %v1607 = vpop.f32.mrf.mxu0
      %v1608 = vadd.f32 %v1332, %v1607
      %v1609 = vpop.f32.mrf.mxu0
      %1610 = vmatprep.mubr.bf16.mxu0 %v1314
      %1611 = vmatmul.mubr.bf16.gmra.mxu0 %v1186
      %v1612 = vpop.f32.mrf.mxu0
      %v1613 = vadd.f32 %v1332, %v1612
      %v1614 = vpop.f32.mrf.mxu0
      %v1615 = vpop.f32.mrf.mxu0
      %v1616 = vadd.f32 %v1332, %v1615
      %v1617 = vpop.f32.mrf.mxu0
      %1618 = vmatprep.mubr.bf16.mxu0 %v1317
      %1619 = vmatmul.mubr.bf16.gmra.mxu0 %v1189
      %v1620 = vpop.f32.mrf.mxu0
      %v1621 = vadd.f32 %v1332, %v1620
      %v1622 = vpop.f32.mrf.mxu0
      %v1623 = vpop.f32.mrf.mxu0
      %v1624 = vadd.f32 %v1332, %v1623
      %v1625 = vpop.f32.mrf.mxu0
      %1626 = vmatprep.mubr.bf16.mxu0 %v1320
      %1627 = vmatmul.mubr.bf16.gmra.mxu0 %v1192
      %v1628 = vpop.f32.mrf.mxu0
      %v1629 = vadd.f32 %v1332, %v1628
      %v1630 = vpop.f32.mrf.mxu0
      %v1631 = vpop.f32.mrf.mxu0
      %v1632 = vadd.f32 %v1332, %v1631
      %v1633 = vpop.f32.mrf.mxu0
      %1634 = vmatprep.mubr.bf16.mxu0 %v1323
      %1635 = vmatmul.mubr.bf16.gmra.mxu0 %v1195
      %v1636 = vpop.f32.mrf.mxu0
      %v1637 = vadd.f32 %v1332, %v1636
      %v1638 = vpop.f32.mrf.mxu0
      %v1639 = vpop.f32.mrf.mxu0
      %v1640 = vadd.f32 %v1332, %v1639
      %v1641 = vpop.f32.mrf.mxu0
      %1642 = vmatprep.mubr.bf16.mxu0 %v1326
      %1643 = vmatmul.mubr.bf16.gmra.mxu0 %v1198
      %v1644 = vpop.f32.mrf.mxu0
      %v1645 = vadd.f32 %v1332, %v1644
      %v1646 = vpop.f32.mrf.mxu0
      %v1647 = vpop.f32.mrf.mxu0
      %v1648 = vadd.f32 %v1332, %v1647
      %v1649 = vpop.f32.mrf.mxu0
      %1650 = vdwg.mxu0
      %1651 = vmatprep.subr.bf16.mxu0 0
      %1652 = vmatpush1.bf16.msra.mxu0 0
      %1653 = vmatprep.subr.bf16.mxu0 0
      %1654 = vmatpush1.bf16.msra.mxu0 0
      %1655 = vmatprep.subr.bf16.mxu0 0
      %1656 = vmatpush1.bf16.msra.mxu0 0
      %1657 = vmatprep.subr.bf16.mxu0 0
      %1658 = vmatpush1.bf16.msra.mxu0 0
      %1659 = vmatprep.subr.bf16.mxu0 0
      %1660 = vmatpush1.bf16.msra.mxu0 0
      %1661 = vmatprep.subr.bf16.mxu0 0
      %1662 = vmatpush1.bf16.msra.mxu0 0
      %1663 = vmatprep.subr.bf16.mxu0 0
      %1664 = vmatpush1.bf16.msra.mxu0 %v1423
      %1665 = vmatprep.subr.bf16.mxu0 0
      %1666 = vmatpush1.bf16.msra.mxu0 %v1422
      %1667 = vmatprep.subr.bf16.mxu0 0
      %1668 = vmatpush2.bf16.msra.mxu0 0
      %1669 = vmatprep.subr.bf16.mxu0 0
      %1670 = vmatpush2.bf16.msra.mxu0 0
      %1671 = vmatprep.subr.bf16.mxu0 0
      %1672 = vmatpush2.bf16.msra.mxu0 0
      %1673 = vmatprep.subr.bf16.mxu0 0
      %1674 = vmatpush2.bf16.msra.mxu0 0
      %1675 = vmatprep.subr.bf16.mxu0 0
      %1676 = vmatpush2.bf16.msra.mxu0 0
      %1677 = vmatprep.subr.bf16.mxu0 0
      %1678 = vmatpush2.bf16.msra.mxu0 0
      %1679 = vmatprep.subr.bf16.mxu0 0
      %1680 = vmatpush2.bf16.msra.mxu0 0
      %1681 = vmatprep.subr.bf16.mxu0 0
      %1682 = vmatpush2.bf16.msra.mxu0 0
      %1683 = vmatprep.mubr.bf16.mxu0 0
      %1684 = vmatmul.mubr.bf16.gmra.mxu0 %v1443
      %v1685 = vpop.f32.mrf.mxu0
      %v1686 = vadd.f32 %v1525, %v1685
      %v1687 = vpop.f32.mrf.mxu0
      %v1688 = vpop.f32.mrf.mxu0
      %v1689 = vadd.f32 %v1528, %v1688
      %v1690 = vpop.f32.mrf.mxu0
      %1691 = vmatprep.mubr.bf16.mxu0 0
      %1692 = vmatmul.mubr.bf16.gmra.mxu0 %v1446
      %v1693 = vpop.f32.mrf.mxu0
      %v1694 = vadd.f32 %v1533, %v1693
      %v1695 = vpop.f32.mrf.mxu0
      %v1696 = vpop.f32.mrf.mxu0
      %v1697 = vadd.f32 %v1536, %v1696
      %v1698 = vpop.f32.mrf.mxu0
      %1699 = vmatprep.mubr.bf16.mxu0 0
      %1700 = vmatmul.mubr.bf16.gmra.mxu0 %v1449
      %v1701 = vpop.f32.mrf.mxu0
      %v1702 = vadd.f32 %v1541, %v1701
      %v1703 = vpop.f32.mrf.mxu0
      %v1704 = vpop.f32.mrf.mxu0
      %v1705 = vadd.f32 %v1544, %v1704
      %v1706 = vpop.f32.mrf.mxu0
      %1707 = vmatprep.mubr.bf16.mxu0 0
      %1708 = vmatmul.mubr.bf16.gmra.mxu0 %v1452
      %v1709 = vpop.f32.mrf.mxu0
      %v1710 = vadd.f32 %v1549, %v1709
      %v1711 = vpop.f32.mrf.mxu0
      %v1712 = vpop.f32.mrf.mxu0
      %v1713 = vadd.f32 %v1552, %v1712
      %v1714 = vpop.f32.mrf.mxu0
      %1715 = vmatprep.mubr.bf16.mxu0 0
      %1716 = vmatmul.mubr.bf16.gmra.mxu0 %v1455
      %v1717 = vpop.f32.mrf.mxu0
      %v1718 = vadd.f32 %v1557, %v1717
      %v1719 = vpop.f32.mrf.mxu0
      %v1720 = vpop.f32.mrf.mxu0
      %v1721 = vadd.f32 %v1560, %v1720
      %v1722 = vpop.f32.mrf.mxu0
      %1723 = vmatprep.mubr.bf16.mxu0 0
      %1724 = vmatmul.mubr.bf16.gmra.mxu0 %v1458
      %v1725 = vpop.f32.mrf.mxu0
      %v1726 = vadd.f32 %v1565, %v1725
      %v1727 = vpop.f32.mrf.mxu0
      %v1728 = vpop.f32.mrf.mxu0
      %v1729 = vadd.f32 %v1568, %v1728
      %v1730 = vpop.f32.mrf.mxu0
      %1731 = vmatprep.mubr.bf16.mxu0 0
      %1732 = vmatmul.mubr.bf16.gmra.mxu0 %v1461
      %v1733 = vpop.f32.mrf.mxu0
      %v1734 = vadd.f32 %v1573, %v1733
      %v1735 = vpop.f32.mrf.mxu0
      %v1736 = vpop.f32.mrf.mxu0
      %v1737 = vadd.f32 %v1576, %v1736
      %v1738 = vpop.f32.mrf.mxu0
      %1739 = vmatprep.mubr.bf16.mxu0 0
      %1740 = vmatmul.mubr.bf16.gmra.mxu0 %v1464
      %v1741 = vpop.f32.mrf.mxu0
      %v1742 = vadd.f32 %v1581, %v1741
      %v1743 = vpop.f32.mrf.mxu0
      %v1744 = vpop.f32.mrf.mxu0
      %v1745 = vadd.f32 %v1584, %v1744
      %v1746 = vpop.f32.mrf.mxu0
      %1747 = vmatprep.mubr.bf16.mxu0 0
      %1748 = vmatmul.mubr.bf16.gmra.mxu0 %v1467
      %v1749 = vpop.f32.mrf.mxu0
      %v1750 = vadd.f32 %v1589, %v1749
      %v1751 = vpop.f32.mrf.mxu0
      %v1752 = vpop.f32.mrf.mxu0
      %v1753 = vadd.f32 %v1592, %v1752
      %v1754 = vpop.f32.mrf.mxu0
      %1755 = vmatprep.mubr.bf16.mxu0 0
      %1756 = vmatmul.mubr.bf16.gmra.mxu0 %v1470
      %v1757 = vpop.f32.mrf.mxu0
      %v1758 = vadd.f32 %v1597, %v1757
      %v1759 = vpop.f32.mrf.mxu0
      %v1760 = vpop.f32.mrf.mxu0
      %v1761 = vadd.f32 %v1600, %v1760
      %v1762 = vpop.f32.mrf.mxu0
      %1763 = vmatprep.mubr.bf16.mxu0 0
      %1764 = vmatmul.mubr.bf16.gmra.mxu0 %v1473
      %v1765 = vpop.f32.mrf.mxu0
      %v1766 = vadd.f32 %v1605, %v1765
      %v1767 = vpop.f32.mrf.mxu0
      %v1768 = vpop.f32.mrf.mxu0
      %v1769 = vadd.f32 %v1608, %v1768
      %v1770 = vpop.f32.mrf.mxu0
      %1771 = vmatprep.mubr.bf16.mxu0 0
      %1772 = vmatmul.mubr.bf16.gmra.mxu0 %v1476
      %v1773 = vpop.f32.mrf.mxu0
      %v1774 = vadd.f32 %v1613, %v1773
      %v1775 = vpop.f32.mrf.mxu0
      %v1776 = vpop.f32.mrf.mxu0
      %v1777 = vadd.f32 %v1616, %v1776
      %v1778 = vpop.f32.mrf.mxu0
      %1779 = vmatprep.mubr.bf16.mxu0 0
      %1780 = vmatmul.mubr.bf16.gmra.mxu0 %v1479
      %v1781 = vpop.f32.mrf.mxu0
      %v1782 = vadd.f32 %v1621, %v1781
      %v1783 = vpop.f32.mrf.mxu0
      %v1784 = vpop.f32.mrf.mxu0
      %v1785 = vadd.f32 %v1624, %v1784
      %v1786 = vpop.f32.mrf.mxu0
      %1787 = vmatprep.mubr.bf16.mxu0 0
      %1788 = vmatmul.mubr.bf16.gmra.mxu0 %v1482
      %v1789 = vpop.f32.mrf.mxu0
      %v1790 = vadd.f32 %v1629, %v1789
      %v1791 = vpop.f32.mrf.mxu0
      %v1792 = vpop.f32.mrf.mxu0
      %v1793 = vadd.f32 %v1632, %v1792
      %v1794 = vpop.f32.mrf.mxu0
      %1795 = vmatprep.mubr.bf16.mxu0 0
      %1796 = vmatmul.mubr.bf16.gmra.mxu0 %v1485
      %v1797 = vpop.f32.mrf.mxu0
      %v1798 = vadd.f32 %v1637, %v1797
      %v1799 = vpop.f32.mrf.mxu0
      %v1800 = vpop.f32.mrf.mxu0
      %v1801 = vadd.f32 %v1640, %v1800
      %v1802 = vpop.f32.mrf.mxu0
      %1803 = vmatprep.mubr.bf16.mxu0 0
      %1804 = vmatmul.mubr.bf16.gmra.mxu0 %v1488
      %v1805 = vpop.f32.mrf.mxu0
      %v1806 = vadd.f32 %v1645, %v1805
      %v1807 = vpop.f32.mrf.mxu0
      %v1808 = vpop.f32.mrf.mxu0
      %v1809 = vadd.f32 %v1648, %v1808
      %v1810 = vpop.f32.mrf.mxu0
      %1811 = vdwg.mxu0
      %v1812 = vmax.f32 %v1686, 0.0
      %v1813 = vmax.f32 %v1689, 0.0
      %v1814 = vmax.f32 %v1694, 0.0
      %v1815 = vmax.f32 %v1697, 0.0
      %v1816 = vmax.f32 %v1702, 0.0
      %v1817 = vmax.f32 %v1705, 0.0
      %v1818 = vmax.f32 %v1710, 0.0
      %v1819 = vmax.f32 %v1713, 0.0
      %v1820 = vmax.f32 %v1718, 0.0
      %v1821 = vmax.f32 %v1721, 0.0
      %v1822 = vmax.f32 %v1726, 0.0
      %v1823 = vmax.f32 %v1729, 0.0
      %v1824 = vmax.f32 %v1734, 0.0
      %v1825 = vmax.f32 %v1737, 0.0
      %v1826 = vmax.f32 %v1742, 0.0
      %v1827 = vmax.f32 %v1745, 0.0
      %v1828 = vmax.f32 %v1750, 0.0
      %v1829 = vmax.f32 %v1753, 0.0
      %v1830 = vmax.f32 %v1758, 0.0
      %v1831 = vmax.f32 %v1761, 0.0
      %v1832 = vmax.f32 %v1766, 0.0
      %v1833 = vmax.f32 %v1769, 0.0
      %v1834 = vmax.f32 %v1774, 0.0
      %v1835 = vmax.f32 %v1777, 0.0
      %v1836 = vmax.f32 %v1782, 0.0
      %v1837 = vmax.f32 %v1785, 0.0
      %v1838 = vmax.f32 %v1790, 0.0
      %v1839 = vmax.f32 %v1793, 0.0
      %v1840 = vmax.f32 %v1798, 0.0
      %v1841 = vmax.f32 %v1801, 0.0
      %v1842 = vmax.f32 %v1806, 0.0
      %v1843 = vmax.f32 %v1809, 0.0
      %v1844 = vpack.c.bf16 %v1813, %v1812
      %v1845 = vpack.c.bf16 %v1815, %v1814
      %v1846 = vpack.c.bf16 %v1817, %v1816
      %v1847 = vpack.c.bf16 %v1819, %v1818
      %v1848 = vpack.c.bf16 %v1821, %v1820
      %v1849 = vpack.c.bf16 %v1823, %v1822
      %v1850 = vpack.c.bf16 %v1825, %v1824
      %v1851 = vpack.c.bf16 %v1827, %v1826
      %v1852 = vpack.c.bf16 %v1829, %v1828
      %v1853 = vpack.c.bf16 %v1831, %v1830
      %v1854 = vpack.c.bf16 %v1833, %v1832
      %v1855 = vpack.c.bf16 %v1835, %v1834
      %v1856 = vpack.c.bf16 %v1837, %v1836
      %v1857 = vpack.c.bf16 %v1839, %v1838
      %v1858 = vpack.c.bf16 %v1841, %v1840
      %v1859 = vpack.c.bf16 %v1843, %v1842
      %v1861 = vshrl.u32 %v1844, 16
      %v1863 = vrot.slane %v1861, 7
      %v1864 = vshll.u32 %v1844, 16
      %v1866 = vor.u32 %v1863, %v1864
      %v1868 = vshrl.u32 %v1845, 16
      %v1870 = vrot.slane %v1868, 7
      %v1871 = vshll.u32 %v1845, 16
      %v1873 = vor.u32 %v1870, %v1871
      %v1875 = vshrl.u32 %v1846, 16
      %v1877 = vrot.slane %v1875, 7
      %v1878 = vshll.u32 %v1846, 16
      %v1880 = vor.u32 %v1877, %v1878
      %v1882 = vshrl.u32 %v1847, 16
      %v1884 = vrot.slane %v1882, 7
      %v1885 = vshll.u32 %v1847, 16
      %v1887 = vor.u32 %v1884, %v1885
      %v1889 = vshrl.u32 %v1848, 16
      %v1891 = vrot.slane %v1889, 7
      %v1892 = vshll.u32 %v1848, 16
      %v1894 = vor.u32 %v1891, %v1892
      %v1896 = vshrl.u32 %v1849, 16
      %v1898 = vrot.slane %v1896, 7
      %v1899 = vshll.u32 %v1849, 16
      %v1901 = vor.u32 %v1898, %v1899
      %v1903 = vshrl.u32 %v1850, 16
      %v1905 = vrot.slane %v1903, 7
      %v1906 = vshll.u32 %v1850, 16
      %v1908 = vor.u32 %v1905, %v1906
      %v1910 = vshrl.u32 %v1851, 16
      %v1912 = vrot.slane %v1910, 7
      %v1913 = vshll.u32 %v1851, 16
      %v1915 = vor.u32 %v1912, %v1913
      %v1917 = vshrl.u32 %v1852, 16
      %v1919 = vrot.slane %v1917, 7
      %v1920 = vshll.u32 %v1852, 16
      %v1922 = vor.u32 %v1919, %v1920
      %v1924 = vshrl.u32 %v1853, 16
      %v1926 = vrot.slane %v1924, 7
      %v1927 = vshll.u32 %v1853, 16
      %v1929 = vor.u32 %v1926, %v1927
      %v1931 = vshrl.u32 %v1854, 16
      %v1933 = vrot.slane %v1931, 7
      %v1934 = vshll.u32 %v1854, 16
      %v1936 = vor.u32 %v1933, %v1934
      %v1938 = vshrl.u32 %v1855, 16
      %v1940 = vrot.slane %v1938, 7
      %v1941 = vshll.u32 %v1855, 16
      %v1943 = vor.u32 %v1940, %v1941
      %v1945 = vshrl.u32 %v1856, 16
      %v1947 = vrot.slane %v1945, 7
      %v1948 = vshll.u32 %v1856, 16
      %v1950 = vor.u32 %v1947, %v1948
      %v1952 = vshrl.u32 %v1857, 16
      %v1954 = vrot.slane %v1952, 7
      %v1955 = vshll.u32 %v1857, 16
      %v1957 = vor.u32 %v1954, %v1955
      %v1959 = vshrl.u32 %v1858, 16
      %v1961 = vrot.slane %v1959, 7
      %v1962 = vshll.u32 %v1858, 16
      %v1964 = vor.u32 %v1961, %v1962
      %v1966 = vshrl.u32 %v1859, 16
      %v1968 = vrot.slane %v1966, 7
      %v1969 = vshll.u32 %v1859, 16
      %v1971 = vor.u32 %v1968, %v1969
      %v2004 = vsel %vm538, 0, %v1866
      %v2005 = vsel %vm538, 0, %v1873
      %v2006 = vsel %vm538, 0, %v1880
      %v2007 = vsel %vm538, 0, %v1887
      %v2008 = vsel %vm538, 0, %v1894
      %v2009 = vsel %vm538, 0, %v1901
      %v2010 = vsel %vm538, 0, %v1908
      %v2011 = vsel %vm538, 0, %v1915
      %v2012 = vsel %vm538, 0, %v1922
      %v2013 = vsel %vm538, 0, %v1929
      %v2014 = vsel %vm538, 0, %v1936
      %v2015 = vsel %vm538, 0, %v1943
      %v2016 = vsel %vm538, 0, %v1950
      %v2017 = vsel %vm538, 0, %v1957
      %v2018 = vsel %vm538, 0, %v1964
      %v2019 = vsel %vm538, 0, %v1971
      %v2020 = vsel %vm538, %v1863, 0
      %v2021 = vsel %vm538, %v1870, 0
      %v2022 = vsel %vm538, %v1877, 0
      %v2023 = vsel %vm538, %v1884, 0
      %v2024 = vsel %vm538, %v1891, 0
      %v2025 = vsel %vm538, %v1898, 0
      %v2026 = vsel %vm538, %v1905, 0
      %v2027 = vsel %vm538, %v1912, 0
      %v2028 = vsel %vm538, %v1919, 0
      %v2029 = vsel %vm538, %v1926, 0
      %v2030 = vsel %vm538, %v1933, 0
      %v2031 = vsel %vm538, %v1940, 0
      %v2032 = vsel %vm538, %v1947, 0
      %v2033 = vsel %vm538, %v1954, 0
      %v2034 = vsel %vm538, %v1961, 0
      %v2035 = vsel %vm538, %v1968, 0
      %v2036 = vld [vmem:[%s3] sm:$0xf]
      %v2037 = vld [vmem:[%s3 + $0x4] sm:$0xf]
      %v2038 = vld [vmem:[%s3 + $0x8] sm:$0xf]
      %v2039 = vld [vmem:[%s3 + $0xc] sm:$0xf]
      %v2040 = vld [vmem:[%s3 + $0x10] sm:$0xf]
      %v2041 = vld [vmem:[%s3 + $0x14] sm:$0xf]
      %v2042 = vld [vmem:[%s3 + $0x18] sm:$0xf]
      %v2043 = vld [vmem:[%s3 + $0x1c] sm:$0xf]
      %v2044 = vld [vmem:[%s3 + $0x20] sm:$0xf]
      %v2045 = vld [vmem:[%s3 + $0x24] sm:$0xf]
      %v2046 = vld [vmem:[%s3 + $0x28] sm:$0xf]
      %v2047 = vld [vmem:[%s3 + $0x2c] sm:$0xf]
      %v2048 = vld [vmem:[%s3 + $0x30] sm:$0xf]
      %v2049 = vld [vmem:[%s3 + $0x34] sm:$0xf]
      %v2050 = vld [vmem:[%s3 + $0x38] sm:$0xf]
      %v2051 = vld [vmem:[%s3 + $0x3c] sm:$0xf]
      %v2052 = vld [vmem:[%s3 + $0x40] sm:$0xf]
      %v2053 = vld [vmem:[%s3 + $0x44] sm:$0xf]
      %v2054 = vld [vmem:[%s3 + $0x48] sm:$0xf]
      %v2055 = vld [vmem:[%s3 + $0x4c] sm:$0xf]
      %v2056 = vld [vmem:[%s3 + $0x50] sm:$0xf]
      %v2057 = vld [vmem:[%s3 + $0x54] sm:$0xf]
      %v2058 = vld [vmem:[%s3 + $0x58] sm:$0xf]
      %v2059 = vld [vmem:[%s3 + $0x5c] sm:$0xf]
      %v2060 = vld [vmem:[%s3 + $0x60] sm:$0xf]
      %v2061 = vld [vmem:[%s3 + $0x64] sm:$0xf]
      %v2062 = vld [vmem:[%s3 + $0x68] sm:$0xf]
      %v2063 = vld [vmem:[%s3 + $0x6c] sm:$0xf]
      %v2064 = vld [vmem:[%s3 + $0x70] sm:$0xf]
      %v2065 = vld [vmem:[%s3 + $0x74] sm:$0xf]
      %v2066 = vld [vmem:[%s3 + $0x78] sm:$0xf]
      %v2067 = vld [vmem:[%s3 + $0x7c] sm:$0xf]
      %v2068 = vld [vmem:[%s3 + $0x80] sm:$0xf]
      %v2069 = vld [vmem:[%s3 + $0x84] sm:$0xf]
      %v2070 = vld [vmem:[%s3 + $0x88] sm:$0xf]
      %v2071 = vld [vmem:[%s3 + $0x8c] sm:$0xf]
      %v2072 = vld [vmem:[%s4] sm:$0x1]
      %v2074 = vshrl.u32 %v2004, 16
      %v2076 = vshll.u32 %v2004, 16
      %v2078 = vrot.slane %v2076, 1
      %v2079 = vor.u32 %v2074, %v2078
      %v2081 = vshll.u32 %v2020, 16
      %v2083 = vrot.slane %v2081, 1
      %v2084 = vsel %vm608, %v2079, %v2083
      %v2086 = vshrl.u32 %v2005, 16
      %v2088 = vshll.u32 %v2005, 16
      %v2090 = vrot.slane %v2088, 1
      %v2091 = vor.u32 %v2086, %v2090
      %v2093 = vshll.u32 %v2021, 16
      %v2095 = vrot.slane %v2093, 1
      %v2096 = vsel %vm608, %v2091, %v2095
      %v2098 = vshrl.u32 %v2006, 16
      %v2100 = vshll.u32 %v2006, 16
      %v2102 = vrot.slane %v2100, 1
      %v2103 = vor.u32 %v2098, %v2102
      %v2105 = vshll.u32 %v2022, 16
      %v2107 = vrot.slane %v2105, 1
      %v2108 = vsel %vm608, %v2103, %v2107
      %v2110 = vshrl.u32 %v2007, 16
      %v2112 = vshll.u32 %v2007, 16
      %v2114 = vrot.slane %v2112, 1
      %v2115 = vor.u32 %v2110, %v2114
      %v2117 = vshll.u32 %v2023, 16
      %v2119 = vrot.slane %v2117, 1
      %v2120 = vsel %vm608, %v2115, %v2119
      %v2122 = vshrl.u32 %v2008, 16
      %v2124 = vshll.u32 %v2008, 16
      %v2126 = vrot.slane %v2124, 1
      %v2127 = vor.u32 %v2122, %v2126
      %v2129 = vshll.u32 %v2024, 16
      %v2131 = vrot.slane %v2129, 1
      %v2132 = vsel %vm608, %v2127, %v2131
      %v2134 = vshrl.u32 %v2009, 16
      %v2136 = vshll.u32 %v2009, 16
      %v2138 = vrot.slane %v2136, 1
      %v2139 = vor.u32 %v2134, %v2138
      %v2141 = vshll.u32 %v2025, 16
      %v2143 = vrot.slane %v2141, 1
      %v2144 = vsel %vm608, %v2139, %v2143
      %v2146 = vshrl.u32 %v2010, 16
      %v2148 = vshll.u32 %v2010, 16
      %v2150 = vrot.slane %v2148, 1
      %v2151 = vor.u32 %v2146, %v2150
      %v2153 = vshll.u32 %v2026, 16
      %v2155 = vrot.slane %v2153, 1
      %v2156 = vsel %vm608, %v2151, %v2155
      %v2158 = vshrl.u32 %v2011, 16
      %v2160 = vshll.u32 %v2011, 16
      %v2162 = vrot.slane %v2160, 1
      %v2163 = vor.u32 %v2158, %v2162
      %v2165 = vshll.u32 %v2027, 16
      %v2167 = vrot.slane %v2165, 1
      %v2168 = vsel %vm608, %v2163, %v2167
      %v2170 = vshrl.u32 %v2012, 16
      %v2172 = vshll.u32 %v2012, 16
      %v2174 = vrot.slane %v2172, 1
      %v2175 = vor.u32 %v2170, %v2174
      %v2177 = vshll.u32 %v2028, 16
      %v2179 = vrot.slane %v2177, 1
      %v2180 = vsel %vm608, %v2175, %v2179
      %v2182 = vshrl.u32 %v2013, 16
      %v2184 = vshll.u32 %v2013, 16
      %v2186 = vrot.slane %v2184, 1
      %v2187 = vor.u32 %v2182, %v2186
      %v2189 = vshll.u32 %v2029, 16
      %v2191 = vrot.slane %v2189, 1
      %v2192 = vsel %vm608, %v2187, %v2191
      %v2194 = vshrl.u32 %v2014, 16
      %v2196 = vshll.u32 %v2014, 16
      %v2198 = vrot.slane %v2196, 1
      %v2199 = vor.u32 %v2194, %v2198
      %v2201 = vshll.u32 %v2030, 16
      %v2203 = vrot.slane %v2201, 1
      %v2204 = vsel %vm608, %v2199, %v2203
      %v2206 = vshrl.u32 %v2015, 16
      %v2208 = vshll.u32 %v2015, 16
      %v2210 = vrot.slane %v2208, 1
      %v2211 = vor.u32 %v2206, %v2210
      %v2213 = vshll.u32 %v2031, 16
      %v2215 = vrot.slane %v2213, 1
      %v2216 = vsel %vm608, %v2211, %v2215
      %v2218 = vshrl.u32 %v2016, 16
      %v2220 = vshll.u32 %v2016, 16
      %v2222 = vrot.slane %v2220, 1
      %v2223 = vor.u32 %v2218, %v2222
      %v2225 = vshll.u32 %v2032, 16
      %v2227 = vrot.slane %v2225, 1
      %v2228 = vsel %vm608, %v2223, %v2227
      %v2230 = vshrl.u32 %v2017, 16
      %v2232 = vshll.u32 %v2017, 16
      %v2234 = vrot.slane %v2232, 1
      %v2235 = vor.u32 %v2230, %v2234
      %v2237 = vshll.u32 %v2033, 16
      %v2239 = vrot.slane %v2237, 1
      %v2240 = vsel %vm608, %v2235, %v2239
      %v2242 = vshrl.u32 %v2018, 16
      %v2244 = vshll.u32 %v2018, 16
      %v2246 = vrot.slane %v2244, 1
      %v2247 = vor.u32 %v2242, %v2246
      %v2249 = vshll.u32 %v2034, 16
      %v2251 = vrot.slane %v2249, 1
      %v2252 = vsel %vm608, %v2247, %v2251
      %v2254 = vshrl.u32 %v2019, 16
      %v2256 = vshll.u32 %v2019, 16
      %v2258 = vrot.slane %v2256, 1
      %v2259 = vor.u32 %v2254, %v2258
      %v2261 = vshll.u32 %v2035, 16
      %v2263 = vrot.slane %v2261, 1
      %v2264 = vsel %vm608, %v2259, %v2263
      %v2297 = vrot.slane %v2004, 1
      %v2298 = vrot.slane %v2020, 1
      %v2299 = vsel %vm842, %v2297, %v2298
      %v2300 = vrot.slane %v2005, 1
      %v2301 = vrot.slane %v2021, 1
      %v2302 = vsel %vm842, %v2300, %v2301
      %v2303 = vrot.slane %v2006, 1
      %v2304 = vrot.slane %v2022, 1
      %v2305 = vsel %vm842, %v2303, %v2304
      %v2306 = vrot.slane %v2007, 1
      %v2307 = vrot.slane %v2023, 1
      %v2308 = vsel %vm842, %v2306, %v2307
      %v2309 = vrot.slane %v2008, 1
      %v2310 = vrot.slane %v2024, 1
      %v2311 = vsel %vm842, %v2309, %v2310
      %v2312 = vrot.slane %v2009, 1
      %v2313 = vrot.slane %v2025, 1
      %v2314 = vsel %vm842, %v2312, %v2313
      %v2315 = vrot.slane %v2010, 1
      %v2316 = vrot.slane %v2026, 1
      %v2317 = vsel %vm842, %v2315, %v2316
      %v2318 = vrot.slane %v2011, 1
      %v2319 = vrot.slane %v2027, 1
      %v2320 = vsel %vm842, %v2318, %v2319
      %v2321 = vrot.slane %v2012, 1
      %v2322 = vrot.slane %v2028, 1
      %v2323 = vsel %vm842, %v2321, %v2322
      %v2324 = vrot.slane %v2013, 1
      %v2325 = vrot.slane %v2029, 1
      %v2326 = vsel %vm842, %v2324, %v2325
      %v2327 = vrot.slane %v2014, 1
      %v2328 = vrot.slane %v2030, 1
      %v2329 = vsel %vm842, %v2327, %v2328
      %v2330 = vrot.slane %v2015, 1
      %v2331 = vrot.slane %v2031, 1
      %v2332 = vsel %vm842, %v2330, %v2331
      %v2333 = vrot.slane %v2016, 1
      %v2334 = vrot.slane %v2032, 1
      %v2335 = vsel %vm842, %v2333, %v2334
      %v2336 = vrot.slane %v2017, 1
      %v2337 = vrot.slane %v2033, 1
      %v2338 = vsel %vm842, %v2336, %v2337
      %v2339 = vrot.slane %v2018, 1
      %v2340 = vrot.slane %v2034, 1
      %v2341 = vsel %vm842, %v2339, %v2340
      %v2342 = vrot.slane %v2019, 1
      %v2343 = vrot.slane %v2035, 1
      %v2344 = vsel %vm842, %v2342, %v2343
      %2345 = vrot.lane.b32.xlu0 %v2084, 32
      %v2346 = vpop.permute.xlu0 %2345
      %2347 = vrot.lane.b32.xlu0 %v2096, 32
      %v2348 = vpop.permute.xlu0 %2347
      %2349 = vrot.lane.b32.xlu0 %v2108, 32
      %v2350 = vpop.permute.xlu0 %2349
      %2351 = vrot.lane.b32.xlu0 %v2120, 32
      %v2352 = vpop.permute.xlu0 %2351
      %2353 = vrot.lane.b32.xlu0 %v2132, 32
      %v2354 = vpop.permute.xlu0 %2353
      %2355 = vrot.lane.b32.xlu0 %v2144, 32
      %v2356 = vpop.permute.xlu0 %2355
      %2357 = vrot.lane.b32.xlu0 %v2156, 32
      %v2358 = vpop.permute.xlu0 %2357
      %2359 = vrot.lane.b32.xlu0 %v2168, 32
      %v2360 = vpop.permute.xlu0 %2359
      %2361 = vrot.lane.b32.xlu0 %v2180, 32
      %v2362 = vpop.permute.xlu0 %2361
      %2363 = vrot.lane.b32.xlu0 %v2192, 32
      %v2364 = vpop.permute.xlu0 %2363
      %2365 = vrot.lane.b32.xlu0 %v2204, 32
      %v2366 = vpop.permute.xlu0 %2365
      %2367 = vrot.lane.b32.xlu0 %v2216, 32
      %v2368 = vpop.permute.xlu0 %2367
      %2369 = vrot.lane.b32.xlu0 %v2228, 32
      %v2370 = vpop.permute.xlu0 %2369
      %2371 = vrot.lane.b32.xlu0 %v2240, 32
      %v2372 = vpop.permute.xlu0 %2371
      %2373 = vrot.lane.b32.xlu0 %v2252, 32
      %v2374 = vpop.permute.xlu0 %2373
      %2375 = vrot.lane.b32.xlu0 %v2299, 64
      %v2376 = vpop.permute.xlu0 %2375
      %2377 = vrot.lane.b32.xlu0 %v2302, 64
      %v2378 = vpop.permute.xlu0 %2377
      %2379 = vrot.lane.b32.xlu0 %v2305, 64
      %v2380 = vpop.permute.xlu0 %2379
      %2381 = vrot.lane.b32.xlu0 %v2308, 64
      %v2382 = vpop.permute.xlu0 %2381
      %2383 = vrot.lane.b32.xlu0 %v2311, 64
      %v2384 = vpop.permute.xlu0 %2383
      %2385 = vrot.lane.b32.xlu0 %v2314, 64
      %v2386 = vpop.permute.xlu0 %2385
      %2387 = vrot.lane.b32.xlu0 %v2317, 64
      %v2388 = vpop.permute.xlu0 %2387
      %2389 = vrot.lane.b32.xlu0 %v2320, 64
      %v2390 = vpop.permute.xlu0 %2389
      %2391 = vrot.lane.b32.xlu0 %v2323, 64
      %v2392 = vpop.permute.xlu0 %2391
      %2393 = vrot.lane.b32.xlu0 %v2326, 64
      %v2394 = vpop.permute.xlu0 %2393
      %2395 = vrot.lane.b32.xlu0 %v2329, 64
      %v2396 = vpop.permute.xlu0 %2395
      %2397 = vrot.lane.b32.xlu0 %v2332, 64
      %v2398 = vpop.permute.xlu0 %2397
      %2399 = vrot.lane.b32.xlu0 %v2335, 64
      %v2400 = vpop.permute.xlu0 %2399
      %2401 = vrot.lane.b32.xlu0 %v2338, 64
      %v2402 = vpop.permute.xlu0 %2401
      %2403 = vrot.lane.b32.xlu0 %v2341, 64
      %v2404 = vpop.permute.xlu0 %2403
      %2405 = vrot.lane.b32.xlu0 %v2004, 96
      %v2406 = vpop.permute.xlu0 %2405
      %2407 = vrot.lane.b32.xlu0 %v2005, 96
      %v2408 = vpop.permute.xlu0 %2407
      %2409 = vrot.lane.b32.xlu0 %v2006, 96
      %v2410 = vpop.permute.xlu0 %2409
      %2411 = vrot.lane.b32.xlu0 %v2007, 96
      %v2412 = vpop.permute.xlu0 %2411
      %2413 = vrot.lane.b32.xlu0 %v2008, 96
      %v2414 = vpop.permute.xlu0 %2413
      %2415 = vrot.lane.b32.xlu0 %v2009, 96
      %v2416 = vpop.permute.xlu0 %2415
      %2417 = vrot.lane.b32.xlu0 %v2010, 96
      %v2418 = vpop.permute.xlu0 %2417
      %2419 = vrot.lane.b32.xlu0 %v2011, 96
      %v2420 = vpop.permute.xlu0 %2419
      %2421 = vrot.lane.b32.xlu0 %v2012, 96
      %v2422 = vpop.permute.xlu0 %2421
      %2423 = vrot.lane.b32.xlu0 %v2013, 96
      %v2424 = vpop.permute.xlu0 %2423
      %2425 = vrot.lane.b32.xlu0 %v2014, 96
      %v2426 = vpop.permute.xlu0 %2425
      %2427 = vrot.lane.b32.xlu0 %v2015, 96
      %v2428 = vpop.permute.xlu0 %2427
      %2429 = vrot.lane.b32.xlu0 %v2016, 96
      %v2430 = vpop.permute.xlu0 %2429
      %2431 = vrot.lane.b32.xlu0 %v2017, 96
      %v2432 = vpop.permute.xlu0 %2431
      %2433 = vrot.lane.b32.xlu0 %v2018, 96
      %v2434 = vpop.permute.xlu0 %2433
      %2435 = vrot.lane.b32.xlu0 %v2019, 96
      %v2436 = vpop.permute.xlu0 %2435
      %2437 = vrot.lane.b32.xlu0 %v2299, 32
      %v2438 = vpop.permute.xlu0 %2437
      %2439 = vrot.lane.b32.xlu0 %v2302, 32
      %v2440 = vpop.permute.xlu0 %2439
      %2441 = vrot.lane.b32.xlu0 %v2305, 32
      %v2442 = vpop.permute.xlu0 %2441
      %2443 = vrot.lane.b32.xlu0 %v2308, 32
      %v2444 = vpop.permute.xlu0 %2443
      %2445 = vrot.lane.b32.xlu0 %v2311, 32
      %v2446 = vpop.permute.xlu0 %2445
      %2447 = vrot.lane.b32.xlu0 %v2314, 32
      %v2448 = vpop.permute.xlu0 %2447
      %2449 = vrot.lane.b32.xlu0 %v2317, 32
      %v2450 = vpop.permute.xlu0 %2449
      %2451 = vrot.lane.b32.xlu0 %v2320, 32
      %v2452 = vpop.permute.xlu0 %2451
      %2453 = vrot.lane.b32.xlu0 %v2323, 32
      %v2454 = vpop.permute.xlu0 %2453
      %2455 = vrot.lane.b32.xlu0 %v2326, 32
      %v2456 = vpop.permute.xlu0 %2455
      %2457 = vrot.lane.b32.xlu0 %v2329, 32
      %v2458 = vpop.permute.xlu0 %2457
      %2459 = vrot.lane.b32.xlu0 %v2332, 32
      %v2460 = vpop.permute.xlu0 %2459
      %2461 = vrot.lane.b32.xlu0 %v2335, 32
      %v2462 = vpop.permute.xlu0 %2461
      %2463 = vrot.lane.b32.xlu0 %v2338, 32
      %v2464 = vpop.permute.xlu0 %2463
      %2465 = vrot.lane.b32.xlu0 %v2341, 32
      %v2466 = vpop.permute.xlu0 %2465
      %2467 = vrot.lane.b32.xlu0 %v2344, 32
      %v2468 = vpop.permute.xlu0 %2467
      %2469 = vrot.lane.b32.xlu0 %v2005, 64
      %v2470 = vpop.permute.xlu0 %2469
      %2471 = vrot.lane.b32.xlu0 %v2006, 64
      %v2472 = vpop.permute.xlu0 %2471
      %2473 = vrot.lane.b32.xlu0 %v2007, 64
      %v2474 = vpop.permute.xlu0 %2473
      %2475 = vrot.lane.b32.xlu0 %v2008, 64
      %v2476 = vpop.permute.xlu0 %2475
      %2477 = vrot.lane.b32.xlu0 %v2009, 64
      %v2478 = vpop.permute.xlu0 %2477
      %2479 = vrot.lane.b32.xlu0 %v2010, 64
      %v2480 = vpop.permute.xlu0 %2479
      %2481 = vrot.lane.b32.xlu0 %v2011, 64
      %v2482 = vpop.permute.xlu0 %2481
      %2483 = vrot.lane.b32.xlu0 %v2012, 64
      %v2484 = vpop.permute.xlu0 %2483
      %2485 = vrot.lane.b32.xlu0 %v2013, 64
      %v2486 = vpop.permute.xlu0 %2485
      %2487 = vrot.lane.b32.xlu0 %v2014, 64
      %v2488 = vpop.permute.xlu0 %2487
      %2489 = vrot.lane.b32.xlu0 %v2015, 64
      %v2490 = vpop.permute.xlu0 %2489
      %2491 = vrot.lane.b32.xlu0 %v2016, 64
      %v2492 = vpop.permute.xlu0 %2491
      %2493 = vrot.lane.b32.xlu0 %v2017, 64
      %v2494 = vpop.permute.xlu0 %2493
      %2495 = vrot.lane.b32.xlu0 %v2018, 64
      %v2496 = vpop.permute.xlu0 %2495
      %2497 = vrot.lane.b32.xlu0 %v2019, 64
      %v2498 = vpop.permute.xlu0 %2497
      %2499 = vrot.lane.b32.xlu0 %v2096, 96
      %v2500 = vpop.permute.xlu0 %2499
      %2501 = vrot.lane.b32.xlu0 %v2108, 96
      %v2502 = vpop.permute.xlu0 %2501
      %2503 = vrot.lane.b32.xlu0 %v2120, 96
      %v2504 = vpop.permute.xlu0 %2503
      %2505 = vrot.lane.b32.xlu0 %v2132, 96
      %v2506 = vpop.permute.xlu0 %2505
      %2507 = vrot.lane.b32.xlu0 %v2144, 96
      %v2508 = vpop.permute.xlu0 %2507
      %2509 = vrot.lane.b32.xlu0 %v2156, 96
      %v2510 = vpop.permute.xlu0 %2509
      %2511 = vrot.lane.b32.xlu0 %v2168, 96
      %v2512 = vpop.permute.xlu0 %2511
      %2513 = vrot.lane.b32.xlu0 %v2180, 96
      %v2514 = vpop.permute.xlu0 %2513
      %2515 = vrot.lane.b32.xlu0 %v2192, 96
      %v2516 = vpop.permute.xlu0 %2515
      %2517 = vrot.lane.b32.xlu0 %v2204, 96
      %v2518 = vpop.permute.xlu0 %2517
      %2519 = vrot.lane.b32.xlu0 %v2216, 96
      %v2520 = vpop.permute.xlu0 %2519
      %2521 = vrot.lane.b32.xlu0 %v2228, 96
      %v2522 = vpop.permute.xlu0 %2521
      %2523 = vrot.lane.b32.xlu0 %v2240, 96
      %v2524 = vpop.permute.xlu0 %2523
      %2525 = vrot.lane.b32.xlu0 %v2252, 96
      %v2526 = vpop.permute.xlu0 %2525
      %2527 = vrot.lane.b32.xlu0 %v2264, 96
      %v2528 = vpop.permute.xlu0 %2527
      %v2530 = vsel %vm1085, %v2004, %v2346
      %v2532 = vsel %vm1085, %v2005, %v2348
      %v2534 = vsel %vm1085, %v2006, %v2350
      %v2536 = vsel %vm1085, %v2007, %v2352
      %v2538 = vsel %vm1085, %v2008, %v2354
      %v2540 = vsel %vm1085, %v2009, %v2356
      %v2542 = vsel %vm1085, %v2010, %v2358
      %v2544 = vsel %vm1085, %v2011, %v2360
      %v2546 = vsel %vm1085, %v2012, %v2362
      %v2548 = vsel %vm1085, %v2013, %v2364
      %v2550 = vsel %vm1085, %v2014, %v2366
      %v2552 = vsel %vm1085, %v2015, %v2368
      %v2554 = vsel %vm1085, %v2016, %v2370
      %v2556 = vsel %vm1085, %v2017, %v2372
      %v2558 = vsel %vm1085, %v2018, %v2374
      %v2560 = vsel %vm1118, %v2530, %v2376
      %v2562 = vsel %vm1118, %v2532, %v2378
      %v2564 = vsel %vm1118, %v2534, %v2380
      %v2566 = vsel %vm1118, %v2536, %v2382
      %v2568 = vsel %vm1118, %v2538, %v2384
      %v2570 = vsel %vm1118, %v2540, %v2386
      %v2572 = vsel %vm1118, %v2542, %v2388
      %v2574 = vsel %vm1118, %v2544, %v2390
      %v2576 = vsel %vm1118, %v2546, %v2392
      %v2578 = vsel %vm1118, %v2548, %v2394
      %v2580 = vsel %vm1118, %v2550, %v2396
      %v2582 = vsel %vm1118, %v2552, %v2398
      %v2584 = vsel %vm1118, %v2554, %v2400
      %v2586 = vsel %vm1118, %v2556, %v2402
      %v2588 = vsel %vm1118, %v2558, %v2404
      %v2590 = vsel %vm1151, %v1120, %v2406
      %v2593 = vsel %vm1151, %v2560, %v2408
      %v2596 = vsel %vm1151, %v2562, %v2410
      %v2599 = vsel %vm1151, %v2564, %v2412
      %v2602 = vsel %vm1151, %v2566, %v2414
      %v2605 = vsel %vm1151, %v2568, %v2416
      %v2608 = vsel %vm1151, %v2570, %v2418
      %v2611 = vsel %vm1151, %v2572, %v2420
      %v2614 = vsel %vm1151, %v2574, %v2422
      %v2617 = vsel %vm1151, %v2576, %v2424
      %v2620 = vsel %vm1151, %v2578, %v2426
      %v2623 = vsel %vm1151, %v2580, %v2428
      %v2626 = vsel %vm1151, %v2582, %v2430
      %v2629 = vsel %vm1151, %v2584, %v2432
      %v2632 = vsel %vm1151, %v2586, %v2434
      %v2635 = vsel %vm1151, %v2588, %v2436
      %v2639 = vsel %vm1085, %v2084, %v2438
      %v2642 = vsel %vm1085, %v2096, %v2440
      %v2645 = vsel %vm1085, %v2108, %v2442
      %v2648 = vsel %vm1085, %v2120, %v2444
      %v2651 = vsel %vm1085, %v2132, %v2446
      %v2654 = vsel %vm1085, %v2144, %v2448
      %v2657 = vsel %vm1085, %v2156, %v2450
      %v2660 = vsel %vm1085, %v2168, %v2452
      %v2663 = vsel %vm1085, %v2180, %v2454
      %v2666 = vsel %vm1085, %v2192, %v2456
      %v2669 = vsel %vm1085, %v2204, %v2458
      %v2672 = vsel %vm1085, %v2216, %v2460
      %v2675 = vsel %vm1085, %v2228, %v2462
      %v2678 = vsel %vm1085, %v2240, %v2464
      %v2681 = vsel %vm1085, %v2252, %v2466
      %v2684 = vsel %vm1085, %v2264, %v2468
      %v2686 = vsel %vm1118, %v2639, %v2470
      %v2688 = vsel %vm1118, %v2642, %v2472
      %v2690 = vsel %vm1118, %v2645, %v2474
      %v2692 = vsel %vm1118, %v2648, %v2476
      %v2694 = vsel %vm1118, %v2651, %v2478
      %v2696 = vsel %vm1118, %v2654, %v2480
      %v2698 = vsel %vm1118, %v2657, %v2482
      %v2700 = vsel %vm1118, %v2660, %v2484
      %v2702 = vsel %vm1118, %v2663, %v2486
      %v2704 = vsel %vm1118, %v2666, %v2488
      %v2706 = vsel %vm1118, %v2669, %v2490
      %v2708 = vsel %vm1118, %v2672, %v2492
      %v2710 = vsel %vm1118, %v2675, %v2494
      %v2712 = vsel %vm1118, %v2678, %v2496
      %v2714 = vsel %vm1118, %v2681, %v2498
      %v2715 = vsel %vm1118, %v2684, %v1052
      %v2717 = vsel %vm1151, %v2686, %v2500
      %v2720 = vsel %vm1151, %v2688, %v2502
      %v2723 = vsel %vm1151, %v2690, %v2504
      %v2726 = vsel %vm1151, %v2692, %v2506
      %v2729 = vsel %vm1151, %v2694, %v2508
      %v2732 = vsel %vm1151, %v2696, %v2510
      %v2735 = vsel %vm1151, %v2698, %v2512
      %v2738 = vsel %vm1151, %v2700, %v2514
      %v2741 = vsel %vm1151, %v2702, %v2516
      %v2744 = vsel %vm1151, %v2704, %v2518
      %v2747 = vsel %vm1151, %v2706, %v2520
      %v2750 = vsel %vm1151, %v2708, %v2522
      %v2753 = vsel %vm1151, %v2710, %v2524
      %v2756 = vsel %vm1151, %v2712, %v2526
      %v2759 = vsel %vm1151, %v2714, %v2528
      %v2761 = vsel %vm1151, %v2715, %v1084
      %v2764 = vlaneseq
      %v2765 = vshrl.u32 %v2764, 7
      %v2766 = vsub.s32 0, %v2765
      %v2767 = vrot.slane %v2072, %v2766
      %v2805 = vunpack.c.l.b16 %v2036
      %v2806 = vunpack.c.l.b16 %v2037
      %v2807 = vunpack.c.l.b16 %v2038
      %v2808 = vunpack.c.l.b16 %v2039
      %v2809 = vunpack.c.l.b16 %v2040
      %v2810 = vunpack.c.l.b16 %v2041
      %v2811 = vunpack.c.l.b16 %v2042
      %v2812 = vunpack.c.l.b16 %v2043
      %v2813 = vunpack.c.l.b16 %v2044
      %v2814 = vunpack.c.l.b16 %v2045
      %v2815 = vunpack.c.l.b16 %v2046
      %v2816 = vunpack.c.l.b16 %v2047
      %v2817 = vunpack.c.l.b16 %v2048
      %v2818 = vunpack.c.l.b16 %v2049
      %v2819 = vunpack.c.l.b16 %v2050
      %v2820 = vunpack.c.l.b16 %v2051
      %v2821 = vunpack.c.l.b16 %v2052
      %v2822 = vunpack.c.l.b16 %v2053
      %v2823 = vunpack.c.l.b16 %v2054
      %v2824 = vunpack.c.l.b16 %v2055
      %v2825 = vunpack.c.l.b16 %v2056
      %v2826 = vunpack.c.l.b16 %v2057
      %v2827 = vunpack.c.l.b16 %v2058
      %v2828 = vunpack.c.l.b16 %v2059
      %v2829 = vunpack.c.l.b16 %v2060
      %v2830 = vunpack.c.l.b16 %v2061
      %v2831 = vunpack.c.l.b16 %v2062
      %v2832 = vunpack.c.l.b16 %v2063
      %v2833 = vunpack.c.l.b16 %v2064
      %v2834 = vunpack.c.l.b16 %v2065
      %v2835 = vunpack.c.l.b16 %v2066
      %v2836 = vunpack.c.l.b16 %v2067
      %v2837 = vunpack.c.l.b16 %v2068
      %v2838 = vunpack.c.l.b16 %v2069
      %v2839 = vunpack.c.l.b16 %v2070
      %v2840 = vunpack.c.l.b16 %v2071
      %v2841 = vpack.c.b16 %v2806, %v2805
      %v2842 = vpack.c.b16 %v2808, %v2807
      %v2843 = vpack.c.b16 %v2810, %v2809
      %v2844 = vpack.c.b16 %v2812, %v2811
      %v2845 = vpack.c.b16 %v2814, %v2813
      %v2846 = vpack.c.b16 %v2816, %v2815
      %v2847 = vpack.c.b16 %v2818, %v2817
      %v2848 = vpack.c.b16 %v2820, %v2819
      %v2849 = vpack.c.b16 %v2822, %v2821
      %v2850 = vpack.c.b16 %v2824, %v2823
      %v2851 = vpack.c.b16 %v2826, %v2825
      %v2852 = vpack.c.b16 %v2828, %v2827
      %v2853 = vpack.c.b16 %v2830, %v2829
      %v2854 = vpack.c.b16 %v2832, %v2831
      %v2855 = vpack.c.b16 %v2834, %v2833
      %v2856 = vpack.c.b16 %v2836, %v2835
      %v2857 = vpack.c.b16 %v2838, %v2837
      %v2858 = vpack.c.b16 %v2840, %v2839
      %v2878 = vsel %vm1085, %v2302, 0
      %v2881 = vsel %vm1085, %v2305, 0
      %v2884 = vsel %vm1085, %v2308, 0
      %v2887 = vsel %vm1085, %v2311, 0
      %v2890 = vsel %vm1085, %v2314, 0
      %v2893 = vsel %vm1085, %v2317, 0
      %v2896 = vsel %vm1085, %v2320, 0
      %v2899 = vsel %vm1085, %v2323, 0
      %v2902 = vsel %vm1085, %v2326, 0
      %v2905 = vsel %vm1085, %v2329, 0
      %v2908 = vsel %vm1085, %v2332, 0
      %v2911 = vsel %vm1085, %v2335, 0
      %v2914 = vsel %vm1085, %v2338, 0
      %v2917 = vsel %vm1085, %v2341, 0
      %v2920 = vsel %vm1085, %v2344, 0
      %2922 = vmatprep.subr.bf16.mxu0 0
      %2923 = vmatpush1.bf16.msra.mxu0 %v2848
      %2924 = vmatprep.subr.bf16.mxu0 0
      %2925 = vmatpush1.bf16.msra.mxu0 %v2847
      %2926 = vmatprep.subr.bf16.mxu0 0
      %2927 = vmatpush1.bf16.msra.mxu0 %v2846
      %2928 = vmatprep.subr.bf16.mxu0 0
      %2929 = vmatpush1.bf16.msra.mxu0 %v2845
      %2930 = vmatprep.subr.bf16.mxu0 0
      %2931 = vmatpush1.bf16.msra.mxu0 %v2844
      %2932 = vmatprep.subr.bf16.mxu0 0
      %2933 = vmatpush1.bf16.msra.mxu0 %v2843
      %2934 = vmatprep.subr.bf16.mxu0 0
      %2935 = vmatpush1.bf16.msra.mxu0 %v2842
      %2936 = vmatprep.subr.bf16.mxu0 0
      %2937 = vmatpush1.bf16.msra.mxu0 %v2841
      %2938 = vmatprep.subr.bf16.mxu0 0
      %2939 = vmatpush2.bf16.msra.mxu0 %v2856
      %2940 = vmatprep.subr.bf16.mxu0 0
      %2941 = vmatpush2.bf16.msra.mxu0 %v2855
      %2942 = vmatprep.subr.bf16.mxu0 0
      %2943 = vmatpush2.bf16.msra.mxu0 %v2854
      %2944 = vmatprep.subr.bf16.mxu0 0
      %2945 = vmatpush2.bf16.msra.mxu0 %v2853
      %2946 = vmatprep.subr.bf16.mxu0 0
      %2947 = vmatpush2.bf16.msra.mxu0 %v2852
      %2948 = vmatprep.subr.bf16.mxu0 0
      %2949 = vmatpush2.bf16.msra.mxu0 %v2851
      %2950 = vmatprep.subr.bf16.mxu0 0
      %2951 = vmatpush2.bf16.msra.mxu0 %v2850
      %2952 = vmatprep.subr.bf16.mxu0 0
      %2953 = vmatpush2.bf16.msra.mxu0 %v2849
      %2954 = vmatprep.mubr.bf16.mxu0 %v2717
      %2955 = vmatmul.mubr.bf16.gmra.mxu0 %v2590
      %v2956 = vpop.f32.mrf.mxu0
      %v2957 = vadd.f32 %v2767, %v2956
      %v2958 = vpop.f32.mrf.mxu0
      %v2959 = vpop.f32.mrf.mxu0
      %v2960 = vadd.f32 %v2767, %v2959
      %v2961 = vpop.f32.mrf.mxu0
      %2962 = vmatprep.mubr.bf16.mxu0 %v2720
      %2963 = vmatmul.mubr.bf16.gmra.mxu0 %v2593
      %v2964 = vpop.f32.mrf.mxu0
      %v2965 = vadd.f32 %v2767, %v2964
      %v2966 = vpop.f32.mrf.mxu0
      %v2967 = vpop.f32.mrf.mxu0
      %v2968 = vadd.f32 %v2767, %v2967
      %v2969 = vpop.f32.mrf.mxu0
      %2970 = vmatprep.mubr.bf16.mxu0 %v2723
      %2971 = vmatmul.mubr.bf16.gmra.mxu0 %v2596
      %v2972 = vpop.f32.mrf.mxu0
      %v2973 = vadd.f32 %v2767, %v2972
      %v2974 = vpop.f32.mrf.mxu0
      %v2975 = vpop.f32.mrf.mxu0
      %v2976 = vadd.f32 %v2767, %v2975
      %v2977 = vpop.f32.mrf.mxu0
      %2978 = vmatprep.mubr.bf16.mxu0 %v2726
      %2979 = vmatmul.mubr.bf16.gmra.mxu0 %v2599
      %v2980 = vpop.f32.mrf.mxu0
      %v2981 = vadd.f32 %v2767, %v2980
      %v2982 = vpop.f32.mrf.mxu0
      %v2983 = vpop.f32.mrf.mxu0
      %v2984 = vadd.f32 %v2767, %v2983
      %v2985 = vpop.f32.mrf.mxu0
      %2986 = vmatprep.mubr.bf16.mxu0 %v2729
      %2987 = vmatmul.mubr.bf16.gmra.mxu0 %v2602
      %v2988 = vpop.f32.mrf.mxu0
      %v2989 = vadd.f32 %v2767, %v2988
      %v2990 = vpop.f32.mrf.mxu0
      %v2991 = vpop.f32.mrf.mxu0
      %v2992 = vadd.f32 %v2767, %v2991
      %v2993 = vpop.f32.mrf.mxu0
      %2994 = vmatprep.mubr.bf16.mxu0 %v2732
      %2995 = vmatmul.mubr.bf16.gmra.mxu0 %v2605
      %v2996 = vpop.f32.mrf.mxu0
      %v2997 = vadd.f32 %v2767, %v2996
      %v2998 = vpop.f32.mrf.mxu0
      %v2999 = vpop.f32.mrf.mxu0
      %v3000 = vadd.f32 %v2767, %v2999
      %v3001 = vpop.f32.mrf.mxu0
      %3002 = vmatprep.mubr.bf16.mxu0 %v2735
      %3003 = vmatmul.mubr.bf16.gmra.mxu0 %v2608
      %v3004 = vpop.f32.mrf.mxu0
      %v3005 = vadd.f32 %v2767, %v3004
      %v3006 = vpop.f32.mrf.mxu0
      %v3007 = vpop.f32.mrf.mxu0
      %v3008 = vadd.f32 %v2767, %v3007
      %v3009 = vpop.f32.mrf.mxu0
      %3010 = vmatprep.mubr.bf16.mxu0 %v2738
      %3011 = vmatmul.mubr.bf16.gmra.mxu0 %v2611
      %v3012 = vpop.f32.mrf.mxu0
      %v3013 = vadd.f32 %v2767, %v3012
      %v3014 = vpop.f32.mrf.mxu0
      %v3015 = vpop.f32.mrf.mxu0
      %v3016 = vadd.f32 %v2767, %v3015
      %v3017 = vpop.f32.mrf.mxu0
      %3018 = vmatprep.mubr.bf16.mxu0 %v2741
      %3019 = vmatmul.mubr.bf16.gmra.mxu0 %v2614
      %v3020 = vpop.f32.mrf.mxu0
      %v3021 = vadd.f32 %v2767, %v3020
      %v3022 = vpop.f32.mrf.mxu0
      %v3023 = vpop.f32.mrf.mxu0
      %v3024 = vadd.f32 %v2767, %v3023
      %v3025 = vpop.f32.mrf.mxu0
      %3026 = vmatprep.mubr.bf16.mxu0 %v2744
      %3027 = vmatmul.mubr.bf16.gmra.mxu0 %v2617
      %v3028 = vpop.f32.mrf.mxu0
      %v3029 = vadd.f32 %v2767, %v3028
      %v3030 = vpop.f32.mrf.mxu0
      %v3031 = vpop.f32.mrf.mxu0
      %v3032 = vadd.f32 %v2767, %v3031
      %v3033 = vpop.f32.mrf.mxu0
      %3034 = vmatprep.mubr.bf16.mxu0 %v2747
      %3035 = vmatmul.mubr.bf16.gmra.mxu0 %v2620
      %v3036 = vpop.f32.mrf.mxu0
      %v3037 = vadd.f32 %v2767, %v3036
      %v3038 = vpop.f32.mrf.mxu0
      %v3039 = vpop.f32.mrf.mxu0
      %v3040 = vadd.f32 %v2767, %v3039
      %v3041 = vpop.f32.mrf.mxu0
      %3042 = vmatprep.mubr.bf16.mxu0 %v2750
      %3043 = vmatmul.mubr.bf16.gmra.mxu0 %v2623
      %v3044 = vpop.f32.mrf.mxu0
      %v3045 = vadd.f32 %v2767, %v3044
      %v3046 = vpop.f32.mrf.mxu0
      %v3047 = vpop.f32.mrf.mxu0
      %v3048 = vadd.f32 %v2767, %v3047
      %v3049 = vpop.f32.mrf.mxu0
      %3050 = vmatprep.mubr.bf16.mxu0 %v2753
      %3051 = vmatmul.mubr.bf16.gmra.mxu0 %v2626
      %v3052 = vpop.f32.mrf.mxu0
      %v3053 = vadd.f32 %v2767, %v3052
      %v3054 = vpop.f32.mrf.mxu0
      %v3055 = vpop.f32.mrf.mxu0
      %v3056 = vadd.f32 %v2767, %v3055
      %v3057 = vpop.f32.mrf.mxu0
      %3058 = vmatprep.mubr.bf16.mxu0 %v2756
      %3059 = vmatmul.mubr.bf16.gmra.mxu0 %v2629
      %v3060 = vpop.f32.mrf.mxu0
      %v3061 = vadd.f32 %v2767, %v3060
      %v3062 = vpop.f32.mrf.mxu0
      %v3063 = vpop.f32.mrf.mxu0
      %v3064 = vadd.f32 %v2767, %v3063
      %v3065 = vpop.f32.mrf.mxu0
      %3066 = vmatprep.mubr.bf16.mxu0 %v2759
      %3067 = vmatmul.mubr.bf16.gmra.mxu0 %v2632
      %v3068 = vpop.f32.mrf.mxu0
      %v3069 = vadd.f32 %v2767, %v3068
      %v3070 = vpop.f32.mrf.mxu0
      %v3071 = vpop.f32.mrf.mxu0
      %v3072 = vadd.f32 %v2767, %v3071
      %v3073 = vpop.f32.mrf.mxu0
      %3074 = vmatprep.mubr.bf16.mxu0 %v2761
      %3075 = vmatmul.mubr.bf16.gmra.mxu0 %v2635
      %v3076 = vpop.f32.mrf.mxu0
      %v3077 = vadd.f32 %v2767, %v3076
      %v3078 = vpop.f32.mrf.mxu0
      %v3079 = vpop.f32.mrf.mxu0
      %v3080 = vadd.f32 %v2767, %v3079
      %v3081 = vpop.f32.mrf.mxu0
      %3082 = vdwg.mxu0
      %3083 = vmatprep.subr.bf16.mxu0 0
      %3084 = vmatpush1.bf16.msra.mxu0 0
      %3085 = vmatprep.subr.bf16.mxu0 0
      %3086 = vmatpush1.bf16.msra.mxu0 0
      %3087 = vmatprep.subr.bf16.mxu0 0
      %3088 = vmatpush1.bf16.msra.mxu0 0
      %3089 = vmatprep.subr.bf16.mxu0 0
      %3090 = vmatpush1.bf16.msra.mxu0 0
      %3091 = vmatprep.subr.bf16.mxu0 0
      %3092 = vmatpush1.bf16.msra.mxu0 0
      %3093 = vmatprep.subr.bf16.mxu0 0
      %3094 = vmatpush1.bf16.msra.mxu0 0
      %3095 = vmatprep.subr.bf16.mxu0 0
      %3096 = vmatpush1.bf16.msra.mxu0 %v2858
      %3097 = vmatprep.subr.bf16.mxu0 0
      %3098 = vmatpush1.bf16.msra.mxu0 %v2857
      %3099 = vmatprep.subr.bf16.mxu0 0
      %3100 = vmatpush2.bf16.msra.mxu0 0
      %3101 = vmatprep.subr.bf16.mxu0 0
      %3102 = vmatpush2.bf16.msra.mxu0 0
      %3103 = vmatprep.subr.bf16.mxu0 0
      %3104 = vmatpush2.bf16.msra.mxu0 0
      %3105 = vmatprep.subr.bf16.mxu0 0
      %3106 = vmatpush2.bf16.msra.mxu0 0
      %3107 = vmatprep.subr.bf16.mxu0 0
      %3108 = vmatpush2.bf16.msra.mxu0 0
      %3109 = vmatprep.subr.bf16.mxu0 0
      %3110 = vmatpush2.bf16.msra.mxu0 0
      %3111 = vmatprep.subr.bf16.mxu0 0
      %3112 = vmatpush2.bf16.msra.mxu0 0
      %3113 = vmatprep.subr.bf16.mxu0 0
      %3114 = vmatpush2.bf16.msra.mxu0 0
      %3115 = vmatprep.mubr.bf16.mxu0 0
      %3116 = vmatmul.mubr.bf16.gmra.mxu0 %v2878
      %v3117 = vpop.f32.mrf.mxu0
      %v3118 = vadd.f32 %v2957, %v3117
      %v3119 = vpop.f32.mrf.mxu0
      %v3120 = vpop.f32.mrf.mxu0
      %v3121 = vadd.f32 %v2960, %v3120
      %v3122 = vpop.f32.mrf.mxu0
      %3123 = vmatprep.mubr.bf16.mxu0 0
      %3124 = vmatmul.mubr.bf16.gmra.mxu0 %v2881
      %v3125 = vpop.f32.mrf.mxu0
      %v3126 = vadd.f32 %v2965, %v3125
      %v3127 = vpop.f32.mrf.mxu0
      %v3128 = vpop.f32.mrf.mxu0
      %v3129 = vadd.f32 %v2968, %v3128
      %v3130 = vpop.f32.mrf.mxu0
      %3131 = vmatprep.mubr.bf16.mxu0 0
      %3132 = vmatmul.mubr.bf16.gmra.mxu0 %v2884
      %v3133 = vpop.f32.mrf.mxu0
      %v3134 = vadd.f32 %v2973, %v3133
      %v3135 = vpop.f32.mrf.mxu0
      %v3136 = vpop.f32.mrf.mxu0
      %v3137 = vadd.f32 %v2976, %v3136
      %v3138 = vpop.f32.mrf.mxu0
      %3139 = vmatprep.mubr.bf16.mxu0 0
      %3140 = vmatmul.mubr.bf16.gmra.mxu0 %v2887
      %v3141 = vpop.f32.mrf.mxu0
      %v3142 = vadd.f32 %v2981, %v3141
      %v3143 = vpop.f32.mrf.mxu0
      %v3144 = vpop.f32.mrf.mxu0
      %v3145 = vadd.f32 %v2984, %v3144
      %v3146 = vpop.f32.mrf.mxu0
      %3147 = vmatprep.mubr.bf16.mxu0 0
      %3148 = vmatmul.mubr.bf16.gmra.mxu0 %v2890
      %v3149 = vpop.f32.mrf.mxu0
      %v3150 = vadd.f32 %v2989, %v3149
      %v3151 = vpop.f32.mrf.mxu0
      %v3152 = vpop.f32.mrf.mxu0
      %v3153 = vadd.f32 %v2992, %v3152
      %v3154 = vpop.f32.mrf.mxu0
      %3155 = vmatprep.mubr.bf16.mxu0 0
      %3156 = vmatmul.mubr.bf16.gmra.mxu0 %v2893
      %v3157 = vpop.f32.mrf.mxu0
      %v3158 = vadd.f32 %v2997, %v3157
      %v3159 = vpop.f32.mrf.mxu0
      %v3160 = vpop.f32.mrf.mxu0
      %v3161 = vadd.f32 %v3000, %v3160
      %v3162 = vpop.f32.mrf.mxu0
      %3163 = vmatprep.mubr.bf16.mxu0 0
      %3164 = vmatmul.mubr.bf16.gmra.mxu0 %v2896
      %v3165 = vpop.f32.mrf.mxu0
      %v3166 = vadd.f32 %v3005, %v3165
      %v3167 = vpop.f32.mrf.mxu0
      %v3168 = vpop.f32.mrf.mxu0
      %v3169 = vadd.f32 %v3008, %v3168
      %v3170 = vpop.f32.mrf.mxu0
      %3171 = vmatprep.mubr.bf16.mxu0 0
      %3172 = vmatmul.mubr.bf16.gmra.mxu0 %v2899
      %v3173 = vpop.f32.mrf.mxu0
      %v3174 = vadd.f32 %v3013, %v3173
      %v3175 = vpop.f32.mrf.mxu0
      %v3176 = vpop.f32.mrf.mxu0
      %v3177 = vadd.f32 %v3016, %v3176
      %v3178 = vpop.f32.mrf.mxu0
      %3179 = vmatprep.mubr.bf16.mxu0 0
      %3180 = vmatmul.mubr.bf16.gmra.mxu0 %v2902
      %v3181 = vpop.f32.mrf.mxu0
      %v3182 = vadd.f32 %v3021, %v3181
      %v3183 = vpop.f32.mrf.mxu0
      %v3184 = vpop.f32.mrf.mxu0
      %v3185 = vadd.f32 %v3024, %v3184
      %v3186 = vpop.f32.mrf.mxu0
      %3187 = vmatprep.mubr.bf16.mxu0 0
      %3188 = vmatmul.mubr.bf16.gmra.mxu0 %v2905
      %v3189 = vpop.f32.mrf.mxu0
      %v3190 = vadd.f32 %v3029, %v3189
      %v3191 = vpop.f32.mrf.mxu0
      %v3192 = vpop.f32.mrf.mxu0
      %v3193 = vadd.f32 %v3032, %v3192
      %v3194 = vpop.f32.mrf.mxu0
      %3195 = vmatprep.mubr.bf16.mxu0 0
      %3196 = vmatmul.mubr.bf16.gmra.mxu0 %v2908
      %v3197 = vpop.f32.mrf.mxu0
      %v3198 = vadd.f32 %v3037, %v3197
      %v3199 = vpop.f32.mrf.mxu0
      %v3200 = vpop.f32.mrf.mxu0
      %v3201 = vadd.f32 %v3040, %v3200
      %v3202 = vpop.f32.mrf.mxu0
      %3203 = vmatprep.mubr.bf16.mxu0 0
      %3204 = vmatmul.mubr.bf16.gmra.mxu0 %v2911
      %v3205 = vpop.f32.mrf.mxu0
      %v3206 = vadd.f32 %v3045, %v3205
      %v3207 = vpop.f32.mrf.mxu0
      %v3208 = vpop.f32.mrf.mxu0
      %v3209 = vadd.f32 %v3048, %v3208
      %v3210 = vpop.f32.mrf.mxu0
      %3211 = vmatprep.mubr.bf16.mxu0 0
      %3212 = vmatmul.mubr.bf16.gmra.mxu0 %v2914
      %v3213 = vpop.f32.mrf.mxu0
      %v3214 = vadd.f32 %v3053, %v3213
      %v3215 = vpop.f32.mrf.mxu0
      %v3216 = vpop.f32.mrf.mxu0
      %v3217 = vadd.f32 %v3056, %v3216
      %v3218 = vpop.f32.mrf.mxu0
      %3219 = vmatprep.mubr.bf16.mxu0 0
      %3220 = vmatmul.mubr.bf16.gmra.mxu0 %v2917
      %v3221 = vpop.f32.mrf.mxu0
      %v3222 = vadd.f32 %v3061, %v3221
      %v3223 = vpop.f32.mrf.mxu0
      %v3224 = vpop.f32.mrf.mxu0
      %v3225 = vadd.f32 %v3064, %v3224
      %v3226 = vpop.f32.mrf.mxu0
      %3227 = vmatprep.mubr.bf16.mxu0 0
      %3228 = vmatmul.mubr.bf16.gmra.mxu0 %v2920
      %v3229 = vpop.f32.mrf.mxu0
      %v3230 = vadd.f32 %v3069, %v3229
      %v3231 = vpop.f32.mrf.mxu0
      %v3232 = vpop.f32.mrf.mxu0
      %v3233 = vadd.f32 %v3072, %v3232
      %v3234 = vpop.f32.mrf.mxu0
      %3235 = vmatprep.mubr.bf16.mxu0 0
      %3236 = vmatmul.mubr.bf16.gmra.mxu0 %v1488
      %v3237 = vpop.f32.mrf.mxu0
      %v3238 = vadd.f32 %v3077, %v3237
      %v3239 = vpop.f32.mrf.mxu0
      %v3240 = vpop.f32.mrf.mxu0
      %v3241 = vadd.f32 %v3080, %v3240
      %v3242 = vpop.f32.mrf.mxu0
      %3243 = vdwg.mxu0
      %v3244 = vmax.f32 %v3118, 0.0
      %v3245 = vmax.f32 %v3121, 0.0
      %v3246 = vmax.f32 %v3126, 0.0
      %v3247 = vmax.f32 %v3129, 0.0
      %v3248 = vmax.f32 %v3134, 0.0
      %v3249 = vmax.f32 %v3137, 0.0
      %v3250 = vmax.f32 %v3142, 0.0
      %v3251 = vmax.f32 %v3145, 0.0
      %v3252 = vmax.f32 %v3150, 0.0
      %v3253 = vmax.f32 %v3153, 0.0
      %v3254 = vmax.f32 %v3158, 0.0
      %v3255 = vmax.f32 %v3161, 0.0
      %v3256 = vmax.f32 %v3166, 0.0
      %v3257 = vmax.f32 %v3169, 0.0
      %v3258 = vmax.f32 %v3174, 0.0
      %v3259 = vmax.f32 %v3177, 0.0
      %v3260 = vmax.f32 %v3182, 0.0
      %v3261 = vmax.f32 %v3185, 0.0
      %v3262 = vmax.f32 %v3190, 0.0
      %v3263 = vmax.f32 %v3193, 0.0
      %v3264 = vmax.f32 %v3198, 0.0
      %v3265 = vmax.f32 %v3201, 0.0
      %v3266 = vmax.f32 %v3206, 0.0
      %v3267 = vmax.f32 %v3209, 0.0
      %v3268 = vmax.f32 %v3214, 0.0
      %v3269 = vmax.f32 %v3217, 0.0
      %v3270 = vmax.f32 %v3222, 0.0
      %v3271 = vmax.f32 %v3225, 0.0
      %v3272 = vmax.f32 %v3230, 0.0
      %v3273 = vmax.f32 %v3233, 0.0
      %v3274 = vmax.f32 %v3238, 0.0
      %v3275 = vmax.f32 %v3241, 0.0
      %v3276 = vpack.c.bf16 %v3245, %v3244
      %v3277 = vpack.c.bf16 %v3247, %v3246
      %v3278 = vpack.c.bf16 %v3249, %v3248
      %v3279 = vpack.c.bf16 %v3251, %v3250
      %v3280 = vpack.c.bf16 %v3253, %v3252
      %v3281 = vpack.c.bf16 %v3255, %v3254
      %v3282 = vpack.c.bf16 %v3257, %v3256
      %v3283 = vpack.c.bf16 %v3259, %v3258
      %v3284 = vpack.c.bf16 %v3261, %v3260
      %v3285 = vpack.c.bf16 %v3263, %v3262
      %v3286 = vpack.c.bf16 %v3265, %v3264
      %v3287 = vpack.c.bf16 %v3267, %v3266
      %v3288 = vpack.c.bf16 %v3269, %v3268
      %v3289 = vpack.c.bf16 %v3271, %v3270
      %v3290 = vpack.c.bf16 %v3273, %v3272
      %v3291 = vpack.c.bf16 %v3275, %v3274
      %v3293 = vshrl.u32 %v3276, 16
      %v3295 = vrot.slane %v3293, 7
      %v3296 = vshll.u32 %v3276, 16
      %v3298 = vor.u32 %v3295, %v3296
      %v3300 = vshrl.u32 %v3277, 16
      %v3302 = vrot.slane %v3300, 7
      %v3303 = vshll.u32 %v3277, 16
      %v3305 = vor.u32 %v3302, %v3303
      %v3307 = vshrl.u32 %v3278, 16
      %v3309 = vrot.slane %v3307, 7
      %v3310 = vshll.u32 %v3278, 16
      %v3312 = vor.u32 %v3309, %v3310
      %v3314 = vshrl.u32 %v3279, 16
      %v3316 = vrot.slane %v3314, 7
      %v3317 = vshll.u32 %v3279, 16
      %v3319 = vor.u32 %v3316, %v3317
      %v3321 = vshrl.u32 %v3280, 16
      %v3323 = vrot.slane %v3321, 7
      %v3324 = vshll.u32 %v3280, 16
      %v3326 = vor.u32 %v3323, %v3324
      %v3328 = vshrl.u32 %v3281, 16
      %v3330 = vrot.slane %v3328, 7
      %v3331 = vshll.u32 %v3281, 16
      %v3333 = vor.u32 %v3330, %v3331
      %v3335 = vshrl.u32 %v3282, 16
      %v3337 = vrot.slane %v3335, 7
      %v3338 = vshll.u32 %v3282, 16
      %v3340 = vor.u32 %v3337, %v3338
      %v3342 = vshrl.u32 %v3283, 16
      %v3344 = vrot.slane %v3342, 7
      %v3345 = vshll.u32 %v3283, 16
      %v3347 = vor.u32 %v3344, %v3345
      %v3349 = vshrl.u32 %v3284, 16
      %v3351 = vrot.slane %v3349, 7
      %v3352 = vshll.u32 %v3284, 16
      %v3354 = vor.u32 %v3351, %v3352
      %v3356 = vshrl.u32 %v3285, 16
      %v3358 = vrot.slane %v3356, 7
      %v3359 = vshll.u32 %v3285, 16
      %v3361 = vor.u32 %v3358, %v3359
      %v3363 = vshrl.u32 %v3286, 16
      %v3365 = vrot.slane %v3363, 7
      %v3366 = vshll.u32 %v3286, 16
      %v3368 = vor.u32 %v3365, %v3366
      %v3370 = vshrl.u32 %v3287, 16
      %v3372 = vrot.slane %v3370, 7
      %v3373 = vshll.u32 %v3287, 16
      %v3375 = vor.u32 %v3372, %v3373
      %v3377 = vshrl.u32 %v3288, 16
      %v3379 = vrot.slane %v3377, 7
      %v3380 = vshll.u32 %v3288, 16
      %v3382 = vor.u32 %v3379, %v3380
      %v3384 = vshrl.u32 %v3289, 16
      %v3386 = vrot.slane %v3384, 7
      %v3387 = vshll.u32 %v3289, 16
      %v3389 = vor.u32 %v3386, %v3387
      %v3391 = vshrl.u32 %v3290, 16
      %v3393 = vrot.slane %v3391, 7
      %v3394 = vshll.u32 %v3290, 16
      %v3396 = vor.u32 %v3393, %v3394
      %v3398 = vshrl.u32 %v3291, 16
      %v3400 = vrot.slane %v3398, 7
      %v3401 = vshll.u32 %v3291, 16
      %v3403 = vor.u32 %v3400, %v3401
      %v3436 = vsel %vm538, 0, %v3298
      %v3437 = vsel %vm538, 0, %v3305
      %v3438 = vsel %vm538, 0, %v3312
      %v3439 = vsel %vm538, 0, %v3319
      %v3440 = vsel %vm538, 0, %v3326
      %v3441 = vsel %vm538, 0, %v3333
      %v3442 = vsel %vm538, 0, %v3340
      %v3443 = vsel %vm538, 0, %v3347
      %v3444 = vsel %vm538, 0, %v3354
      %v3445 = vsel %vm538, 0, %v3361
      %v3446 = vsel %vm538, 0, %v3368
      %v3447 = vsel %vm538, 0, %v3375
      %v3448 = vsel %vm538, 0, %v3382
      %v3449 = vsel %vm538, 0, %v3389
      %v3450 = vsel %vm538, 0, %v3396
      %v3451 = vsel %vm538, 0, %v3403
      %v3452 = vsel %vm538, %v3295, 0
      %v3453 = vsel %vm538, %v3302, 0
      %v3454 = vsel %vm538, %v3309, 0
      %v3455 = vsel %vm538, %v3316, 0
      %v3456 = vsel %vm538, %v3323, 0
      %v3457 = vsel %vm538, %v3330, 0
      %v3458 = vsel %vm538, %v3337, 0
      %v3459 = vsel %vm538, %v3344, 0
      %v3460 = vsel %vm538, %v3351, 0
      %v3461 = vsel %vm538, %v3358, 0
      %v3462 = vsel %vm538, %v3365, 0
      %v3463 = vsel %vm538, %v3372, 0
      %v3464 = vsel %vm538, %v3379, 0
      %v3465 = vsel %vm538, %v3386, 0
      %v3466 = vsel %vm538, %v3393, 0
      %v3467 = vsel %vm538, %v3400, 0
      %s3468 = scalar_lea.vmem %s3, 144
      %v3469 = vld [vmem:[%s3468] sm:$0xf]
      %v3470 = vld [vmem:[%s3468 + $0x4] sm:$0xf]
      %v3471 = vld [vmem:[%s3468 + $0x8] sm:$0xf]
      %v3472 = vld [vmem:[%s3468 + $0xc] sm:$0xf]
      %v3473 = vld [vmem:[%s3468 + $0x10] sm:$0xf]
      %v3474 = vld [vmem:[%s3468 + $0x14] sm:$0xf]
      %v3475 = vld [vmem:[%s3468 + $0x18] sm:$0xf]
      %v3476 = vld [vmem:[%s3468 + $0x1c] sm:$0xf]
      %v3477 = vld [vmem:[%s3468 + $0x20] sm:$0xf]
      %v3478 = vld [vmem:[%s3468 + $0x24] sm:$0xf]
      %v3479 = vld [vmem:[%s3468 + $0x28] sm:$0xf]
      %v3480 = vld [vmem:[%s3468 + $0x2c] sm:$0xf]
      %v3481 = vld [vmem:[%s3468 + $0x30] sm:$0xf]
      %v3482 = vld [vmem:[%s3468 + $0x34] sm:$0xf]
      %v3483 = vld [vmem:[%s3468 + $0x38] sm:$0xf]
      %v3484 = vld [vmem:[%s3468 + $0x3c] sm:$0xf]
      %v3485 = vld [vmem:[%s3468 + $0x40] sm:$0xf]
      %v3486 = vld [vmem:[%s3468 + $0x44] sm:$0xf]
      %v3487 = vld [vmem:[%s3468 + $0x48] sm:$0xf]
      %v3488 = vld [vmem:[%s3468 + $0x4c] sm:$0xf]
      %v3489 = vld [vmem:[%s3468 + $0x50] sm:$0xf]
      %v3490 = vld [vmem:[%s3468 + $0x54] sm:$0xf]
      %v3491 = vld [vmem:[%s3468 + $0x58] sm:$0xf]
      %v3492 = vld [vmem:[%s3468 + $0x5c] sm:$0xf]
      %v3493 = vld [vmem:[%s3468 + $0x60] sm:$0xf]
      %v3494 = vld [vmem:[%s3468 + $0x64] sm:$0xf]
      %v3495 = vld [vmem:[%s3468 + $0x68] sm:$0xf]
      %v3496 = vld [vmem:[%s3468 + $0x6c] sm:$0xf]
      %v3497 = vld [vmem:[%s3468 + $0x70] sm:$0xf]
      %v3498 = vld [vmem:[%s3468 + $0x74] sm:$0xf]
      %v3499 = vld [vmem:[%s3468 + $0x78] sm:$0xf]
      %v3500 = vld [vmem:[%s3468 + $0x7c] sm:$0xf]
      %v3501 = vld [vmem:[%s3468 + $0x80] sm:$0xf]
      %v3502 = vld [vmem:[%s3468 + $0x84] sm:$0xf]
      %v3503 = vld [vmem:[%s3468 + $0x88] sm:$0xf]
      %v3504 = vld [vmem:[%s3468 + $0x8c] sm:$0xf]
      %s3505 = scalar_lea.vmem %s4, 1
      %v3506 = vld [vmem:[%s3505] sm:$0x1]
      %v3508 = vshrl.u32 %v3436, 16
      %v3510 = vshll.u32 %v3436, 16
      %v3512 = vrot.slane %v3510, 1
      %v3513 = vor.u32 %v3508, %v3512
      %v3515 = vshll.u32 %v3452, 16
      %v3517 = vrot.slane %v3515, 1
      %v3518 = vsel %vm608, %v3513, %v3517
      %v3520 = vshrl.u32 %v3437, 16
      %v3522 = vshll.u32 %v3437, 16
      %v3524 = vrot.slane %v3522, 1
      %v3525 = vor.u32 %v3520, %v3524
      %v3527 = vshll.u32 %v3453, 16
      %v3529 = vrot.slane %v3527, 1
      %v3530 = vsel %vm608, %v3525, %v3529
      %v3532 = vshrl.u32 %v3438, 16
      %v3534 = vshll.u32 %v3438, 16
      %v3536 = vrot.slane %v3534, 1
      %v3537 = vor.u32 %v3532, %v3536
      %v3539 = vshll.u32 %v3454, 16
      %v3541 = vrot.slane %v3539, 1
      %v3542 = vsel %vm608, %v3537, %v3541
      %v3544 = vshrl.u32 %v3439, 16
      %v3546 = vshll.u32 %v3439, 16
      %v3548 = vrot.slane %v3546, 1
      %v3549 = vor.u32 %v3544, %v3548
      %v3551 = vshll.u32 %v3455, 16
      %v3553 = vrot.slane %v3551, 1
      %v3554 = vsel %vm608, %v3549, %v3553
      %v3556 = vshrl.u32 %v3440, 16
      %v3558 = vshll.u32 %v3440, 16
      %v3560 = vrot.slane %v3558, 1
      %v3561 = vor.u32 %v3556, %v3560
      %v3563 = vshll.u32 %v3456, 16
      %v3565 = vrot.slane %v3563, 1
      %v3566 = vsel %vm608, %v3561, %v3565
      %v3568 = vshrl.u32 %v3441, 16
      %v3570 = vshll.u32 %v3441, 16
      %v3572 = vrot.slane %v3570, 1
      %v3573 = vor.u32 %v3568, %v3572
      %v3575 = vshll.u32 %v3457, 16
      %v3577 = vrot.slane %v3575, 1
      %v3578 = vsel %vm608, %v3573, %v3577
      %v3580 = vshrl.u32 %v3442, 16
      %v3582 = vshll.u32 %v3442, 16
      %v3584 = vrot.slane %v3582, 1
      %v3585 = vor.u32 %v3580, %v3584
      %v3587 = vshll.u32 %v3458, 16
      %v3589 = vrot.slane %v3587, 1
      %v3590 = vsel %vm608, %v3585, %v3589
      %v3592 = vshrl.u32 %v3443, 16
      %v3594 = vshll.u32 %v3443, 16
      %v3596 = vrot.slane %v3594, 1
      %v3597 = vor.u32 %v3592, %v3596
      %v3599 = vshll.u32 %v3459, 16
      %v3601 = vrot.slane %v3599, 1
      %v3602 = vsel %vm608, %v3597, %v3601
      %v3604 = vshrl.u32 %v3444, 16
      %v3606 = vshll.u32 %v3444, 16
      %v3608 = vrot.slane %v3606, 1
      %v3609 = vor.u32 %v3604, %v3608
      %v3611 = vshll.u32 %v3460, 16
      %v3613 = vrot.slane %v3611, 1
      %v3614 = vsel %vm608, %v3609, %v3613
      %v3616 = vshrl.u32 %v3445, 16
      %v3618 = vshll.u32 %v3445, 16
      %v3620 = vrot.slane %v3618, 1
      %v3621 = vor.u32 %v3616, %v3620
      %v3623 = vshll.u32 %v3461, 16
      %v3625 = vrot.slane %v3623, 1
      %v3626 = vsel %vm608, %v3621, %v3625
      %v3628 = vshrl.u32 %v3446, 16
      %v3630 = vshll.u32 %v3446, 16
      %v3632 = vrot.slane %v3630, 1
      %v3633 = vor.u32 %v3628, %v3632
      %v3635 = vshll.u32 %v3462, 16
      %v3637 = vrot.slane %v3635, 1
      %v3638 = vsel %vm608, %v3633, %v3637
      %v3640 = vshrl.u32 %v3447, 16
      %v3642 = vshll.u32 %v3447, 16
      %v3644 = vrot.slane %v3642, 1
      %v3645 = vor.u32 %v3640, %v3644
      %v3647 = vshll.u32 %v3463, 16
      %v3649 = vrot.slane %v3647, 1
      %v3650 = vsel %vm608, %v3645, %v3649
      %v3652 = vshrl.u32 %v3448, 16
      %v3654 = vshll.u32 %v3448, 16
      %v3656 = vrot.slane %v3654, 1
      %v3657 = vor.u32 %v3652, %v3656
      %v3659 = vshll.u32 %v3464, 16
      %v3661 = vrot.slane %v3659, 1
      %v3662 = vsel %vm608, %v3657, %v3661
      %v3664 = vshrl.u32 %v3449, 16
      %v3666 = vshll.u32 %v3449, 16
      %v3668 = vrot.slane %v3666, 1
      %v3669 = vor.u32 %v3664, %v3668
      %v3671 = vshll.u32 %v3465, 16
      %v3673 = vrot.slane %v3671, 1
      %v3674 = vsel %vm608, %v3669, %v3673
      %v3676 = vshrl.u32 %v3450, 16
      %v3678 = vshll.u32 %v3450, 16
      %v3680 = vrot.slane %v3678, 1
      %v3681 = vor.u32 %v3676, %v3680
      %v3683 = vshll.u32 %v3466, 16
      %v3685 = vrot.slane %v3683, 1
      %v3686 = vsel %vm608, %v3681, %v3685
      %v3688 = vshrl.u32 %v3451, 16
      %v3690 = vshll.u32 %v3451, 16
      %v3692 = vrot.slane %v3690, 1
      %v3693 = vor.u32 %v3688, %v3692
      %v3695 = vshll.u32 %v3467, 16
      %v3697 = vrot.slane %v3695, 1
      %v3698 = vsel %vm608, %v3693, %v3697
      %v3731 = vrot.slane %v3436, 1
      %v3732 = vrot.slane %v3452, 1
      %v3733 = vsel %vm842, %v3731, %v3732
      %v3734 = vrot.slane %v3437, 1
      %v3735 = vrot.slane %v3453, 1
      %v3736 = vsel %vm842, %v3734, %v3735
      %v3737 = vrot.slane %v3438, 1
      %v3738 = vrot.slane %v3454, 1
      %v3739 = vsel %vm842, %v3737, %v3738
      %v3740 = vrot.slane %v3439, 1
      %v3741 = vrot.slane %v3455, 1
      %v3742 = vsel %vm842, %v3740, %v3741
      %v3743 = vrot.slane %v3440, 1
      %v3744 = vrot.slane %v3456, 1
      %v3745 = vsel %vm842, %v3743, %v3744
      %v3746 = vrot.slane %v3441, 1
      %v3747 = vrot.slane %v3457, 1
      %v3748 = vsel %vm842, %v3746, %v3747
      %v3749 = vrot.slane %v3442, 1
      %v3750 = vrot.slane %v3458, 1
      %v3751 = vsel %vm842, %v3749, %v3750
      %v3752 = vrot.slane %v3443, 1
      %v3753 = vrot.slane %v3459, 1
      %v3754 = vsel %vm842, %v3752, %v3753
      %v3755 = vrot.slane %v3444, 1
      %v3756 = vrot.slane %v3460, 1
      %v3757 = vsel %vm842, %v3755, %v3756
      %v3758 = vrot.slane %v3445, 1
      %v3759 = vrot.slane %v3461, 1
      %v3760 = vsel %vm842, %v3758, %v3759
      %v3761 = vrot.slane %v3446, 1
      %v3762 = vrot.slane %v3462, 1
      %v3763 = vsel %vm842, %v3761, %v3762
      %v3764 = vrot.slane %v3447, 1
      %v3765 = vrot.slane %v3463, 1
      %v3766 = vsel %vm842, %v3764, %v3765
      %v3767 = vrot.slane %v3448, 1
      %v3768 = vrot.slane %v3464, 1
      %v3769 = vsel %vm842, %v3767, %v3768
      %v3770 = vrot.slane %v3449, 1
      %v3771 = vrot.slane %v3465, 1
      %v3772 = vsel %vm842, %v3770, %v3771
      %v3773 = vrot.slane %v3450, 1
      %v3774 = vrot.slane %v3466, 1
      %v3775 = vsel %vm842, %v3773, %v3774
      %v3776 = vrot.slane %v3451, 1
      %v3777 = vrot.slane %v3467, 1
      %v3778 = vsel %vm842, %v3776, %v3777
      %3779 = vrot.lane.b32.xlu0 %v3518, 32
      %v3780 = vpop.permute.xlu0 %3779
      %3781 = vrot.lane.b32.xlu0 %v3530, 32
      %v3782 = vpop.permute.xlu0 %3781
      %3783 = vrot.lane.b32.xlu0 %v3542, 32
      %v3784 = vpop.permute.xlu0 %3783
      %3785 = vrot.lane.b32.xlu0 %v3554, 32
      %v3786 = vpop.permute.xlu0 %3785
      %3787 = vrot.lane.b32.xlu0 %v3566, 32
      %v3788 = vpop.permute.xlu0 %3787
      %3789 = vrot.lane.b32.xlu0 %v3578, 32
      %v3790 = vpop.permute.xlu0 %3789
      %3791 = vrot.lane.b32.xlu0 %v3590, 32
      %v3792 = vpop.permute.xlu0 %3791
      %3793 = vrot.lane.b32.xlu0 %v3602, 32
      %v3794 = vpop.permute.xlu0 %3793
      %3795 = vrot.lane.b32.xlu0 %v3614, 32
      %v3796 = vpop.permute.xlu0 %3795
      %3797 = vrot.lane.b32.xlu0 %v3626, 32
      %v3798 = vpop.permute.xlu0 %3797
      %3799 = vrot.lane.b32.xlu0 %v3638, 32
      %v3800 = vpop.permute.xlu0 %3799
      %3801 = vrot.lane.b32.xlu0 %v3650, 32
      %v3802 = vpop.permute.xlu0 %3801
      %3803 = vrot.lane.b32.xlu0 %v3662, 32
      %v3804 = vpop.permute.xlu0 %3803
      %3805 = vrot.lane.b32.xlu0 %v3674, 32
      %v3806 = vpop.permute.xlu0 %3805
      %3807 = vrot.lane.b32.xlu0 %v3686, 32
      %v3808 = vpop.permute.xlu0 %3807
      %3809 = vrot.lane.b32.xlu0 %v3733, 64
      %v3810 = vpop.permute.xlu0 %3809
      %3811 = vrot.lane.b32.xlu0 %v3736, 64
      %v3812 = vpop.permute.xlu0 %3811
      %3813 = vrot.lane.b32.xlu0 %v3739, 64
      %v3814 = vpop.permute.xlu0 %3813
      %3815 = vrot.lane.b32.xlu0 %v3742, 64
      %v3816 = vpop.permute.xlu0 %3815
      %3817 = vrot.lane.b32.xlu0 %v3745, 64
      %v3818 = vpop.permute.xlu0 %3817
      %3819 = vrot.lane.b32.xlu0 %v3748, 64
      %v3820 = vpop.permute.xlu0 %3819
      %3821 = vrot.lane.b32.xlu0 %v3751, 64
      %v3822 = vpop.permute.xlu0 %3821
      %3823 = vrot.lane.b32.xlu0 %v3754, 64
      %v3824 = vpop.permute.xlu0 %3823
      %3825 = vrot.lane.b32.xlu0 %v3757, 64
      %v3826 = vpop.permute.xlu0 %3825
      %3827 = vrot.lane.b32.xlu0 %v3760, 64
      %v3828 = vpop.permute.xlu0 %3827
      %3829 = vrot.lane.b32.xlu0 %v3763, 64
      %v3830 = vpop.permute.xlu0 %3829
      %3831 = vrot.lane.b32.xlu0 %v3766, 64
      %v3832 = vpop.permute.xlu0 %3831
      %3833 = vrot.lane.b32.xlu0 %v3769, 64
      %v3834 = vpop.permute.xlu0 %3833
      %3835 = vrot.lane.b32.xlu0 %v3772, 64
      %v3836 = vpop.permute.xlu0 %3835
      %3837 = vrot.lane.b32.xlu0 %v3775, 64
      %v3838 = vpop.permute.xlu0 %3837
      %3839 = vrot.lane.b32.xlu0 %v3436, 96
      %v3840 = vpop.permute.xlu0 %3839
      %3841 = vrot.lane.b32.xlu0 %v3437, 96
      %v3842 = vpop.permute.xlu0 %3841
      %3843 = vrot.lane.b32.xlu0 %v3438, 96
      %v3844 = vpop.permute.xlu0 %3843
      %3845 = vrot.lane.b32.xlu0 %v3439, 96
      %v3846 = vpop.permute.xlu0 %3845
      %3847 = vrot.lane.b32.xlu0 %v3440, 96
      %v3848 = vpop.permute.xlu0 %3847
      %3849 = vrot.lane.b32.xlu0 %v3441, 96
      %v3850 = vpop.permute.xlu0 %3849
      %3851 = vrot.lane.b32.xlu0 %v3442, 96
      %v3852 = vpop.permute.xlu0 %3851
      %3853 = vrot.lane.b32.xlu0 %v3443, 96
      %v3854 = vpop.permute.xlu0 %3853
      %3855 = vrot.lane.b32.xlu0 %v3444, 96
      %v3856 = vpop.permute.xlu0 %3855
      %3857 = vrot.lane.b32.xlu0 %v3445, 96
      %v3858 = vpop.permute.xlu0 %3857
      %3859 = vrot.lane.b32.xlu0 %v3446, 96
      %v3860 = vpop.permute.xlu0 %3859
      %3861 = vrot.lane.b32.xlu0 %v3447, 96
      %v3862 = vpop.permute.xlu0 %3861
      %3863 = vrot.lane.b32.xlu0 %v3448, 96
      %v3864 = vpop.permute.xlu0 %3863
      %3865 = vrot.lane.b32.xlu0 %v3449, 96
      %v3866 = vpop.permute.xlu0 %3865
      %3867 = vrot.lane.b32.xlu0 %v3450, 96
      %v3868 = vpop.permute.xlu0 %3867
      %3869 = vrot.lane.b32.xlu0 %v3451, 96
      %v3870 = vpop.permute.xlu0 %3869
      %3871 = vrot.lane.b32.xlu0 %v3733, 32
      %v3872 = vpop.permute.xlu0 %3871
      %3873 = vrot.lane.b32.xlu0 %v3736, 32
      %v3874 = vpop.permute.xlu0 %3873
      %3875 = vrot.lane.b32.xlu0 %v3739, 32
      %v3876 = vpop.permute.xlu0 %3875
      %3877 = vrot.lane.b32.xlu0 %v3742, 32
      %v3878 = vpop.permute.xlu0 %3877
      %3879 = vrot.lane.b32.xlu0 %v3745, 32
      %v3880 = vpop.permute.xlu0 %3879
      %3881 = vrot.lane.b32.xlu0 %v3748, 32
      %v3882 = vpop.permute.xlu0 %3881
      %3883 = vrot.lane.b32.xlu0 %v3751, 32
      %v3884 = vpop.permute.xlu0 %3883
      %3885 = vrot.lane.b32.xlu0 %v3754, 32
      %v3886 = vpop.permute.xlu0 %3885
      %3887 = vrot.lane.b32.xlu0 %v3757, 32
      %v3888 = vpop.permute.xlu0 %3887
      %3889 = vrot.lane.b32.xlu0 %v3760, 32
      %v3890 = vpop.permute.xlu0 %3889
      %3891 = vrot.lane.b32.xlu0 %v3763, 32
      %v3892 = vpop.permute.xlu0 %3891
      %3893 = vrot.lane.b32.xlu0 %v3766, 32
      %v3894 = vpop.permute.xlu0 %3893
      %3895 = vrot.lane.b32.xlu0 %v3769, 32
      %v3896 = vpop.permute.xlu0 %3895
      %3897 = vrot.lane.b32.xlu0 %v3772, 32
      %v3898 = vpop.permute.xlu0 %3897
      %3899 = vrot.lane.b32.xlu0 %v3775, 32
      %v3900 = vpop.permute.xlu0 %3899
      %3901 = vrot.lane.b32.xlu0 %v3778, 32
      %v3902 = vpop.permute.xlu0 %3901
      %3903 = vrot.lane.b32.xlu0 %v3437, 64
      %v3904 = vpop.permute.xlu0 %3903
      %3905 = vrot.lane.b32.xlu0 %v3438, 64
      %v3906 = vpop.permute.xlu0 %3905
      %3907 = vrot.lane.b32.xlu0 %v3439, 64
      %v3908 = vpop.permute.xlu0 %3907
      %3909 = vrot.lane.b32.xlu0 %v3440, 64
      %v3910 = vpop.permute.xlu0 %3909
      %3911 = vrot.lane.b32.xlu0 %v3441, 64
      %v3912 = vpop.permute.xlu0 %3911
      %3913 = vrot.lane.b32.xlu0 %v3442, 64
      %v3914 = vpop.permute.xlu0 %3913
      %3915 = vrot.lane.b32.xlu0 %v3443, 64
      %v3916 = vpop.permute.xlu0 %3915
      %3917 = vrot.lane.b32.xlu0 %v3444, 64
      %v3918 = vpop.permute.xlu0 %3917
      %3919 = vrot.lane.b32.xlu0 %v3445, 64
      %v3920 = vpop.permute.xlu0 %3919
      %3921 = vrot.lane.b32.xlu0 %v3446, 64
      %v3922 = vpop.permute.xlu0 %3921
      %3923 = vrot.lane.b32.xlu0 %v3447, 64
      %v3924 = vpop.permute.xlu0 %3923
      %3925 = vrot.lane.b32.xlu0 %v3448, 64
      %v3926 = vpop.permute.xlu0 %3925
      %3927 = vrot.lane.b32.xlu0 %v3449, 64
      %v3928 = vpop.permute.xlu0 %3927
      %3929 = vrot.lane.b32.xlu0 %v3450, 64
      %v3930 = vpop.permute.xlu0 %3929
      %3931 = vrot.lane.b32.xlu0 %v3451, 64
      %v3932 = vpop.permute.xlu0 %3931
      %3933 = vrot.lane.b32.xlu0 %v3530, 96
      %v3934 = vpop.permute.xlu0 %3933
      %3935 = vrot.lane.b32.xlu0 %v3542, 96
      %v3936 = vpop.permute.xlu0 %3935
      %3937 = vrot.lane.b32.xlu0 %v3554, 96
      %v3938 = vpop.permute.xlu0 %3937
      %3939 = vrot.lane.b32.xlu0 %v3566, 96
      %v3940 = vpop.permute.xlu0 %3939
      %3941 = vrot.lane.b32.xlu0 %v3578, 96
      %v3942 = vpop.permute.xlu0 %3941
      %3943 = vrot.lane.b32.xlu0 %v3590, 96
      %v3944 = vpop.permute.xlu0 %3943
      %3945 = vrot.lane.b32.xlu0 %v3602, 96
      %v3946 = vpop.permute.xlu0 %3945
      %3947 = vrot.lane.b32.xlu0 %v3614, 96
      %v3948 = vpop.permute.xlu0 %3947
      %3949 = vrot.lane.b32.xlu0 %v3626, 96
      %v3950 = vpop.permute.xlu0 %3949
      %3951 = vrot.lane.b32.xlu0 %v3638, 96
      %v3952 = vpop.permute.xlu0 %3951
      %3953 = vrot.lane.b32.xlu0 %v3650, 96
      %v3954 = vpop.permute.xlu0 %3953
      %3955 = vrot.lane.b32.xlu0 %v3662, 96
      %v3956 = vpop.permute.xlu0 %3955
      %3957 = vrot.lane.b32.xlu0 %v3674, 96
      %v3958 = vpop.permute.xlu0 %3957
      %3959 = vrot.lane.b32.xlu0 %v3686, 96
      %v3960 = vpop.permute.xlu0 %3959
      %3961 = vrot.lane.b32.xlu0 %v3698, 96
      %v3962 = vpop.permute.xlu0 %3961
      %v3964 = vsel %vm1085, %v3436, %v3780
      %v3966 = vsel %vm1085, %v3437, %v3782
      %v3968 = vsel %vm1085, %v3438, %v3784
      %v3970 = vsel %vm1085, %v3439, %v3786
      %v3972 = vsel %vm1085, %v3440, %v3788
      %v3974 = vsel %vm1085, %v3441, %v3790
      %v3976 = vsel %vm1085, %v3442, %v3792
      %v3978 = vsel %vm1085, %v3443, %v3794
      %v3980 = vsel %vm1085, %v3444, %v3796
      %v3982 = vsel %vm1085, %v3445, %v3798
      %v3984 = vsel %vm1085, %v3446, %v3800
      %v3986 = vsel %vm1085, %v3447, %v3802
      %v3988 = vsel %vm1085, %v3448, %v3804
      %v3990 = vsel %vm1085, %v3449, %v3806
      %v3992 = vsel %vm1085, %v3450, %v3808
      %v3994 = vsel %vm1118, %v3964, %v3810
      %v3996 = vsel %vm1118, %v3966, %v3812
      %v3998 = vsel %vm1118, %v3968, %v3814
      %v4000 = vsel %vm1118, %v3970, %v3816
      %v4002 = vsel %vm1118, %v3972, %v3818
      %v4004 = vsel %vm1118, %v3974, %v3820
      %v4006 = vsel %vm1118, %v3976, %v3822
      %v4008 = vsel %vm1118, %v3978, %v3824
      %v4010 = vsel %vm1118, %v3980, %v3826
      %v4012 = vsel %vm1118, %v3982, %v3828
      %v4014 = vsel %vm1118, %v3984, %v3830
      %v4016 = vsel %vm1118, %v3986, %v3832
      %v4018 = vsel %vm1118, %v3988, %v3834
      %v4020 = vsel %vm1118, %v3990, %v3836
      %v4022 = vsel %vm1118, %v3992, %v3838
      %v4024 = vsel %vm1151, %v1120, %v3840
      %v4027 = vsel %vm1151, %v3994, %v3842
      %v4030 = vsel %vm1151, %v3996, %v3844
      %v4033 = vsel %vm1151, %v3998, %v3846
      %v4036 = vsel %vm1151, %v4000, %v3848
      %v4039 = vsel %vm1151, %v4002, %v3850
      %v4042 = vsel %vm1151, %v4004, %v3852
      %v4045 = vsel %vm1151, %v4006, %v3854
      %v4048 = vsel %vm1151, %v4008, %v3856
      %v4051 = vsel %vm1151, %v4010, %v3858
      %v4054 = vsel %vm1151, %v4012, %v3860
      %v4057 = vsel %vm1151, %v4014, %v3862
      %v4060 = vsel %vm1151, %v4016, %v3864
      %v4063 = vsel %vm1151, %v4018, %v3866
      %v4066 = vsel %vm1151, %v4020, %v3868
      %v4069 = vsel %vm1151, %v4022, %v3870
      %v4073 = vsel %vm1085, %v3518, %v3872
      %v4076 = vsel %vm1085, %v3530, %v3874
      %v4079 = vsel %vm1085, %v3542, %v3876
      %v4082 = vsel %vm1085, %v3554, %v3878
      %v4085 = vsel %vm1085, %v3566, %v3880
      %v4088 = vsel %vm1085, %v3578, %v3882
      %v4091 = vsel %vm1085, %v3590, %v3884
      %v4094 = vsel %vm1085, %v3602, %v3886
      %v4097 = vsel %vm1085, %v3614, %v3888
      %v4100 = vsel %vm1085, %v3626, %v3890
      %v4103 = vsel %vm1085, %v3638, %v3892
      %v4106 = vsel %vm1085, %v3650, %v3894
      %v4109 = vsel %vm1085, %v3662, %v3896
      %v4112 = vsel %vm1085, %v3674, %v3898
      %v4115 = vsel %vm1085, %v3686, %v3900
      %v4118 = vsel %vm1085, %v3698, %v3902
      %v4120 = vsel %vm1118, %v4073, %v3904
      %v4122 = vsel %vm1118, %v4076, %v3906
      %v4124 = vsel %vm1118, %v4079, %v3908
      %v4126 = vsel %vm1118, %v4082, %v3910
      %v4128 = vsel %vm1118, %v4085, %v3912
      %v4130 = vsel %vm1118, %v4088, %v3914
      %v4132 = vsel %vm1118, %v4091, %v3916
      %v4134 = vsel %vm1118, %v4094, %v3918
      %v4136 = vsel %vm1118, %v4097, %v3920
      %v4138 = vsel %vm1118, %v4100, %v3922
      %v4140 = vsel %vm1118, %v4103, %v3924
      %v4142 = vsel %vm1118, %v4106, %v3926
      %v4144 = vsel %vm1118, %v4109, %v3928
      %v4146 = vsel %vm1118, %v4112, %v3930
      %v4148 = vsel %vm1118, %v4115, %v3932
      %v4149 = vsel %vm1118, %v4118, %v1052
      %v4151 = vsel %vm1151, %v4120, %v3934
      %v4154 = vsel %vm1151, %v4122, %v3936
      %v4157 = vsel %vm1151, %v4124, %v3938
      %v4160 = vsel %vm1151, %v4126, %v3940
      %v4163 = vsel %vm1151, %v4128, %v3942
      %v4166 = vsel %vm1151, %v4130, %v3944
      %v4169 = vsel %vm1151, %v4132, %v3946
      %v4172 = vsel %vm1151, %v4134, %v3948
      %v4175 = vsel %vm1151, %v4136, %v3950
      %v4178 = vsel %vm1151, %v4138, %v3952
      %v4181 = vsel %vm1151, %v4140, %v3954
      %v4184 = vsel %vm1151, %v4142, %v3956
      %v4187 = vsel %vm1151, %v4144, %v3958
      %v4190 = vsel %vm1151, %v4146, %v3960
      %v4193 = vsel %vm1151, %v4148, %v3962
      %v4195 = vsel %vm1151, %v4149, %v1084
      %v4198 = vlaneseq
      %v4199 = vshrl.u32 %v4198, 7
      %v4200 = vsub.s32 0, %v4199
      %v4201 = vrot.slane %v3506, %v4200
      %v4239 = vunpack.c.l.b16 %v3469
      %v4240 = vunpack.c.l.b16 %v3470
      %v4241 = vunpack.c.l.b16 %v3471
      %v4242 = vunpack.c.l.b16 %v3472
      %v4243 = vunpack.c.l.b16 %v3473
      %v4244 = vunpack.c.l.b16 %v3474
      %v4245 = vunpack.c.l.b16 %v3475
      %v4246 = vunpack.c.l.b16 %v3476
      %v4247 = vunpack.c.l.b16 %v3477
      %v4248 = vunpack.c.l.b16 %v3478
      %v4249 = vunpack.c.l.b16 %v3479
      %v4250 = vunpack.c.l.b16 %v3480
      %v4251 = vunpack.c.l.b16 %v3481
      %v4252 = vunpack.c.l.b16 %v3482
      %v4253 = vunpack.c.l.b16 %v3483
      %v4254 = vunpack.c.l.b16 %v3484
      %v4255 = vunpack.c.l.b16 %v3485
      %v4256 = vunpack.c.l.b16 %v3486
      %v4257 = vunpack.c.l.b16 %v3487
      %v4258 = vunpack.c.l.b16 %v3488
      %v4259 = vunpack.c.l.b16 %v3489
      %v4260 = vunpack.c.l.b16 %v3490
      %v4261 = vunpack.c.l.b16 %v3491
      %v4262 = vunpack.c.l.b16 %v3492
      %v4263 = vunpack.c.l.b16 %v3493
      %v4264 = vunpack.c.l.b16 %v3494
      %v4265 = vunpack.c.l.b16 %v3495
      %v4266 = vunpack.c.l.b16 %v3496
      %v4267 = vunpack.c.l.b16 %v3497
      %v4268 = vunpack.c.l.b16 %v3498
      %v4269 = vunpack.c.l.b16 %v3499
      %v4270 = vunpack.c.l.b16 %v3500
      %v4271 = vunpack.c.l.b16 %v3501
      %v4272 = vunpack.c.l.b16 %v3502
      %v4273 = vunpack.c.l.b16 %v3503
      %v4274 = vunpack.c.l.b16 %v3504
      %v4275 = vpack.c.b16 %v4240, %v4239
      %v4276 = vpack.c.b16 %v4242, %v4241
      %v4277 = vpack.c.b16 %v4244, %v4243
      %v4278 = vpack.c.b16 %v4246, %v4245
      %v4279 = vpack.c.b16 %v4248, %v4247
      %v4280 = vpack.c.b16 %v4250, %v4249
      %v4281 = vpack.c.b16 %v4252, %v4251
      %v4282 = vpack.c.b16 %v4254, %v4253
      %v4283 = vpack.c.b16 %v4256, %v4255
      %v4284 = vpack.c.b16 %v4258, %v4257
      %v4285 = vpack.c.b16 %v4260, %v4259
      %v4286 = vpack.c.b16 %v4262, %v4261
      %v4287 = vpack.c.b16 %v4264, %v4263
      %v4288 = vpack.c.b16 %v4266, %v4265
      %v4289 = vpack.c.b16 %v4268, %v4267
      %v4290 = vpack.c.b16 %v4270, %v4269
      %v4291 = vpack.c.b16 %v4272, %v4271
      %v4292 = vpack.c.b16 %v4274, %v4273
      %v4312 = vsel %vm1085, %v3736, 0
      %v4315 = vsel %vm1085, %v3739, 0
      %v4318 = vsel %vm1085, %v3742, 0
      %v4321 = vsel %vm1085, %v3745, 0
      %v4324 = vsel %vm1085, %v3748, 0
      %v4327 = vsel %vm1085, %v3751, 0
      %v4330 = vsel %vm1085, %v3754, 0
      %v4333 = vsel %vm1085, %v3757, 0
      %v4336 = vsel %vm1085, %v3760, 0
      %v4339 = vsel %vm1085, %v3763, 0
      %v4342 = vsel %vm1085, %v3766, 0
      %v4345 = vsel %vm1085, %v3769, 0
      %v4348 = vsel %vm1085, %v3772, 0
      %v4351 = vsel %vm1085, %v3775, 0
      %v4354 = vsel %vm1085, %v3778, 0
      %4356 = vmatprep.subr.bf16.mxu0 0
      %4357 = vmatpush1.bf16.msra.mxu0 %v4282
      %4358 = vmatprep.subr.bf16.mxu0 0
      %4359 = vmatpush1.bf16.msra.mxu0 %v4281
      %4360 = vmatprep.subr.bf16.mxu0 0
      %4361 = vmatpush1.bf16.msra.mxu0 %v4280
      %4362 = vmatprep.subr.bf16.mxu0 0
      %4363 = vmatpush1.bf16.msra.mxu0 %v4279
      %4364 = vmatprep.subr.bf16.mxu0 0
      %4365 = vmatpush1.bf16.msra.mxu0 %v4278
      %4366 = vmatprep.subr.bf16.mxu0 0
      %4367 = vmatpush1.bf16.msra.mxu0 %v4277
      %4368 = vmatprep.subr.bf16.mxu0 0
      %4369 = vmatpush1.bf16.msra.mxu0 %v4276
      %4370 = vmatprep.subr.bf16.mxu0 0
      %4371 = vmatpush1.bf16.msra.mxu0 %v4275
      %4372 = vmatprep.subr.bf16.mxu0 0
      %4373 = vmatpush2.bf16.msra.mxu0 %v4290
      %4374 = vmatprep.subr.bf16.mxu0 0
      %4375 = vmatpush2.bf16.msra.mxu0 %v4289
      %4376 = vmatprep.subr.bf16.mxu0 0
      %4377 = vmatpush2.bf16.msra.mxu0 %v4288
      %4378 = vmatprep.subr.bf16.mxu0 0
      %4379 = vmatpush2.bf16.msra.mxu0 %v4287
      %4380 = vmatprep.subr.bf16.mxu0 0
      %4381 = vmatpush2.bf16.msra.mxu0 %v4286
      %4382 = vmatprep.subr.bf16.mxu0 0
      %4383 = vmatpush2.bf16.msra.mxu0 %v4285
      %4384 = vmatprep.subr.bf16.mxu0 0
      %4385 = vmatpush2.bf16.msra.mxu0 %v4284
      %4386 = vmatprep.subr.bf16.mxu0 0
      %4387 = vmatpush2.bf16.msra.mxu0 %v4283
      %4388 = vmatprep.mubr.bf16.mxu0 %v4151
      %4389 = vmatmul.mubr.bf16.gmra.mxu0 %v4024
      %v4390 = vpop.f32.mrf.mxu0
      %v4391 = vadd.f32 %v4201, %v4390
      %v4392 = vpop.f32.mrf.mxu0
      %v4393 = vpop.f32.mrf.mxu0
      %v4394 = vadd.f32 %v4201, %v4393
      %v4395 = vpop.f32.mrf.mxu0
      %4396 = vmatprep.mubr.bf16.mxu0 %v4154
      %4397 = vmatmul.mubr.bf16.gmra.mxu0 %v4027
      %v4398 = vpop.f32.mrf.mxu0
      %v4399 = vadd.f32 %v4201, %v4398
      %v4400 = vpop.f32.mrf.mxu0
      %v4401 = vpop.f32.mrf.mxu0
      %v4402 = vadd.f32 %v4201, %v4401
      %v4403 = vpop.f32.mrf.mxu0
      %4404 = vmatprep.mubr.bf16.mxu0 %v4157
      %4405 = vmatmul.mubr.bf16.gmra.mxu0 %v4030
      %v4406 = vpop.f32.mrf.mxu0
      %v4407 = vadd.f32 %v4201, %v4406
      %v4408 = vpop.f32.mrf.mxu0
      %v4409 = vpop.f32.mrf.mxu0
      %v4410 = vadd.f32 %v4201, %v4409
      %v4411 = vpop.f32.mrf.mxu0
      %4412 = vmatprep.mubr.bf16.mxu0 %v4160
      %4413 = vmatmul.mubr.bf16.gmra.mxu0 %v4033
      %v4414 = vpop.f32.mrf.mxu0
      %v4415 = vadd.f32 %v4201, %v4414
      %v4416 = vpop.f32.mrf.mxu0
      %v4417 = vpop.f32.mrf.mxu0
      %v4418 = vadd.f32 %v4201, %v4417
      %v4419 = vpop.f32.mrf.mxu0
      %4420 = vmatprep.mubr.bf16.mxu0 %v4163
      %4421 = vmatmul.mubr.bf16.gmra.mxu0 %v4036
      %v4422 = vpop.f32.mrf.mxu0
      %v4423 = vadd.f32 %v4201, %v4422
      %v4424 = vpop.f32.mrf.mxu0
      %v4425 = vpop.f32.mrf.mxu0
      %v4426 = vadd.f32 %v4201, %v4425
      %v4427 = vpop.f32.mrf.mxu0
      %4428 = vmatprep.mubr.bf16.mxu0 %v4166
      %4429 = vmatmul.mubr.bf16.gmra.mxu0 %v4039
      %v4430 = vpop.f32.mrf.mxu0
      %v4431 = vadd.f32 %v4201, %v4430
      %v4432 = vpop.f32.mrf.mxu0
      %v4433 = vpop.f32.mrf.mxu0
      %v4434 = vadd.f32 %v4201, %v4433
      %v4435 = vpop.f32.mrf.mxu0
      %4436 = vmatprep.mubr.bf16.mxu0 %v4169
      %4437 = vmatmul.mubr.bf16.gmra.mxu0 %v4042
      %v4438 = vpop.f32.mrf.mxu0
      %v4439 = vadd.f32 %v4201, %v4438
      %v4440 = vpop.f32.mrf.mxu0
      %v4441 = vpop.f32.mrf.mxu0
      %v4442 = vadd.f32 %v4201, %v4441
      %v4443 = vpop.f32.mrf.mxu0
      %4444 = vmatprep.mubr.bf16.mxu0 %v4172
      %4445 = vmatmul.mubr.bf16.gmra.mxu0 %v4045
      %v4446 = vpop.f32.mrf.mxu0
      %v4447 = vadd.f32 %v4201, %v4446
      %v4448 = vpop.f32.mrf.mxu0
      %v4449 = vpop.f32.mrf.mxu0
      %v4450 = vadd.f32 %v4201, %v4449
      %v4451 = vpop.f32.mrf.mxu0
      %4452 = vmatprep.mubr.bf16.mxu0 %v4175
      %4453 = vmatmul.mubr.bf16.gmra.mxu0 %v4048
      %v4454 = vpop.f32.mrf.mxu0
      %v4455 = vadd.f32 %v4201, %v4454
      %v4456 = vpop.f32.mrf.mxu0
      %v4457 = vpop.f32.mrf.mxu0
      %v4458 = vadd.f32 %v4201, %v4457
      %v4459 = vpop.f32.mrf.mxu0
      %4460 = vmatprep.mubr.bf16.mxu0 %v4178
      %4461 = vmatmul.mubr.bf16.gmra.mxu0 %v4051
      %v4462 = vpop.f32.mrf.mxu0
      %v4463 = vadd.f32 %v4201, %v4462
      %v4464 = vpop.f32.mrf.mxu0
      %v4465 = vpop.f32.mrf.mxu0
      %v4466 = vadd.f32 %v4201, %v4465
      %v4467 = vpop.f32.mrf.mxu0
      %4468 = vmatprep.mubr.bf16.mxu0 %v4181
      %4469 = vmatmul.mubr.bf16.gmra.mxu0 %v4054
      %v4470 = vpop.f32.mrf.mxu0
      %v4471 = vadd.f32 %v4201, %v4470
      %v4472 = vpop.f32.mrf.mxu0
      %v4473 = vpop.f32.mrf.mxu0
      %v4474 = vadd.f32 %v4201, %v4473
      %v4475 = vpop.f32.mrf.mxu0
      %4476 = vmatprep.mubr.bf16.mxu0 %v4184
      %4477 = vmatmul.mubr.bf16.gmra.mxu0 %v4057
      %v4478 = vpop.f32.mrf.mxu0
      %v4479 = vadd.f32 %v4201, %v4478
      %v4480 = vpop.f32.mrf.mxu0
      %v4481 = vpop.f32.mrf.mxu0
      %v4482 = vadd.f32 %v4201, %v4481
      %v4483 = vpop.f32.mrf.mxu0
      %4484 = vmatprep.mubr.bf16.mxu0 %v4187
      %4485 = vmatmul.mubr.bf16.gmra.mxu0 %v4060
      %v4486 = vpop.f32.mrf.mxu0
      %v4487 = vadd.f32 %v4201, %v4486
      %v4488 = vpop.f32.mrf.mxu0
      %v4489 = vpop.f32.mrf.mxu0
      %v4490 = vadd.f32 %v4201, %v4489
      %v4491 = vpop.f32.mrf.mxu0
      %4492 = vmatprep.mubr.bf16.mxu0 %v4190
      %4493 = vmatmul.mubr.bf16.gmra.mxu0 %v4063
      %v4494 = vpop.f32.mrf.mxu0
      %v4495 = vadd.f32 %v4201, %v4494
      %v4496 = vpop.f32.mrf.mxu0
      %v4497 = vpop.f32.mrf.mxu0
      %v4498 = vadd.f32 %v4201, %v4497
      %v4499 = vpop.f32.mrf.mxu0
      %4500 = vmatprep.mubr.bf16.mxu0 %v4193
      %4501 = vmatmul.mubr.bf16.gmra.mxu0 %v4066
      %v4502 = vpop.f32.mrf.mxu0
      %v4503 = vadd.f32 %v4201, %v4502
      %v4504 = vpop.f32.mrf.mxu0
      %v4505 = vpop.f32.mrf.mxu0
      %v4506 = vadd.f32 %v4201, %v4505
      %v4507 = vpop.f32.mrf.mxu0
      %4508 = vmatprep.mubr.bf16.mxu0 %v4195
      %4509 = vmatmul.mubr.bf16.gmra.mxu0 %v4069
      %v4510 = vpop.f32.mrf.mxu0
      %v4511 = vadd.f32 %v4201, %v4510
      %v4512 = vpop.f32.mrf.mxu0
      %v4513 = vpop.f32.mrf.mxu0
      %v4514 = vadd.f32 %v4201, %v4513
      %v4515 = vpop.f32.mrf.mxu0
      %4516 = vdwg.mxu0
      %4517 = vmatprep.subr.bf16.mxu0 0
      %4518 = vmatpush1.bf16.msra.mxu0 0
      %4519 = vmatprep.subr.bf16.mxu0 0
      %4520 = vmatpush1.bf16.msra.mxu0 0
      %4521 = vmatprep.subr.bf16.mxu0 0
      %4522 = vmatpush1.bf16.msra.mxu0 0
      %4523 = vmatprep.subr.bf16.mxu0 0
      %4524 = vmatpush1.bf16.msra.mxu0 0
      %4525 = vmatprep.subr.bf16.mxu0 0
      %4526 = vmatpush1.bf16.msra.mxu0 0
      %4527 = vmatprep.subr.bf16.mxu0 0
      %4528 = vmatpush1.bf16.msra.mxu0 0
      %4529 = vmatprep.subr.bf16.mxu0 0
      %4530 = vmatpush1.bf16.msra.mxu0 %v4292
      %4531 = vmatprep.subr.bf16.mxu0 0
      %4532 = vmatpush1.bf16.msra.mxu0 %v4291
      %4533 = vmatprep.subr.bf16.mxu0 0
      %4534 = vmatpush2.bf16.msra.mxu0 0
      %4535 = vmatprep.subr.bf16.mxu0 0
      %4536 = vmatpush2.bf16.msra.mxu0 0
      %4537 = vmatprep.subr.bf16.mxu0 0
      %4538 = vmatpush2.bf16.msra.mxu0 0
      %4539 = vmatprep.subr.bf16.mxu0 0
      %4540 = vmatpush2.bf16.msra.mxu0 0
      %4541 = vmatprep.subr.bf16.mxu0 0
      %4542 = vmatpush2.bf16.msra.mxu0 0
      %4543 = vmatprep.subr.bf16.mxu0 0
      %4544 = vmatpush2.bf16.msra.mxu0 0
      %4545 = vmatprep.subr.bf16.mxu0 0
      %4546 = vmatpush2.bf16.msra.mxu0 0
      %4547 = vmatprep.subr.bf16.mxu0 0
      %4548 = vmatpush2.bf16.msra.mxu0 0
      %4549 = vmatprep.mubr.bf16.mxu0 0
      %4550 = vmatmul.mubr.bf16.gmra.mxu0 %v4312
      %v4551 = vpop.f32.mrf.mxu0
      %v4552 = vadd.f32 %v4391, %v4551
      %v4553 = vpop.f32.mrf.mxu0
      %v4554 = vpop.f32.mrf.mxu0
      %v4555 = vadd.f32 %v4394, %v4554
      %v4556 = vpop.f32.mrf.mxu0
      %4557 = vmatprep.mubr.bf16.mxu0 0
      %4558 = vmatmul.mubr.bf16.gmra.mxu0 %v4315
      %v4559 = vpop.f32.mrf.mxu0
      %v4560 = vadd.f32 %v4399, %v4559
      %v4561 = vpop.f32.mrf.mxu0
      %v4562 = vpop.f32.mrf.mxu0
      %v4563 = vadd.f32 %v4402, %v4562
      %v4564 = vpop.f32.mrf.mxu0
      %4565 = vmatprep.mubr.bf16.mxu0 0
      %4566 = vmatmul.mubr.bf16.gmra.mxu0 %v4318
      %v4567 = vpop.f32.mrf.mxu0
      %v4568 = vadd.f32 %v4407, %v4567
      %v4569 = vpop.f32.mrf.mxu0
      %v4570 = vpop.f32.mrf.mxu0
      %v4571 = vadd.f32 %v4410, %v4570
      %v4572 = vpop.f32.mrf.mxu0
      %4573 = vmatprep.mubr.bf16.mxu0 0
      %4574 = vmatmul.mubr.bf16.gmra.mxu0 %v4321
      %v4575 = vpop.f32.mrf.mxu0
      %v4576 = vadd.f32 %v4415, %v4575
      %v4577 = vpop.f32.mrf.mxu0
      %v4578 = vpop.f32.mrf.mxu0
      %v4579 = vadd.f32 %v4418, %v4578
      %v4580 = vpop.f32.mrf.mxu0
      %4581 = vmatprep.mubr.bf16.mxu0 0
      %4582 = vmatmul.mubr.bf16.gmra.mxu0 %v4324
      %v4583 = vpop.f32.mrf.mxu0
      %v4584 = vadd.f32 %v4423, %v4583
      %v4585 = vpop.f32.mrf.mxu0
      %v4586 = vpop.f32.mrf.mxu0
      %v4587 = vadd.f32 %v4426, %v4586
      %v4588 = vpop.f32.mrf.mxu0
      %4589 = vmatprep.mubr.bf16.mxu0 0
      %4590 = vmatmul.mubr.bf16.gmra.mxu0 %v4327
      %v4591 = vpop.f32.mrf.mxu0
      %v4592 = vadd.f32 %v4431, %v4591
      %v4593 = vpop.f32.mrf.mxu0
      %v4594 = vpop.f32.mrf.mxu0
      %v4595 = vadd.f32 %v4434, %v4594
      %v4596 = vpop.f32.mrf.mxu0
      %4597 = vmatprep.mubr.bf16.mxu0 0
      %4598 = vmatmul.mubr.bf16.gmra.mxu0 %v4330
      %v4599 = vpop.f32.mrf.mxu0
      %v4600 = vadd.f32 %v4439, %v4599
      %v4601 = vpop.f32.mrf.mxu0
      %v4602 = vpop.f32.mrf.mxu0
      %v4603 = vadd.f32 %v4442, %v4602
      %v4604 = vpop.f32.mrf.mxu0
      %4605 = vmatprep.mubr.bf16.mxu0 0
      %4606 = vmatmul.mubr.bf16.gmra.mxu0 %v4333
      %v4607 = vpop.f32.mrf.mxu0
      %v4608 = vadd.f32 %v4447, %v4607
      %v4609 = vpop.f32.mrf.mxu0
      %v4610 = vpop.f32.mrf.mxu0
      %v4611 = vadd.f32 %v4450, %v4610
      %v4612 = vpop.f32.mrf.mxu0
      %4613 = vmatprep.mubr.bf16.mxu0 0
      %4614 = vmatmul.mubr.bf16.gmra.mxu0 %v4336
      %v4615 = vpop.f32.mrf.mxu0
      %v4616 = vadd.f32 %v4455, %v4615
      %v4617 = vpop.f32.mrf.mxu0
      %v4618 = vpop.f32.mrf.mxu0
      %v4619 = vadd.f32 %v4458, %v4618
      %v4620 = vpop.f32.mrf.mxu0
      %4621 = vmatprep.mubr.bf16.mxu0 0
      %4622 = vmatmul.mubr.bf16.gmra.mxu0 %v4339
      %v4623 = vpop.f32.mrf.mxu0
      %v4624 = vadd.f32 %v4463, %v4623
      %v4625 = vpop.f32.mrf.mxu0
      %v4626 = vpop.f32.mrf.mxu0
      %v4627 = vadd.f32 %v4466, %v4626
      %v4628 = vpop.f32.mrf.mxu0
      %4629 = vmatprep.mubr.bf16.mxu0 0
      %4630 = vmatmul.mubr.bf16.gmra.mxu0 %v4342
      %v4631 = vpop.f32.mrf.mxu0
      %v4632 = vadd.f32 %v4471, %v4631
      %v4633 = vpop.f32.mrf.mxu0
      %v4634 = vpop.f32.mrf.mxu0
      %v4635 = vadd.f32 %v4474, %v4634
      %v4636 = vpop.f32.mrf.mxu0
      %4637 = vmatprep.mubr.bf16.mxu0 0
      %4638 = vmatmul.mubr.bf16.gmra.mxu0 %v4345
      %v4639 = vpop.f32.mrf.mxu0
      %v4640 = vadd.f32 %v4479, %v4639
      %v4641 = vpop.f32.mrf.mxu0
      %v4642 = vpop.f32.mrf.mxu0
      %v4643 = vadd.f32 %v4482, %v4642
      %v4644 = vpop.f32.mrf.mxu0
      %4645 = vmatprep.mubr.bf16.mxu0 0
      %4646 = vmatmul.mubr.bf16.gmra.mxu0 %v4348
      %v4647 = vpop.f32.mrf.mxu0
      %v4648 = vadd.f32 %v4487, %v4647
      %v4649 = vpop.f32.mrf.mxu0
      %v4650 = vpop.f32.mrf.mxu0
      %v4651 = vadd.f32 %v4490, %v4650
      %v4652 = vpop.f32.mrf.mxu0
      %4653 = vmatprep.mubr.bf16.mxu0 0
      %4654 = vmatmul.mubr.bf16.gmra.mxu0 %v4351
      %v4655 = vpop.f32.mrf.mxu0
      %v4656 = vadd.f32 %v4495, %v4655
      %v4657 = vpop.f32.mrf.mxu0
      %v4658 = vpop.f32.mrf.mxu0
      %v4659 = vadd.f32 %v4498, %v4658
      %v4660 = vpop.f32.mrf.mxu0
      %4661 = vmatprep.mubr.bf16.mxu0 0
      %4662 = vmatmul.mubr.bf16.gmra.mxu0 %v4354
      %v4663 = vpop.f32.mrf.mxu0
      %v4664 = vadd.f32 %v4503, %v4663
      %v4665 = vpop.f32.mrf.mxu0
      %v4666 = vpop.f32.mrf.mxu0
      %v4667 = vadd.f32 %v4506, %v4666
      %v4668 = vpop.f32.mrf.mxu0
      %4669 = vmatprep.mubr.bf16.mxu0 0
      %4670 = vmatmul.mubr.bf16.gmra.mxu0 %v1488
      %v4671 = vpop.f32.mrf.mxu0
      %v4672 = vadd.f32 %v4511, %v4671
      %v4673 = vpop.f32.mrf.mxu0
      %v4674 = vpop.f32.mrf.mxu0
      %v4675 = vadd.f32 %v4514, %v4674
      %v4676 = vpop.f32.mrf.mxu0
      %4677 = vdwg.mxu0
      %v4678 = vadd.f32 %v1686, %v4552
      %v4679 = vadd.f32 %v1689, %v4555
      %v4680 = vadd.f32 %v1694, %v4560
      %v4681 = vadd.f32 %v1697, %v4563
      %v4682 = vadd.f32 %v1702, %v4568
      %v4683 = vadd.f32 %v1705, %v4571
      %v4684 = vadd.f32 %v1710, %v4576
      %v4685 = vadd.f32 %v1713, %v4579
      %v4686 = vadd.f32 %v1718, %v4584
      %v4687 = vadd.f32 %v1721, %v4587
      %v4688 = vadd.f32 %v1726, %v4592
      %v4689 = vadd.f32 %v1729, %v4595
      %v4690 = vadd.f32 %v1734, %v4600
      %v4691 = vadd.f32 %v1737, %v4603
      %v4692 = vadd.f32 %v1742, %v4608
      %v4693 = vadd.f32 %v1745, %v4611
      %v4694 = vadd.f32 %v1750, %v4616
      %v4695 = vadd.f32 %v1753, %v4619
      %v4696 = vadd.f32 %v1758, %v4624
      %v4697 = vadd.f32 %v1761, %v4627
      %v4698 = vadd.f32 %v1766, %v4632
      %v4699 = vadd.f32 %v1769, %v4635
      %v4700 = vadd.f32 %v1774, %v4640
      %v4701 = vadd.f32 %v1777, %v4643
      %v4702 = vadd.f32 %v1782, %v4648
      %v4703 = vadd.f32 %v1785, %v4651
      %v4704 = vadd.f32 %v1790, %v4656
      %v4705 = vadd.f32 %v1793, %v4659
      %v4706 = vadd.f32 %v1798, %v4664
      %v4707 = vadd.f32 %v1801, %v4667
      %v4708 = vadd.f32 %v1806, %v4672
      %v4709 = vadd.f32 %v1809, %v4675
      %v4710 = vmax.f32 %v4678, 0.0
      %v4711 = vmax.f32 %v4679, 0.0
      %v4712 = vmax.f32 %v4680, 0.0
      %v4713 = vmax.f32 %v4681, 0.0
      %v4714 = vmax.f32 %v4682, 0.0
      %v4715 = vmax.f32 %v4683, 0.0
      %v4716 = vmax.f32 %v4684, 0.0
      %v4717 = vmax.f32 %v4685, 0.0
      %v4718 = vmax.f32 %v4686, 0.0
      %v4719 = vmax.f32 %v4687, 0.0
      %v4720 = vmax.f32 %v4688, 0.0
      %v4721 = vmax.f32 %v4689, 0.0
      %v4722 = vmax.f32 %v4690, 0.0
      %v4723 = vmax.f32 %v4691, 0.0
      %v4724 = vmax.f32 %v4692, 0.0
      %v4725 = vmax.f32 %v4693, 0.0
      %v4726 = vmax.f32 %v4694, 0.0
      %v4727 = vmax.f32 %v4695, 0.0
      %v4728 = vmax.f32 %v4696, 0.0
      %v4729 = vmax.f32 %v4697, 0.0
      %v4730 = vmax.f32 %v4698, 0.0
      %v4731 = vmax.f32 %v4699, 0.0
      %v4732 = vmax.f32 %v4700, 0.0
      %v4733 = vmax.f32 %v4701, 0.0
      %v4734 = vmax.f32 %v4702, 0.0
      %v4735 = vmax.f32 %v4703, 0.0
      %v4736 = vmax.f32 %v4704, 0.0
      %v4737 = vmax.f32 %v4705, 0.0
      %v4738 = vmax.f32 %v4706, 0.0
      %v4739 = vmax.f32 %v4707, 0.0
      %v4740 = vmax.f32 %v4708, 0.0
      %v4741 = vmax.f32 %v4709, 0.0
      %v4742 = vpack.c.bf16 %v4711, %v4710
      %v4743 = vpack.c.bf16 %v4713, %v4712
      %v4744 = vpack.c.bf16 %v4715, %v4714
      %v4745 = vpack.c.bf16 %v4717, %v4716
      %v4746 = vpack.c.bf16 %v4719, %v4718
      %v4747 = vpack.c.bf16 %v4721, %v4720
      %v4748 = vpack.c.bf16 %v4723, %v4722
      %v4749 = vpack.c.bf16 %v4725, %v4724
      %v4750 = vpack.c.bf16 %v4727, %v4726
      %v4751 = vpack.c.bf16 %v4729, %v4728
      %v4752 = vpack.c.bf16 %v4731, %v4730
      %v4753 = vpack.c.bf16 %v4733, %v4732
      %v4754 = vpack.c.bf16 %v4735, %v4734
      %v4755 = vpack.c.bf16 %v4737, %v4736
      %v4756 = vpack.c.bf16 %v4739, %v4738
      %v4757 = vpack.c.bf16 %v4741, %v4740
      %v4759 = vshrl.u32 %v4742, 16
      %v4761 = vrot.slane %v4759, 7
      %v4762 = vshll.u32 %v4742, 16
      %v4764 = vor.u32 %v4761, %v4762
      %v4766 = vshrl.u32 %v4743, 16
      %v4768 = vrot.slane %v4766, 7
      %v4769 = vshll.u32 %v4743, 16
      %v4771 = vor.u32 %v4768, %v4769
      %v4773 = vshrl.u32 %v4744, 16
      %v4775 = vrot.slane %v4773, 7
      %v4776 = vshll.u32 %v4744, 16
      %v4778 = vor.u32 %v4775, %v4776
      %v4780 = vshrl.u32 %v4745, 16
      %v4782 = vrot.slane %v4780, 7
      %v4783 = vshll.u32 %v4745, 16
      %v4785 = vor.u32 %v4782, %v4783
      %v4787 = vshrl.u32 %v4746, 16
      %v4789 = vrot.slane %v4787, 7
      %v4790 = vshll.u32 %v4746, 16
      %v4792 = vor.u32 %v4789, %v4790
      %v4794 = vshrl.u32 %v4747, 16
      %v4796 = vrot.slane %v4794, 7
      %v4797 = vshll.u32 %v4747, 16
      %v4799 = vor.u32 %v4796, %v4797
      %v4801 = vshrl.u32 %v4748, 16
      %v4803 = vrot.slane %v4801, 7
      %v4804 = vshll.u32 %v4748, 16
      %v4806 = vor.u32 %v4803, %v4804
      %v4808 = vshrl.u32 %v4749, 16
      %v4810 = vrot.slane %v4808, 7
      %v4811 = vshll.u32 %v4749, 16
      %v4813 = vor.u32 %v4810, %v4811
      %v4815 = vshrl.u32 %v4750, 16
      %v4817 = vrot.slane %v4815, 7
      %v4818 = vshll.u32 %v4750, 16
      %v4820 = vor.u32 %v4817, %v4818
      %v4822 = vshrl.u32 %v4751, 16
      %v4824 = vrot.slane %v4822, 7
      %v4825 = vshll.u32 %v4751, 16
      %v4827 = vor.u32 %v4824, %v4825
      %v4829 = vshrl.u32 %v4752, 16
      %v4831 = vrot.slane %v4829, 7
      %v4832 = vshll.u32 %v4752, 16
      %v4834 = vor.u32 %v4831, %v4832
      %v4836 = vshrl.u32 %v4753, 16
      %v4838 = vrot.slane %v4836, 7
      %v4839 = vshll.u32 %v4753, 16
      %v4841 = vor.u32 %v4838, %v4839
      %v4843 = vshrl.u32 %v4754, 16
      %v4845 = vrot.slane %v4843, 7
      %v4846 = vshll.u32 %v4754, 16
      %v4848 = vor.u32 %v4845, %v4846
      %v4850 = vshrl.u32 %v4755, 16
      %v4852 = vrot.slane %v4850, 7
      %v4853 = vshll.u32 %v4755, 16
      %v4855 = vor.u32 %v4852, %v4853
      %v4857 = vshrl.u32 %v4756, 16
      %v4859 = vrot.slane %v4857, 7
      %v4860 = vshll.u32 %v4756, 16
      %v4862 = vor.u32 %v4859, %v4860
      %v4864 = vshrl.u32 %v4757, 16
      %v4866 = vrot.slane %v4864, 7
      %v4867 = vshll.u32 %v4757, 16
      %v4869 = vor.u32 %v4866, %v4867
      %v4902 = vsel %vm538, 0, %v4764
      %v4903 = vsel %vm538, 0, %v4771
      %v4904 = vsel %vm538, 0, %v4778
      %v4905 = vsel %vm538, 0, %v4785
      %v4906 = vsel %vm538, 0, %v4792
      %v4907 = vsel %vm538, 0, %v4799
      %v4908 = vsel %vm538, 0, %v4806
      %v4909 = vsel %vm538, 0, %v4813
      %v4910 = vsel %vm538, 0, %v4820
      %v4911 = vsel %vm538, 0, %v4827
      %v4912 = vsel %vm538, 0, %v4834
      %v4913 = vsel %vm538, 0, %v4841
      %v4914 = vsel %vm538, 0, %v4848
      %v4915 = vsel %vm538, 0, %v4855
      %v4916 = vsel %vm538, 0, %v4862
      %v4917 = vsel %vm538, 0, %v4869
      %v4918 = vsel %vm538, %v4761, 0
      %v4919 = vsel %vm538, %v4768, 0
      %v4920 = vsel %vm538, %v4775, 0
      %v4921 = vsel %vm538, %v4782, 0
      %v4922 = vsel %vm538, %v4789, 0
      %v4923 = vsel %vm538, %v4796, 0
      %v4924 = vsel %vm538, %v4803, 0
      %v4925 = vsel %vm538, %v4810, 0
      %v4926 = vsel %vm538, %v4817, 0
      %v4927 = vsel %vm538, %v4824, 0
      %v4928 = vsel %vm538, %v4831, 0
      %v4929 = vsel %vm538, %v4838, 0
      %v4930 = vsel %vm538, %v4845, 0
      %v4931 = vsel %vm538, %v4852, 0
      %v4932 = vsel %vm538, %v4859, 0
      %v4933 = vsel %vm538, %v4866, 0
      %s4934 = scalar_lea.vmem %s3, 288
      %v4935 = vld [vmem:[%s4934] sm:$0xf]
      %v4936 = vld [vmem:[%s4934 + $0x4] sm:$0xf]
      %v4937 = vld [vmem:[%s4934 + $0x8] sm:$0xf]
      %v4938 = vld [vmem:[%s4934 + $0xc] sm:$0xf]
      %v4939 = vld [vmem:[%s4934 + $0x10] sm:$0xf]
      %v4940 = vld [vmem:[%s4934 + $0x14] sm:$0xf]
      %v4941 = vld [vmem:[%s4934 + $0x18] sm:$0xf]
      %v4942 = vld [vmem:[%s4934 + $0x1c] sm:$0xf]
      %v4943 = vld [vmem:[%s4934 + $0x20] sm:$0xf]
      %v4944 = vld [vmem:[%s4934 + $0x24] sm:$0xf]
      %v4945 = vld [vmem:[%s4934 + $0x28] sm:$0xf]
      %v4946 = vld [vmem:[%s4934 + $0x2c] sm:$0xf]
      %v4947 = vld [vmem:[%s4934 + $0x30] sm:$0xf]
      %v4948 = vld [vmem:[%s4934 + $0x34] sm:$0xf]
      %v4949 = vld [vmem:[%s4934 + $0x38] sm:$0xf]
      %v4950 = vld [vmem:[%s4934 + $0x3c] sm:$0xf]
      %v4951 = vld [vmem:[%s4934 + $0x40] sm:$0xf]
      %v4952 = vld [vmem:[%s4934 + $0x44] sm:$0xf]
      %v4953 = vld [vmem:[%s4934 + $0x48] sm:$0xf]
      %v4954 = vld [vmem:[%s4934 + $0x4c] sm:$0xf]
      %v4955 = vld [vmem:[%s4934 + $0x50] sm:$0xf]
      %v4956 = vld [vmem:[%s4934 + $0x54] sm:$0xf]
      %v4957 = vld [vmem:[%s4934 + $0x58] sm:$0xf]
      %v4958 = vld [vmem:[%s4934 + $0x5c] sm:$0xf]
      %v4959 = vld [vmem:[%s4934 + $0x60] sm:$0xf]
      %v4960 = vld [vmem:[%s4934 + $0x64] sm:$0xf]
      %v4961 = vld [vmem:[%s4934 + $0x68] sm:$0xf]
      %v4962 = vld [vmem:[%s4934 + $0x6c] sm:$0xf]
      %v4963 = vld [vmem:[%s4934 + $0x70] sm:$0xf]
      %v4964 = vld [vmem:[%s4934 + $0x74] sm:$0xf]
      %v4965 = vld [vmem:[%s4934 + $0x78] sm:$0xf]
      %v4966 = vld [vmem:[%s4934 + $0x7c] sm:$0xf]
      %v4967 = vld [vmem:[%s4934 + $0x80] sm:$0xf]
      %v4968 = vld [vmem:[%s4934 + $0x84] sm:$0xf]
      %v4969 = vld [vmem:[%s4934 + $0x88] sm:$0xf]
      %v4970 = vld [vmem:[%s4934 + $0x8c] sm:$0xf]
      %s4971 = scalar_lea.vmem %s4, 2
      %v4972 = vld [vmem:[%s4971] sm:$0x1]
      %v4974 = vshrl.u32 %v4902, 16
      %v4976 = vshll.u32 %v4902, 16
      %v4978 = vrot.slane %v4976, 1
      %v4979 = vor.u32 %v4974, %v4978
      %v4981 = vshll.u32 %v4918, 16
      %v4983 = vrot.slane %v4981, 1
      %v4984 = vsel %vm608, %v4979, %v4983
      %v4986 = vshrl.u32 %v4903, 16
      %v4988 = vshll.u32 %v4903, 16
      %v4990 = vrot.slane %v4988, 1
      %v4991 = vor.u32 %v4986, %v4990
      %v4993 = vshll.u32 %v4919, 16
      %v4995 = vrot.slane %v4993, 1
      %v4996 = vsel %vm608, %v4991, %v4995
      %v4998 = vshrl.u32 %v4904, 16
      %v5000 = vshll.u32 %v4904, 16
      %v5002 = vrot.slane %v5000, 1
      %v5003 = vor.u32 %v4998, %v5002
      %v5005 = vshll.u32 %v4920, 16
      %v5007 = vrot.slane %v5005, 1
      %v5008 = vsel %vm608, %v5003, %v5007
      %v5010 = vshrl.u32 %v4905, 16
      %v5012 = vshll.u32 %v4905, 16
      %v5014 = vrot.slane %v5012, 1
      %v5015 = vor.u32 %v5010, %v5014
      %v5017 = vshll.u32 %v4921, 16
      %v5019 = vrot.slane %v5017, 1
      %v5020 = vsel %vm608, %v5015, %v5019
      %v5022 = vshrl.u32 %v4906, 16
      %v5024 = vshll.u32 %v4906, 16
      %v5026 = vrot.slane %v5024, 1
      %v5027 = vor.u32 %v5022, %v5026
      %v5029 = vshll.u32 %v4922, 16
      %v5031 = vrot.slane %v5029, 1
      %v5032 = vsel %vm608, %v5027, %v5031
      %v5034 = vshrl.u32 %v4907, 16
      %v5036 = vshll.u32 %v4907, 16
      %v5038 = vrot.slane %v5036, 1
      %v5039 = vor.u32 %v5034, %v5038
      %v5041 = vshll.u32 %v4923, 16
      %v5043 = vrot.slane %v5041, 1
      %v5044 = vsel %vm608, %v5039, %v5043
      %v5046 = vshrl.u32 %v4908, 16
      %v5048 = vshll.u32 %v4908, 16
      %v5050 = vrot.slane %v5048, 1
      %v5051 = vor.u32 %v5046, %v5050
      %v5053 = vshll.u32 %v4924, 16
      %v5055 = vrot.slane %v5053, 1
      %v5056 = vsel %vm608, %v5051, %v5055
      %v5058 = vshrl.u32 %v4909, 16
      %v5060 = vshll.u32 %v4909, 16
      %v5062 = vrot.slane %v5060, 1
      %v5063 = vor.u32 %v5058, %v5062
      %v5065 = vshll.u32 %v4925, 16
      %v5067 = vrot.slane %v5065, 1
      %v5068 = vsel %vm608, %v5063, %v5067
      %v5070 = vshrl.u32 %v4910, 16
      %v5072 = vshll.u32 %v4910, 16
      %v5074 = vrot.slane %v5072, 1
      %v5075 = vor.u32 %v5070, %v5074
      %v5077 = vshll.u32 %v4926, 16
      %v5079 = vrot.slane %v5077, 1
      %v5080 = vsel %vm608, %v5075, %v5079
      %v5082 = vshrl.u32 %v4911, 16
      %v5084 = vshll.u32 %v4911, 16
      %v5086 = vrot.slane %v5084, 1
      %v5087 = vor.u32 %v5082, %v5086
      %v5089 = vshll.u32 %v4927, 16
      %v5091 = vrot.slane %v5089, 1
      %v5092 = vsel %vm608, %v5087, %v5091
      %v5094 = vshrl.u32 %v4912, 16
      %v5096 = vshll.u32 %v4912, 16
      %v5098 = vrot.slane %v5096, 1
      %v5099 = vor.u32 %v5094, %v5098
      %v5101 = vshll.u32 %v4928, 16
      %v5103 = vrot.slane %v5101, 1
      %v5104 = vsel %vm608, %v5099, %v5103
      %v5106 = vshrl.u32 %v4913, 16
      %v5108 = vshll.u32 %v4913, 16
      %v5110 = vrot.slane %v5108, 1
      %v5111 = vor.u32 %v5106, %v5110
      %v5113 = vshll.u32 %v4929, 16
      %v5115 = vrot.slane %v5113, 1
      %v5116 = vsel %vm608, %v5111, %v5115
      %v5118 = vshrl.u32 %v4914, 16
      %v5120 = vshll.u32 %v4914, 16
      %v5122 = vrot.slane %v5120, 1
      %v5123 = vor.u32 %v5118, %v5122
      %v5125 = vshll.u32 %v4930, 16
      %v5127 = vrot.slane %v5125, 1
      %v5128 = vsel %vm608, %v5123, %v5127
      %v5130 = vshrl.u32 %v4915, 16
      %v5132 = vshll.u32 %v4915, 16
      %v5134 = vrot.slane %v5132, 1
      %v5135 = vor.u32 %v5130, %v5134
      %v5137 = vshll.u32 %v4931, 16
      %v5139 = vrot.slane %v5137, 1
      %v5140 = vsel %vm608, %v5135, %v5139
      %v5142 = vshrl.u32 %v4916, 16
      %v5144 = vshll.u32 %v4916, 16
      %v5146 = vrot.slane %v5144, 1
      %v5147 = vor.u32 %v5142, %v5146
      %v5149 = vshll.u32 %v4932, 16
      %v5151 = vrot.slane %v5149, 1
      %v5152 = vsel %vm608, %v5147, %v5151
      %v5154 = vshrl.u32 %v4917, 16
      %v5156 = vshll.u32 %v4917, 16
      %v5158 = vrot.slane %v5156, 1
      %v5159 = vor.u32 %v5154, %v5158
      %v5161 = vshll.u32 %v4933, 16
      %v5163 = vrot.slane %v5161, 1
      %v5164 = vsel %vm608, %v5159, %v5163
      %v5197 = vrot.slane %v4902, 1
      %v5198 = vrot.slane %v4918, 1
      %v5199 = vsel %vm842, %v5197, %v5198
      %v5200 = vrot.slane %v4903, 1
      %v5201 = vrot.slane %v4919, 1
      %v5202 = vsel %vm842, %v5200, %v5201
      %v5203 = vrot.slane %v4904, 1
      %v5204 = vrot.slane %v4920, 1
      %v5205 = vsel %vm842, %v5203, %v5204
      %v5206 = vrot.slane %v4905, 1
      %v5207 = vrot.slane %v4921, 1
      %v5208 = vsel %vm842, %v5206, %v5207
      %v5209 = vrot.slane %v4906, 1
      %v5210 = vrot.slane %v4922, 1
      %v5211 = vsel %vm842, %v5209, %v5210
      %v5212 = vrot.slane %v4907, 1
      %v5213 = vrot.slane %v4923, 1
      %v5214 = vsel %vm842, %v5212, %v5213
      %v5215 = vrot.slane %v4908, 1
      %v5216 = vrot.slane %v4924, 1
      %v5217 = vsel %vm842, %v5215, %v5216
      %v5218 = vrot.slane %v4909, 1
      %v5219 = vrot.slane %v4925, 1
      %v5220 = vsel %vm842, %v5218, %v5219
      %v5221 = vrot.slane %v4910, 1
      %v5222 = vrot.slane %v4926, 1
      %v5223 = vsel %vm842, %v5221, %v5222
      %v5224 = vrot.slane %v4911, 1
      %v5225 = vrot.slane %v4927, 1
      %v5226 = vsel %vm842, %v5224, %v5225
      %v5227 = vrot.slane %v4912, 1
      %v5228 = vrot.slane %v4928, 1
      %v5229 = vsel %vm842, %v5227, %v5228
      %v5230 = vrot.slane %v4913, 1
      %v5231 = vrot.slane %v4929, 1
      %v5232 = vsel %vm842, %v5230, %v5231
      %v5233 = vrot.slane %v4914, 1
      %v5234 = vrot.slane %v4930, 1
      %v5235 = vsel %vm842, %v5233, %v5234
      %v5236 = vrot.slane %v4915, 1
      %v5237 = vrot.slane %v4931, 1
      %v5238 = vsel %vm842, %v5236, %v5237
      %v5239 = vrot.slane %v4916, 1
      %v5240 = vrot.slane %v4932, 1
      %v5241 = vsel %vm842, %v5239, %v5240
      %v5242 = vrot.slane %v4917, 1
      %v5243 = vrot.slane %v4933, 1
      %v5244 = vsel %vm842, %v5242, %v5243
      %5245 = vrot.lane.b32.xlu0 %v4984, 32
      %v5246 = vpop.permute.xlu0 %5245
      %5247 = vrot.lane.b32.xlu0 %v4996, 32
      %v5248 = vpop.permute.xlu0 %5247
      %5249 = vrot.lane.b32.xlu0 %v5008, 32
      %v5250 = vpop.permute.xlu0 %5249
      %5251 = vrot.lane.b32.xlu0 %v5020, 32
      %v5252 = vpop.permute.xlu0 %5251
      %5253 = vrot.lane.b32.xlu0 %v5032, 32
      %v5254 = vpop.permute.xlu0 %5253
      %5255 = vrot.lane.b32.xlu0 %v5044, 32
      %v5256 = vpop.permute.xlu0 %5255
      %5257 = vrot.lane.b32.xlu0 %v5056, 32
      %v5258 = vpop.permute.xlu0 %5257
      %5259 = vrot.lane.b32.xlu0 %v5068, 32
      %v5260 = vpop.permute.xlu0 %5259
      %5261 = vrot.lane.b32.xlu0 %v5080, 32
      %v5262 = vpop.permute.xlu0 %5261
      %5263 = vrot.lane.b32.xlu0 %v5092, 32
      %v5264 = vpop.permute.xlu0 %5263
      %5265 = vrot.lane.b32.xlu0 %v5104, 32
      %v5266 = vpop.permute.xlu0 %5265
      %5267 = vrot.lane.b32.xlu0 %v5116, 32
      %v5268 = vpop.permute.xlu0 %5267
      %5269 = vrot.lane.b32.xlu0 %v5128, 32
      %v5270 = vpop.permute.xlu0 %5269
      %5271 = vrot.lane.b32.xlu0 %v5140, 32
      %v5272 = vpop.permute.xlu0 %5271
      %5273 = vrot.lane.b32.xlu0 %v5152, 32
      %v5274 = vpop.permute.xlu0 %5273
      %5275 = vrot.lane.b32.xlu0 %v5199, 64
      %v5276 = vpop.permute.xlu0 %5275
      %5277 = vrot.lane.b32.xlu0 %v5202, 64
      %v5278 = vpop.permute.xlu0 %5277
      %5279 = vrot.lane.b32.xlu0 %v5205, 64
      %v5280 = vpop.permute.xlu0 %5279
      %5281 = vrot.lane.b32.xlu0 %v5208, 64
      %v5282 = vpop.permute.xlu0 %5281
      %5283 = vrot.lane.b32.xlu0 %v5211, 64
      %v5284 = vpop.permute.xlu0 %5283
      %5285 = vrot.lane.b32.xlu0 %v5214, 64
      %v5286 = vpop.permute.xlu0 %5285
      %5287 = vrot.lane.b32.xlu0 %v5217, 64
      %v5288 = vpop.permute.xlu0 %5287
      %5289 = vrot.lane.b32.xlu0 %v5220, 64
      %v5290 = vpop.permute.xlu0 %5289
      %5291 = vrot.lane.b32.xlu0 %v5223, 64
      %v5292 = vpop.permute.xlu0 %5291
      %5293 = vrot.lane.b32.xlu0 %v5226, 64
      %v5294 = vpop.permute.xlu0 %5293
      %5295 = vrot.lane.b32.xlu0 %v5229, 64
      %v5296 = vpop.permute.xlu0 %5295
      %5297 = vrot.lane.b32.xlu0 %v5232, 64
      %v5298 = vpop.permute.xlu0 %5297
      %5299 = vrot.lane.b32.xlu0 %v5235, 64
      %v5300 = vpop.permute.xlu0 %5299
      %5301 = vrot.lane.b32.xlu0 %v5238, 64
      %v5302 = vpop.permute.xlu0 %5301
      %5303 = vrot.lane.b32.xlu0 %v5241, 64
      %v5304 = vpop.permute.xlu0 %5303
      %5305 = vrot.lane.b32.xlu0 %v4902, 96
      %v5306 = vpop.permute.xlu0 %5305
      %5307 = vrot.lane.b32.xlu0 %v4903, 96
      %v5308 = vpop.permute.xlu0 %5307
      %5309 = vrot.lane.b32.xlu0 %v4904, 96
      %v5310 = vpop.permute.xlu0 %5309
      %5311 = vrot.lane.b32.xlu0 %v4905, 96
      %v5312 = vpop.permute.xlu0 %5311
      %5313 = vrot.lane.b32.xlu0 %v4906, 96
      %v5314 = vpop.permute.xlu0 %5313
      %5315 = vrot.lane.b32.xlu0 %v4907, 96
      %v5316 = vpop.permute.xlu0 %5315
      %5317 = vrot.lane.b32.xlu0 %v4908, 96
      %v5318 = vpop.permute.xlu0 %5317
      %5319 = vrot.lane.b32.xlu0 %v4909, 96
      %v5320 = vpop.permute.xlu0 %5319
      %5321 = vrot.lane.b32.xlu0 %v4910, 96
      %v5322 = vpop.permute.xlu0 %5321
      %5323 = vrot.lane.b32.xlu0 %v4911, 96
      %v5324 = vpop.permute.xlu0 %5323
      %5325 = vrot.lane.b32.xlu0 %v4912, 96
      %v5326 = vpop.permute.xlu0 %5325
      %5327 = vrot.lane.b32.xlu0 %v4913, 96
      %v5328 = vpop.permute.xlu0 %5327
      %5329 = vrot.lane.b32.xlu0 %v4914, 96
      %v5330 = vpop.permute.xlu0 %5329
      %5331 = vrot.lane.b32.xlu0 %v4915, 96
      %v5332 = vpop.permute.xlu0 %5331
      %5333 = vrot.lane.b32.xlu0 %v4916, 96
      %v5334 = vpop.permute.xlu0 %5333
      %5335 = vrot.lane.b32.xlu0 %v4917, 96
      %v5336 = vpop.permute.xlu0 %5335
      %5337 = vrot.lane.b32.xlu0 %v5199, 32
      %v5338 = vpop.permute.xlu0 %5337
      %5339 = vrot.lane.b32.xlu0 %v5202, 32
      %v5340 = vpop.permute.xlu0 %5339
      %5341 = vrot.lane.b32.xlu0 %v5205, 32
      %v5342 = vpop.permute.xlu0 %5341
      %5343 = vrot.lane.b32.xlu0 %v5208, 32
      %v5344 = vpop.permute.xlu0 %5343
      %5345 = vrot.lane.b32.xlu0 %v5211, 32
      %v5346 = vpop.permute.xlu0 %5345
      %5347 = vrot.lane.b32.xlu0 %v5214, 32
      %v5348 = vpop.permute.xlu0 %5347
      %5349 = vrot.lane.b32.xlu0 %v5217, 32
      %v5350 = vpop.permute.xlu0 %5349
      %5351 = vrot.lane.b32.xlu0 %v5220, 32
      %v5352 = vpop.permute.xlu0 %5351
      %5353 = vrot.lane.b32.xlu0 %v5223, 32
      %v5354 = vpop.permute.xlu0 %5353
      %5355 = vrot.lane.b32.xlu0 %v5226, 32
      %v5356 = vpop.permute.xlu0 %5355
      %5357 = vrot.lane.b32.xlu0 %v5229, 32
      %v5358 = vpop.permute.xlu0 %5357
      %5359 = vrot.lane.b32.xlu0 %v5232, 32
      %v5360 = vpop.permute.xlu0 %5359
      %5361 = vrot.lane.b32.xlu0 %v5235, 32
      %v5362 = vpop.permute.xlu0 %5361
      %5363 = vrot.lane.b32.xlu0 %v5238, 32
      %v5364 = vpop.permute.xlu0 %5363
      %5365 = vrot.lane.b32.xlu0 %v5241, 32
      %v5366 = vpop.permute.xlu0 %5365
      %5367 = vrot.lane.b32.xlu0 %v5244, 32
      %v5368 = vpop.permute.xlu0 %5367
      %5369 = vrot.lane.b32.xlu0 %v4903, 64
      %v5370 = vpop.permute.xlu0 %5369
      %5371 = vrot.lane.b32.xlu0 %v4904, 64
      %v5372 = vpop.permute.xlu0 %5371
      %5373 = vrot.lane.b32.xlu0 %v4905, 64
      %v5374 = vpop.permute.xlu0 %5373
      %5375 = vrot.lane.b32.xlu0 %v4906, 64
      %v5376 = vpop.permute.xlu0 %5375
      %5377 = vrot.lane.b32.xlu0 %v4907, 64
      %v5378 = vpop.permute.xlu0 %5377
      %5379 = vrot.lane.b32.xlu0 %v4908, 64
      %v5380 = vpop.permute.xlu0 %5379
      %5381 = vrot.lane.b32.xlu0 %v4909, 64
      %v5382 = vpop.permute.xlu0 %5381
      %5383 = vrot.lane.b32.xlu0 %v4910, 64
      %v5384 = vpop.permute.xlu0 %5383
      %5385 = vrot.lane.b32.xlu0 %v4911, 64
      %v5386 = vpop.permute.xlu0 %5385
      %5387 = vrot.lane.b32.xlu0 %v4912, 64
      %v5388 = vpop.permute.xlu0 %5387
      %5389 = vrot.lane.b32.xlu0 %v4913, 64
      %v5390 = vpop.permute.xlu0 %5389
      %5391 = vrot.lane.b32.xlu0 %v4914, 64
      %v5392 = vpop.permute.xlu0 %5391
      %5393 = vrot.lane.b32.xlu0 %v4915, 64
      %v5394 = vpop.permute.xlu0 %5393
      %5395 = vrot.lane.b32.xlu0 %v4916, 64
      %v5396 = vpop.permute.xlu0 %5395
      %5397 = vrot.lane.b32.xlu0 %v4917, 64
      %v5398 = vpop.permute.xlu0 %5397
      %5399 = vrot.lane.b32.xlu0 %v4996, 96
      %v5400 = vpop.permute.xlu0 %5399
      %5401 = vrot.lane.b32.xlu0 %v5008, 96
      %v5402 = vpop.permute.xlu0 %5401
      %5403 = vrot.lane.b32.xlu0 %v5020, 96
      %v5404 = vpop.permute.xlu0 %5403
      %5405 = vrot.lane.b32.xlu0 %v5032, 96
      %v5406 = vpop.permute.xlu0 %5405
      %5407 = vrot.lane.b32.xlu0 %v5044, 96
      %v5408 = vpop.permute.xlu0 %5407
      %5409 = vrot.lane.b32.xlu0 %v5056, 96
      %v5410 = vpop.permute.xlu0 %5409
      %5411 = vrot.lane.b32.xlu0 %v5068, 96
      %v5412 = vpop.permute.xlu0 %5411
      %5413 = vrot.lane.b32.xlu0 %v5080, 96
      %v5414 = vpop.permute.xlu0 %5413
      %5415 = vrot.lane.b32.xlu0 %v5092, 96
      %v5416 = vpop.permute.xlu0 %5415
      %5417 = vrot.lane.b32.xlu0 %v5104, 96
      %v5418 = vpop.permute.xlu0 %5417
      %5419 = vrot.lane.b32.xlu0 %v5116, 96
      %v5420 = vpop.permute.xlu0 %5419
      %5421 = vrot.lane.b32.xlu0 %v5128, 96
      %v5422 = vpop.permute.xlu0 %5421
      %5423 = vrot.lane.b32.xlu0 %v5140, 96
      %v5424 = vpop.permute.xlu0 %5423
      %5425 = vrot.lane.b32.xlu0 %v5152, 96
      %v5426 = vpop.permute.xlu0 %5425
      %5427 = vrot.lane.b32.xlu0 %v5164, 96
      %v5428 = vpop.permute.xlu0 %5427
      %v5430 = vsel %vm1085, %v4902, %v5246
      %v5432 = vsel %vm1085, %v4903, %v5248
      %v5434 = vsel %vm1085, %v4904, %v5250
      %v5436 = vsel %vm1085, %v4905, %v5252
      %v5438 = vsel %vm1085, %v4906, %v5254
      %v5440 = vsel %vm1085, %v4907, %v5256
      %v5442 = vsel %vm1085, %v4908, %v5258
      %v5444 = vsel %vm1085, %v4909, %v5260
      %v5446 = vsel %vm1085, %v4910, %v5262
      %v5448 = vsel %vm1085, %v4911, %v5264
      %v5450 = vsel %vm1085, %v4912, %v5266
      %v5452 = vsel %vm1085, %v4913, %v5268
      %v5454 = vsel %vm1085, %v4914, %v5270
      %v5456 = vsel %vm1085, %v4915, %v5272
      %v5458 = vsel %vm1085, %v4916, %v5274
      %v5460 = vsel %vm1118, %v5430, %v5276
      %v5462 = vsel %vm1118, %v5432, %v5278
      %v5464 = vsel %vm1118, %v5434, %v5280
      %v5466 = vsel %vm1118, %v5436, %v5282
      %v5468 = vsel %vm1118, %v5438, %v5284
      %v5470 = vsel %vm1118, %v5440, %v5286
      %v5472 = vsel %vm1118, %v5442, %v5288
      %v5474 = vsel %vm1118, %v5444, %v5290
      %v5476 = vsel %vm1118, %v5446, %v5292
      %v5478 = vsel %vm1118, %v5448, %v5294
      %v5480 = vsel %vm1118, %v5450, %v5296
      %v5482 = vsel %vm1118, %v5452, %v5298
      %v5484 = vsel %vm1118, %v5454, %v5300
      %v5486 = vsel %vm1118, %v5456, %v5302
      %v5488 = vsel %vm1118, %v5458, %v5304
      %v5490 = vsel %vm1151, %v1120, %v5306
      %v5493 = vsel %vm1151, %v5460, %v5308
      %v5496 = vsel %vm1151, %v5462, %v5310
      %v5499 = vsel %vm1151, %v5464, %v5312
      %v5502 = vsel %vm1151, %v5466, %v5314
      %v5505 = vsel %vm1151, %v5468, %v5316
      %v5508 = vsel %vm1151, %v5470, %v5318
      %v5511 = vsel %vm1151, %v5472, %v5320
      %v5514 = vsel %vm1151, %v5474, %v5322
      %v5517 = vsel %vm1151, %v5476, %v5324
      %v5520 = vsel %vm1151, %v5478, %v5326
      %v5523 = vsel %vm1151, %v5480, %v5328
      %v5526 = vsel %vm1151, %v5482, %v5330
      %v5529 = vsel %vm1151, %v5484, %v5332
      %v5532 = vsel %vm1151, %v5486, %v5334
      %v5535 = vsel %vm1151, %v5488, %v5336
      %v5539 = vsel %vm1085, %v4984, %v5338
      %v5542 = vsel %vm1085, %v4996, %v5340
      %v5545 = vsel %vm1085, %v5008, %v5342
      %v5548 = vsel %vm1085, %v5020, %v5344
      %v5551 = vsel %vm1085, %v5032, %v5346
      %v5554 = vsel %vm1085, %v5044, %v5348
      %v5557 = vsel %vm1085, %v5056, %v5350
      %v5560 = vsel %vm1085, %v5068, %v5352
      %v5563 = vsel %vm1085, %v5080, %v5354
      %v5566 = vsel %vm1085, %v5092, %v5356
      %v5569 = vsel %vm1085, %v5104, %v5358
      %v5572 = vsel %vm1085, %v5116, %v5360
      %v5575 = vsel %vm1085, %v5128, %v5362
      %v5578 = vsel %vm1085, %v5140, %v5364
      %v5581 = vsel %vm1085, %v5152, %v5366
      %v5584 = vsel %vm1085, %v5164, %v5368
      %v5586 = vsel %vm1118, %v5539, %v5370
      %v5588 = vsel %vm1118, %v5542, %v5372
      %v5590 = vsel %vm1118, %v5545, %v5374
      %v5592 = vsel %vm1118, %v5548, %v5376
      %v5594 = vsel %vm1118, %v5551, %v5378
      %v5596 = vsel %vm1118, %v5554, %v5380
      %v5598 = vsel %vm1118, %v5557, %v5382
      %v5600 = vsel %vm1118, %v5560, %v5384
      %v5602 = vsel %vm1118, %v5563, %v5386
      %v5604 = vsel %vm1118, %v5566, %v5388
      %v5606 = vsel %vm1118, %v5569, %v5390
      %v5608 = vsel %vm1118, %v5572, %v5392
      %v5610 = vsel %vm1118, %v5575, %v5394
      %v5612 = vsel %vm1118, %v5578, %v5396
      %v5614 = vsel %vm1118, %v5581, %v5398
      %v5615 = vsel %vm1118, %v5584, %v1052
      %v5617 = vsel %vm1151, %v5586, %v5400
      %v5620 = vsel %vm1151, %v5588, %v5402
      %v5623 = vsel %vm1151, %v5590, %v5404
      %v5626 = vsel %vm1151, %v5592, %v5406
      %v5629 = vsel %vm1151, %v5594, %v5408
      %v5632 = vsel %vm1151, %v5596, %v5410
      %v5635 = vsel %vm1151, %v5598, %v5412
      %v5638 = vsel %vm1151, %v5600, %v5414
      %v5641 = vsel %vm1151, %v5602, %v5416
      %v5644 = vsel %vm1151, %v5604, %v5418
      %v5647 = vsel %vm1151, %v5606, %v5420
      %v5650 = vsel %vm1151, %v5608, %v5422
      %v5653 = vsel %vm1151, %v5610, %v5424
      %v5656 = vsel %vm1151, %v5612, %v5426
      %v5659 = vsel %vm1151, %v5614, %v5428
      %v5661 = vsel %vm1151, %v5615, %v1084
      %v5664 = vlaneseq
      %v5665 = vshrl.u32 %v5664, 7
      %v5666 = vsub.s32 0, %v5665
      %v5667 = vrot.slane %v4972, %v5666
      %v5705 = vunpack.c.l.b16 %v4935
      %v5706 = vunpack.c.l.b16 %v4936
      %v5707 = vunpack.c.l.b16 %v4937
      %v5708 = vunpack.c.l.b16 %v4938
      %v5709 = vunpack.c.l.b16 %v4939
      %v5710 = vunpack.c.l.b16 %v4940
      %v5711 = vunpack.c.l.b16 %v4941
      %v5712 = vunpack.c.l.b16 %v4942
      %v5713 = vunpack.c.l.b16 %v4943
      %v5714 = vunpack.c.l.b16 %v4944
      %v5715 = vunpack.c.l.b16 %v4945
      %v5716 = vunpack.c.l.b16 %v4946
      %v5717 = vunpack.c.l.b16 %v4947
      %v5718 = vunpack.c.l.b16 %v4948
      %v5719 = vunpack.c.l.b16 %v4949
      %v5720 = vunpack.c.l.b16 %v4950
      %v5721 = vunpack.c.l.b16 %v4951
      %v5722 = vunpack.c.l.b16 %v4952
      %v5723 = vunpack.c.l.b16 %v4953
      %v5724 = vunpack.c.l.b16 %v4954
      %v5725 = vunpack.c.l.b16 %v4955
      %v5726 = vunpack.c.l.b16 %v4956
      %v5727 = vunpack.c.l.b16 %v4957
      %v5728 = vunpack.c.l.b16 %v4958
      %v5729 = vunpack.c.l.b16 %v4959
      %v5730 = vunpack.c.l.b16 %v4960
      %v5731 = vunpack.c.l.b16 %v4961
      %v5732 = vunpack.c.l.b16 %v4962
      %v5733 = vunpack.c.l.b16 %v4963
      %v5734 = vunpack.c.l.b16 %v4964
      %v5735 = vunpack.c.l.b16 %v4965
      %v5736 = vunpack.c.l.b16 %v4966
      %v5737 = vunpack.c.l.b16 %v4967
      %v5738 = vunpack.c.l.b16 %v4968
      %v5739 = vunpack.c.l.b16 %v4969
      %v5740 = vunpack.c.l.b16 %v4970
      %v5741 = vpack.c.b16 %v5706, %v5705
      %v5742 = vpack.c.b16 %v5708, %v5707
      %v5743 = vpack.c.b16 %v5710, %v5709
      %v5744 = vpack.c.b16 %v5712, %v5711
      %v5745 = vpack.c.b16 %v5714, %v5713
      %v5746 = vpack.c.b16 %v5716, %v5715
      %v5747 = vpack.c.b16 %v5718, %v5717
      %v5748 = vpack.c.b16 %v5720, %v5719
      %v5749 = vpack.c.b16 %v5722, %v5721
      %v5750 = vpack.c.b16 %v5724, %v5723
      %v5751 = vpack.c.b16 %v5726, %v5725
      %v5752 = vpack.c.b16 %v5728, %v5727
      %v5753 = vpack.c.b16 %v5730, %v5729
      %v5754 = vpack.c.b16 %v5732, %v5731
      %v5755 = vpack.c.b16 %v5734, %v5733
      %v5756 = vpack.c.b16 %v5736, %v5735
      %v5757 = vpack.c.b16 %v5738, %v5737
      %v5758 = vpack.c.b16 %v5740, %v5739
      %v5778 = vsel %vm1085, %v5202, 0
      %v5781 = vsel %vm1085, %v5205, 0
      %v5784 = vsel %vm1085, %v5208, 0
      %v5787 = vsel %vm1085, %v5211, 0
      %v5790 = vsel %vm1085, %v5214, 0
      %v5793 = vsel %vm1085, %v5217, 0
      %v5796 = vsel %vm1085, %v5220, 0
      %v5799 = vsel %vm1085, %v5223, 0
      %v5802 = vsel %vm1085, %v5226, 0
      %v5805 = vsel %vm1085, %v5229, 0
      %v5808 = vsel %vm1085, %v5232, 0
      %v5811 = vsel %vm1085, %v5235, 0
      %v5814 = vsel %vm1085, %v5238, 0
      %v5817 = vsel %vm1085, %v5241, 0
      %v5820 = vsel %vm1085, %v5244, 0
      %5822 = vmatprep.subr.bf16.mxu0 0
      %5823 = vmatpush1.bf16.msra.mxu0 %v5748
      %5824 = vmatprep.subr.bf16.mxu0 0
      %5825 = vmatpush1.bf16.msra.mxu0 %v5747
      %5826 = vmatprep.subr.bf16.mxu0 0
      %5827 = vmatpush1.bf16.msra.mxu0 %v5746
      %5828 = vmatprep.subr.bf16.mxu0 0
      %5829 = vmatpush1.bf16.msra.mxu0 %v5745
      %5830 = vmatprep.subr.bf16.mxu0 0
      %5831 = vmatpush1.bf16.msra.mxu0 %v5744
      %5832 = vmatprep.subr.bf16.mxu0 0
      %5833 = vmatpush1.bf16.msra.mxu0 %v5743
      %5834 = vmatprep.subr.bf16.mxu0 0
      %5835 = vmatpush1.bf16.msra.mxu0 %v5742
      %5836 = vmatprep.subr.bf16.mxu0 0
      %5837 = vmatpush1.bf16.msra.mxu0 %v5741
      %5838 = vmatprep.subr.bf16.mxu0 0
      %5839 = vmatpush2.bf16.msra.mxu0 %v5756
      %5840 = vmatprep.subr.bf16.mxu0 0
      %5841 = vmatpush2.bf16.msra.mxu0 %v5755
      %5842 = vmatprep.subr.bf16.mxu0 0
      %5843 = vmatpush2.bf16.msra.mxu0 %v5754
      %5844 = vmatprep.subr.bf16.mxu0 0
      %5845 = vmatpush2.bf16.msra.mxu0 %v5753
      %5846 = vmatprep.subr.bf16.mxu0 0
      %5847 = vmatpush2.bf16.msra.mxu0 %v5752
      %5848 = vmatprep.subr.bf16.mxu0 0
      %5849 = vmatpush2.bf16.msra.mxu0 %v5751
      %5850 = vmatprep.subr.bf16.mxu0 0
      %5851 = vmatpush2.bf16.msra.mxu0 %v5750
      %5852 = vmatprep.subr.bf16.mxu0 0
      %5853 = vmatpush2.bf16.msra.mxu0 %v5749
      %5854 = vmatprep.mubr.bf16.mxu0 %v5617
      %5855 = vmatmul.mubr.bf16.gmra.mxu0 %v5490
      %v5856 = vpop.f32.mrf.mxu0
      %v5857 = vadd.f32 %v5667, %v5856
      %v5858 = vpop.f32.mrf.mxu0
      %v5859 = vpop.f32.mrf.mxu0
      %v5860 = vadd.f32 %v5667, %v5859
      %v5861 = vpop.f32.mrf.mxu0
      %5862 = vmatprep.mubr.bf16.mxu0 %v5620
      %5863 = vmatmul.mubr.bf16.gmra.mxu0 %v5493
      %v5864 = vpop.f32.mrf.mxu0
      %v5865 = vadd.f32 %v5667, %v5864
      %v5866 = vpop.f32.mrf.mxu0
      %v5867 = vpop.f32.mrf.mxu0
      %v5868 = vadd.f32 %v5667, %v5867
      %v5869 = vpop.f32.mrf.mxu0
      %5870 = vmatprep.mubr.bf16.mxu0 %v5623
      %5871 = vmatmul.mubr.bf16.gmra.mxu0 %v5496
      %v5872 = vpop.f32.mrf.mxu0
      %v5873 = vadd.f32 %v5667, %v5872
      %v5874 = vpop.f32.mrf.mxu0
      %v5875 = vpop.f32.mrf.mxu0
      %v5876 = vadd.f32 %v5667, %v5875
      %v5877 = vpop.f32.mrf.mxu0
      %5878 = vmatprep.mubr.bf16.mxu0 %v5626
      %5879 = vmatmul.mubr.bf16.gmra.mxu0 %v5499
      %v5880 = vpop.f32.mrf.mxu0
      %v5881 = vadd.f32 %v5667, %v5880
      %v5882 = vpop.f32.mrf.mxu0
      %v5883 = vpop.f32.mrf.mxu0
      %v5884 = vadd.f32 %v5667, %v5883
      %v5885 = vpop.f32.mrf.mxu0
      %5886 = vmatprep.mubr.bf16.mxu0 %v5629
      %5887 = vmatmul.mubr.bf16.gmra.mxu0 %v5502
      %v5888 = vpop.f32.mrf.mxu0
      %v5889 = vadd.f32 %v5667, %v5888
      %v5890 = vpop.f32.mrf.mxu0
      %v5891 = vpop.f32.mrf.mxu0
      %v5892 = vadd.f32 %v5667, %v5891
      %v5893 = vpop.f32.mrf.mxu0
      %5894 = vmatprep.mubr.bf16.mxu0 %v5632
      %5895 = vmatmul.mubr.bf16.gmra.mxu0 %v5505
      %v5896 = vpop.f32.mrf.mxu0
      %v5897 = vadd.f32 %v5667, %v5896
      %v5898 = vpop.f32.mrf.mxu0
      %v5899 = vpop.f32.mrf.mxu0
      %v5900 = vadd.f32 %v5667, %v5899
      %v5901 = vpop.f32.mrf.mxu0
      %5902 = vmatprep.mubr.bf16.mxu0 %v5635
      %5903 = vmatmul.mubr.bf16.gmra.mxu0 %v5508
      %v5904 = vpop.f32.mrf.mxu0
      %v5905 = vadd.f32 %v5667, %v5904
      %v5906 = vpop.f32.mrf.mxu0
      %v5907 = vpop.f32.mrf.mxu0
      %v5908 = vadd.f32 %v5667, %v5907
      %v5909 = vpop.f32.mrf.mxu0
      %5910 = vmatprep.mubr.bf16.mxu0 %v5638
      %5911 = vmatmul.mubr.bf16.gmra.mxu0 %v5511
      %v5912 = vpop.f32.mrf.mxu0
      %v5913 = vadd.f32 %v5667, %v5912
      %v5914 = vpop.f32.mrf.mxu0
      %v5915 = vpop.f32.mrf.mxu0
      %v5916 = vadd.f32 %v5667, %v5915
      %v5917 = vpop.f32.mrf.mxu0
      %5918 = vmatprep.mubr.bf16.mxu0 %v5641
      %5919 = vmatmul.mubr.bf16.gmra.mxu0 %v5514
      %v5920 = vpop.f32.mrf.mxu0
      %v5921 = vadd.f32 %v5667, %v5920
      %v5922 = vpop.f32.mrf.mxu0
      %v5923 = vpop.f32.mrf.mxu0
      %v5924 = vadd.f32 %v5667, %v5923
      %v5925 = vpop.f32.mrf.mxu0
      %5926 = vmatprep.mubr.bf16.mxu0 %v5644
      %5927 = vmatmul.mubr.bf16.gmra.mxu0 %v5517
      %v5928 = vpop.f32.mrf.mxu0
      %v5929 = vadd.f32 %v5667, %v5928
      %v5930 = vpop.f32.mrf.mxu0
      %v5931 = vpop.f32.mrf.mxu0
      %v5932 = vadd.f32 %v5667, %v5931
      %v5933 = vpop.f32.mrf.mxu0
      %5934 = vmatprep.mubr.bf16.mxu0 %v5647
      %5935 = vmatmul.mubr.bf16.gmra.mxu0 %v5520
      %v5936 = vpop.f32.mrf.mxu0
      %v5937 = vadd.f32 %v5667, %v5936
      %v5938 = vpop.f32.mrf.mxu0
      %v5939 = vpop.f32.mrf.mxu0
      %v5940 = vadd.f32 %v5667, %v5939
      %v5941 = vpop.f32.mrf.mxu0
      %5942 = vmatprep.mubr.bf16.mxu0 %v5650
      %5943 = vmatmul.mubr.bf16.gmra.mxu0 %v5523
      %v5944 = vpop.f32.mrf.mxu0
      %v5945 = vadd.f32 %v5667, %v5944
      %v5946 = vpop.f32.mrf.mxu0
      %v5947 = vpop.f32.mrf.mxu0
      %v5948 = vadd.f32 %v5667, %v5947
      %v5949 = vpop.f32.mrf.mxu0
      %5950 = vmatprep.mubr.bf16.mxu0 %v5653
      %5951 = vmatmul.mubr.bf16.gmra.mxu0 %v5526
      %v5952 = vpop.f32.mrf.mxu0
      %v5953 = vadd.f32 %v5667, %v5952
      %v5954 = vpop.f32.mrf.mxu0
      %v5955 = vpop.f32.mrf.mxu0
      %v5956 = vadd.f32 %v5667, %v5955
      %v5957 = vpop.f32.mrf.mxu0
      %5958 = vmatprep.mubr.bf16.mxu0 %v5656
      %5959 = vmatmul.mubr.bf16.gmra.mxu0 %v5529
      %v5960 = vpop.f32.mrf.mxu0
      %v5961 = vadd.f32 %v5667, %v5960
      %v5962 = vpop.f32.mrf.mxu0
      %v5963 = vpop.f32.mrf.mxu0
      %v5964 = vadd.f32 %v5667, %v5963
      %v5965 = vpop.f32.mrf.mxu0
      %5966 = vmatprep.mubr.bf16.mxu0 %v5659
      %5967 = vmatmul.mubr.bf16.gmra.mxu0 %v5532
      %v5968 = vpop.f32.mrf.mxu0
      %v5969 = vadd.f32 %v5667, %v5968
      %v5970 = vpop.f32.mrf.mxu0
      %v5971 = vpop.f32.mrf.mxu0
      %v5972 = vadd.f32 %v5667, %v5971
      %v5973 = vpop.f32.mrf.mxu0
      %5974 = vmatprep.mubr.bf16.mxu0 %v5661
      %5975 = vmatmul.mubr.bf16.gmra.mxu0 %v5535
      %v5976 = vpop.f32.mrf.mxu0
      %v5977 = vadd.f32 %v5667, %v5976
      %v5978 = vpop.f32.mrf.mxu0
      %v5979 = vpop.f32.mrf.mxu0
      %v5980 = vadd.f32 %v5667, %v5979
      %v5981 = vpop.f32.mrf.mxu0
      %5982 = vdwg.mxu0
      %5983 = vmatprep.subr.bf16.mxu0 0
      %5984 = vmatpush1.bf16.msra.mxu0 0
      %5985 = vmatprep.subr.bf16.mxu0 0
      %5986 = vmatpush1.bf16.msra.mxu0 0
      %5987 = vmatprep.subr.bf16.mxu0 0
      %5988 = vmatpush1.bf16.msra.mxu0 0
      %5989 = vmatprep.subr.bf16.mxu0 0
      %5990 = vmatpush1.bf16.msra.mxu0 0
      %5991 = vmatprep.subr.bf16.mxu0 0
      %5992 = vmatpush1.bf16.msra.mxu0 0
      %5993 = vmatprep.subr.bf16.mxu0 0
      %5994 = vmatpush1.bf16.msra.mxu0 0
      %5995 = vmatprep.subr.bf16.mxu0 0
      %5996 = vmatpush1.bf16.msra.mxu0 %v5758
      %5997 = vmatprep.subr.bf16.mxu0 0
      %5998 = vmatpush1.bf16.msra.mxu0 %v5757
      %5999 = vmatprep.subr.bf16.mxu0 0
      %6000 = vmatpush2.bf16.msra.mxu0 0
      %6001 = vmatprep.subr.bf16.mxu0 0
      %6002 = vmatpush2.bf16.msra.mxu0 0
      %6003 = vmatprep.subr.bf16.mxu0 0
      %6004 = vmatpush2.bf16.msra.mxu0 0
      %6005 = vmatprep.subr.bf16.mxu0 0
      %6006 = vmatpush2.bf16.msra.mxu0 0
      %6007 = vmatprep.subr.bf16.mxu0 0
      %6008 = vmatpush2.bf16.msra.mxu0 0
      %6009 = vmatprep.subr.bf16.mxu0 0
      %6010 = vmatpush2.bf16.msra.mxu0 0
      %6011 = vmatprep.subr.bf16.mxu0 0
      %6012 = vmatpush2.bf16.msra.mxu0 0
      %6013 = vmatprep.subr.bf16.mxu0 0
      %6014 = vmatpush2.bf16.msra.mxu0 0
      %6015 = vmatprep.mubr.bf16.mxu0 0
      %6016 = vmatmul.mubr.bf16.gmra.mxu0 %v5778
      %v6017 = vpop.f32.mrf.mxu0
      %v6018 = vadd.f32 %v5857, %v6017
      %v6019 = vpop.f32.mrf.mxu0
      %v6020 = vpop.f32.mrf.mxu0
      %v6021 = vadd.f32 %v5860, %v6020
      %v6022 = vpop.f32.mrf.mxu0
      %6023 = vmatprep.mubr.bf16.mxu0 0
      %6024 = vmatmul.mubr.bf16.gmra.mxu0 %v5781
      %v6025 = vpop.f32.mrf.mxu0
      %v6026 = vadd.f32 %v5865, %v6025
      %v6027 = vpop.f32.mrf.mxu0
      %v6028 = vpop.f32.mrf.mxu0
      %v6029 = vadd.f32 %v5868, %v6028
      %v6030 = vpop.f32.mrf.mxu0
      %6031 = vmatprep.mubr.bf16.mxu0 0
      %6032 = vmatmul.mubr.bf16.gmra.mxu0 %v5784
      %v6033 = vpop.f32.mrf.mxu0
      %v6034 = vadd.f32 %v5873, %v6033
      %v6035 = vpop.f32.mrf.mxu0
      %v6036 = vpop.f32.mrf.mxu0
      %v6037 = vadd.f32 %v5876, %v6036
      %v6038 = vpop.f32.mrf.mxu0
      %6039 = vmatprep.mubr.bf16.mxu0 0
      %6040 = vmatmul.mubr.bf16.gmra.mxu0 %v5787
      %v6041 = vpop.f32.mrf.mxu0
      %v6042 = vadd.f32 %v5881, %v6041
      %v6043 = vpop.f32.mrf.mxu0
      %v6044 = vpop.f32.mrf.mxu0
      %v6045 = vadd.f32 %v5884, %v6044
      %v6046 = vpop.f32.mrf.mxu0
      %6047 = vmatprep.mubr.bf16.mxu0 0
      %6048 = vmatmul.mubr.bf16.gmra.mxu0 %v5790
      %v6049 = vpop.f32.mrf.mxu0
      %v6050 = vadd.f32 %v5889, %v6049
      %v6051 = vpop.f32.mrf.mxu0
      %v6052 = vpop.f32.mrf.mxu0
      %v6053 = vadd.f32 %v5892, %v6052
      %v6054 = vpop.f32.mrf.mxu0
      %6055 = vmatprep.mubr.bf16.mxu0 0
      %6056 = vmatmul.mubr.bf16.gmra.mxu0 %v5793
      %v6057 = vpop.f32.mrf.mxu0
      %v6058 = vadd.f32 %v5897, %v6057
      %v6059 = vpop.f32.mrf.mxu0
      %v6060 = vpop.f32.mrf.mxu0
      %v6061 = vadd.f32 %v5900, %v6060
      %v6062 = vpop.f32.mrf.mxu0
      %6063 = vmatprep.mubr.bf16.mxu0 0
      %6064 = vmatmul.mubr.bf16.gmra.mxu0 %v5796
      %v6065 = vpop.f32.mrf.mxu0
      %v6066 = vadd.f32 %v5905, %v6065
      %v6067 = vpop.f32.mrf.mxu0
      %v6068 = vpop.f32.mrf.mxu0
      %v6069 = vadd.f32 %v5908, %v6068
      %v6070 = vpop.f32.mrf.mxu0
      %6071 = vmatprep.mubr.bf16.mxu0 0
      %6072 = vmatmul.mubr.bf16.gmra.mxu0 %v5799
      %v6073 = vpop.f32.mrf.mxu0
      %v6074 = vadd.f32 %v5913, %v6073
      %v6075 = vpop.f32.mrf.mxu0
      %v6076 = vpop.f32.mrf.mxu0
      %v6077 = vadd.f32 %v5916, %v6076
      %v6078 = vpop.f32.mrf.mxu0
      %6079 = vmatprep.mubr.bf16.mxu0 0
      %6080 = vmatmul.mubr.bf16.gmra.mxu0 %v5802
      %v6081 = vpop.f32.mrf.mxu0
      %v6082 = vadd.f32 %v5921, %v6081
      %v6083 = vpop.f32.mrf.mxu0
      %v6084 = vpop.f32.mrf.mxu0
      %v6085 = vadd.f32 %v5924, %v6084
      %v6086 = vpop.f32.mrf.mxu0
      %6087 = vmatprep.mubr.bf16.mxu0 0
      %6088 = vmatmul.mubr.bf16.gmra.mxu0 %v5805
      %v6089 = vpop.f32.mrf.mxu0
      %v6090 = vadd.f32 %v5929, %v6089
      %v6091 = vpop.f32.mrf.mxu0
      %v6092 = vpop.f32.mrf.mxu0
      %v6093 = vadd.f32 %v5932, %v6092
      %v6094 = vpop.f32.mrf.mxu0
      %6095 = vmatprep.mubr.bf16.mxu0 0
      %6096 = vmatmul.mubr.bf16.gmra.mxu0 %v5808
      %v6097 = vpop.f32.mrf.mxu0
      %v6098 = vadd.f32 %v5937, %v6097
      %v6099 = vpop.f32.mrf.mxu0
      %v6100 = vpop.f32.mrf.mxu0
      %v6101 = vadd.f32 %v5940, %v6100
      %v6102 = vpop.f32.mrf.mxu0
      %6103 = vmatprep.mubr.bf16.mxu0 0
      %6104 = vmatmul.mubr.bf16.gmra.mxu0 %v5811
      %v6105 = vpop.f32.mrf.mxu0
      %v6106 = vadd.f32 %v5945, %v6105
      %v6107 = vpop.f32.mrf.mxu0
      %v6108 = vpop.f32.mrf.mxu0
      %v6109 = vadd.f32 %v5948, %v6108
      %v6110 = vpop.f32.mrf.mxu0
      %6111 = vmatprep.mubr.bf16.mxu0 0
      %6112 = vmatmul.mubr.bf16.gmra.mxu0 %v5814
      %v6113 = vpop.f32.mrf.mxu0
      %v6114 = vadd.f32 %v5953, %v6113
      %v6115 = vpop.f32.mrf.mxu0
      %v6116 = vpop.f32.mrf.mxu0
      %v6117 = vadd.f32 %v5956, %v6116
      %v6118 = vpop.f32.mrf.mxu0
      %6119 = vmatprep.mubr.bf16.mxu0 0
      %6120 = vmatmul.mubr.bf16.gmra.mxu0 %v5817
      %v6121 = vpop.f32.mrf.mxu0
      %v6122 = vadd.f32 %v5961, %v6121
      %v6123 = vpop.f32.mrf.mxu0
      %v6124 = vpop.f32.mrf.mxu0
      %v6125 = vadd.f32 %v5964, %v6124
      %v6126 = vpop.f32.mrf.mxu0
      %6127 = vmatprep.mubr.bf16.mxu0 0
      %6128 = vmatmul.mubr.bf16.gmra.mxu0 %v5820
      %v6129 = vpop.f32.mrf.mxu0
      %v6130 = vadd.f32 %v5969, %v6129
      %v6131 = vpop.f32.mrf.mxu0
      %v6132 = vpop.f32.mrf.mxu0
      %v6133 = vadd.f32 %v5972, %v6132
      %v6134 = vpop.f32.mrf.mxu0
      %6135 = vmatprep.mubr.bf16.mxu0 0
      %6136 = vmatmul.mubr.bf16.gmra.mxu0 %v1488
      %v6137 = vpop.f32.mrf.mxu0
      %v6138 = vadd.f32 %v5977, %v6137
      %v6139 = vpop.f32.mrf.mxu0
      %v6140 = vpop.f32.mrf.mxu0
      %v6141 = vadd.f32 %v5980, %v6140
      %v6142 = vpop.f32.mrf.mxu0
      %6143 = vdwg.mxu0
      %v6144 = vmax.f32 %v6018, 0.0
      %v6145 = vmax.f32 %v6021, 0.0
      %v6146 = vmax.f32 %v6026, 0.0
      %v6147 = vmax.f32 %v6029, 0.0
      %v6148 = vmax.f32 %v6034, 0.0
      %v6149 = vmax.f32 %v6037, 0.0
      %v6150 = vmax.f32 %v6042, 0.0
      %v6151 = vmax.f32 %v6045, 0.0
      %v6152 = vmax.f32 %v6050, 0.0
      %v6153 = vmax.f32 %v6053, 0.0
      %v6154 = vmax.f32 %v6058, 0.0
      %v6155 = vmax.f32 %v6061, 0.0
      %v6156 = vmax.f32 %v6066, 0.0
      %v6157 = vmax.f32 %v6069, 0.0
      %v6158 = vmax.f32 %v6074, 0.0
      %v6159 = vmax.f32 %v6077, 0.0
      %v6160 = vmax.f32 %v6082, 0.0
      %v6161 = vmax.f32 %v6085, 0.0
      %v6162 = vmax.f32 %v6090, 0.0
      %v6163 = vmax.f32 %v6093, 0.0
      %v6164 = vmax.f32 %v6098, 0.0
      %v6165 = vmax.f32 %v6101, 0.0
      %v6166 = vmax.f32 %v6106, 0.0
      %v6167 = vmax.f32 %v6109, 0.0
      %v6168 = vmax.f32 %v6114, 0.0
      %v6169 = vmax.f32 %v6117, 0.0
      %v6170 = vmax.f32 %v6122, 0.0
      %v6171 = vmax.f32 %v6125, 0.0
      %v6172 = vmax.f32 %v6130, 0.0
      %v6173 = vmax.f32 %v6133, 0.0
      %v6174 = vmax.f32 %v6138, 0.0
      %v6175 = vmax.f32 %v6141, 0.0
      %v6176 = vpack.c.bf16 %v6145, %v6144
      %v6177 = vpack.c.bf16 %v6147, %v6146
      %v6178 = vpack.c.bf16 %v6149, %v6148
      %v6179 = vpack.c.bf16 %v6151, %v6150
      %v6180 = vpack.c.bf16 %v6153, %v6152
      %v6181 = vpack.c.bf16 %v6155, %v6154
      %v6182 = vpack.c.bf16 %v6157, %v6156
      %v6183 = vpack.c.bf16 %v6159, %v6158
      %v6184 = vpack.c.bf16 %v6161, %v6160
      %v6185 = vpack.c.bf16 %v6163, %v6162
      %v6186 = vpack.c.bf16 %v6165, %v6164
      %v6187 = vpack.c.bf16 %v6167, %v6166
      %v6188 = vpack.c.bf16 %v6169, %v6168
      %v6189 = vpack.c.bf16 %v6171, %v6170
      %v6190 = vpack.c.bf16 %v6173, %v6172
      %v6191 = vpack.c.bf16 %v6175, %v6174
      %v6193 = vshrl.u32 %v6176, 16
      %v6195 = vrot.slane %v6193, 7
      %v6196 = vshll.u32 %v6176, 16
      %v6198 = vor.u32 %v6195, %v6196
      %v6200 = vshrl.u32 %v6177, 16
      %v6202 = vrot.slane %v6200, 7
      %v6203 = vshll.u32 %v6177, 16
      %v6205 = vor.u32 %v6202, %v6203
      %v6207 = vshrl.u32 %v6178, 16
      %v6209 = vrot.slane %v6207, 7
      %v6210 = vshll.u32 %v6178, 16
      %v6212 = vor.u32 %v6209, %v6210
      %v6214 = vshrl.u32 %v6179, 16
      %v6216 = vrot.slane %v6214, 7
      %v6217 = vshll.u32 %v6179, 16
      %v6219 = vor.u32 %v6216, %v6217
      %v6221 = vshrl.u32 %v6180, 16
      %v6223 = vrot.slane %v6221, 7
      %v6224 = vshll.u32 %v6180, 16
      %v6226 = vor.u32 %v6223, %v6224
      %v6228 = vshrl.u32 %v6181, 16
      %v6230 = vrot.slane %v6228, 7
      %v6231 = vshll.u32 %v6181, 16
      %v6233 = vor.u32 %v6230, %v6231
      %v6235 = vshrl.u32 %v6182, 16
      %v6237 = vrot.slane %v6235, 7
      %v6238 = vshll.u32 %v6182, 16
      %v6240 = vor.u32 %v6237, %v6238
      %v6242 = vshrl.u32 %v6183, 16
      %v6244 = vrot.slane %v6242, 7
      %v6245 = vshll.u32 %v6183, 16
      %v6247 = vor.u32 %v6244, %v6245
      %v6249 = vshrl.u32 %v6184, 16
      %v6251 = vrot.slane %v6249, 7
      %v6252 = vshll.u32 %v6184, 16
      %v6254 = vor.u32 %v6251, %v6252
      %v6256 = vshrl.u32 %v6185, 16
      %v6258 = vrot.slane %v6256, 7
      %v6259 = vshll.u32 %v6185, 16
      %v6261 = vor.u32 %v6258, %v6259
      %v6263 = vshrl.u32 %v6186, 16
      %v6265 = vrot.slane %v6263, 7
      %v6266 = vshll.u32 %v6186, 16
      %v6268 = vor.u32 %v6265, %v6266
      %v6270 = vshrl.u32 %v6187, 16
      %v6272 = vrot.slane %v6270, 7
      %v6273 = vshll.u32 %v6187, 16
      %v6275 = vor.u32 %v6272, %v6273
      %v6277 = vshrl.u32 %v6188, 16
      %v6279 = vrot.slane %v6277, 7
      %v6280 = vshll.u32 %v6188, 16
      %v6282 = vor.u32 %v6279, %v6280
      %v6284 = vshrl.u32 %v6189, 16
      %v6286 = vrot.slane %v6284, 7
      %v6287 = vshll.u32 %v6189, 16
      %v6289 = vor.u32 %v6286, %v6287
      %v6291 = vshrl.u32 %v6190, 16
      %v6293 = vrot.slane %v6291, 7
      %v6294 = vshll.u32 %v6190, 16
      %v6296 = vor.u32 %v6293, %v6294
      %v6298 = vshrl.u32 %v6191, 16
      %v6300 = vrot.slane %v6298, 7
      %v6301 = vshll.u32 %v6191, 16
      %v6303 = vor.u32 %v6300, %v6301
      %v6336 = vsel %vm538, 0, %v6198
      %v6337 = vsel %vm538, 0, %v6205
      %v6338 = vsel %vm538, 0, %v6212
      %v6339 = vsel %vm538, 0, %v6219
      %v6340 = vsel %vm538, 0, %v6226
      %v6341 = vsel %vm538, 0, %v6233
      %v6342 = vsel %vm538, 0, %v6240
      %v6343 = vsel %vm538, 0, %v6247
      %v6344 = vsel %vm538, 0, %v6254
      %v6345 = vsel %vm538, 0, %v6261
      %v6346 = vsel %vm538, 0, %v6268
      %v6347 = vsel %vm538, 0, %v6275
      %v6348 = vsel %vm538, 0, %v6282
      %v6349 = vsel %vm538, 0, %v6289
      %v6350 = vsel %vm538, 0, %v6296
      %v6351 = vsel %vm538, 0, %v6303
      %v6352 = vsel %vm538, %v6195, 0
      %v6353 = vsel %vm538, %v6202, 0
      %v6354 = vsel %vm538, %v6209, 0
      %v6355 = vsel %vm538, %v6216, 0
      %v6356 = vsel %vm538, %v6223, 0
      %v6357 = vsel %vm538, %v6230, 0
      %v6358 = vsel %vm538, %v6237, 0
      %v6359 = vsel %vm538, %v6244, 0
      %v6360 = vsel %vm538, %v6251, 0
      %v6361 = vsel %vm538, %v6258, 0
      %v6362 = vsel %vm538, %v6265, 0
      %v6363 = vsel %vm538, %v6272, 0
      %v6364 = vsel %vm538, %v6279, 0
      %v6365 = vsel %vm538, %v6286, 0
      %v6366 = vsel %vm538, %v6293, 0
      %v6367 = vsel %vm538, %v6300, 0
      %s6368 = scalar_lea.vmem %s3, 432
      %v6369 = vld [vmem:[%s6368] sm:$0xf]
      %v6370 = vld [vmem:[%s6368 + $0x4] sm:$0xf]
      %v6371 = vld [vmem:[%s6368 + $0x8] sm:$0xf]
      %v6372 = vld [vmem:[%s6368 + $0xc] sm:$0xf]
      %v6373 = vld [vmem:[%s6368 + $0x10] sm:$0xf]
      %v6374 = vld [vmem:[%s6368 + $0x14] sm:$0xf]
      %v6375 = vld [vmem:[%s6368 + $0x18] sm:$0xf]
      %v6376 = vld [vmem:[%s6368 + $0x1c] sm:$0xf]
      %v6377 = vld [vmem:[%s6368 + $0x20] sm:$0xf]
      %v6378 = vld [vmem:[%s6368 + $0x24] sm:$0xf]
      %v6379 = vld [vmem:[%s6368 + $0x28] sm:$0xf]
      %v6380 = vld [vmem:[%s6368 + $0x2c] sm:$0xf]
      %v6381 = vld [vmem:[%s6368 + $0x30] sm:$0xf]
      %v6382 = vld [vmem:[%s6368 + $0x34] sm:$0xf]
      %v6383 = vld [vmem:[%s6368 + $0x38] sm:$0xf]
      %v6384 = vld [vmem:[%s6368 + $0x3c] sm:$0xf]
      %v6385 = vld [vmem:[%s6368 + $0x40] sm:$0xf]
      %v6386 = vld [vmem:[%s6368 + $0x44] sm:$0xf]
      %v6387 = vld [vmem:[%s6368 + $0x48] sm:$0xf]
      %v6388 = vld [vmem:[%s6368 + $0x4c] sm:$0xf]
      %v6389 = vld [vmem:[%s6368 + $0x50] sm:$0xf]
      %v6390 = vld [vmem:[%s6368 + $0x54] sm:$0xf]
      %v6391 = vld [vmem:[%s6368 + $0x58] sm:$0xf]
      %v6392 = vld [vmem:[%s6368 + $0x5c] sm:$0xf]
      %v6393 = vld [vmem:[%s6368 + $0x60] sm:$0xf]
      %v6394 = vld [vmem:[%s6368 + $0x64] sm:$0xf]
      %v6395 = vld [vmem:[%s6368 + $0x68] sm:$0xf]
      %v6396 = vld [vmem:[%s6368 + $0x6c] sm:$0xf]
      %v6397 = vld [vmem:[%s6368 + $0x70] sm:$0xf]
      %v6398 = vld [vmem:[%s6368 + $0x74] sm:$0xf]
      %v6399 = vld [vmem:[%s6368 + $0x78] sm:$0xf]
      %v6400 = vld [vmem:[%s6368 + $0x7c] sm:$0xf]
      %v6401 = vld [vmem:[%s6368 + $0x80] sm:$0xf]
      %v6402 = vld [vmem:[%s6368 + $0x84] sm:$0xf]
      %v6403 = vld [vmem:[%s6368 + $0x88] sm:$0xf]
      %v6404 = vld [vmem:[%s6368 + $0x8c] sm:$0xf]
      %s6405 = scalar_lea.vmem %s4, 3
      %v6406 = vld [vmem:[%s6405] sm:$0x1]
      %v6408 = vshrl.u32 %v6336, 16
      %v6410 = vshll.u32 %v6336, 16
      %v6412 = vrot.slane %v6410, 1
      %v6413 = vor.u32 %v6408, %v6412
      %v6415 = vshll.u32 %v6352, 16
      %v6417 = vrot.slane %v6415, 1
      %v6418 = vsel %vm608, %v6413, %v6417
      %v6420 = vshrl.u32 %v6337, 16
      %v6422 = vshll.u32 %v6337, 16
      %v6424 = vrot.slane %v6422, 1
      %v6425 = vor.u32 %v6420, %v6424
      %v6427 = vshll.u32 %v6353, 16
      %v6429 = vrot.slane %v6427, 1
      %v6430 = vsel %vm608, %v6425, %v6429
      %v6432 = vshrl.u32 %v6338, 16
      %v6434 = vshll.u32 %v6338, 16
      %v6436 = vrot.slane %v6434, 1
      %v6437 = vor.u32 %v6432, %v6436
      %v6439 = vshll.u32 %v6354, 16
      %v6441 = vrot.slane %v6439, 1
      %v6442 = vsel %vm608, %v6437, %v6441
      %v6444 = vshrl.u32 %v6339, 16
      %v6446 = vshll.u32 %v6339, 16
      %v6448 = vrot.slane %v6446, 1
      %v6449 = vor.u32 %v6444, %v6448
      %v6451 = vshll.u32 %v6355, 16
      %v6453 = vrot.slane %v6451, 1
      %v6454 = vsel %vm608, %v6449, %v6453
      %v6456 = vshrl.u32 %v6340, 16
      %v6458 = vshll.u32 %v6340, 16
      %v6460 = vrot.slane %v6458, 1
      %v6461 = vor.u32 %v6456, %v6460
      %v6463 = vshll.u32 %v6356, 16
      %v6465 = vrot.slane %v6463, 1
      %v6466 = vsel %vm608, %v6461, %v6465
      %v6468 = vshrl.u32 %v6341, 16
      %v6470 = vshll.u32 %v6341, 16
      %v6472 = vrot.slane %v6470, 1
      %v6473 = vor.u32 %v6468, %v6472
      %v6475 = vshll.u32 %v6357, 16
      %v6477 = vrot.slane %v6475, 1
      %v6478 = vsel %vm608, %v6473, %v6477
      %v6480 = vshrl.u32 %v6342, 16
      %v6482 = vshll.u32 %v6342, 16
      %v6484 = vrot.slane %v6482, 1
      %v6485 = vor.u32 %v6480, %v6484
      %v6487 = vshll.u32 %v6358, 16
      %v6489 = vrot.slane %v6487, 1
      %v6490 = vsel %vm608, %v6485, %v6489
      %v6492 = vshrl.u32 %v6343, 16
      %v6494 = vshll.u32 %v6343, 16
      %v6496 = vrot.slane %v6494, 1
      %v6497 = vor.u32 %v6492, %v6496
      %v6499 = vshll.u32 %v6359, 16
      %v6501 = vrot.slane %v6499, 1
      %v6502 = vsel %vm608, %v6497, %v6501
      %v6504 = vshrl.u32 %v6344, 16
      %v6506 = vshll.u32 %v6344, 16
      %v6508 = vrot.slane %v6506, 1
      %v6509 = vor.u32 %v6504, %v6508
      %v6511 = vshll.u32 %v6360, 16
      %v6513 = vrot.slane %v6511, 1
      %v6514 = vsel %vm608, %v6509, %v6513
      %v6516 = vshrl.u32 %v6345, 16
      %v6518 = vshll.u32 %v6345, 16
      %v6520 = vrot.slane %v6518, 1
      %v6521 = vor.u32 %v6516, %v6520
      %v6523 = vshll.u32 %v6361, 16
      %v6525 = vrot.slane %v6523, 1
      %v6526 = vsel %vm608, %v6521, %v6525
      %v6528 = vshrl.u32 %v6346, 16
      %v6530 = vshll.u32 %v6346, 16
      %v6532 = vrot.slane %v6530, 1
      %v6533 = vor.u32 %v6528, %v6532
      %v6535 = vshll.u32 %v6362, 16
      %v6537 = vrot.slane %v6535, 1
      %v6538 = vsel %vm608, %v6533, %v6537
      %v6540 = vshrl.u32 %v6347, 16
      %v6542 = vshll.u32 %v6347, 16
      %v6544 = vrot.slane %v6542, 1
      %v6545 = vor.u32 %v6540, %v6544
      %v6547 = vshll.u32 %v6363, 16
      %v6549 = vrot.slane %v6547, 1
      %v6550 = vsel %vm608, %v6545, %v6549
      %v6552 = vshrl.u32 %v6348, 16
      %v6554 = vshll.u32 %v6348, 16
      %v6556 = vrot.slane %v6554, 1
      %v6557 = vor.u32 %v6552, %v6556
      %v6559 = vshll.u32 %v6364, 16
      %v6561 = vrot.slane %v6559, 1
      %v6562 = vsel %vm608, %v6557, %v6561
      %v6564 = vshrl.u32 %v6349, 16
      %v6566 = vshll.u32 %v6349, 16
      %v6568 = vrot.slane %v6566, 1
      %v6569 = vor.u32 %v6564, %v6568
      %v6571 = vshll.u32 %v6365, 16
      %v6573 = vrot.slane %v6571, 1
      %v6574 = vsel %vm608, %v6569, %v6573
      %v6576 = vshrl.u32 %v6350, 16
      %v6578 = vshll.u32 %v6350, 16
      %v6580 = vrot.slane %v6578, 1
      %v6581 = vor.u32 %v6576, %v6580
      %v6583 = vshll.u32 %v6366, 16
      %v6585 = vrot.slane %v6583, 1
      %v6586 = vsel %vm608, %v6581, %v6585
      %v6588 = vshrl.u32 %v6351, 16
      %v6590 = vshll.u32 %v6351, 16
      %v6592 = vrot.slane %v6590, 1
      %v6593 = vor.u32 %v6588, %v6592
      %v6595 = vshll.u32 %v6367, 16
      %v6597 = vrot.slane %v6595, 1
      %v6598 = vsel %vm608, %v6593, %v6597
      %v6631 = vrot.slane %v6336, 1
      %v6632 = vrot.slane %v6352, 1
      %v6633 = vsel %vm842, %v6631, %v6632
      %v6634 = vrot.slane %v6337, 1
      %v6635 = vrot.slane %v6353, 1
      %v6636 = vsel %vm842, %v6634, %v6635
      %v6637 = vrot.slane %v6338, 1
      %v6638 = vrot.slane %v6354, 1
      %v6639 = vsel %vm842, %v6637, %v6638
      %v6640 = vrot.slane %v6339, 1
      %v6641 = vrot.slane %v6355, 1
      %v6642 = vsel %vm842, %v6640, %v6641
      %v6643 = vrot.slane %v6340, 1
      %v6644 = vrot.slane %v6356, 1
      %v6645 = vsel %vm842, %v6643, %v6644
      %v6646 = vrot.slane %v6341, 1
      %v6647 = vrot.slane %v6357, 1
      %v6648 = vsel %vm842, %v6646, %v6647
      %v6649 = vrot.slane %v6342, 1
      %v6650 = vrot.slane %v6358, 1
      %v6651 = vsel %vm842, %v6649, %v6650
      %v6652 = vrot.slane %v6343, 1
      %v6653 = vrot.slane %v6359, 1
      %v6654 = vsel %vm842, %v6652, %v6653
      %v6655 = vrot.slane %v6344, 1
      %v6656 = vrot.slane %v6360, 1
      %v6657 = vsel %vm842, %v6655, %v6656
      %v6658 = vrot.slane %v6345, 1
      %v6659 = vrot.slane %v6361, 1
      %v6660 = vsel %vm842, %v6658, %v6659
      %v6661 = vrot.slane %v6346, 1
      %v6662 = vrot.slane %v6362, 1
      %v6663 = vsel %vm842, %v6661, %v6662
      %v6664 = vrot.slane %v6347, 1
      %v6665 = vrot.slane %v6363, 1
      %v6666 = vsel %vm842, %v6664, %v6665
      %v6667 = vrot.slane %v6348, 1
      %v6668 = vrot.slane %v6364, 1
      %v6669 = vsel %vm842, %v6667, %v6668
      %v6670 = vrot.slane %v6349, 1
      %v6671 = vrot.slane %v6365, 1
      %v6672 = vsel %vm842, %v6670, %v6671
      %v6673 = vrot.slane %v6350, 1
      %v6674 = vrot.slane %v6366, 1
      %v6675 = vsel %vm842, %v6673, %v6674
      %v6676 = vrot.slane %v6351, 1
      %v6677 = vrot.slane %v6367, 1
      %v6678 = vsel %vm842, %v6676, %v6677
      %6679 = vrot.lane.b32.xlu0 %v6418, 32
      %v6680 = vpop.permute.xlu0 %6679
      %6681 = vrot.lane.b32.xlu0 %v6430, 32
      %v6682 = vpop.permute.xlu0 %6681
      %6683 = vrot.lane.b32.xlu0 %v6442, 32
      %v6684 = vpop.permute.xlu0 %6683
      %6685 = vrot.lane.b32.xlu0 %v6454, 32
      %v6686 = vpop.permute.xlu0 %6685
      %6687 = vrot.lane.b32.xlu0 %v6466, 32
      %v6688 = vpop.permute.xlu0 %6687
      %6689 = vrot.lane.b32.xlu0 %v6478, 32
      %v6690 = vpop.permute.xlu0 %6689
      %6691 = vrot.lane.b32.xlu0 %v6490, 32
      %v6692 = vpop.permute.xlu0 %6691
      %6693 = vrot.lane.b32.xlu0 %v6502, 32
      %v6694 = vpop.permute.xlu0 %6693
      %6695 = vrot.lane.b32.xlu0 %v6514, 32
      %v6696 = vpop.permute.xlu0 %6695
      %6697 = vrot.lane.b32.xlu0 %v6526, 32
      %v6698 = vpop.permute.xlu0 %6697
      %6699 = vrot.lane.b32.xlu0 %v6538, 32
      %v6700 = vpop.permute.xlu0 %6699
      %6701 = vrot.lane.b32.xlu0 %v6550, 32
      %v6702 = vpop.permute.xlu0 %6701
      %6703 = vrot.lane.b32.xlu0 %v6562, 32
      %v6704 = vpop.permute.xlu0 %6703
      %6705 = vrot.lane.b32.xlu0 %v6574, 32
      %v6706 = vpop.permute.xlu0 %6705
      %6707 = vrot.lane.b32.xlu0 %v6586, 32
      %v6708 = vpop.permute.xlu0 %6707
      %6709 = vrot.lane.b32.xlu0 %v6633, 64
      %v6710 = vpop.permute.xlu0 %6709
      %6711 = vrot.lane.b32.xlu0 %v6636, 64
      %v6712 = vpop.permute.xlu0 %6711
      %6713 = vrot.lane.b32.xlu0 %v6639, 64
      %v6714 = vpop.permute.xlu0 %6713
      %6715 = vrot.lane.b32.xlu0 %v6642, 64
      %v6716 = vpop.permute.xlu0 %6715
      %6717 = vrot.lane.b32.xlu0 %v6645, 64
      %v6718 = vpop.permute.xlu0 %6717
      %6719 = vrot.lane.b32.xlu0 %v6648, 64
      %v6720 = vpop.permute.xlu0 %6719
      %6721 = vrot.lane.b32.xlu0 %v6651, 64
      %v6722 = vpop.permute.xlu0 %6721
      %6723 = vrot.lane.b32.xlu0 %v6654, 64
      %v6724 = vpop.permute.xlu0 %6723
      %6725 = vrot.lane.b32.xlu0 %v6657, 64
      %v6726 = vpop.permute.xlu0 %6725
      %6727 = vrot.lane.b32.xlu0 %v6660, 64
      %v6728 = vpop.permute.xlu0 %6727
      %6729 = vrot.lane.b32.xlu0 %v6663, 64
      %v6730 = vpop.permute.xlu0 %6729
      %6731 = vrot.lane.b32.xlu0 %v6666, 64
      %v6732 = vpop.permute.xlu0 %6731
      %6733 = vrot.lane.b32.xlu0 %v6669, 64
      %v6734 = vpop.permute.xlu0 %6733
      %6735 = vrot.lane.b32.xlu0 %v6672, 64
      %v6736 = vpop.permute.xlu0 %6735
      %6737 = vrot.lane.b32.xlu0 %v6675, 64
      %v6738 = vpop.permute.xlu0 %6737
      %6739 = vrot.lane.b32.xlu0 %v6336, 96
      %v6740 = vpop.permute.xlu0 %6739
      %6741 = vrot.lane.b32.xlu0 %v6337, 96
      %v6742 = vpop.permute.xlu0 %6741
      %6743 = vrot.lane.b32.xlu0 %v6338, 96
      %v6744 = vpop.permute.xlu0 %6743
      %6745 = vrot.lane.b32.xlu0 %v6339, 96
      %v6746 = vpop.permute.xlu0 %6745
      %6747 = vrot.lane.b32.xlu0 %v6340, 96
      %v6748 = vpop.permute.xlu0 %6747
      %6749 = vrot.lane.b32.xlu0 %v6341, 96
      %v6750 = vpop.permute.xlu0 %6749
      %6751 = vrot.lane.b32.xlu0 %v6342, 96
      %v6752 = vpop.permute.xlu0 %6751
      %6753 = vrot.lane.b32.xlu0 %v6343, 96
      %v6754 = vpop.permute.xlu0 %6753
      %6755 = vrot.lane.b32.xlu0 %v6344, 96
      %v6756 = vpop.permute.xlu0 %6755
      %6757 = vrot.lane.b32.xlu0 %v6345, 96
      %v6758 = vpop.permute.xlu0 %6757
      %6759 = vrot.lane.b32.xlu0 %v6346, 96
      %v6760 = vpop.permute.xlu0 %6759
      %6761 = vrot.lane.b32.xlu0 %v6347, 96
      %v6762 = vpop.permute.xlu0 %6761
      %6763 = vrot.lane.b32.xlu0 %v6348, 96
      %v6764 = vpop.permute.xlu0 %6763
      %6765 = vrot.lane.b32.xlu0 %v6349, 96
      %v6766 = vpop.permute.xlu0 %6765
      %6767 = vrot.lane.b32.xlu0 %v6350, 96
      %v6768 = vpop.permute.xlu0 %6767
      %6769 = vrot.lane.b32.xlu0 %v6351, 96
      %v6770 = vpop.permute.xlu0 %6769
      %6771 = vrot.lane.b32.xlu0 %v6633, 32
      %v6772 = vpop.permute.xlu0 %6771
      %6773 = vrot.lane.b32.xlu0 %v6636, 32
      %v6774 = vpop.permute.xlu0 %6773
      %6775 = vrot.lane.b32.xlu0 %v6639, 32
      %v6776 = vpop.permute.xlu0 %6775
      %6777 = vrot.lane.b32.xlu0 %v6642, 32
      %v6778 = vpop.permute.xlu0 %6777
      %6779 = vrot.lane.b32.xlu0 %v6645, 32
      %v6780 = vpop.permute.xlu0 %6779
      %6781 = vrot.lane.b32.xlu0 %v6648, 32
      %v6782 = vpop.permute.xlu0 %6781
      %6783 = vrot.lane.b32.xlu0 %v6651, 32
      %v6784 = vpop.permute.xlu0 %6783
      %6785 = vrot.lane.b32.xlu0 %v6654, 32
      %v6786 = vpop.permute.xlu0 %6785
      %6787 = vrot.lane.b32.xlu0 %v6657, 32
      %v6788 = vpop.permute.xlu0 %6787
      %6789 = vrot.lane.b32.xlu0 %v6660, 32
      %v6790 = vpop.permute.xlu0 %6789
      %6791 = vrot.lane.b32.xlu0 %v6663, 32
      %v6792 = vpop.permute.xlu0 %6791
      %6793 = vrot.lane.b32.xlu0 %v6666, 32
      %v6794 = vpop.permute.xlu0 %6793
      %6795 = vrot.lane.b32.xlu0 %v6669, 32
      %v6796 = vpop.permute.xlu0 %6795
      %6797 = vrot.lane.b32.xlu0 %v6672, 32
      %v6798 = vpop.permute.xlu0 %6797
      %6799 = vrot.lane.b32.xlu0 %v6675, 32
      %v6800 = vpop.permute.xlu0 %6799
      %6801 = vrot.lane.b32.xlu0 %v6678, 32
      %v6802 = vpop.permute.xlu0 %6801
      %6803 = vrot.lane.b32.xlu0 %v6337, 64
      %v6804 = vpop.permute.xlu0 %6803
      %6805 = vrot.lane.b32.xlu0 %v6338, 64
      %v6806 = vpop.permute.xlu0 %6805
      %6807 = vrot.lane.b32.xlu0 %v6339, 64
      %v6808 = vpop.permute.xlu0 %6807
      %6809 = vrot.lane.b32.xlu0 %v6340, 64
      %v6810 = vpop.permute.xlu0 %6809
      %6811 = vrot.lane.b32.xlu0 %v6341, 64
      %v6812 = vpop.permute.xlu0 %6811
      %6813 = vrot.lane.b32.xlu0 %v6342, 64
      %v6814 = vpop.permute.xlu0 %6813
      %6815 = vrot.lane.b32.xlu0 %v6343, 64
      %v6816 = vpop.permute.xlu0 %6815
      %6817 = vrot.lane.b32.xlu0 %v6344, 64
      %v6818 = vpop.permute.xlu0 %6817
      %6819 = vrot.lane.b32.xlu0 %v6345, 64
      %v6820 = vpop.permute.xlu0 %6819
      %6821 = vrot.lane.b32.xlu0 %v6346, 64
      %v6822 = vpop.permute.xlu0 %6821
      %6823 = vrot.lane.b32.xlu0 %v6347, 64
      %v6824 = vpop.permute.xlu0 %6823
      %6825 = vrot.lane.b32.xlu0 %v6348, 64
      %v6826 = vpop.permute.xlu0 %6825
      %6827 = vrot.lane.b32.xlu0 %v6349, 64
      %v6828 = vpop.permute.xlu0 %6827
      %6829 = vrot.lane.b32.xlu0 %v6350, 64
      %v6830 = vpop.permute.xlu0 %6829
      %6831 = vrot.lane.b32.xlu0 %v6351, 64
      %v6832 = vpop.permute.xlu0 %6831
      %6833 = vrot.lane.b32.xlu0 %v6430, 96
      %v6834 = vpop.permute.xlu0 %6833
      %6835 = vrot.lane.b32.xlu0 %v6442, 96
      %v6836 = vpop.permute.xlu0 %6835
      %6837 = vrot.lane.b32.xlu0 %v6454, 96
      %v6838 = vpop.permute.xlu0 %6837
      %6839 = vrot.lane.b32.xlu0 %v6466, 96
      %v6840 = vpop.permute.xlu0 %6839
      %6841 = vrot.lane.b32.xlu0 %v6478, 96
      %v6842 = vpop.permute.xlu0 %6841
      %6843 = vrot.lane.b32.xlu0 %v6490, 96
      %v6844 = vpop.permute.xlu0 %6843
      %6845 = vrot.lane.b32.xlu0 %v6502, 96
      %v6846 = vpop.permute.xlu0 %6845
      %6847 = vrot.lane.b32.xlu0 %v6514, 96
      %v6848 = vpop.permute.xlu0 %6847
      %6849 = vrot.lane.b32.xlu0 %v6526, 96
      %v6850 = vpop.permute.xlu0 %6849
      %6851 = vrot.lane.b32.xlu0 %v6538, 96
      %v6852 = vpop.permute.xlu0 %6851
      %6853 = vrot.lane.b32.xlu0 %v6550, 96
      %v6854 = vpop.permute.xlu0 %6853
      %6855 = vrot.lane.b32.xlu0 %v6562, 96
      %v6856 = vpop.permute.xlu0 %6855
      %6857 = vrot.lane.b32.xlu0 %v6574, 96
      %v6858 = vpop.permute.xlu0 %6857
      %6859 = vrot.lane.b32.xlu0 %v6586, 96
      %v6860 = vpop.permute.xlu0 %6859
      %6861 = vrot.lane.b32.xlu0 %v6598, 96
      %v6862 = vpop.permute.xlu0 %6861
      %v6864 = vsel %vm1085, %v6336, %v6680
      %v6866 = vsel %vm1085, %v6337, %v6682
      %v6868 = vsel %vm1085, %v6338, %v6684
      %v6870 = vsel %vm1085, %v6339, %v6686
      %v6872 = vsel %vm1085, %v6340, %v6688
      %v6874 = vsel %vm1085, %v6341, %v6690
      %v6876 = vsel %vm1085, %v6342, %v6692
      %v6878 = vsel %vm1085, %v6343, %v6694
      %v6880 = vsel %vm1085, %v6344, %v6696
      %v6882 = vsel %vm1085, %v6345, %v6698
      %v6884 = vsel %vm1085, %v6346, %v6700
      %v6886 = vsel %vm1085, %v6347, %v6702
      %v6888 = vsel %vm1085, %v6348, %v6704
      %v6890 = vsel %vm1085, %v6349, %v6706
      %v6892 = vsel %vm1085, %v6350, %v6708
      %v6894 = vsel %vm1118, %v6864, %v6710
      %v6896 = vsel %vm1118, %v6866, %v6712
      %v6898 = vsel %vm1118, %v6868, %v6714
      %v6900 = vsel %vm1118, %v6870, %v6716
      %v6902 = vsel %vm1118, %v6872, %v6718
      %v6904 = vsel %vm1118, %v6874, %v6720
      %v6906 = vsel %vm1118, %v6876, %v6722
      %v6908 = vsel %vm1118, %v6878, %v6724
      %v6910 = vsel %vm1118, %v6880, %v6726
      %v6912 = vsel %vm1118, %v6882, %v6728
      %v6914 = vsel %vm1118, %v6884, %v6730
      %v6916 = vsel %vm1118, %v6886, %v6732
      %v6918 = vsel %vm1118, %v6888, %v6734
      %v6920 = vsel %vm1118, %v6890, %v6736
      %v6922 = vsel %vm1118, %v6892, %v6738
      %v6924 = vsel %vm1151, %v1120, %v6740
      %v6927 = vsel %vm1151, %v6894, %v6742
      %v6930 = vsel %vm1151, %v6896, %v6744
      %v6933 = vsel %vm1151, %v6898, %v6746
      %v6936 = vsel %vm1151, %v6900, %v6748
      %v6939 = vsel %vm1151, %v6902, %v6750
      %v6942 = vsel %vm1151, %v6904, %v6752
      %v6945 = vsel %vm1151, %v6906, %v6754
      %v6948 = vsel %vm1151, %v6908, %v6756
      %v6951 = vsel %vm1151, %v6910, %v6758
      %v6954 = vsel %vm1151, %v6912, %v6760
      %v6957 = vsel %vm1151, %v6914, %v6762
      %v6960 = vsel %vm1151, %v6916, %v6764
      %v6963 = vsel %vm1151, %v6918, %v6766
      %v6966 = vsel %vm1151, %v6920, %v6768
      %v6969 = vsel %vm1151, %v6922, %v6770
      %v6973 = vsel %vm1085, %v6418, %v6772
      %v6976 = vsel %vm1085, %v6430, %v6774
      %v6979 = vsel %vm1085, %v6442, %v6776
      %v6982 = vsel %vm1085, %v6454, %v6778
      %v6985 = vsel %vm1085, %v6466, %v6780
      %v6988 = vsel %vm1085, %v6478, %v6782
      %v6991 = vsel %vm1085, %v6490, %v6784
      %v6994 = vsel %vm1085, %v6502, %v6786
      %v6997 = vsel %vm1085, %v6514, %v6788
      %v7000 = vsel %vm1085, %v6526, %v6790
      %v7003 = vsel %vm1085, %v6538, %v6792
      %v7006 = vsel %vm1085, %v6550, %v6794
      %v7009 = vsel %vm1085, %v6562, %v6796
      %v7012 = vsel %vm1085, %v6574, %v6798
      %v7015 = vsel %vm1085, %v6586, %v6800
      %v7018 = vsel %vm1085, %v6598, %v6802
      %v7020 = vsel %vm1118, %v6973, %v6804
      %v7022 = vsel %vm1118, %v6976, %v6806
      %v7024 = vsel %vm1118, %v6979, %v6808
      %v7026 = vsel %vm1118, %v6982, %v6810
      %v7028 = vsel %vm1118, %v6985, %v6812
      %v7030 = vsel %vm1118, %v6988, %v6814
      %v7032 = vsel %vm1118, %v6991, %v6816
      %v7034 = vsel %vm1118, %v6994, %v6818
      %v7036 = vsel %vm1118, %v6997, %v6820
      %v7038 = vsel %vm1118, %v7000, %v6822
      %v7040 = vsel %vm1118, %v7003, %v6824
      %v7042 = vsel %vm1118, %v7006, %v6826
      %v7044 = vsel %vm1118, %v7009, %v6828
      %v7046 = vsel %vm1118, %v7012, %v6830
      %v7048 = vsel %vm1118, %v7015, %v6832
      %v7049 = vsel %vm1118, %v7018, %v1052
      %v7051 = vsel %vm1151, %v7020, %v6834
      %v7054 = vsel %vm1151, %v7022, %v6836
      %v7057 = vsel %vm1151, %v7024, %v6838
      %v7060 = vsel %vm1151, %v7026, %v6840
      %v7063 = vsel %vm1151, %v7028, %v6842
      %v7066 = vsel %vm1151, %v7030, %v6844
      %v7069 = vsel %vm1151, %v7032, %v6846
      %v7072 = vsel %vm1151, %v7034, %v6848
      %v7075 = vsel %vm1151, %v7036, %v6850
      %v7078 = vsel %vm1151, %v7038, %v6852
      %v7081 = vsel %vm1151, %v7040, %v6854
      %v7084 = vsel %vm1151, %v7042, %v6856
      %v7087 = vsel %vm1151, %v7044, %v6858
      %v7090 = vsel %vm1151, %v7046, %v6860
      %v7093 = vsel %vm1151, %v7048, %v6862
      %v7095 = vsel %vm1151, %v7049, %v1084
      %v7098 = vlaneseq
      %v7099 = vshrl.u32 %v7098, 7
      %v7100 = vsub.s32 0, %v7099
      %v7101 = vrot.slane %v6406, %v7100
      %v7139 = vunpack.c.l.b16 %v6369
      %v7140 = vunpack.c.l.b16 %v6370
      %v7141 = vunpack.c.l.b16 %v6371
      %v7142 = vunpack.c.l.b16 %v6372
      %v7143 = vunpack.c.l.b16 %v6373
      %v7144 = vunpack.c.l.b16 %v6374
      %v7145 = vunpack.c.l.b16 %v6375
      %v7146 = vunpack.c.l.b16 %v6376
      %v7147 = vunpack.c.l.b16 %v6377
      %v7148 = vunpack.c.l.b16 %v6378
      %v7149 = vunpack.c.l.b16 %v6379
      %v7150 = vunpack.c.l.b16 %v6380
      %v7151 = vunpack.c.l.b16 %v6381
      %v7152 = vunpack.c.l.b16 %v6382
      %v7153 = vunpack.c.l.b16 %v6383
      %v7154 = vunpack.c.l.b16 %v6384
      %v7155 = vunpack.c.l.b16 %v6385
      %v7156 = vunpack.c.l.b16 %v6386
      %v7157 = vunpack.c.l.b16 %v6387
      %v7158 = vunpack.c.l.b16 %v6388
      %v7159 = vunpack.c.l.b16 %v6389
      %v7160 = vunpack.c.l.b16 %v6390
      %v7161 = vunpack.c.l.b16 %v6391
      %v7162 = vunpack.c.l.b16 %v6392
      %v7163 = vunpack.c.l.b16 %v6393
      %v7164 = vunpack.c.l.b16 %v6394
      %v7165 = vunpack.c.l.b16 %v6395
      %v7166 = vunpack.c.l.b16 %v6396
      %v7167 = vunpack.c.l.b16 %v6397
      %v7168 = vunpack.c.l.b16 %v6398
      %v7169 = vunpack.c.l.b16 %v6399
      %v7170 = vunpack.c.l.b16 %v6400
      %v7171 = vunpack.c.l.b16 %v6401
      %v7172 = vunpack.c.l.b16 %v6402
      %v7173 = vunpack.c.l.b16 %v6403
      %v7174 = vunpack.c.l.b16 %v6404
      %v7175 = vpack.c.b16 %v7140, %v7139
      %v7176 = vpack.c.b16 %v7142, %v7141
      %v7177 = vpack.c.b16 %v7144, %v7143
      %v7178 = vpack.c.b16 %v7146, %v7145
      %v7179 = vpack.c.b16 %v7148, %v7147
      %v7180 = vpack.c.b16 %v7150, %v7149
      %v7181 = vpack.c.b16 %v7152, %v7151
      %v7182 = vpack.c.b16 %v7154, %v7153
      %v7183 = vpack.c.b16 %v7156, %v7155
      %v7184 = vpack.c.b16 %v7158, %v7157
      %v7185 = vpack.c.b16 %v7160, %v7159
      %v7186 = vpack.c.b16 %v7162, %v7161
      %v7187 = vpack.c.b16 %v7164, %v7163
      %v7188 = vpack.c.b16 %v7166, %v7165
      %v7189 = vpack.c.b16 %v7168, %v7167
      %v7190 = vpack.c.b16 %v7170, %v7169
      %v7191 = vpack.c.b16 %v7172, %v7171
      %v7192 = vpack.c.b16 %v7174, %v7173
      %v7212 = vsel %vm1085, %v6636, 0
      %v7215 = vsel %vm1085, %v6639, 0
      %v7218 = vsel %vm1085, %v6642, 0
      %v7221 = vsel %vm1085, %v6645, 0
      %v7224 = vsel %vm1085, %v6648, 0
      %v7227 = vsel %vm1085, %v6651, 0
      %v7230 = vsel %vm1085, %v6654, 0
      %v7233 = vsel %vm1085, %v6657, 0
      %v7236 = vsel %vm1085, %v6660, 0
      %v7239 = vsel %vm1085, %v6663, 0
      %v7242 = vsel %vm1085, %v6666, 0
      %v7245 = vsel %vm1085, %v6669, 0
      %v7248 = vsel %vm1085, %v6672, 0
      %v7251 = vsel %vm1085, %v6675, 0
      %v7254 = vsel %vm1085, %v6678, 0
      %7256 = vmatprep.subr.bf16.mxu0 0
      %7257 = vmatpush1.bf16.msra.mxu0 %v7182
      %7258 = vmatprep.subr.bf16.mxu0 0
      %7259 = vmatpush1.bf16.msra.mxu0 %v7181
      %7260 = vmatprep.subr.bf16.mxu0 0
      %7261 = vmatpush1.bf16.msra.mxu0 %v7180
      %7262 = vmatprep.subr.bf16.mxu0 0
      %7263 = vmatpush1.bf16.msra.mxu0 %v7179
      %7264 = vmatprep.subr.bf16.mxu0 0
      %7265 = vmatpush1.bf16.msra.mxu0 %v7178
      %7266 = vmatprep.subr.bf16.mxu0 0
      %7267 = vmatpush1.bf16.msra.mxu0 %v7177
      %7268 = vmatprep.subr.bf16.mxu0 0
      %7269 = vmatpush1.bf16.msra.mxu0 %v7176
      %7270 = vmatprep.subr.bf16.mxu0 0
      %7271 = vmatpush1.bf16.msra.mxu0 %v7175
      %7272 = vmatprep.subr.bf16.mxu0 0
      %7273 = vmatpush2.bf16.msra.mxu0 %v7190
      %7274 = vmatprep.subr.bf16.mxu0 0
      %7275 = vmatpush2.bf16.msra.mxu0 %v7189
      %7276 = vmatprep.subr.bf16.mxu0 0
      %7277 = vmatpush2.bf16.msra.mxu0 %v7188
      %7278 = vmatprep.subr.bf16.mxu0 0
      %7279 = vmatpush2.bf16.msra.mxu0 %v7187
      %7280 = vmatprep.subr.bf16.mxu0 0
      %7281 = vmatpush2.bf16.msra.mxu0 %v7186
      %7282 = vmatprep.subr.bf16.mxu0 0
      %7283 = vmatpush2.bf16.msra.mxu0 %v7185
      %7284 = vmatprep.subr.bf16.mxu0 0
      %7285 = vmatpush2.bf16.msra.mxu0 %v7184
      %7286 = vmatprep.subr.bf16.mxu0 0
      %7287 = vmatpush2.bf16.msra.mxu0 %v7183
      %7288 = vmatprep.mubr.bf16.mxu0 %v7051
      %7289 = vmatmul.mubr.bf16.gmra.mxu0 %v6924
      %v7290 = vpop.f32.mrf.mxu0
      %v7291 = vadd.f32 %v7101, %v7290
      %v7292 = vpop.f32.mrf.mxu0
      %v7293 = vpop.f32.mrf.mxu0
      %v7294 = vadd.f32 %v7101, %v7293
      %v7295 = vpop.f32.mrf.mxu0
      %7296 = vmatprep.mubr.bf16.mxu0 %v7054
      %7297 = vmatmul.mubr.bf16.gmra.mxu0 %v6927
      %v7298 = vpop.f32.mrf.mxu0
      %v7299 = vadd.f32 %v7101, %v7298
      %v7300 = vpop.f32.mrf.mxu0
      %v7301 = vpop.f32.mrf.mxu0
      %v7302 = vadd.f32 %v7101, %v7301
      %v7303 = vpop.f32.mrf.mxu0
      %7304 = vmatprep.mubr.bf16.mxu0 %v7057
      %7305 = vmatmul.mubr.bf16.gmra.mxu0 %v6930
      %v7306 = vpop.f32.mrf.mxu0
      %v7307 = vadd.f32 %v7101, %v7306
      %v7308 = vpop.f32.mrf.mxu0
      %v7309 = vpop.f32.mrf.mxu0
      %v7310 = vadd.f32 %v7101, %v7309
      %v7311 = vpop.f32.mrf.mxu0
      %7312 = vmatprep.mubr.bf16.mxu0 %v7060
      %7313 = vmatmul.mubr.bf16.gmra.mxu0 %v6933
      %v7314 = vpop.f32.mrf.mxu0
      %v7315 = vadd.f32 %v7101, %v7314
      %v7316 = vpop.f32.mrf.mxu0
      %v7317 = vpop.f32.mrf.mxu0
      %v7318 = vadd.f32 %v7101, %v7317
      %v7319 = vpop.f32.mrf.mxu0
      %7320 = vmatprep.mubr.bf16.mxu0 %v7063
      %7321 = vmatmul.mubr.bf16.gmra.mxu0 %v6936
      %v7322 = vpop.f32.mrf.mxu0
      %v7323 = vadd.f32 %v7101, %v7322
      %v7324 = vpop.f32.mrf.mxu0
      %v7325 = vpop.f32.mrf.mxu0
      %v7326 = vadd.f32 %v7101, %v7325
      %v7327 = vpop.f32.mrf.mxu0
      %7328 = vmatprep.mubr.bf16.mxu0 %v7066
      %7329 = vmatmul.mubr.bf16.gmra.mxu0 %v6939
      %v7330 = vpop.f32.mrf.mxu0
      %v7331 = vadd.f32 %v7101, %v7330
      %v7332 = vpop.f32.mrf.mxu0
      %v7333 = vpop.f32.mrf.mxu0
      %v7334 = vadd.f32 %v7101, %v7333
      %v7335 = vpop.f32.mrf.mxu0
      %7336 = vmatprep.mubr.bf16.mxu0 %v7069
      %7337 = vmatmul.mubr.bf16.gmra.mxu0 %v6942
      %v7338 = vpop.f32.mrf.mxu0
      %v7339 = vadd.f32 %v7101, %v7338
      %v7340 = vpop.f32.mrf.mxu0
      %v7341 = vpop.f32.mrf.mxu0
      %v7342 = vadd.f32 %v7101, %v7341
      %v7343 = vpop.f32.mrf.mxu0
      %7344 = vmatprep.mubr.bf16.mxu0 %v7072
      %7345 = vmatmul.mubr.bf16.gmra.mxu0 %v6945
      %v7346 = vpop.f32.mrf.mxu0
      %v7347 = vadd.f32 %v7101, %v7346
      %v7348 = vpop.f32.mrf.mxu0
      %v7349 = vpop.f32.mrf.mxu0
      %v7350 = vadd.f32 %v7101, %v7349
      %v7351 = vpop.f32.mrf.mxu0
      %7352 = vmatprep.mubr.bf16.mxu0 %v7075
      %7353 = vmatmul.mubr.bf16.gmra.mxu0 %v6948
      %v7354 = vpop.f32.mrf.mxu0
      %v7355 = vadd.f32 %v7101, %v7354
      %v7356 = vpop.f32.mrf.mxu0
      %v7357 = vpop.f32.mrf.mxu0
      %v7358 = vadd.f32 %v7101, %v7357
      %v7359 = vpop.f32.mrf.mxu0
      %7360 = vmatprep.mubr.bf16.mxu0 %v7078
      %7361 = vmatmul.mubr.bf16.gmra.mxu0 %v6951
      %v7362 = vpop.f32.mrf.mxu0
      %v7363 = vadd.f32 %v7101, %v7362
      %v7364 = vpop.f32.mrf.mxu0
      %v7365 = vpop.f32.mrf.mxu0
      %v7366 = vadd.f32 %v7101, %v7365
      %v7367 = vpop.f32.mrf.mxu0
      %7368 = vmatprep.mubr.bf16.mxu0 %v7081
      %7369 = vmatmul.mubr.bf16.gmra.mxu0 %v6954
      %v7370 = vpop.f32.mrf.mxu0
      %v7371 = vadd.f32 %v7101, %v7370
      %v7372 = vpop.f32.mrf.mxu0
      %v7373 = vpop.f32.mrf.mxu0
      %v7374 = vadd.f32 %v7101, %v7373
      %v7375 = vpop.f32.mrf.mxu0
      %7376 = vmatprep.mubr.bf16.mxu0 %v7084
      %7377 = vmatmul.mubr.bf16.gmra.mxu0 %v6957
      %v7378 = vpop.f32.mrf.mxu0
      %v7379 = vadd.f32 %v7101, %v7378
      %v7380 = vpop.f32.mrf.mxu0
      %v7381 = vpop.f32.mrf.mxu0
      %v7382 = vadd.f32 %v7101, %v7381
      %v7383 = vpop.f32.mrf.mxu0
      %7384 = vmatprep.mubr.bf16.mxu0 %v7087
      %7385 = vmatmul.mubr.bf16.gmra.mxu0 %v6960
      %v7386 = vpop.f32.mrf.mxu0
      %v7387 = vadd.f32 %v7101, %v7386
      %v7388 = vpop.f32.mrf.mxu0
      %v7389 = vpop.f32.mrf.mxu0
      %v7390 = vadd.f32 %v7101, %v7389
      %v7391 = vpop.f32.mrf.mxu0
      %7392 = vmatprep.mubr.bf16.mxu0 %v7090
      %7393 = vmatmul.mubr.bf16.gmra.mxu0 %v6963
      %v7394 = vpop.f32.mrf.mxu0
      %v7395 = vadd.f32 %v7101, %v7394
      %v7396 = vpop.f32.mrf.mxu0
      %v7397 = vpop.f32.mrf.mxu0
      %v7398 = vadd.f32 %v7101, %v7397
      %v7399 = vpop.f32.mrf.mxu0
      %7400 = vmatprep.mubr.bf16.mxu0 %v7093
      %7401 = vmatmul.mubr.bf16.gmra.mxu0 %v6966
      %v7402 = vpop.f32.mrf.mxu0
      %v7403 = vadd.f32 %v7101, %v7402
      %v7404 = vpop.f32.mrf.mxu0
      %v7405 = vpop.f32.mrf.mxu0
      %v7406 = vadd.f32 %v7101, %v7405
      %v7407 = vpop.f32.mrf.mxu0
      %7408 = vmatprep.mubr.bf16.mxu0 %v7095
      %7409 = vmatmul.mubr.bf16.gmra.mxu0 %v6969
      %v7410 = vpop.f32.mrf.mxu0
      %v7411 = vadd.f32 %v7101, %v7410
      %v7412 = vpop.f32.mrf.mxu0
      %v7413 = vpop.f32.mrf.mxu0
      %v7414 = vadd.f32 %v7101, %v7413
      %v7415 = vpop.f32.mrf.mxu0
      %7416 = vdwg.mxu0
      %7417 = vmatprep.subr.bf16.mxu0 0
      %7418 = vmatpush1.bf16.msra.mxu0 0
      %7419 = vmatprep.subr.bf16.mxu0 0
      %7420 = vmatpush1.bf16.msra.mxu0 0
      %7421 = vmatprep.subr.bf16.mxu0 0
      %7422 = vmatpush1.bf16.msra.mxu0 0
      %7423 = vmatprep.subr.bf16.mxu0 0
      %7424 = vmatpush1.bf16.msra.mxu0 0
      %7425 = vmatprep.subr.bf16.mxu0 0
      %7426 = vmatpush1.bf16.msra.mxu0 0
      %7427 = vmatprep.subr.bf16.mxu0 0
      %7428 = vmatpush1.bf16.msra.mxu0 0
      %7429 = vmatprep.subr.bf16.mxu0 0
      %7430 = vmatpush1.bf16.msra.mxu0 %v7192
      %7431 = vmatprep.subr.bf16.mxu0 0
      %7432 = vmatpush1.bf16.msra.mxu0 %v7191
      %7433 = vmatprep.subr.bf16.mxu0 0
      %7434 = vmatpush2.bf16.msra.mxu0 0
      %7435 = vmatprep.subr.bf16.mxu0 0
      %7436 = vmatpush2.bf16.msra.mxu0 0
      %7437 = vmatprep.subr.bf16.mxu0 0
      %7438 = vmatpush2.bf16.msra.mxu0 0
      %7439 = vmatprep.subr.bf16.mxu0 0
      %7440 = vmatpush2.bf16.msra.mxu0 0
      %7441 = vmatprep.subr.bf16.mxu0 0
      %7442 = vmatpush2.bf16.msra.mxu0 0
      %7443 = vmatprep.subr.bf16.mxu0 0
      %7444 = vmatpush2.bf16.msra.mxu0 0
      %7445 = vmatprep.subr.bf16.mxu0 0
      %7446 = vmatpush2.bf16.msra.mxu0 0
      %7447 = vmatprep.subr.bf16.mxu0 0
      %7448 = vmatpush2.bf16.msra.mxu0 0
      %7449 = vmatprep.mubr.bf16.mxu0 0
      %7450 = vmatmul.mubr.bf16.gmra.mxu0 %v7212
      %v7451 = vpop.f32.mrf.mxu0
      %v7452 = vadd.f32 %v7291, %v7451
      %v7453 = vpop.f32.mrf.mxu0
      %v7454 = vpop.f32.mrf.mxu0
      %v7455 = vadd.f32 %v7294, %v7454
      %v7456 = vpop.f32.mrf.mxu0
      %7457 = vmatprep.mubr.bf16.mxu0 0
      %7458 = vmatmul.mubr.bf16.gmra.mxu0 %v7215
      %v7459 = vpop.f32.mrf.mxu0
      %v7460 = vadd.f32 %v7299, %v7459
      %v7461 = vpop.f32.mrf.mxu0
      %v7462 = vpop.f32.mrf.mxu0
      %v7463 = vadd.f32 %v7302, %v7462
      %v7464 = vpop.f32.mrf.mxu0
      %7465 = vmatprep.mubr.bf16.mxu0 0
      %7466 = vmatmul.mubr.bf16.gmra.mxu0 %v7218
      %v7467 = vpop.f32.mrf.mxu0
      %v7468 = vadd.f32 %v7307, %v7467
      %v7469 = vpop.f32.mrf.mxu0
      %v7470 = vpop.f32.mrf.mxu0
      %v7471 = vadd.f32 %v7310, %v7470
      %v7472 = vpop.f32.mrf.mxu0
      %7473 = vmatprep.mubr.bf16.mxu0 0
      %7474 = vmatmul.mubr.bf16.gmra.mxu0 %v7221
      %v7475 = vpop.f32.mrf.mxu0
      %v7476 = vadd.f32 %v7315, %v7475
      %v7477 = vpop.f32.mrf.mxu0
      %v7478 = vpop.f32.mrf.mxu0
      %v7479 = vadd.f32 %v7318, %v7478
      %v7480 = vpop.f32.mrf.mxu0
      %7481 = vmatprep.mubr.bf16.mxu0 0
      %7482 = vmatmul.mubr.bf16.gmra.mxu0 %v7224
      %v7483 = vpop.f32.mrf.mxu0
      %v7484 = vadd.f32 %v7323, %v7483
      %v7485 = vpop.f32.mrf.mxu0
      %v7486 = vpop.f32.mrf.mxu0
      %v7487 = vadd.f32 %v7326, %v7486
      %v7488 = vpop.f32.mrf.mxu0
      %7489 = vmatprep.mubr.bf16.mxu0 0
      %7490 = vmatmul.mubr.bf16.gmra.mxu0 %v7227
      %v7491 = vpop.f32.mrf.mxu0
      %v7492 = vadd.f32 %v7331, %v7491
      %v7493 = vpop.f32.mrf.mxu0
      %v7494 = vpop.f32.mrf.mxu0
      %v7495 = vadd.f32 %v7334, %v7494
      %v7496 = vpop.f32.mrf.mxu0
      %7497 = vmatprep.mubr.bf16.mxu0 0
      %7498 = vmatmul.mubr.bf16.gmra.mxu0 %v7230
      %v7499 = vpop.f32.mrf.mxu0
      %v7500 = vadd.f32 %v7339, %v7499
      %v7501 = vpop.f32.mrf.mxu0
      %v7502 = vpop.f32.mrf.mxu0
      %v7503 = vadd.f32 %v7342, %v7502
      %v7504 = vpop.f32.mrf.mxu0
      %7505 = vmatprep.mubr.bf16.mxu0 0
      %7506 = vmatmul.mubr.bf16.gmra.mxu0 %v7233
      %v7507 = vpop.f32.mrf.mxu0
      %v7508 = vadd.f32 %v7347, %v7507
      %v7509 = vpop.f32.mrf.mxu0
      %v7510 = vpop.f32.mrf.mxu0
      %v7511 = vadd.f32 %v7350, %v7510
      %v7512 = vpop.f32.mrf.mxu0
      %7513 = vmatprep.mubr.bf16.mxu0 0
      %7514 = vmatmul.mubr.bf16.gmra.mxu0 %v7236
      %v7515 = vpop.f32.mrf.mxu0
      %v7516 = vadd.f32 %v7355, %v7515
      %v7517 = vpop.f32.mrf.mxu0
      %v7518 = vpop.f32.mrf.mxu0
      %v7519 = vadd.f32 %v7358, %v7518
      %v7520 = vpop.f32.mrf.mxu0
      %7521 = vmatprep.mubr.bf16.mxu0 0
      %7522 = vmatmul.mubr.bf16.gmra.mxu0 %v7239
      %v7523 = vpop.f32.mrf.mxu0
      %v7524 = vadd.f32 %v7363, %v7523
      %v7525 = vpop.f32.mrf.mxu0
      %v7526 = vpop.f32.mrf.mxu0
      %v7527 = vadd.f32 %v7366, %v7526
      %v7528 = vpop.f32.mrf.mxu0
      %7529 = vmatprep.mubr.bf16.mxu0 0
      %7530 = vmatmul.mubr.bf16.gmra.mxu0 %v7242
      %v7531 = vpop.f32.mrf.mxu0
      %v7532 = vadd.f32 %v7371, %v7531
      %v7533 = vpop.f32.mrf.mxu0
      %v7534 = vpop.f32.mrf.mxu0
      %v7535 = vadd.f32 %v7374, %v7534
      %v7536 = vpop.f32.mrf.mxu0
      %7537 = vmatprep.mubr.bf16.mxu0 0
      %7538 = vmatmul.mubr.bf16.gmra.mxu0 %v7245
      %v7539 = vpop.f32.mrf.mxu0
      %v7540 = vadd.f32 %v7379, %v7539
      %v7541 = vpop.f32.mrf.mxu0
      %v7542 = vpop.f32.mrf.mxu0
      %v7543 = vadd.f32 %v7382, %v7542
      %v7544 = vpop.f32.mrf.mxu0
      %7545 = vmatprep.mubr.bf16.mxu0 0
      %7546 = vmatmul.mubr.bf16.gmra.mxu0 %v7248
      %v7547 = vpop.f32.mrf.mxu0
      %v7548 = vadd.f32 %v7387, %v7547
      %v7549 = vpop.f32.mrf.mxu0
      %v7550 = vpop.f32.mrf.mxu0
      %v7551 = vadd.f32 %v7390, %v7550
      %v7552 = vpop.f32.mrf.mxu0
      %7553 = vmatprep.mubr.bf16.mxu0 0
      %7554 = vmatmul.mubr.bf16.gmra.mxu0 %v7251
      %v7555 = vpop.f32.mrf.mxu0
      %v7556 = vadd.f32 %v7395, %v7555
      %v7557 = vpop.f32.mrf.mxu0
      %v7558 = vpop.f32.mrf.mxu0
      %v7559 = vadd.f32 %v7398, %v7558
      %v7560 = vpop.f32.mrf.mxu0
      %7561 = vmatprep.mubr.bf16.mxu0 0
      %7562 = vmatmul.mubr.bf16.gmra.mxu0 %v7254
      %v7563 = vpop.f32.mrf.mxu0
      %v7564 = vadd.f32 %v7403, %v7563
      %v7565 = vpop.f32.mrf.mxu0
      %v7566 = vpop.f32.mrf.mxu0
      %v7567 = vadd.f32 %v7406, %v7566
      %v7568 = vpop.f32.mrf.mxu0
      %7569 = vmatprep.mubr.bf16.mxu0 0
      %7570 = vmatmul.mubr.bf16.gmra.mxu0 %v1488
      %v7571 = vpop.f32.mrf.mxu0
      %v7572 = vadd.f32 %v7411, %v7571
      %v7573 = vpop.f32.mrf.mxu0
      %v7574 = vpop.f32.mrf.mxu0
      %v7575 = vadd.f32 %v7414, %v7574
      %v7576 = vpop.f32.mrf.mxu0
      %7577 = vdwg.mxu0
      %v7578 = vadd.f32 %v4678, %v7452
      %v7579 = vadd.f32 %v4679, %v7455
      %v7580 = vadd.f32 %v4680, %v7460
      %v7581 = vadd.f32 %v4681, %v7463
      %v7582 = vadd.f32 %v4682, %v7468
      %v7583 = vadd.f32 %v4683, %v7471
      %v7584 = vadd.f32 %v4684, %v7476
      %v7585 = vadd.f32 %v4685, %v7479
      %v7586 = vadd.f32 %v4686, %v7484
      %v7587 = vadd.f32 %v4687, %v7487
      %v7588 = vadd.f32 %v4688, %v7492
      %v7589 = vadd.f32 %v4689, %v7495
      %v7590 = vadd.f32 %v4690, %v7500
      %v7591 = vadd.f32 %v4691, %v7503
      %v7592 = vadd.f32 %v4692, %v7508
      %v7593 = vadd.f32 %v4693, %v7511
      %v7594 = vadd.f32 %v4694, %v7516
      %v7595 = vadd.f32 %v4695, %v7519
      %v7596 = vadd.f32 %v4696, %v7524
      %v7597 = vadd.f32 %v4697, %v7527
      %v7598 = vadd.f32 %v4698, %v7532
      %v7599 = vadd.f32 %v4699, %v7535
      %v7600 = vadd.f32 %v4700, %v7540
      %v7601 = vadd.f32 %v4701, %v7543
      %v7602 = vadd.f32 %v4702, %v7548
      %v7603 = vadd.f32 %v4703, %v7551
      %v7604 = vadd.f32 %v4704, %v7556
      %v7605 = vadd.f32 %v4705, %v7559
      %v7606 = vadd.f32 %v4706, %v7564
      %v7607 = vadd.f32 %v4707, %v7567
      %v7608 = vadd.f32 %v4708, %v7572
      %v7609 = vadd.f32 %v4709, %v7575
      %v7610 = vmax.f32 %v7578, 0.0
      %v7611 = vmax.f32 %v7579, 0.0
      %v7612 = vmax.f32 %v7580, 0.0
      %v7613 = vmax.f32 %v7581, 0.0
      %v7614 = vmax.f32 %v7582, 0.0
      %v7615 = vmax.f32 %v7583, 0.0
      %v7616 = vmax.f32 %v7584, 0.0
      %v7617 = vmax.f32 %v7585, 0.0
      %v7618 = vmax.f32 %v7586, 0.0
      %v7619 = vmax.f32 %v7587, 0.0
      %v7620 = vmax.f32 %v7588, 0.0
      %v7621 = vmax.f32 %v7589, 0.0
      %v7622 = vmax.f32 %v7590, 0.0
      %v7623 = vmax.f32 %v7591, 0.0
      %v7624 = vmax.f32 %v7592, 0.0
      %v7625 = vmax.f32 %v7593, 0.0
      %v7626 = vmax.f32 %v7594, 0.0
      %v7627 = vmax.f32 %v7595, 0.0
      %v7628 = vmax.f32 %v7596, 0.0
      %v7629 = vmax.f32 %v7597, 0.0
      %v7630 = vmax.f32 %v7598, 0.0
      %v7631 = vmax.f32 %v7599, 0.0
      %v7632 = vmax.f32 %v7600, 0.0
      %v7633 = vmax.f32 %v7601, 0.0
      %v7634 = vmax.f32 %v7602, 0.0
      %v7635 = vmax.f32 %v7603, 0.0
      %v7636 = vmax.f32 %v7604, 0.0
      %v7637 = vmax.f32 %v7605, 0.0
      %v7638 = vmax.f32 %v7606, 0.0
      %v7639 = vmax.f32 %v7607, 0.0
      %v7640 = vmax.f32 %v7608, 0.0
      %v7641 = vmax.f32 %v7609, 0.0
      %v7642 = vpack.c.bf16 %v7611, %v7610
      %v7643 = vpack.c.bf16 %v7613, %v7612
      %v7644 = vpack.c.bf16 %v7615, %v7614
      %v7645 = vpack.c.bf16 %v7617, %v7616
      %v7646 = vpack.c.bf16 %v7619, %v7618
      %v7647 = vpack.c.bf16 %v7621, %v7620
      %v7648 = vpack.c.bf16 %v7623, %v7622
      %v7649 = vpack.c.bf16 %v7625, %v7624
      %v7650 = vpack.c.bf16 %v7627, %v7626
      %v7651 = vpack.c.bf16 %v7629, %v7628
      %v7652 = vpack.c.bf16 %v7631, %v7630
      %v7653 = vpack.c.bf16 %v7633, %v7632
      %v7654 = vpack.c.bf16 %v7635, %v7634
      %v7655 = vpack.c.bf16 %v7637, %v7636
      %v7656 = vpack.c.bf16 %v7639, %v7638
      %v7657 = vpack.c.bf16 %v7641, %v7640
      %v7659 = vshrl.u32 %v7642, 16
      %v7661 = vrot.slane %v7659, 7
      %v7662 = vshll.u32 %v7642, 16
      %v7664 = vor.u32 %v7661, %v7662
      %v7666 = vshrl.u32 %v7643, 16
      %v7668 = vrot.slane %v7666, 7
      %v7669 = vshll.u32 %v7643, 16
      %v7671 = vor.u32 %v7668, %v7669
      %v7673 = vshrl.u32 %v7644, 16
      %v7675 = vrot.slane %v7673, 7
      %v7676 = vshll.u32 %v7644, 16
      %v7678 = vor.u32 %v7675, %v7676
      %v7680 = vshrl.u32 %v7645, 16
      %v7682 = vrot.slane %v7680, 7
      %v7683 = vshll.u32 %v7645, 16
      %v7685 = vor.u32 %v7682, %v7683
      %v7687 = vshrl.u32 %v7646, 16
      %v7689 = vrot.slane %v7687, 7
      %v7690 = vshll.u32 %v7646, 16
      %v7692 = vor.u32 %v7689, %v7690
      %v7694 = vshrl.u32 %v7647, 16
      %v7696 = vrot.slane %v7694, 7
      %v7697 = vshll.u32 %v7647, 16
      %v7699 = vor.u32 %v7696, %v7697
      %v7701 = vshrl.u32 %v7648, 16
      %v7703 = vrot.slane %v7701, 7
      %v7704 = vshll.u32 %v7648, 16
      %v7706 = vor.u32 %v7703, %v7704
      %v7708 = vshrl.u32 %v7649, 16
      %v7710 = vrot.slane %v7708, 7
      %v7711 = vshll.u32 %v7649, 16
      %v7713 = vor.u32 %v7710, %v7711
      %v7715 = vshrl.u32 %v7650, 16
      %v7717 = vrot.slane %v7715, 7
      %v7718 = vshll.u32 %v7650, 16
      %v7720 = vor.u32 %v7717, %v7718
      %v7722 = vshrl.u32 %v7651, 16
      %v7724 = vrot.slane %v7722, 7
      %v7725 = vshll.u32 %v7651, 16
      %v7727 = vor.u32 %v7724, %v7725
      %v7729 = vshrl.u32 %v7652, 16
      %v7731 = vrot.slane %v7729, 7
      %v7732 = vshll.u32 %v7652, 16
      %v7734 = vor.u32 %v7731, %v7732
      %v7736 = vshrl.u32 %v7653, 16
      %v7738 = vrot.slane %v7736, 7
      %v7739 = vshll.u32 %v7653, 16
      %v7741 = vor.u32 %v7738, %v7739
      %v7743 = vshrl.u32 %v7654, 16
      %v7745 = vrot.slane %v7743, 7
      %v7746 = vshll.u32 %v7654, 16
      %v7748 = vor.u32 %v7745, %v7746
      %v7750 = vshrl.u32 %v7655, 16
      %v7752 = vrot.slane %v7750, 7
      %v7753 = vshll.u32 %v7655, 16
      %v7755 = vor.u32 %v7752, %v7753
      %v7757 = vshrl.u32 %v7656, 16
      %v7759 = vrot.slane %v7757, 7
      %v7760 = vshll.u32 %v7656, 16
      %v7762 = vor.u32 %v7759, %v7760
      %v7764 = vshrl.u32 %v7657, 16
      %v7766 = vrot.slane %v7764, 7
      %v7767 = vshll.u32 %v7657, 16
      %v7769 = vor.u32 %v7766, %v7767
      %v7802 = vsel %vm538, 0, %v7664
      %v7803 = vsel %vm538, 0, %v7671
      %v7804 = vsel %vm538, 0, %v7678
      %v7805 = vsel %vm538, 0, %v7685
      %v7806 = vsel %vm538, 0, %v7692
      %v7807 = vsel %vm538, 0, %v7699
      %v7808 = vsel %vm538, 0, %v7706
      %v7809 = vsel %vm538, 0, %v7713
      %v7810 = vsel %vm538, 0, %v7720
      %v7811 = vsel %vm538, 0, %v7727
      %v7812 = vsel %vm538, 0, %v7734
      %v7813 = vsel %vm538, 0, %v7741
      %v7814 = vsel %vm538, 0, %v7748
      %v7815 = vsel %vm538, 0, %v7755
      %v7816 = vsel %vm538, 0, %v7762
      %v7817 = vsel %vm538, 0, %v7769
      %v7818 = vsel %vm538, %v7661, 0
      %v7819 = vsel %vm538, %v7668, 0
      %v7820 = vsel %vm538, %v7675, 0
      %v7821 = vsel %vm538, %v7682, 0
      %v7822 = vsel %vm538, %v7689, 0
      %v7823 = vsel %vm538, %v7696, 0
      %v7824 = vsel %vm538, %v7703, 0
      %v7825 = vsel %vm538, %v7710, 0
      %v7826 = vsel %vm538, %v7717, 0
      %v7827 = vsel %vm538, %v7724, 0
      %v7828 = vsel %vm538, %v7731, 0
      %v7829 = vsel %vm538, %v7738, 0
      %v7830 = vsel %vm538, %v7745, 0
      %v7831 = vsel %vm538, %v7752, 0
      %v7832 = vsel %vm538, %v7759, 0
      %v7833 = vsel %vm538, %v7766, 0
      %s7834 = scalar_lea.vmem %s3, 576
      %v7835 = vld [vmem:[%s7834] sm:$0xf]
      %v7836 = vld [vmem:[%s7834 + $0x4] sm:$0xf]
      %v7837 = vld [vmem:[%s7834 + $0x8] sm:$0xf]
      %v7838 = vld [vmem:[%s7834 + $0xc] sm:$0xf]
      %v7839 = vld [vmem:[%s7834 + $0x10] sm:$0xf]
      %v7840 = vld [vmem:[%s7834 + $0x14] sm:$0xf]
      %v7841 = vld [vmem:[%s7834 + $0x18] sm:$0xf]
      %v7842 = vld [vmem:[%s7834 + $0x1c] sm:$0xf]
      %v7843 = vld [vmem:[%s7834 + $0x20] sm:$0xf]
      %v7844 = vld [vmem:[%s7834 + $0x24] sm:$0xf]
      %v7845 = vld [vmem:[%s7834 + $0x28] sm:$0xf]
      %v7846 = vld [vmem:[%s7834 + $0x2c] sm:$0xf]
      %v7847 = vld [vmem:[%s7834 + $0x30] sm:$0xf]
      %v7848 = vld [vmem:[%s7834 + $0x34] sm:$0xf]
      %v7849 = vld [vmem:[%s7834 + $0x38] sm:$0xf]
      %v7850 = vld [vmem:[%s7834 + $0x3c] sm:$0xf]
      %v7851 = vld [vmem:[%s7834 + $0x40] sm:$0xf]
      %v7852 = vld [vmem:[%s7834 + $0x44] sm:$0xf]
      %v7853 = vld [vmem:[%s7834 + $0x48] sm:$0xf]
      %v7854 = vld [vmem:[%s7834 + $0x4c] sm:$0xf]
      %v7855 = vld [vmem:[%s7834 + $0x50] sm:$0xf]
      %v7856 = vld [vmem:[%s7834 + $0x54] sm:$0xf]
      %v7857 = vld [vmem:[%s7834 + $0x58] sm:$0xf]
      %v7858 = vld [vmem:[%s7834 + $0x5c] sm:$0xf]
      %v7859 = vld [vmem:[%s7834 + $0x60] sm:$0xf]
      %v7860 = vld [vmem:[%s7834 + $0x64] sm:$0xf]
      %v7861 = vld [vmem:[%s7834 + $0x68] sm:$0xf]
      %v7862 = vld [vmem:[%s7834 + $0x6c] sm:$0xf]
      %v7863 = vld [vmem:[%s7834 + $0x70] sm:$0xf]
      %v7864 = vld [vmem:[%s7834 + $0x74] sm:$0xf]
      %v7865 = vld [vmem:[%s7834 + $0x78] sm:$0xf]
      %v7866 = vld [vmem:[%s7834 + $0x7c] sm:$0xf]
      %v7867 = vld [vmem:[%s7834 + $0x80] sm:$0xf]
      %v7868 = vld [vmem:[%s7834 + $0x84] sm:$0xf]
      %v7869 = vld [vmem:[%s7834 + $0x88] sm:$0xf]
      %v7870 = vld [vmem:[%s7834 + $0x8c] sm:$0xf]
      %s7871 = scalar_lea.vmem %s4, 4
      %v7872 = vld [vmem:[%s7871] sm:$0x1]
      %v7874 = vshrl.u32 %v7802, 16
      %v7876 = vshll.u32 %v7802, 16
      %v7878 = vrot.slane %v7876, 1
      %v7879 = vor.u32 %v7874, %v7878
      %v7881 = vshll.u32 %v7818, 16
      %v7883 = vrot.slane %v7881, 1
      %v7884 = vsel %vm608, %v7879, %v7883
      %v7886 = vshrl.u32 %v7803, 16
      %v7888 = vshll.u32 %v7803, 16
      %v7890 = vrot.slane %v7888, 1
      %v7891 = vor.u32 %v7886, %v7890
      %v7893 = vshll.u32 %v7819, 16
      %v7895 = vrot.slane %v7893, 1
      %v7896 = vsel %vm608, %v7891, %v7895
      %v7898 = vshrl.u32 %v7804, 16
      %v7900 = vshll.u32 %v7804, 16
      %v7902 = vrot.slane %v7900, 1
      %v7903 = vor.u32 %v7898, %v7902
      %v7905 = vshll.u32 %v7820, 16
      %v7907 = vrot.slane %v7905, 1
      %v7908 = vsel %vm608, %v7903, %v7907
      %v7910 = vshrl.u32 %v7805, 16
      %v7912 = vshll.u32 %v7805, 16
      %v7914 = vrot.slane %v7912, 1
      %v7915 = vor.u32 %v7910, %v7914
      %v7917 = vshll.u32 %v7821, 16
      %v7919 = vrot.slane %v7917, 1
      %v7920 = vsel %vm608, %v7915, %v7919
      %v7922 = vshrl.u32 %v7806, 16
      %v7924 = vshll.u32 %v7806, 16
      %v7926 = vrot.slane %v7924, 1
      %v7927 = vor.u32 %v7922, %v7926
      %v7929 = vshll.u32 %v7822, 16
      %v7931 = vrot.slane %v7929, 1
      %v7932 = vsel %vm608, %v7927, %v7931
      %v7934 = vshrl.u32 %v7807, 16
      %v7936 = vshll.u32 %v7807, 16
      %v7938 = vrot.slane %v7936, 1
      %v7939 = vor.u32 %v7934, %v7938
      %v7941 = vshll.u32 %v7823, 16
      %v7943 = vrot.slane %v7941, 1
      %v7944 = vsel %vm608, %v7939, %v7943
      %v7946 = vshrl.u32 %v7808, 16
      %v7948 = vshll.u32 %v7808, 16
      %v7950 = vrot.slane %v7948, 1
      %v7951 = vor.u32 %v7946, %v7950
      %v7953 = vshll.u32 %v7824, 16
      %v7955 = vrot.slane %v7953, 1
      %v7956 = vsel %vm608, %v7951, %v7955
      %v7958 = vshrl.u32 %v7809, 16
      %v7960 = vshll.u32 %v7809, 16
      %v7962 = vrot.slane %v7960, 1
      %v7963 = vor.u32 %v7958, %v7962
      %v7965 = vshll.u32 %v7825, 16
      %v7967 = vrot.slane %v7965, 1
      %v7968 = vsel %vm608, %v7963, %v7967
      %v7970 = vshrl.u32 %v7810, 16
      %v7972 = vshll.u32 %v7810, 16
      %v7974 = vrot.slane %v7972, 1
      %v7975 = vor.u32 %v7970, %v7974
      %v7977 = vshll.u32 %v7826, 16
      %v7979 = vrot.slane %v7977, 1
      %v7980 = vsel %vm608, %v7975, %v7979
      %v7982 = vshrl.u32 %v7811, 16
      %v7984 = vshll.u32 %v7811, 16
      %v7986 = vrot.slane %v7984, 1
      %v7987 = vor.u32 %v7982, %v7986
      %v7989 = vshll.u32 %v7827, 16
      %v7991 = vrot.slane %v7989, 1
      %v7992 = vsel %vm608, %v7987, %v7991
      %v7994 = vshrl.u32 %v7812, 16
      %v7996 = vshll.u32 %v7812, 16
      %v7998 = vrot.slane %v7996, 1
      %v7999 = vor.u32 %v7994, %v7998
      %v8001 = vshll.u32 %v7828, 16
      %v8003 = vrot.slane %v8001, 1
      %v8004 = vsel %vm608, %v7999, %v8003
      %v8006 = vshrl.u32 %v7813, 16
      %v8008 = vshll.u32 %v7813, 16
      %v8010 = vrot.slane %v8008, 1
      %v8011 = vor.u32 %v8006, %v8010
      %v8013 = vshll.u32 %v7829, 16
      %v8015 = vrot.slane %v8013, 1
      %v8016 = vsel %vm608, %v8011, %v8015
      %v8018 = vshrl.u32 %v7814, 16
      %v8020 = vshll.u32 %v7814, 16
      %v8022 = vrot.slane %v8020, 1
      %v8023 = vor.u32 %v8018, %v8022
      %v8025 = vshll.u32 %v7830, 16
      %v8027 = vrot.slane %v8025, 1
      %v8028 = vsel %vm608, %v8023, %v8027
      %v8030 = vshrl.u32 %v7815, 16
      %v8032 = vshll.u32 %v7815, 16
      %v8034 = vrot.slane %v8032, 1
      %v8035 = vor.u32 %v8030, %v8034
      %v8037 = vshll.u32 %v7831, 16
      %v8039 = vrot.slane %v8037, 1
      %v8040 = vsel %vm608, %v8035, %v8039
      %v8042 = vshrl.u32 %v7816, 16
      %v8044 = vshll.u32 %v7816, 16
      %v8046 = vrot.slane %v8044, 1
      %v8047 = vor.u32 %v8042, %v8046
      %v8049 = vshll.u32 %v7832, 16
      %v8051 = vrot.slane %v8049, 1
      %v8052 = vsel %vm608, %v8047, %v8051
      %v8054 = vshrl.u32 %v7817, 16
      %v8056 = vshll.u32 %v7817, 16
      %v8058 = vrot.slane %v8056, 1
      %v8059 = vor.u32 %v8054, %v8058
      %v8061 = vshll.u32 %v7833, 16
      %v8063 = vrot.slane %v8061, 1
      %v8064 = vsel %vm608, %v8059, %v8063
      %v8097 = vrot.slane %v7802, 1
      %v8098 = vrot.slane %v7818, 1
      %v8099 = vsel %vm842, %v8097, %v8098
      %v8100 = vrot.slane %v7803, 1
      %v8101 = vrot.slane %v7819, 1
      %v8102 = vsel %vm842, %v8100, %v8101
      %v8103 = vrot.slane %v7804, 1
      %v8104 = vrot.slane %v7820, 1
      %v8105 = vsel %vm842, %v8103, %v8104
      %v8106 = vrot.slane %v7805, 1
      %v8107 = vrot.slane %v7821, 1
      %v8108 = vsel %vm842, %v8106, %v8107
      %v8109 = vrot.slane %v7806, 1
      %v8110 = vrot.slane %v7822, 1
      %v8111 = vsel %vm842, %v8109, %v8110
      %v8112 = vrot.slane %v7807, 1
      %v8113 = vrot.slane %v7823, 1
      %v8114 = vsel %vm842, %v8112, %v8113
      %v8115 = vrot.slane %v7808, 1
      %v8116 = vrot.slane %v7824, 1
      %v8117 = vsel %vm842, %v8115, %v8116
      %v8118 = vrot.slane %v7809, 1
      %v8119 = vrot.slane %v7825, 1
      %v8120 = vsel %vm842, %v8118, %v8119
      %v8121 = vrot.slane %v7810, 1
      %v8122 = vrot.slane %v7826, 1
      %v8123 = vsel %vm842, %v8121, %v8122
      %v8124 = vrot.slane %v7811, 1
      %v8125 = vrot.slane %v7827, 1
      %v8126 = vsel %vm842, %v8124, %v8125
      %v8127 = vrot.slane %v7812, 1
      %v8128 = vrot.slane %v7828, 1
      %v8129 = vsel %vm842, %v8127, %v8128
      %v8130 = vrot.slane %v7813, 1
      %v8131 = vrot.slane %v7829, 1
      %v8132 = vsel %vm842, %v8130, %v8131
      %v8133 = vrot.slane %v7814, 1
      %v8134 = vrot.slane %v7830, 1
      %v8135 = vsel %vm842, %v8133, %v8134
      %v8136 = vrot.slane %v7815, 1
      %v8137 = vrot.slane %v7831, 1
      %v8138 = vsel %vm842, %v8136, %v8137
      %v8139 = vrot.slane %v7816, 1
      %v8140 = vrot.slane %v7832, 1
      %v8141 = vsel %vm842, %v8139, %v8140
      %v8142 = vrot.slane %v7817, 1
      %v8143 = vrot.slane %v7833, 1
      %v8144 = vsel %vm842, %v8142, %v8143
      %8145 = vrot.lane.b32.xlu0 %v7884, 32
      %v8146 = vpop.permute.xlu0 %8145
      %8147 = vrot.lane.b32.xlu0 %v7896, 32
      %v8148 = vpop.permute.xlu0 %8147
      %8149 = vrot.lane.b32.xlu0 %v7908, 32
      %v8150 = vpop.permute.xlu0 %8149
      %8151 = vrot.lane.b32.xlu0 %v7920, 32
      %v8152 = vpop.permute.xlu0 %8151
      %8153 = vrot.lane.b32.xlu0 %v7932, 32
      %v8154 = vpop.permute.xlu0 %8153
      %8155 = vrot.lane.b32.xlu0 %v7944, 32
      %v8156 = vpop.permute.xlu0 %8155
      %8157 = vrot.lane.b32.xlu0 %v7956, 32
      %v8158 = vpop.permute.xlu0 %8157
      %8159 = vrot.lane.b32.xlu0 %v7968, 32
      %v8160 = vpop.permute.xlu0 %8159
      %8161 = vrot.lane.b32.xlu0 %v7980, 32
      %v8162 = vpop.permute.xlu0 %8161
      %8163 = vrot.lane.b32.xlu0 %v7992, 32
      %v8164 = vpop.permute.xlu0 %8163
      %8165 = vrot.lane.b32.xlu0 %v8004, 32
      %v8166 = vpop.permute.xlu0 %8165
      %8167 = vrot.lane.b32.xlu0 %v8016, 32
      %v8168 = vpop.permute.xlu0 %8167
      %8169 = vrot.lane.b32.xlu0 %v8028, 32
      %v8170 = vpop.permute.xlu0 %8169
      %8171 = vrot.lane.b32.xlu0 %v8040, 32
      %v8172 = vpop.permute.xlu0 %8171
      %8173 = vrot.lane.b32.xlu0 %v8052, 32
      %v8174 = vpop.permute.xlu0 %8173
      %8175 = vrot.lane.b32.xlu0 %v8099, 64
      %v8176 = vpop.permute.xlu0 %8175
      %8177 = vrot.lane.b32.xlu0 %v8102, 64
      %v8178 = vpop.permute.xlu0 %8177
      %8179 = vrot.lane.b32.xlu0 %v8105, 64
      %v8180 = vpop.permute.xlu0 %8179
      %8181 = vrot.lane.b32.xlu0 %v8108, 64
      %v8182 = vpop.permute.xlu0 %8181
      %8183 = vrot.lane.b32.xlu0 %v8111, 64
      %v8184 = vpop.permute.xlu0 %8183
      %8185 = vrot.lane.b32.xlu0 %v8114, 64
      %v8186 = vpop.permute.xlu0 %8185
      %8187 = vrot.lane.b32.xlu0 %v8117, 64
      %v8188 = vpop.permute.xlu0 %8187
      %8189 = vrot.lane.b32.xlu0 %v8120, 64
      %v8190 = vpop.permute.xlu0 %8189
      %8191 = vrot.lane.b32.xlu0 %v8123, 64
      %v8192 = vpop.permute.xlu0 %8191
      %8193 = vrot.lane.b32.xlu0 %v8126, 64
      %v8194 = vpop.permute.xlu0 %8193
      %8195 = vrot.lane.b32.xlu0 %v8129, 64
      %v8196 = vpop.permute.xlu0 %8195
      %8197 = vrot.lane.b32.xlu0 %v8132, 64
      %v8198 = vpop.permute.xlu0 %8197
      %8199 = vrot.lane.b32.xlu0 %v8135, 64
      %v8200 = vpop.permute.xlu0 %8199
      %8201 = vrot.lane.b32.xlu0 %v8138, 64
      %v8202 = vpop.permute.xlu0 %8201
      %8203 = vrot.lane.b32.xlu0 %v8141, 64
      %v8204 = vpop.permute.xlu0 %8203
      %8205 = vrot.lane.b32.xlu0 %v7802, 96
      %v8206 = vpop.permute.xlu0 %8205
      %8207 = vrot.lane.b32.xlu0 %v7803, 96
      %v8208 = vpop.permute.xlu0 %8207
      %8209 = vrot.lane.b32.xlu0 %v7804, 96
      %v8210 = vpop.permute.xlu0 %8209
      %8211 = vrot.lane.b32.xlu0 %v7805, 96
      %v8212 = vpop.permute.xlu0 %8211
      %8213 = vrot.lane.b32.xlu0 %v7806, 96
      %v8214 = vpop.permute.xlu0 %8213
      %8215 = vrot.lane.b32.xlu0 %v7807, 96
      %v8216 = vpop.permute.xlu0 %8215
      %8217 = vrot.lane.b32.xlu0 %v7808, 96
      %v8218 = vpop.permute.xlu0 %8217
      %8219 = vrot.lane.b32.xlu0 %v7809, 96
      %v8220 = vpop.permute.xlu0 %8219
      %8221 = vrot.lane.b32.xlu0 %v7810, 96
      %v8222 = vpop.permute.xlu0 %8221
      %8223 = vrot.lane.b32.xlu0 %v7811, 96
      %v8224 = vpop.permute.xlu0 %8223
      %8225 = vrot.lane.b32.xlu0 %v7812, 96
      %v8226 = vpop.permute.xlu0 %8225
      %8227 = vrot.lane.b32.xlu0 %v7813, 96
      %v8228 = vpop.permute.xlu0 %8227
      %8229 = vrot.lane.b32.xlu0 %v7814, 96
      %v8230 = vpop.permute.xlu0 %8229
      %8231 = vrot.lane.b32.xlu0 %v7815, 96
      %v8232 = vpop.permute.xlu0 %8231
      %8233 = vrot.lane.b32.xlu0 %v7816, 96
      %v8234 = vpop.permute.xlu0 %8233
      %8235 = vrot.lane.b32.xlu0 %v7817, 96
      %v8236 = vpop.permute.xlu0 %8235
      %8237 = vrot.lane.b32.xlu0 %v8099, 32
      %v8238 = vpop.permute.xlu0 %8237
      %8239 = vrot.lane.b32.xlu0 %v8102, 32
      %v8240 = vpop.permute.xlu0 %8239
      %8241 = vrot.lane.b32.xlu0 %v8105, 32
      %v8242 = vpop.permute.xlu0 %8241
      %8243 = vrot.lane.b32.xlu0 %v8108, 32
      %v8244 = vpop.permute.xlu0 %8243
      %8245 = vrot.lane.b32.xlu0 %v8111, 32
      %v8246 = vpop.permute.xlu0 %8245
      %8247 = vrot.lane.b32.xlu0 %v8114, 32
      %v8248 = vpop.permute.xlu0 %8247
      %8249 = vrot.lane.b32.xlu0 %v8117, 32
      %v8250 = vpop.permute.xlu0 %8249
      %8251 = vrot.lane.b32.xlu0 %v8120, 32
      %v8252 = vpop.permute.xlu0 %8251
      %8253 = vrot.lane.b32.xlu0 %v8123, 32
      %v8254 = vpop.permute.xlu0 %8253
      %8255 = vrot.lane.b32.xlu0 %v8126, 32
      %v8256 = vpop.permute.xlu0 %8255
      %8257 = vrot.lane.b32.xlu0 %v8129, 32
      %v8258 = vpop.permute.xlu0 %8257
      %8259 = vrot.lane.b32.xlu0 %v8132, 32
      %v8260 = vpop.permute.xlu0 %8259
      %8261 = vrot.lane.b32.xlu0 %v8135, 32
      %v8262 = vpop.permute.xlu0 %8261
      %8263 = vrot.lane.b32.xlu0 %v8138, 32
      %v8264 = vpop.permute.xlu0 %8263
      %8265 = vrot.lane.b32.xlu0 %v8141, 32
      %v8266 = vpop.permute.xlu0 %8265
      %8267 = vrot.lane.b32.xlu0 %v8144, 32
      %v8268 = vpop.permute.xlu0 %8267
      %8269 = vrot.lane.b32.xlu0 %v7803, 64
      %v8270 = vpop.permute.xlu0 %8269
      %8271 = vrot.lane.b32.xlu0 %v7804, 64
      %v8272 = vpop.permute.xlu0 %8271
      %8273 = vrot.lane.b32.xlu0 %v7805, 64
      %v8274 = vpop.permute.xlu0 %8273
      %8275 = vrot.lane.b32.xlu0 %v7806, 64
      %v8276 = vpop.permute.xlu0 %8275
      %8277 = vrot.lane.b32.xlu0 %v7807, 64
      %v8278 = vpop.permute.xlu0 %8277
      %8279 = vrot.lane.b32.xlu0 %v7808, 64
      %v8280 = vpop.permute.xlu0 %8279
      %8281 = vrot.lane.b32.xlu0 %v7809, 64
      %v8282 = vpop.permute.xlu0 %8281
      %8283 = vrot.lane.b32.xlu0 %v7810, 64
      %v8284 = vpop.permute.xlu0 %8283
      %8285 = vrot.lane.b32.xlu0 %v7811, 64
      %v8286 = vpop.permute.xlu0 %8285
      %8287 = vrot.lane.b32.xlu0 %v7812, 64
      %v8288 = vpop.permute.xlu0 %8287
      %8289 = vrot.lane.b32.xlu0 %v7813, 64
      %v8290 = vpop.permute.xlu0 %8289
      %8291 = vrot.lane.b32.xlu0 %v7814, 64
      %v8292 = vpop.permute.xlu0 %8291
      %8293 = vrot.lane.b32.xlu0 %v7815, 64
      %v8294 = vpop.permute.xlu0 %8293
      %8295 = vrot.lane.b32.xlu0 %v7816, 64
      %v8296 = vpop.permute.xlu0 %8295
      %8297 = vrot.lane.b32.xlu0 %v7817, 64
      %v8298 = vpop.permute.xlu0 %8297
      %8299 = vrot.lane.b32.xlu0 %v7896, 96
      %v8300 = vpop.permute.xlu0 %8299
      %8301 = vrot.lane.b32.xlu0 %v7908, 96
      %v8302 = vpop.permute.xlu0 %8301
      %8303 = vrot.lane.b32.xlu0 %v7920, 96
      %v8304 = vpop.permute.xlu0 %8303
      %8305 = vrot.lane.b32.xlu0 %v7932, 96
      %v8306 = vpop.permute.xlu0 %8305
      %8307 = vrot.lane.b32.xlu0 %v7944, 96
      %v8308 = vpop.permute.xlu0 %8307
      %8309 = vrot.lane.b32.xlu0 %v7956, 96
      %v8310 = vpop.permute.xlu0 %8309
      %8311 = vrot.lane.b32.xlu0 %v7968, 96
      %v8312 = vpop.permute.xlu0 %8311
      %8313 = vrot.lane.b32.xlu0 %v7980, 96
      %v8314 = vpop.permute.xlu0 %8313
      %8315 = vrot.lane.b32.xlu0 %v7992, 96
      %v8316 = vpop.permute.xlu0 %8315
      %8317 = vrot.lane.b32.xlu0 %v8004, 96
      %v8318 = vpop.permute.xlu0 %8317
      %8319 = vrot.lane.b32.xlu0 %v8016, 96
      %v8320 = vpop.permute.xlu0 %8319
      %8321 = vrot.lane.b32.xlu0 %v8028, 96
      %v8322 = vpop.permute.xlu0 %8321
      %8323 = vrot.lane.b32.xlu0 %v8040, 96
      %v8324 = vpop.permute.xlu0 %8323
      %8325 = vrot.lane.b32.xlu0 %v8052, 96
      %v8326 = vpop.permute.xlu0 %8325
      %8327 = vrot.lane.b32.xlu0 %v8064, 96
      %v8328 = vpop.permute.xlu0 %8327
      %v8330 = vsel %vm1085, %v7802, %v8146
      %v8332 = vsel %vm1085, %v7803, %v8148
      %v8334 = vsel %vm1085, %v7804, %v8150
      %v8336 = vsel %vm1085, %v7805, %v8152
      %v8338 = vsel %vm1085, %v7806, %v8154
      %v8340 = vsel %vm1085, %v7807, %v8156
      %v8342 = vsel %vm1085, %v7808, %v8158
      %v8344 = vsel %vm1085, %v7809, %v8160
      %v8346 = vsel %vm1085, %v7810, %v8162
      %v8348 = vsel %vm1085, %v7811, %v8164
      %v8350 = vsel %vm1085, %v7812, %v8166
      %v8352 = vsel %vm1085, %v7813, %v8168
      %v8354 = vsel %vm1085, %v7814, %v8170
      %v8356 = vsel %vm1085, %v7815, %v8172
      %v8358 = vsel %vm1085, %v7816, %v8174
      %v8360 = vsel %vm1118, %v8330, %v8176
      %v8362 = vsel %vm1118, %v8332, %v8178
      %v8364 = vsel %vm1118, %v8334, %v8180
      %v8366 = vsel %vm1118, %v8336, %v8182
      %v8368 = vsel %vm1118, %v8338, %v8184
      %v8370 = vsel %vm1118, %v8340, %v8186
      %v8372 = vsel %vm1118, %v8342, %v8188
      %v8374 = vsel %vm1118, %v8344, %v8190
      %v8376 = vsel %vm1118, %v8346, %v8192
      %v8378 = vsel %vm1118, %v8348, %v8194
      %v8380 = vsel %vm1118, %v8350, %v8196
      %v8382 = vsel %vm1118, %v8352, %v8198
      %v8384 = vsel %vm1118, %v8354, %v8200
      %v8386 = vsel %vm1118, %v8356, %v8202
      %v8388 = vsel %vm1118, %v8358, %v8204
      %v8390 = vsel %vm1151, %v1120, %v8206
      %v8393 = vsel %vm1151, %v8360, %v8208
      %v8396 = vsel %vm1151, %v8362, %v8210
      %v8399 = vsel %vm1151, %v8364, %v8212
      %v8402 = vsel %vm1151, %v8366, %v8214
      %v8405 = vsel %vm1151, %v8368, %v8216
      %v8408 = vsel %vm1151, %v8370, %v8218
      %v8411 = vsel %vm1151, %v8372, %v8220
      %v8414 = vsel %vm1151, %v8374, %v8222
      %v8417 = vsel %vm1151, %v8376, %v8224
      %v8420 = vsel %vm1151, %v8378, %v8226
      %v8423 = vsel %vm1151, %v8380, %v8228
      %v8426 = vsel %vm1151, %v8382, %v8230
      %v8429 = vsel %vm1151, %v8384, %v8232
      %v8432 = vsel %vm1151, %v8386, %v8234
      %v8435 = vsel %vm1151, %v8388, %v8236
      %v8439 = vsel %vm1085, %v7884, %v8238
      %v8442 = vsel %vm1085, %v7896, %v8240
      %v8445 = vsel %vm1085, %v7908, %v8242
      %v8448 = vsel %vm1085, %v7920, %v8244
      %v8451 = vsel %vm1085, %v7932, %v8246
      %v8454 = vsel %vm1085, %v7944, %v8248
      %v8457 = vsel %vm1085, %v7956, %v8250
      %v8460 = vsel %vm1085, %v7968, %v8252
      %v8463 = vsel %vm1085, %v7980, %v8254
      %v8466 = vsel %vm1085, %v7992, %v8256
      %v8469 = vsel %vm1085, %v8004, %v8258
      %v8472 = vsel %vm1085, %v8016, %v8260
      %v8475 = vsel %vm1085, %v8028, %v8262
      %v8478 = vsel %vm1085, %v8040, %v8264
      %v8481 = vsel %vm1085, %v8052, %v8266
      %v8484 = vsel %vm1085, %v8064, %v8268
      %v8486 = vsel %vm1118, %v8439, %v8270
      %v8488 = vsel %vm1118, %v8442, %v8272
      %v8490 = vsel %vm1118, %v8445, %v8274
      %v8492 = vsel %vm1118, %v8448, %v8276
      %v8494 = vsel %vm1118, %v8451, %v8278
      %v8496 = vsel %vm1118, %v8454, %v8280
      %v8498 = vsel %vm1118, %v8457, %v8282
      %v8500 = vsel %vm1118, %v8460, %v8284
      %v8502 = vsel %vm1118, %v8463, %v8286
      %v8504 = vsel %vm1118, %v8466, %v8288
      %v8506 = vsel %vm1118, %v8469, %v8290
      %v8508 = vsel %vm1118, %v8472, %v8292
      %v8510 = vsel %vm1118, %v8475, %v8294
      %v8512 = vsel %vm1118, %v8478, %v8296
      %v8514 = vsel %vm1118, %v8481, %v8298
      %v8515 = vsel %vm1118, %v8484, %v1052
      %v8517 = vsel %vm1151, %v8486, %v8300
      %v8520 = vsel %vm1151, %v8488, %v8302
      %v8523 = vsel %vm1151, %v8490, %v8304
      %v8526 = vsel %vm1151, %v8492, %v8306
      %v8529 = vsel %vm1151, %v8494, %v8308
      %v8532 = vsel %vm1151, %v8496, %v8310
      %v8535 = vsel %vm1151, %v8498, %v8312
      %v8538 = vsel %vm1151, %v8500, %v8314
      %v8541 = vsel %vm1151, %v8502, %v8316
      %v8544 = vsel %vm1151, %v8504, %v8318
      %v8547 = vsel %vm1151, %v8506, %v8320
      %v8550 = vsel %vm1151, %v8508, %v8322
      %v8553 = vsel %vm1151, %v8510, %v8324
      %v8556 = vsel %vm1151, %v8512, %v8326
      %v8559 = vsel %vm1151, %v8514, %v8328
      %v8561 = vsel %vm1151, %v8515, %v1084
      %v8564 = vlaneseq
      %v8565 = vshrl.u32 %v8564, 7
      %v8566 = vsub.s32 0, %v8565
      %v8567 = vrot.slane %v7872, %v8566
      %v8605 = vunpack.c.l.b16 %v7835
      %v8606 = vunpack.c.l.b16 %v7836
      %v8607 = vunpack.c.l.b16 %v7837
      %v8608 = vunpack.c.l.b16 %v7838
      %v8609 = vunpack.c.l.b16 %v7839
      %v8610 = vunpack.c.l.b16 %v7840
      %v8611 = vunpack.c.l.b16 %v7841
      %v8612 = vunpack.c.l.b16 %v7842
      %v8613 = vunpack.c.l.b16 %v7843
      %v8614 = vunpack.c.l.b16 %v7844
      %v8615 = vunpack.c.l.b16 %v7845
      %v8616 = vunpack.c.l.b16 %v7846
      %v8617 = vunpack.c.l.b16 %v7847
      %v8618 = vunpack.c.l.b16 %v7848
      %v8619 = vunpack.c.l.b16 %v7849
      %v8620 = vunpack.c.l.b16 %v7850
      %v8621 = vunpack.c.l.b16 %v7851
      %v8622 = vunpack.c.l.b16 %v7852
      %v8623 = vunpack.c.l.b16 %v7853
      %v8624 = vunpack.c.l.b16 %v7854
      %v8625 = vunpack.c.l.b16 %v7855
      %v8626 = vunpack.c.l.b16 %v7856
      %v8627 = vunpack.c.l.b16 %v7857
      %v8628 = vunpack.c.l.b16 %v7858
      %v8629 = vunpack.c.l.b16 %v7859
      %v8630 = vunpack.c.l.b16 %v7860
      %v8631 = vunpack.c.l.b16 %v7861
      %v8632 = vunpack.c.l.b16 %v7862
      %v8633 = vunpack.c.l.b16 %v7863
      %v8634 = vunpack.c.l.b16 %v7864
      %v8635 = vunpack.c.l.b16 %v7865
      %v8636 = vunpack.c.l.b16 %v7866
      %v8637 = vunpack.c.l.b16 %v7867
      %v8638 = vunpack.c.l.b16 %v7868
      %v8639 = vunpack.c.l.b16 %v7869
      %v8640 = vunpack.c.l.b16 %v7870
      %v8641 = vpack.c.b16 %v8606, %v8605
      %v8642 = vpack.c.b16 %v8608, %v8607
      %v8643 = vpack.c.b16 %v8610, %v8609
      %v8644 = vpack.c.b16 %v8612, %v8611
      %v8645 = vpack.c.b16 %v8614, %v8613
      %v8646 = vpack.c.b16 %v8616, %v8615
      %v8647 = vpack.c.b16 %v8618, %v8617
      %v8648 = vpack.c.b16 %v8620, %v8619
      %v8649 = vpack.c.b16 %v8622, %v8621
      %v8650 = vpack.c.b16 %v8624, %v8623
      %v8651 = vpack.c.b16 %v8626, %v8625
      %v8652 = vpack.c.b16 %v8628, %v8627
      %v8653 = vpack.c.b16 %v8630, %v8629
      %v8654 = vpack.c.b16 %v8632, %v8631
      %v8655 = vpack.c.b16 %v8634, %v8633
      %v8656 = vpack.c.b16 %v8636, %v8635
      %v8657 = vpack.c.b16 %v8638, %v8637
      %v8658 = vpack.c.b16 %v8640, %v8639
      %v8678 = vsel %vm1085, %v8102, 0
      %v8681 = vsel %vm1085, %v8105, 0
      %v8684 = vsel %vm1085, %v8108, 0
      %v8687 = vsel %vm1085, %v8111, 0
      %v8690 = vsel %vm1085, %v8114, 0
      %v8693 = vsel %vm1085, %v8117, 0
      %v8696 = vsel %vm1085, %v8120, 0
      %v8699 = vsel %vm1085, %v8123, 0
      %v8702 = vsel %vm1085, %v8126, 0
      %v8705 = vsel %vm1085, %v8129, 0
      %v8708 = vsel %vm1085, %v8132, 0
      %v8711 = vsel %vm1085, %v8135, 0
      %v8714 = vsel %vm1085, %v8138, 0
      %v8717 = vsel %vm1085, %v8141, 0
      %v8720 = vsel %vm1085, %v8144, 0
      %8722 = vmatprep.subr.bf16.mxu0 0
      %8723 = vmatpush1.bf16.msra.mxu0 %v8648
      %8724 = vmatprep.subr.bf16.mxu0 0
      %8725 = vmatpush1.bf16.msra.mxu0 %v8647
      %8726 = vmatprep.subr.bf16.mxu0 0
      %8727 = vmatpush1.bf16.msra.mxu0 %v8646
      %8728 = vmatprep.subr.bf16.mxu0 0
      %8729 = vmatpush1.bf16.msra.mxu0 %v8645
      %8730 = vmatprep.subr.bf16.mxu0 0
      %8731 = vmatpush1.bf16.msra.mxu0 %v8644
      %8732 = vmatprep.subr.bf16.mxu0 0
      %8733 = vmatpush1.bf16.msra.mxu0 %v8643
      %8734 = vmatprep.subr.bf16.mxu0 0
      %8735 = vmatpush1.bf16.msra.mxu0 %v8642
      %8736 = vmatprep.subr.bf16.mxu0 0
      %8737 = vmatpush1.bf16.msra.mxu0 %v8641
      %8738 = vmatprep.subr.bf16.mxu0 0
      %8739 = vmatpush2.bf16.msra.mxu0 %v8656
      %8740 = vmatprep.subr.bf16.mxu0 0
      %8741 = vmatpush2.bf16.msra.mxu0 %v8655
      %8742 = vmatprep.subr.bf16.mxu0 0
      %8743 = vmatpush2.bf16.msra.mxu0 %v8654
      %8744 = vmatprep.subr.bf16.mxu0 0
      %8745 = vmatpush2.bf16.msra.mxu0 %v8653
      %8746 = vmatprep.subr.bf16.mxu0 0
      %8747 = vmatpush2.bf16.msra.mxu0 %v8652
      %8748 = vmatprep.subr.bf16.mxu0 0
      %8749 = vmatpush2.bf16.msra.mxu0 %v8651
      %8750 = vmatprep.subr.bf16.mxu0 0
      %8751 = vmatpush2.bf16.msra.mxu0 %v8650
      %8752 = vmatprep.subr.bf16.mxu0 0
      %8753 = vmatpush2.bf16.msra.mxu0 %v8649
      %8754 = vmatprep.mubr.bf16.mxu0 %v8517
      %8755 = vmatmul.mubr.bf16.gmra.mxu0 %v8390
      %v8756 = vpop.f32.mrf.mxu0
      %v8757 = vadd.f32 %v8567, %v8756
      %v8758 = vpop.f32.mrf.mxu0
      %v8759 = vpop.f32.mrf.mxu0
      %v8760 = vadd.f32 %v8567, %v8759
      %v8761 = vpop.f32.mrf.mxu0
      %8762 = vmatprep.mubr.bf16.mxu0 %v8520
      %8763 = vmatmul.mubr.bf16.gmra.mxu0 %v8393
      %v8764 = vpop.f32.mrf.mxu0
      %v8765 = vadd.f32 %v8567, %v8764
      %v8766 = vpop.f32.mrf.mxu0
      %v8767 = vpop.f32.mrf.mxu0
      %v8768 = vadd.f32 %v8567, %v8767
      %v8769 = vpop.f32.mrf.mxu0
      %8770 = vmatprep.mubr.bf16.mxu0 %v8523
      %8771 = vmatmul.mubr.bf16.gmra.mxu0 %v8396
      %v8772 = vpop.f32.mrf.mxu0
      %v8773 = vadd.f32 %v8567, %v8772
      %v8774 = vpop.f32.mrf.mxu0
      %v8775 = vpop.f32.mrf.mxu0
      %v8776 = vadd.f32 %v8567, %v8775
      %v8777 = vpop.f32.mrf.mxu0
      %8778 = vmatprep.mubr.bf16.mxu0 %v8526
      %8779 = vmatmul.mubr.bf16.gmra.mxu0 %v8399
      %v8780 = vpop.f32.mrf.mxu0
      %v8781 = vadd.f32 %v8567, %v8780
      %v8782 = vpop.f32.mrf.mxu0
      %v8783 = vpop.f32.mrf.mxu0
      %v8784 = vadd.f32 %v8567, %v8783
      %v8785 = vpop.f32.mrf.mxu0
      %8786 = vmatprep.mubr.bf16.mxu0 %v8529
      %8787 = vmatmul.mubr.bf16.gmra.mxu0 %v8402
      %v8788 = vpop.f32.mrf.mxu0
      %v8789 = vadd.f32 %v8567, %v8788
      %v8790 = vpop.f32.mrf.mxu0
      %v8791 = vpop.f32.mrf.mxu0
      %v8792 = vadd.f32 %v8567, %v8791
      %v8793 = vpop.f32.mrf.mxu0
      %8794 = vmatprep.mubr.bf16.mxu0 %v8532
      %8795 = vmatmul.mubr.bf16.gmra.mxu0 %v8405
      %v8796 = vpop.f32.mrf.mxu0
      %v8797 = vadd.f32 %v8567, %v8796
      %v8798 = vpop.f32.mrf.mxu0
      %v8799 = vpop.f32.mrf.mxu0
      %v8800 = vadd.f32 %v8567, %v8799
      %v8801 = vpop.f32.mrf.mxu0
      %8802 = vmatprep.mubr.bf16.mxu0 %v8535
      %8803 = vmatmul.mubr.bf16.gmra.mxu0 %v8408
      %v8804 = vpop.f32.mrf.mxu0
      %v8805 = vadd.f32 %v8567, %v8804
      %v8806 = vpop.f32.mrf.mxu0
      %v8807 = vpop.f32.mrf.mxu0
      %v8808 = vadd.f32 %v8567, %v8807
      %v8809 = vpop.f32.mrf.mxu0
      %8810 = vmatprep.mubr.bf16.mxu0 %v8538
      %8811 = vmatmul.mubr.bf16.gmra.mxu0 %v8411
      %v8812 = vpop.f32.mrf.mxu0
      %v8813 = vadd.f32 %v8567, %v8812
      %v8814 = vpop.f32.mrf.mxu0
      %v8815 = vpop.f32.mrf.mxu0
      %v8816 = vadd.f32 %v8567, %v8815
      %v8817 = vpop.f32.mrf.mxu0
      %8818 = vmatprep.mubr.bf16.mxu0 %v8541
      %8819 = vmatmul.mubr.bf16.gmra.mxu0 %v8414
      %v8820 = vpop.f32.mrf.mxu0
      %v8821 = vadd.f32 %v8567, %v8820
      %v8822 = vpop.f32.mrf.mxu0
      %v8823 = vpop.f32.mrf.mxu0
      %v8824 = vadd.f32 %v8567, %v8823
      %v8825 = vpop.f32.mrf.mxu0
      %8826 = vmatprep.mubr.bf16.mxu0 %v8544
      %8827 = vmatmul.mubr.bf16.gmra.mxu0 %v8417
      %v8828 = vpop.f32.mrf.mxu0
      %v8829 = vadd.f32 %v8567, %v8828
      %v8830 = vpop.f32.mrf.mxu0
      %v8831 = vpop.f32.mrf.mxu0
      %v8832 = vadd.f32 %v8567, %v8831
      %v8833 = vpop.f32.mrf.mxu0
      %8834 = vmatprep.mubr.bf16.mxu0 %v8547
      %8835 = vmatmul.mubr.bf16.gmra.mxu0 %v8420
      %v8836 = vpop.f32.mrf.mxu0
      %v8837 = vadd.f32 %v8567, %v8836
      %v8838 = vpop.f32.mrf.mxu0
      %v8839 = vpop.f32.mrf.mxu0
      %v8840 = vadd.f32 %v8567, %v8839
      %v8841 = vpop.f32.mrf.mxu0
      %8842 = vmatprep.mubr.bf16.mxu0 %v8550
      %8843 = vmatmul.mubr.bf16.gmra.mxu0 %v8423
      %v8844 = vpop.f32.mrf.mxu0
      %v8845 = vadd.f32 %v8567, %v8844
      %v8846 = vpop.f32.mrf.mxu0
      %v8847 = vpop.f32.mrf.mxu0
      %v8848 = vadd.f32 %v8567, %v8847
      %v8849 = vpop.f32.mrf.mxu0
      %8850 = vmatprep.mubr.bf16.mxu0 %v8553
      %8851 = vmatmul.mubr.bf16.gmra.mxu0 %v8426
      %v8852 = vpop.f32.mrf.mxu0
      %v8853 = vadd.f32 %v8567, %v8852
      %v8854 = vpop.f32.mrf.mxu0
      %v8855 = vpop.f32.mrf.mxu0
      %v8856 = vadd.f32 %v8567, %v8855
      %v8857 = vpop.f32.mrf.mxu0
      %8858 = vmatprep.mubr.bf16.mxu0 %v8556
      %8859 = vmatmul.mubr.bf16.gmra.mxu0 %v8429
      %v8860 = vpop.f32.mrf.mxu0
      %v8861 = vadd.f32 %v8567, %v8860
      %v8862 = vpop.f32.mrf.mxu0
      %v8863 = vpop.f32.mrf.mxu0
      %v8864 = vadd.f32 %v8567, %v8863
      %v8865 = vpop.f32.mrf.mxu0
      %8866 = vmatprep.mubr.bf16.mxu0 %v8559
      %8867 = vmatmul.mubr.bf16.gmra.mxu0 %v8432
      %v8868 = vpop.f32.mrf.mxu0
      %v8869 = vadd.f32 %v8567, %v8868
      %v8870 = vpop.f32.mrf.mxu0
      %v8871 = vpop.f32.mrf.mxu0
      %v8872 = vadd.f32 %v8567, %v8871
      %v8873 = vpop.f32.mrf.mxu0
      %8874 = vmatprep.mubr.bf16.mxu0 %v8561
      %8875 = vmatmul.mubr.bf16.gmra.mxu0 %v8435
      %v8876 = vpop.f32.mrf.mxu0
      %v8877 = vadd.f32 %v8567, %v8876
      %v8878 = vpop.f32.mrf.mxu0
      %v8879 = vpop.f32.mrf.mxu0
      %v8880 = vadd.f32 %v8567, %v8879
      %v8881 = vpop.f32.mrf.mxu0
      %8882 = vdwg.mxu0
      %8883 = vmatprep.subr.bf16.mxu0 0
      %8884 = vmatpush1.bf16.msra.mxu0 0
      %8885 = vmatprep.subr.bf16.mxu0 0
      %8886 = vmatpush1.bf16.msra.mxu0 0
      %8887 = vmatprep.subr.bf16.mxu0 0
      %8888 = vmatpush1.bf16.msra.mxu0 0
      %8889 = vmatprep.subr.bf16.mxu0 0
      %8890 = vmatpush1.bf16.msra.mxu0 0
      %8891 = vmatprep.subr.bf16.mxu0 0
      %8892 = vmatpush1.bf16.msra.mxu0 0
      %8893 = vmatprep.subr.bf16.mxu0 0
      %8894 = vmatpush1.bf16.msra.mxu0 0
      %8895 = vmatprep.subr.bf16.mxu0 0
      %8896 = vmatpush1.bf16.msra.mxu0 %v8658
      %8897 = vmatprep.subr.bf16.mxu0 0
      %8898 = vmatpush1.bf16.msra.mxu0 %v8657
      %8899 = vmatprep.subr.bf16.mxu0 0
      %8900 = vmatpush2.bf16.msra.mxu0 0
      %8901 = vmatprep.subr.bf16.mxu0 0
      %8902 = vmatpush2.bf16.msra.mxu0 0
      %8903 = vmatprep.subr.bf16.mxu0 0
      %8904 = vmatpush2.bf16.msra.mxu0 0
      %8905 = vmatprep.subr.bf16.mxu0 0
      %8906 = vmatpush2.bf16.msra.mxu0 0
      %8907 = vmatprep.subr.bf16.mxu0 0
      %8908 = vmatpush2.bf16.msra.mxu0 0
      %8909 = vmatprep.subr.bf16.mxu0 0
      %8910 = vmatpush2.bf16.msra.mxu0 0
      %8911 = vmatprep.subr.bf16.mxu0 0
      %8912 = vmatpush2.bf16.msra.mxu0 0
      %8913 = vmatprep.subr.bf16.mxu0 0
      %8914 = vmatpush2.bf16.msra.mxu0 0
      %8915 = vmatprep.mubr.bf16.mxu0 0
      %8916 = vmatmul.mubr.bf16.gmra.mxu0 %v8678
      %v8917 = vpop.f32.mrf.mxu0
      %v8918 = vadd.f32 %v8757, %v8917
      %v8919 = vpop.f32.mrf.mxu0
      %v8920 = vpop.f32.mrf.mxu0
      %v8921 = vadd.f32 %v8760, %v8920
      %v8922 = vpop.f32.mrf.mxu0
      %8923 = vmatprep.mubr.bf16.mxu0 0
      %8924 = vmatmul.mubr.bf16.gmra.mxu0 %v8681
      %v8925 = vpop.f32.mrf.mxu0
      %v8926 = vadd.f32 %v8765, %v8925
      %v8927 = vpop.f32.mrf.mxu0
      %v8928 = vpop.f32.mrf.mxu0
      %v8929 = vadd.f32 %v8768, %v8928
      %v8930 = vpop.f32.mrf.mxu0
      %8931 = vmatprep.mubr.bf16.mxu0 0
      %8932 = vmatmul.mubr.bf16.gmra.mxu0 %v8684
      %v8933 = vpop.f32.mrf.mxu0
      %v8934 = vadd.f32 %v8773, %v8933
      %v8935 = vpop.f32.mrf.mxu0
      %v8936 = vpop.f32.mrf.mxu0
      %v8937 = vadd.f32 %v8776, %v8936
      %v8938 = vpop.f32.mrf.mxu0
      %8939 = vmatprep.mubr.bf16.mxu0 0
      %8940 = vmatmul.mubr.bf16.gmra.mxu0 %v8687
      %v8941 = vpop.f32.mrf.mxu0
      %v8942 = vadd.f32 %v8781, %v8941
      %v8943 = vpop.f32.mrf.mxu0
      %v8944 = vpop.f32.mrf.mxu0
      %v8945 = vadd.f32 %v8784, %v8944
      %v8946 = vpop.f32.mrf.mxu0
      %8947 = vmatprep.mubr.bf16.mxu0 0
      %8948 = vmatmul.mubr.bf16.gmra.mxu0 %v8690
      %v8949 = vpop.f32.mrf.mxu0
      %v8950 = vadd.f32 %v8789, %v8949
      %v8951 = vpop.f32.mrf.mxu0
      %v8952 = vpop.f32.mrf.mxu0
      %v8953 = vadd.f32 %v8792, %v8952
      %v8954 = vpop.f32.mrf.mxu0
      %8955 = vmatprep.mubr.bf16.mxu0 0
      %8956 = vmatmul.mubr.bf16.gmra.mxu0 %v8693
      %v8957 = vpop.f32.mrf.mxu0
      %v8958 = vadd.f32 %v8797, %v8957
      %v8959 = vpop.f32.mrf.mxu0
      %v8960 = vpop.f32.mrf.mxu0
      %v8961 = vadd.f32 %v8800, %v8960
      %v8962 = vpop.f32.mrf.mxu0
      %8963 = vmatprep.mubr.bf16.mxu0 0
      %8964 = vmatmul.mubr.bf16.gmra.mxu0 %v8696
      %v8965 = vpop.f32.mrf.mxu0
      %v8966 = vadd.f32 %v8805, %v8965
      %v8967 = vpop.f32.mrf.mxu0
      %v8968 = vpop.f32.mrf.mxu0
      %v8969 = vadd.f32 %v8808, %v8968
      %v8970 = vpop.f32.mrf.mxu0
      %8971 = vmatprep.mubr.bf16.mxu0 0
      %8972 = vmatmul.mubr.bf16.gmra.mxu0 %v8699
      %v8973 = vpop.f32.mrf.mxu0
      %v8974 = vadd.f32 %v8813, %v8973
      %v8975 = vpop.f32.mrf.mxu0
      %v8976 = vpop.f32.mrf.mxu0
      %v8977 = vadd.f32 %v8816, %v8976
      %v8978 = vpop.f32.mrf.mxu0
      %8979 = vmatprep.mubr.bf16.mxu0 0
      %8980 = vmatmul.mubr.bf16.gmra.mxu0 %v8702
      %v8981 = vpop.f32.mrf.mxu0
      %v8982 = vadd.f32 %v8821, %v8981
      %v8983 = vpop.f32.mrf.mxu0
      %v8984 = vpop.f32.mrf.mxu0
      %v8985 = vadd.f32 %v8824, %v8984
      %v8986 = vpop.f32.mrf.mxu0
      %8987 = vmatprep.mubr.bf16.mxu0 0
      %8988 = vmatmul.mubr.bf16.gmra.mxu0 %v8705
      %v8989 = vpop.f32.mrf.mxu0
      %v8990 = vadd.f32 %v8829, %v8989
      %v8991 = vpop.f32.mrf.mxu0
      %v8992 = vpop.f32.mrf.mxu0
      %v8993 = vadd.f32 %v8832, %v8992
      %v8994 = vpop.f32.mrf.mxu0
      %8995 = vmatprep.mubr.bf16.mxu0 0
      %8996 = vmatmul.mubr.bf16.gmra.mxu0 %v8708
      %v8997 = vpop.f32.mrf.mxu0
      %v8998 = vadd.f32 %v8837, %v8997
      %v8999 = vpop.f32.mrf.mxu0
      %v9000 = vpop.f32.mrf.mxu0
      %v9001 = vadd.f32 %v8840, %v9000
      %v9002 = vpop.f32.mrf.mxu0
      %9003 = vmatprep.mubr.bf16.mxu0 0
      %9004 = vmatmul.mubr.bf16.gmra.mxu0 %v8711
      %v9005 = vpop.f32.mrf.mxu0
      %v9006 = vadd.f32 %v8845, %v9005
      %v9007 = vpop.f32.mrf.mxu0
      %v9008 = vpop.f32.mrf.mxu0
      %v9009 = vadd.f32 %v8848, %v9008
      %v9010 = vpop.f32.mrf.mxu0
      %9011 = vmatprep.mubr.bf16.mxu0 0
      %9012 = vmatmul.mubr.bf16.gmra.mxu0 %v8714
      %v9013 = vpop.f32.mrf.mxu0
      %v9014 = vadd.f32 %v8853, %v9013
      %v9015 = vpop.f32.mrf.mxu0
      %v9016 = vpop.f32.mrf.mxu0
      %v9017 = vadd.f32 %v8856, %v9016
      %v9018 = vpop.f32.mrf.mxu0
      %9019 = vmatprep.mubr.bf16.mxu0 0
      %9020 = vmatmul.mubr.bf16.gmra.mxu0 %v8717
      %v9021 = vpop.f32.mrf.mxu0
      %v9022 = vadd.f32 %v8861, %v9021
      %v9023 = vpop.f32.mrf.mxu0
      %v9024 = vpop.f32.mrf.mxu0
      %v9025 = vadd.f32 %v8864, %v9024
      %v9026 = vpop.f32.mrf.mxu0
      %9027 = vmatprep.mubr.bf16.mxu0 0
      %9028 = vmatmul.mubr.bf16.gmra.mxu0 %v8720
      %v9029 = vpop.f32.mrf.mxu0
      %v9030 = vadd.f32 %v8869, %v9029
      %v9031 = vpop.f32.mrf.mxu0
      %v9032 = vpop.f32.mrf.mxu0
      %v9033 = vadd.f32 %v8872, %v9032
      %v9034 = vpop.f32.mrf.mxu0
      %9035 = vmatprep.mubr.bf16.mxu0 0
      %9036 = vmatmul.mubr.bf16.gmra.mxu0 %v1488
      %v9037 = vpop.f32.mrf.mxu0
      %v9038 = vadd.f32 %v8877, %v9037
      %v9039 = vpop.f32.mrf.mxu0
      %v9040 = vpop.f32.mrf.mxu0
      %v9041 = vadd.f32 %v8880, %v9040
      %v9042 = vpop.f32.mrf.mxu0
      %9043 = vdwg.mxu0
      %v9044 = vmax.f32 %v8918, 0.0
      %v9045 = vmax.f32 %v8921, 0.0
      %v9046 = vmax.f32 %v8926, 0.0
      %v9047 = vmax.f32 %v8929, 0.0
      %v9048 = vmax.f32 %v8934, 0.0
      %v9049 = vmax.f32 %v8937, 0.0
      %v9050 = vmax.f32 %v8942, 0.0
      %v9051 = vmax.f32 %v8945, 0.0
      %v9052 = vmax.f32 %v8950, 0.0
      %v9053 = vmax.f32 %v8953, 0.0
      %v9054 = vmax.f32 %v8958, 0.0
      %v9055 = vmax.f32 %v8961, 0.0
      %v9056 = vmax.f32 %v8966, 0.0
      %v9057 = vmax.f32 %v8969, 0.0
      %v9058 = vmax.f32 %v8974, 0.0
      %v9059 = vmax.f32 %v8977, 0.0
      %v9060 = vmax.f32 %v8982, 0.0
      %v9061 = vmax.f32 %v8985, 0.0
      %v9062 = vmax.f32 %v8990, 0.0
      %v9063 = vmax.f32 %v8993, 0.0
      %v9064 = vmax.f32 %v8998, 0.0
      %v9065 = vmax.f32 %v9001, 0.0
      %v9066 = vmax.f32 %v9006, 0.0
      %v9067 = vmax.f32 %v9009, 0.0
      %v9068 = vmax.f32 %v9014, 0.0
      %v9069 = vmax.f32 %v9017, 0.0
      %v9070 = vmax.f32 %v9022, 0.0
      %v9071 = vmax.f32 %v9025, 0.0
      %v9072 = vmax.f32 %v9030, 0.0
      %v9073 = vmax.f32 %v9033, 0.0
      %v9074 = vmax.f32 %v9038, 0.0
      %v9075 = vmax.f32 %v9041, 0.0
      %v9076 = vpack.c.bf16 %v9045, %v9044
      %v9077 = vpack.c.bf16 %v9047, %v9046
      %v9078 = vpack.c.bf16 %v9049, %v9048
      %v9079 = vpack.c.bf16 %v9051, %v9050
      %v9080 = vpack.c.bf16 %v9053, %v9052
      %v9081 = vpack.c.bf16 %v9055, %v9054
      %v9082 = vpack.c.bf16 %v9057, %v9056
      %v9083 = vpack.c.bf16 %v9059, %v9058
      %v9084 = vpack.c.bf16 %v9061, %v9060
      %v9085 = vpack.c.bf16 %v9063, %v9062
      %v9086 = vpack.c.bf16 %v9065, %v9064
      %v9087 = vpack.c.bf16 %v9067, %v9066
      %v9088 = vpack.c.bf16 %v9069, %v9068
      %v9089 = vpack.c.bf16 %v9071, %v9070
      %v9090 = vpack.c.bf16 %v9073, %v9072
      %v9091 = vpack.c.bf16 %v9075, %v9074
      %v9093 = vshrl.u32 %v9076, 16
      %v9095 = vrot.slane %v9093, 7
      %v9096 = vshll.u32 %v9076, 16
      %v9098 = vor.u32 %v9095, %v9096
      %v9100 = vshrl.u32 %v9077, 16
      %v9102 = vrot.slane %v9100, 7
      %v9103 = vshll.u32 %v9077, 16
      %v9105 = vor.u32 %v9102, %v9103
      %v9107 = vshrl.u32 %v9078, 16
      %v9109 = vrot.slane %v9107, 7
      %v9110 = vshll.u32 %v9078, 16
      %v9112 = vor.u32 %v9109, %v9110
      %v9114 = vshrl.u32 %v9079, 16
      %v9116 = vrot.slane %v9114, 7
      %v9117 = vshll.u32 %v9079, 16
      %v9119 = vor.u32 %v9116, %v9117
      %v9121 = vshrl.u32 %v9080, 16
      %v9123 = vrot.slane %v9121, 7
      %v9124 = vshll.u32 %v9080, 16
      %v9126 = vor.u32 %v9123, %v9124
      %v9128 = vshrl.u32 %v9081, 16
      %v9130 = vrot.slane %v9128, 7
      %v9131 = vshll.u32 %v9081, 16
      %v9133 = vor.u32 %v9130, %v9131
      %v9135 = vshrl.u32 %v9082, 16
      %v9137 = vrot.slane %v9135, 7
      %v9138 = vshll.u32 %v9082, 16
      %v9140 = vor.u32 %v9137, %v9138
      %v9142 = vshrl.u32 %v9083, 16
      %v9144 = vrot.slane %v9142, 7
      %v9145 = vshll.u32 %v9083, 16
      %v9147 = vor.u32 %v9144, %v9145
      %v9149 = vshrl.u32 %v9084, 16
      %v9151 = vrot.slane %v9149, 7
      %v9152 = vshll.u32 %v9084, 16
      %v9154 = vor.u32 %v9151, %v9152
      %v9156 = vshrl.u32 %v9085, 16
      %v9158 = vrot.slane %v9156, 7
      %v9159 = vshll.u32 %v9085, 16
      %v9161 = vor.u32 %v9158, %v9159
      %v9163 = vshrl.u32 %v9086, 16
      %v9165 = vrot.slane %v9163, 7
      %v9166 = vshll.u32 %v9086, 16
      %v9168 = vor.u32 %v9165, %v9166
      %v9170 = vshrl.u32 %v9087, 16
      %v9172 = vrot.slane %v9170, 7
      %v9173 = vshll.u32 %v9087, 16
      %v9175 = vor.u32 %v9172, %v9173
      %v9177 = vshrl.u32 %v9088, 16
      %v9179 = vrot.slane %v9177, 7
      %v9180 = vshll.u32 %v9088, 16
      %v9182 = vor.u32 %v9179, %v9180
      %v9184 = vshrl.u32 %v9089, 16
      %v9186 = vrot.slane %v9184, 7
      %v9187 = vshll.u32 %v9089, 16
      %v9189 = vor.u32 %v9186, %v9187
      %v9191 = vshrl.u32 %v9090, 16
      %v9193 = vrot.slane %v9191, 7
      %v9194 = vshll.u32 %v9090, 16
      %v9196 = vor.u32 %v9193, %v9194
      %v9198 = vshrl.u32 %v9091, 16
      %v9200 = vrot.slane %v9198, 7
      %v9201 = vshll.u32 %v9091, 16
      %v9203 = vor.u32 %v9200, %v9201
      %v9236 = vsel %vm538, 0, %v9098
      %v9237 = vsel %vm538, 0, %v9105
      %v9238 = vsel %vm538, 0, %v9112
      %v9239 = vsel %vm538, 0, %v9119
      %v9240 = vsel %vm538, 0, %v9126
      %v9241 = vsel %vm538, 0, %v9133
      %v9242 = vsel %vm538, 0, %v9140
      %v9243 = vsel %vm538, 0, %v9147
      %v9244 = vsel %vm538, 0, %v9154
      %v9245 = vsel %vm538, 0, %v9161
      %v9246 = vsel %vm538, 0, %v9168
      %v9247 = vsel %vm538, 0, %v9175
      %v9248 = vsel %vm538, 0, %v9182
      %v9249 = vsel %vm538, 0, %v9189
      %v9250 = vsel %vm538, 0, %v9196
      %v9251 = vsel %vm538, 0, %v9203
      %v9252 = vsel %vm538, %v9095, 0
      %v9253 = vsel %vm538, %v9102, 0
      %v9254 = vsel %vm538, %v9109, 0
      %v9255 = vsel %vm538, %v9116, 0
      %v9256 = vsel %vm538, %v9123, 0
      %v9257 = vsel %vm538, %v9130, 0
      %v9258 = vsel %vm538, %v9137, 0
      %v9259 = vsel %vm538, %v9144, 0
      %v9260 = vsel %vm538, %v9151, 0
      %v9261 = vsel %vm538, %v9158, 0
      %v9262 = vsel %vm538, %v9165, 0
      %v9263 = vsel %vm538, %v9172, 0
      %v9264 = vsel %vm538, %v9179, 0
      %v9265 = vsel %vm538, %v9186, 0
      %v9266 = vsel %vm538, %v9193, 0
      %v9267 = vsel %vm538, %v9200, 0
      %s9268 = scalar_lea.vmem %s3, 720
      %v9269 = vld [vmem:[%s9268] sm:$0xf]
      %v9270 = vld [vmem:[%s9268 + $0x4] sm:$0xf]
      %v9271 = vld [vmem:[%s9268 + $0x8] sm:$0xf]
      %v9272 = vld [vmem:[%s9268 + $0xc] sm:$0xf]
      %v9273 = vld [vmem:[%s9268 + $0x10] sm:$0xf]
      %v9274 = vld [vmem:[%s9268 + $0x14] sm:$0xf]
      %v9275 = vld [vmem:[%s9268 + $0x18] sm:$0xf]
      %v9276 = vld [vmem:[%s9268 + $0x1c] sm:$0xf]
      %v9277 = vld [vmem:[%s9268 + $0x20] sm:$0xf]
      %v9278 = vld [vmem:[%s9268 + $0x24] sm:$0xf]
      %v9279 = vld [vmem:[%s9268 + $0x28] sm:$0xf]
      %v9280 = vld [vmem:[%s9268 + $0x2c] sm:$0xf]
      %v9281 = vld [vmem:[%s9268 + $0x30] sm:$0xf]
      %v9282 = vld [vmem:[%s9268 + $0x34] sm:$0xf]
      %v9283 = vld [vmem:[%s9268 + $0x38] sm:$0xf]
      %v9284 = vld [vmem:[%s9268 + $0x3c] sm:$0xf]
      %v9285 = vld [vmem:[%s9268 + $0x40] sm:$0xf]
      %v9286 = vld [vmem:[%s9268 + $0x44] sm:$0xf]
      %v9287 = vld [vmem:[%s9268 + $0x48] sm:$0xf]
      %v9288 = vld [vmem:[%s9268 + $0x4c] sm:$0xf]
      %v9289 = vld [vmem:[%s9268 + $0x50] sm:$0xf]
      %v9290 = vld [vmem:[%s9268 + $0x54] sm:$0xf]
      %v9291 = vld [vmem:[%s9268 + $0x58] sm:$0xf]
      %v9292 = vld [vmem:[%s9268 + $0x5c] sm:$0xf]
      %v9293 = vld [vmem:[%s9268 + $0x60] sm:$0xf]
      %v9294 = vld [vmem:[%s9268 + $0x64] sm:$0xf]
      %v9295 = vld [vmem:[%s9268 + $0x68] sm:$0xf]
      %v9296 = vld [vmem:[%s9268 + $0x6c] sm:$0xf]
      %v9297 = vld [vmem:[%s9268 + $0x70] sm:$0xf]
      %v9298 = vld [vmem:[%s9268 + $0x74] sm:$0xf]
      %v9299 = vld [vmem:[%s9268 + $0x78] sm:$0xf]
      %v9300 = vld [vmem:[%s9268 + $0x7c] sm:$0xf]
      %v9301 = vld [vmem:[%s9268 + $0x80] sm:$0xf]
      %v9302 = vld [vmem:[%s9268 + $0x84] sm:$0xf]
      %v9303 = vld [vmem:[%s9268 + $0x88] sm:$0xf]
      %v9304 = vld [vmem:[%s9268 + $0x8c] sm:$0xf]
      %s9305 = scalar_lea.vmem %s4, 5
      %v9306 = vld [vmem:[%s9305] sm:$0x1]
      %v9308 = vshrl.u32 %v9236, 16
      %v9310 = vshll.u32 %v9236, 16
      %v9312 = vrot.slane %v9310, 1
      %v9313 = vor.u32 %v9308, %v9312
      %v9315 = vshll.u32 %v9252, 16
      %v9317 = vrot.slane %v9315, 1
      %v9318 = vsel %vm608, %v9313, %v9317
      %v9320 = vshrl.u32 %v9237, 16
      %v9322 = vshll.u32 %v9237, 16
      %v9324 = vrot.slane %v9322, 1
      %v9325 = vor.u32 %v9320, %v9324
      %v9327 = vshll.u32 %v9253, 16
      %v9329 = vrot.slane %v9327, 1
      %v9330 = vsel %vm608, %v9325, %v9329
      %v9332 = vshrl.u32 %v9238, 16
      %v9334 = vshll.u32 %v9238, 16
      %v9336 = vrot.slane %v9334, 1
      %v9337 = vor.u32 %v9332, %v9336
      %v9339 = vshll.u32 %v9254, 16
      %v9341 = vrot.slane %v9339, 1
      %v9342 = vsel %vm608, %v9337, %v9341
      %v9344 = vshrl.u32 %v9239, 16
      %v9346 = vshll.u32 %v9239, 16
      %v9348 = vrot.slane %v9346, 1
      %v9349 = vor.u32 %v9344, %v9348
      %v9351 = vshll.u32 %v9255, 16
      %v9353 = vrot.slane %v9351, 1
      %v9354 = vsel %vm608, %v9349, %v9353
      %v9356 = vshrl.u32 %v9240, 16
      %v9358 = vshll.u32 %v9240, 16
      %v9360 = vrot.slane %v9358, 1
      %v9361 = vor.u32 %v9356, %v9360
      %v9363 = vshll.u32 %v9256, 16
      %v9365 = vrot.slane %v9363, 1
      %v9366 = vsel %vm608, %v9361, %v9365
      %v9368 = vshrl.u32 %v9241, 16
      %v9370 = vshll.u32 %v9241, 16
      %v9372 = vrot.slane %v9370, 1
      %v9373 = vor.u32 %v9368, %v9372
      %v9375 = vshll.u32 %v9257, 16
      %v9377 = vrot.slane %v9375, 1
      %v9378 = vsel %vm608, %v9373, %v9377
      %v9380 = vshrl.u32 %v9242, 16
      %v9382 = vshll.u32 %v9242, 16
      %v9384 = vrot.slane %v9382, 1
      %v9385 = vor.u32 %v9380, %v9384
      %v9387 = vshll.u32 %v9258, 16
      %v9389 = vrot.slane %v9387, 1
      %v9390 = vsel %vm608, %v9385, %v9389
      %v9392 = vshrl.u32 %v9243, 16
      %v9394 = vshll.u32 %v9243, 16
      %v9396 = vrot.slane %v9394, 1
      %v9397 = vor.u32 %v9392, %v9396
      %v9399 = vshll.u32 %v9259, 16
      %v9401 = vrot.slane %v9399, 1
      %v9402 = vsel %vm608, %v9397, %v9401
      %v9404 = vshrl.u32 %v9244, 16
      %v9406 = vshll.u32 %v9244, 16
      %v9408 = vrot.slane %v9406, 1
      %v9409 = vor.u32 %v9404, %v9408
      %v9411 = vshll.u32 %v9260, 16
      %v9413 = vrot.slane %v9411, 1
      %v9414 = vsel %vm608, %v9409, %v9413
      %v9416 = vshrl.u32 %v9245, 16
      %v9418 = vshll.u32 %v9245, 16
      %v9420 = vrot.slane %v9418, 1
      %v9421 = vor.u32 %v9416, %v9420
      %v9423 = vshll.u32 %v9261, 16
      %v9425 = vrot.slane %v9423, 1
      %v9426 = vsel %vm608, %v9421, %v9425
      %v9428 = vshrl.u32 %v9246, 16
      %v9430 = vshll.u32 %v9246, 16
      %v9432 = vrot.slane %v9430, 1
      %v9433 = vor.u32 %v9428, %v9432
      %v9435 = vshll.u32 %v9262, 16
      %v9437 = vrot.slane %v9435, 1
      %v9438 = vsel %vm608, %v9433, %v9437
      %v9440 = vshrl.u32 %v9247, 16
      %v9442 = vshll.u32 %v9247, 16
      %v9444 = vrot.slane %v9442, 1
      %v9445 = vor.u32 %v9440, %v9444
      %v9447 = vshll.u32 %v9263, 16
      %v9449 = vrot.slane %v9447, 1
      %v9450 = vsel %vm608, %v9445, %v9449
      %v9452 = vshrl.u32 %v9248, 16
      %v9454 = vshll.u32 %v9248, 16
      %v9456 = vrot.slane %v9454, 1
      %v9457 = vor.u32 %v9452, %v9456
      %v9459 = vshll.u32 %v9264, 16
      %v9461 = vrot.slane %v9459, 1
      %v9462 = vsel %vm608, %v9457, %v9461
      %v9464 = vshrl.u32 %v9249, 16
      %v9466 = vshll.u32 %v9249, 16
      %v9468 = vrot.slane %v9466, 1
      %v9469 = vor.u32 %v9464, %v9468
      %v9471 = vshll.u32 %v9265, 16
      %v9473 = vrot.slane %v9471, 1
      %v9474 = vsel %vm608, %v9469, %v9473
      %v9476 = vshrl.u32 %v9250, 16
      %v9478 = vshll.u32 %v9250, 16
      %v9480 = vrot.slane %v9478, 1
      %v9481 = vor.u32 %v9476, %v9480
      %v9483 = vshll.u32 %v9266, 16
      %v9485 = vrot.slane %v9483, 1
      %v9486 = vsel %vm608, %v9481, %v9485
      %v9488 = vshrl.u32 %v9251, 16
      %v9490 = vshll.u32 %v9251, 16
      %v9492 = vrot.slane %v9490, 1
      %v9493 = vor.u32 %v9488, %v9492
      %v9495 = vshll.u32 %v9267, 16
      %v9497 = vrot.slane %v9495, 1
      %v9498 = vsel %vm608, %v9493, %v9497
      %v9531 = vrot.slane %v9236, 1
      %v9532 = vrot.slane %v9252, 1
      %v9533 = vsel %vm842, %v9531, %v9532
      %v9534 = vrot.slane %v9237, 1
      %v9535 = vrot.slane %v9253, 1
      %v9536 = vsel %vm842, %v9534, %v9535
      %v9537 = vrot.slane %v9238, 1
      %v9538 = vrot.slane %v9254, 1
      %v9539 = vsel %vm842, %v9537, %v9538
      %v9540 = vrot.slane %v9239, 1
      %v9541 = vrot.slane %v9255, 1
      %v9542 = vsel %vm842, %v9540, %v9541
      %v9543 = vrot.slane %v9240, 1
      %v9544 = vrot.slane %v9256, 1
      %v9545 = vsel %vm842, %v9543, %v9544
      %v9546 = vrot.slane %v9241, 1
      %v9547 = vrot.slane %v9257, 1
      %v9548 = vsel %vm842, %v9546, %v9547
      %v9549 = vrot.slane %v9242, 1
      %v9550 = vrot.slane %v9258, 1
      %v9551 = vsel %vm842, %v9549, %v9550
      %v9552 = vrot.slane %v9243, 1
      %v9553 = vrot.slane %v9259, 1
      %v9554 = vsel %vm842, %v9552, %v9553
      %v9555 = vrot.slane %v9244, 1
      %v9556 = vrot.slane %v9260, 1
      %v9557 = vsel %vm842, %v9555, %v9556
      %v9558 = vrot.slane %v9245, 1
      %v9559 = vrot.slane %v9261, 1
      %v9560 = vsel %vm842, %v9558, %v9559
      %v9561 = vrot.slane %v9246, 1
      %v9562 = vrot.slane %v9262, 1
      %v9563 = vsel %vm842, %v9561, %v9562
      %v9564 = vrot.slane %v9247, 1
      %v9565 = vrot.slane %v9263, 1
      %v9566 = vsel %vm842, %v9564, %v9565
      %v9567 = vrot.slane %v9248, 1
      %v9568 = vrot.slane %v9264, 1
      %v9569 = vsel %vm842, %v9567, %v9568
      %v9570 = vrot.slane %v9249, 1
      %v9571 = vrot.slane %v9265, 1
      %v9572 = vsel %vm842, %v9570, %v9571
      %v9573 = vrot.slane %v9250, 1
      %v9574 = vrot.slane %v9266, 1
      %v9575 = vsel %vm842, %v9573, %v9574
      %v9576 = vrot.slane %v9251, 1
      %v9577 = vrot.slane %v9267, 1
      %v9578 = vsel %vm842, %v9576, %v9577
      %9579 = vrot.lane.b32.xlu0 %v9318, 32
      %v9580 = vpop.permute.xlu0 %9579
      %9581 = vrot.lane.b32.xlu0 %v9330, 32
      %v9582 = vpop.permute.xlu0 %9581
      %9583 = vrot.lane.b32.xlu0 %v9342, 32
      %v9584 = vpop.permute.xlu0 %9583
      %9585 = vrot.lane.b32.xlu0 %v9354, 32
      %v9586 = vpop.permute.xlu0 %9585
      %9587 = vrot.lane.b32.xlu0 %v9366, 32
      %v9588 = vpop.permute.xlu0 %9587
      %9589 = vrot.lane.b32.xlu0 %v9378, 32
      %v9590 = vpop.permute.xlu0 %9589
      %9591 = vrot.lane.b32.xlu0 %v9390, 32
      %v9592 = vpop.permute.xlu0 %9591
      %9593 = vrot.lane.b32.xlu0 %v9402, 32
      %v9594 = vpop.permute.xlu0 %9593
      %9595 = vrot.lane.b32.xlu0 %v9414, 32
      %v9596 = vpop.permute.xlu0 %9595
      %9597 = vrot.lane.b32.xlu0 %v9426, 32
      %v9598 = vpop.permute.xlu0 %9597
      %9599 = vrot.lane.b32.xlu0 %v9438, 32
      %v9600 = vpop.permute.xlu0 %9599
      %9601 = vrot.lane.b32.xlu0 %v9450, 32
      %v9602 = vpop.permute.xlu0 %9601
      %9603 = vrot.lane.b32.xlu0 %v9462, 32
      %v9604 = vpop.permute.xlu0 %9603
      %9605 = vrot.lane.b32.xlu0 %v9474, 32
      %v9606 = vpop.permute.xlu0 %9605
      %9607 = vrot.lane.b32.xlu0 %v9486, 32
      %v9608 = vpop.permute.xlu0 %9607
      %9609 = vrot.lane.b32.xlu0 %v9533, 64
      %v9610 = vpop.permute.xlu0 %9609
      %9611 = vrot.lane.b32.xlu0 %v9536, 64
      %v9612 = vpop.permute.xlu0 %9611
      %9613 = vrot.lane.b32.xlu0 %v9539, 64
      %v9614 = vpop.permute.xlu0 %9613
      %9615 = vrot.lane.b32.xlu0 %v9542, 64
      %v9616 = vpop.permute.xlu0 %9615
      %9617 = vrot.lane.b32.xlu0 %v9545, 64
      %v9618 = vpop.permute.xlu0 %9617
      %9619 = vrot.lane.b32.xlu0 %v9548, 64
      %v9620 = vpop.permute.xlu0 %9619
      %9621 = vrot.lane.b32.xlu0 %v9551, 64
      %v9622 = vpop.permute.xlu0 %9621
      %9623 = vrot.lane.b32.xlu0 %v9554, 64
      %v9624 = vpop.permute.xlu0 %9623
      %9625 = vrot.lane.b32.xlu0 %v9557, 64
      %v9626 = vpop.permute.xlu0 %9625
      %9627 = vrot.lane.b32.xlu0 %v9560, 64
      %v9628 = vpop.permute.xlu0 %9627
      %9629 = vrot.lane.b32.xlu0 %v9563, 64
      %v9630 = vpop.permute.xlu0 %9629
      %9631 = vrot.lane.b32.xlu0 %v9566, 64
      %v9632 = vpop.permute.xlu0 %9631
      %9633 = vrot.lane.b32.xlu0 %v9569, 64
      %v9634 = vpop.permute.xlu0 %9633
      %9635 = vrot.lane.b32.xlu0 %v9572, 64
      %v9636 = vpop.permute.xlu0 %9635
      %9637 = vrot.lane.b32.xlu0 %v9575, 64
      %v9638 = vpop.permute.xlu0 %9637
      %9639 = vrot.lane.b32.xlu0 %v9236, 96
      %v9640 = vpop.permute.xlu0 %9639
      %9641 = vrot.lane.b32.xlu0 %v9237, 96
      %v9642 = vpop.permute.xlu0 %9641
      %9643 = vrot.lane.b32.xlu0 %v9238, 96
      %v9644 = vpop.permute.xlu0 %9643
      %9645 = vrot.lane.b32.xlu0 %v9239, 96
      %v9646 = vpop.permute.xlu0 %9645
      %9647 = vrot.lane.b32.xlu0 %v9240, 96
      %v9648 = vpop.permute.xlu0 %9647
      %9649 = vrot.lane.b32.xlu0 %v9241, 96
      %v9650 = vpop.permute.xlu0 %9649
      %9651 = vrot.lane.b32.xlu0 %v9242, 96
      %v9652 = vpop.permute.xlu0 %9651
      %9653 = vrot.lane.b32.xlu0 %v9243, 96
      %v9654 = vpop.permute.xlu0 %9653
      %9655 = vrot.lane.b32.xlu0 %v9244, 96
      %v9656 = vpop.permute.xlu0 %9655
      %9657 = vrot.lane.b32.xlu0 %v9245, 96
      %v9658 = vpop.permute.xlu0 %9657
      %9659 = vrot.lane.b32.xlu0 %v9246, 96
      %v9660 = vpop.permute.xlu0 %9659
      %9661 = vrot.lane.b32.xlu0 %v9247, 96
      %v9662 = vpop.permute.xlu0 %9661
      %9663 = vrot.lane.b32.xlu0 %v9248, 96
      %v9664 = vpop.permute.xlu0 %9663
      %9665 = vrot.lane.b32.xlu0 %v9249, 96
      %v9666 = vpop.permute.xlu0 %9665
      %9667 = vrot.lane.b32.xlu0 %v9250, 96
      %v9668 = vpop.permute.xlu0 %9667
      %9669 = vrot.lane.b32.xlu0 %v9251, 96
      %v9670 = vpop.permute.xlu0 %9669
      %9671 = vrot.lane.b32.xlu0 %v9533, 32
      %v9672 = vpop.permute.xlu0 %9671
      %9673 = vrot.lane.b32.xlu0 %v9536, 32
      %v9674 = vpop.permute.xlu0 %9673
      %9675 = vrot.lane.b32.xlu0 %v9539, 32
      %v9676 = vpop.permute.xlu0 %9675
      %9677 = vrot.lane.b32.xlu0 %v9542, 32
      %v9678 = vpop.permute.xlu0 %9677
      %9679 = vrot.lane.b32.xlu0 %v9545, 32
      %v9680 = vpop.permute.xlu0 %9679
      %9681 = vrot.lane.b32.xlu0 %v9548, 32
      %v9682 = vpop.permute.xlu0 %9681
      %9683 = vrot.lane.b32.xlu0 %v9551, 32
      %v9684 = vpop.permute.xlu0 %9683
      %9685 = vrot.lane.b32.xlu0 %v9554, 32
      %v9686 = vpop.permute.xlu0 %9685
      %9687 = vrot.lane.b32.xlu0 %v9557, 32
      %v9688 = vpop.permute.xlu0 %9687
      %9689 = vrot.lane.b32.xlu0 %v9560, 32
      %v9690 = vpop.permute.xlu0 %9689
      %9691 = vrot.lane.b32.xlu0 %v9563, 32
      %v9692 = vpop.permute.xlu0 %9691
      %9693 = vrot.lane.b32.xlu0 %v9566, 32
      %v9694 = vpop.permute.xlu0 %9693
      %9695 = vrot.lane.b32.xlu0 %v9569, 32
      %v9696 = vpop.permute.xlu0 %9695
      %9697 = vrot.lane.b32.xlu0 %v9572, 32
      %v9698 = vpop.permute.xlu0 %9697
      %9699 = vrot.lane.b32.xlu0 %v9575, 32
      %v9700 = vpop.permute.xlu0 %9699
      %9701 = vrot.lane.b32.xlu0 %v9578, 32
      %v9702 = vpop.permute.xlu0 %9701
      %9703 = vrot.lane.b32.xlu0 %v9237, 64
      %v9704 = vpop.permute.xlu0 %9703
      %9705 = vrot.lane.b32.xlu0 %v9238, 64
      %v9706 = vpop.permute.xlu0 %9705
      %9707 = vrot.lane.b32.xlu0 %v9239, 64
      %v9708 = vpop.permute.xlu0 %9707
      %9709 = vrot.lane.b32.xlu0 %v9240, 64
      %v9710 = vpop.permute.xlu0 %9709
      %9711 = vrot.lane.b32.xlu0 %v9241, 64
      %v9712 = vpop.permute.xlu0 %9711
      %9713 = vrot.lane.b32.xlu0 %v9242, 64
      %v9714 = vpop.permute.xlu0 %9713
      %9715 = vrot.lane.b32.xlu0 %v9243, 64
      %v9716 = vpop.permute.xlu0 %9715
      %9717 = vrot.lane.b32.xlu0 %v9244, 64
      %v9718 = vpop.permute.xlu0 %9717
      %9719 = vrot.lane.b32.xlu0 %v9245, 64
      %v9720 = vpop.permute.xlu0 %9719
      %9721 = vrot.lane.b32.xlu0 %v9246, 64
      %v9722 = vpop.permute.xlu0 %9721
      %9723 = vrot.lane.b32.xlu0 %v9247, 64
      %v9724 = vpop.permute.xlu0 %9723
      %9725 = vrot.lane.b32.xlu0 %v9248, 64
      %v9726 = vpop.permute.xlu0 %9725
      %9727 = vrot.lane.b32.xlu0 %v9249, 64
      %v9728 = vpop.permute.xlu0 %9727
      %9729 = vrot.lane.b32.xlu0 %v9250, 64
      %v9730 = vpop.permute.xlu0 %9729
      %9731 = vrot.lane.b32.xlu0 %v9251, 64
      %v9732 = vpop.permute.xlu0 %9731
      %9733 = vrot.lane.b32.xlu0 %v9330, 96
      %v9734 = vpop.permute.xlu0 %9733
      %9735 = vrot.lane.b32.xlu0 %v9342, 96
      %v9736 = vpop.permute.xlu0 %9735
      %9737 = vrot.lane.b32.xlu0 %v9354, 96
      %v9738 = vpop.permute.xlu0 %9737
      %9739 = vrot.lane.b32.xlu0 %v9366, 96
      %v9740 = vpop.permute.xlu0 %9739
      %9741 = vrot.lane.b32.xlu0 %v9378, 96
      %v9742 = vpop.permute.xlu0 %9741
      %9743 = vrot.lane.b32.xlu0 %v9390, 96
      %v9744 = vpop.permute.xlu0 %9743
      %9745 = vrot.lane.b32.xlu0 %v9402, 96
      %v9746 = vpop.permute.xlu0 %9745
      %9747 = vrot.lane.b32.xlu0 %v9414, 96
      %v9748 = vpop.permute.xlu0 %9747
      %9749 = vrot.lane.b32.xlu0 %v9426, 96
      %v9750 = vpop.permute.xlu0 %9749
      %9751 = vrot.lane.b32.xlu0 %v9438, 96
      %v9752 = vpop.permute.xlu0 %9751
      %9753 = vrot.lane.b32.xlu0 %v9450, 96
      %v9754 = vpop.permute.xlu0 %9753
      %9755 = vrot.lane.b32.xlu0 %v9462, 96
      %v9756 = vpop.permute.xlu0 %9755
      %9757 = vrot.lane.b32.xlu0 %v9474, 96
      %v9758 = vpop.permute.xlu0 %9757
      %9759 = vrot.lane.b32.xlu0 %v9486, 96
      %v9760 = vpop.permute.xlu0 %9759
      %9761 = vrot.lane.b32.xlu0 %v9498, 96
      %v9762 = vpop.permute.xlu0 %9761
      %v9764 = vsel %vm1085, %v9236, %v9580
      %v9766 = vsel %vm1085, %v9237, %v9582
      %v9768 = vsel %vm1085, %v9238, %v9584
      %v9770 = vsel %vm1085, %v9239, %v9586
      %v9772 = vsel %vm1085, %v9240, %v9588
      %v9774 = vsel %vm1085, %v9241, %v9590
      %v9776 = vsel %vm1085, %v9242, %v9592
      %v9778 = vsel %vm1085, %v9243, %v9594
      %v9780 = vsel %vm1085, %v9244, %v9596
      %v9782 = vsel %vm1085, %v9245, %v9598
      %v9784 = vsel %vm1085, %v9246, %v9600
      %v9786 = vsel %vm1085, %v9247, %v9602
      %v9788 = vsel %vm1085, %v9248, %v9604
      %v9790 = vsel %vm1085, %v9249, %v9606
      %v9792 = vsel %vm1085, %v9250, %v9608
      %v9794 = vsel %vm1118, %v9764, %v9610
      %v9796 = vsel %vm1118, %v9766, %v9612
      %v9798 = vsel %vm1118, %v9768, %v9614
      %v9800 = vsel %vm1118, %v9770, %v9616
      %v9802 = vsel %vm1118, %v9772, %v9618
      %v9804 = vsel %vm1118, %v9774, %v9620
      %v9806 = vsel %vm1118, %v9776, %v9622
      %v9808 = vsel %vm1118, %v9778, %v9624
      %v9810 = vsel %vm1118, %v9780, %v9626
      %v9812 = vsel %vm1118, %v9782, %v9628
      %v9814 = vsel %vm1118, %v9784, %v9630
      %v9816 = vsel %vm1118, %v9786, %v9632
      %v9818 = vsel %vm1118, %v9788, %v9634
      %v9820 = vsel %vm1118, %v9790, %v9636
      %v9822 = vsel %vm1118, %v9792, %v9638
      %v9824 = vsel %vm1151, %v1120, %v9640
      %v9827 = vsel %vm1151, %v9794, %v9642
      %v9830 = vsel %vm1151, %v9796, %v9644
      %v9833 = vsel %vm1151, %v9798, %v9646
      %v9836 = vsel %vm1151, %v9800, %v9648
      %v9839 = vsel %vm1151, %v9802, %v9650
      %v9842 = vsel %vm1151, %v9804, %v9652
      %v9845 = vsel %vm1151, %v9806, %v9654
      %v9848 = vsel %vm1151, %v9808, %v9656
      %v9851 = vsel %vm1151, %v9810, %v9658
      %v9854 = vsel %vm1151, %v9812, %v9660
      %v9857 = vsel %vm1151, %v9814, %v9662
      %v9860 = vsel %vm1151, %v9816, %v9664
      %v9863 = vsel %vm1151, %v9818, %v9666
      %v9866 = vsel %vm1151, %v9820, %v9668
      %v9869 = vsel %vm1151, %v9822, %v9670
      %v9873 = vsel %vm1085, %v9318, %v9672
      %v9876 = vsel %vm1085, %v9330, %v9674
      %v9879 = vsel %vm1085, %v9342, %v9676
      %v9882 = vsel %vm1085, %v9354, %v9678
      %v9885 = vsel %vm1085, %v9366, %v9680
      %v9888 = vsel %vm1085, %v9378, %v9682
      %v9891 = vsel %vm1085, %v9390, %v9684
      %v9894 = vsel %vm1085, %v9402, %v9686
      %v9897 = vsel %vm1085, %v9414, %v9688
      %v9900 = vsel %vm1085, %v9426, %v9690
      %v9903 = vsel %vm1085, %v9438, %v9692
      %v9906 = vsel %vm1085, %v9450, %v9694
      %v9909 = vsel %vm1085, %v9462, %v9696
      %v9912 = vsel %vm1085, %v9474, %v9698
      %v9915 = vsel %vm1085, %v9486, %v9700
      %v9918 = vsel %vm1085, %v9498, %v9702
      %v9920 = vsel %vm1118, %v9873, %v9704
      %v9922 = vsel %vm1118, %v9876, %v9706
      %v9924 = vsel %vm1118, %v9879, %v9708
      %v9926 = vsel %vm1118, %v9882, %v9710
      %v9928 = vsel %vm1118, %v9885, %v9712
      %v9930 = vsel %vm1118, %v9888, %v9714
      %v9932 = vsel %vm1118, %v9891, %v9716
      %v9934 = vsel %vm1118, %v9894, %v9718
      %v9936 = vsel %vm1118, %v9897, %v9720
      %v9938 = vsel %vm1118, %v9900, %v9722
      %v9940 = vsel %vm1118, %v9903, %v9724
      %v9942 = vsel %vm1118, %v9906, %v9726
      %v9944 = vsel %vm1118, %v9909, %v9728
      %v9946 = vsel %vm1118, %v9912, %v9730
      %v9948 = vsel %vm1118, %v9915, %v9732
      %v9949 = vsel %vm1118, %v9918, %v1052
      %v9951 = vsel %vm1151, %v9920, %v9734
      %v9954 = vsel %vm1151, %v9922, %v9736
      %v9957 = vsel %vm1151, %v9924, %v9738
      %v9960 = vsel %vm1151, %v9926, %v9740
      %v9963 = vsel %vm1151, %v9928, %v9742
      %v9966 = vsel %vm1151, %v9930, %v9744
      %v9969 = vsel %vm1151, %v9932, %v9746
      %v9972 = vsel %vm1151, %v9934, %v9748
      %v9975 = vsel %vm1151, %v9936, %v9750
      %v9978 = vsel %vm1151, %v9938, %v9752
      %v9981 = vsel %vm1151, %v9940, %v9754
      %v9984 = vsel %vm1151, %v9942, %v9756
      %v9987 = vsel %vm1151, %v9944, %v9758
      %v9990 = vsel %vm1151, %v9946, %v9760
      %v9993 = vsel %vm1151, %v9948, %v9762
      %v9995 = vsel %vm1151, %v9949, %v1084
      %v9998 = vlaneseq
      %v9999 = vshrl.u32 %v9998, 7
      %v10000 = vsub.s32 0, %v9999
      %v10001 = vrot.slane %v9306, %v10000
      %v10039 = vunpack.c.l.b16 %v9269
      %v10040 = vunpack.c.l.b16 %v9270
      %v10041 = vunpack.c.l.b16 %v9271
      %v10042 = vunpack.c.l.b16 %v9272
      %v10043 = vunpack.c.l.b16 %v9273
      %v10044 = vunpack.c.l.b16 %v9274
      %v10045 = vunpack.c.l.b16 %v9275
      %v10046 = vunpack.c.l.b16 %v9276
      %v10047 = vunpack.c.l.b16 %v9277
      %v10048 = vunpack.c.l.b16 %v9278
      %v10049 = vunpack.c.l.b16 %v9279
      %v10050 = vunpack.c.l.b16 %v9280
      %v10051 = vunpack.c.l.b16 %v9281
      %v10052 = vunpack.c.l.b16 %v9282
      %v10053 = vunpack.c.l.b16 %v9283
      %v10054 = vunpack.c.l.b16 %v9284
      %v10055 = vunpack.c.l.b16 %v9285
      %v10056 = vunpack.c.l.b16 %v9286
      %v10057 = vunpack.c.l.b16 %v9287
      %v10058 = vunpack.c.l.b16 %v9288
      %v10059 = vunpack.c.l.b16 %v9289
      %v10060 = vunpack.c.l.b16 %v9290
      %v10061 = vunpack.c.l.b16 %v9291
      %v10062 = vunpack.c.l.b16 %v9292
      %v10063 = vunpack.c.l.b16 %v9293
      %v10064 = vunpack.c.l.b16 %v9294
      %v10065 = vunpack.c.l.b16 %v9295
      %v10066 = vunpack.c.l.b16 %v9296
      %v10067 = vunpack.c.l.b16 %v9297
      %v10068 = vunpack.c.l.b16 %v9298
      %v10069 = vunpack.c.l.b16 %v9299
      %v10070 = vunpack.c.l.b16 %v9300
      %v10071 = vunpack.c.l.b16 %v9301
      %v10072 = vunpack.c.l.b16 %v9302
      %v10073 = vunpack.c.l.b16 %v9303
      %v10074 = vunpack.c.l.b16 %v9304
      %v10075 = vpack.c.b16 %v10040, %v10039
      %v10076 = vpack.c.b16 %v10042, %v10041
      %v10077 = vpack.c.b16 %v10044, %v10043
      %v10078 = vpack.c.b16 %v10046, %v10045
      %v10079 = vpack.c.b16 %v10048, %v10047
      %v10080 = vpack.c.b16 %v10050, %v10049
      %v10081 = vpack.c.b16 %v10052, %v10051
      %v10082 = vpack.c.b16 %v10054, %v10053
      %v10083 = vpack.c.b16 %v10056, %v10055
      %v10084 = vpack.c.b16 %v10058, %v10057
      %v10085 = vpack.c.b16 %v10060, %v10059
      %v10086 = vpack.c.b16 %v10062, %v10061
      %v10087 = vpack.c.b16 %v10064, %v10063
      %v10088 = vpack.c.b16 %v10066, %v10065
      %v10089 = vpack.c.b16 %v10068, %v10067
      %v10090 = vpack.c.b16 %v10070, %v10069
      %v10091 = vpack.c.b16 %v10072, %v10071
      %v10092 = vpack.c.b16 %v10074, %v10073
      %v10112 = vsel %vm1085, %v9536, 0
      %v10115 = vsel %vm1085, %v9539, 0
      %v10118 = vsel %vm1085, %v9542, 0
      %v10121 = vsel %vm1085, %v9545, 0
      %v10124 = vsel %vm1085, %v9548, 0
      %v10127 = vsel %vm1085, %v9551, 0
      %v10130 = vsel %vm1085, %v9554, 0
      %v10133 = vsel %vm1085, %v9557, 0
      %v10136 = vsel %vm1085, %v9560, 0
      %v10139 = vsel %vm1085, %v9563, 0
      %v10142 = vsel %vm1085, %v9566, 0
      %v10145 = vsel %vm1085, %v9569, 0
      %v10148 = vsel %vm1085, %v9572, 0
      %v10151 = vsel %vm1085, %v9575, 0
      %v10154 = vsel %vm1085, %v9578, 0
      %10156 = vmatprep.subr.bf16.mxu0 0
      %10157 = vmatpush1.bf16.msra.mxu0 %v10082
      %10158 = vmatprep.subr.bf16.mxu0 0
      %10159 = vmatpush1.bf16.msra.mxu0 %v10081
      %10160 = vmatprep.subr.bf16.mxu0 0
      %10161 = vmatpush1.bf16.msra.mxu0 %v10080
      %10162 = vmatprep.subr.bf16.mxu0 0
      %10163 = vmatpush1.bf16.msra.mxu0 %v10079
      %10164 = vmatprep.subr.bf16.mxu0 0
      %10165 = vmatpush1.bf16.msra.mxu0 %v10078
      %10166 = vmatprep.subr.bf16.mxu0 0
      %10167 = vmatpush1.bf16.msra.mxu0 %v10077
      %10168 = vmatprep.subr.bf16.mxu0 0
      %10169 = vmatpush1.bf16.msra.mxu0 %v10076
      %10170 = vmatprep.subr.bf16.mxu0 0
      %10171 = vmatpush1.bf16.msra.mxu0 %v10075
      %10172 = vmatprep.subr.bf16.mxu0 0
      %10173 = vmatpush2.bf16.msra.mxu0 %v10090
      %10174 = vmatprep.subr.bf16.mxu0 0
      %10175 = vmatpush2.bf16.msra.mxu0 %v10089
      %10176 = vmatprep.subr.bf16.mxu0 0
      %10177 = vmatpush2.bf16.msra.mxu0 %v10088
      %10178 = vmatprep.subr.bf16.mxu0 0
      %10179 = vmatpush2.bf16.msra.mxu0 %v10087
      %10180 = vmatprep.subr.bf16.mxu0 0
      %10181 = vmatpush2.bf16.msra.mxu0 %v10086
      %10182 = vmatprep.subr.bf16.mxu0 0
      %10183 = vmatpush2.bf16.msra.mxu0 %v10085
      %10184 = vmatprep.subr.bf16.mxu0 0
      %10185 = vmatpush2.bf16.msra.mxu0 %v10084
      %10186 = vmatprep.subr.bf16.mxu0 0
      %10187 = vmatpush2.bf16.msra.mxu0 %v10083
      %10188 = vmatprep.mubr.bf16.mxu0 %v9951
      %10189 = vmatmul.mubr.bf16.gmra.mxu0 %v9824
      %v10190 = vpop.f32.mrf.mxu0
      %v10191 = vadd.f32 %v10001, %v10190
      %v10192 = vpop.f32.mrf.mxu0
      %v10193 = vpop.f32.mrf.mxu0
      %v10194 = vadd.f32 %v10001, %v10193
      %v10195 = vpop.f32.mrf.mxu0
      %10196 = vmatprep.mubr.bf16.mxu0 %v9954
      %10197 = vmatmul.mubr.bf16.gmra.mxu0 %v9827
      %v10198 = vpop.f32.mrf.mxu0
      %v10199 = vadd.f32 %v10001, %v10198
      %v10200 = vpop.f32.mrf.mxu0
      %v10201 = vpop.f32.mrf.mxu0
      %v10202 = vadd.f32 %v10001, %v10201
      %v10203 = vpop.f32.mrf.mxu0
      %10204 = vmatprep.mubr.bf16.mxu0 %v9957
      %10205 = vmatmul.mubr.bf16.gmra.mxu0 %v9830
      %v10206 = vpop.f32.mrf.mxu0
      %v10207 = vadd.f32 %v10001, %v10206
      %v10208 = vpop.f32.mrf.mxu0
      %v10209 = vpop.f32.mrf.mxu0
      %v10210 = vadd.f32 %v10001, %v10209
      %v10211 = vpop.f32.mrf.mxu0
      %10212 = vmatprep.mubr.bf16.mxu0 %v9960
      %10213 = vmatmul.mubr.bf16.gmra.mxu0 %v9833
      %v10214 = vpop.f32.mrf.mxu0
      %v10215 = vadd.f32 %v10001, %v10214
      %v10216 = vpop.f32.mrf.mxu0
      %v10217 = vpop.f32.mrf.mxu0
      %v10218 = vadd.f32 %v10001, %v10217
      %v10219 = vpop.f32.mrf.mxu0
      %10220 = vmatprep.mubr.bf16.mxu0 %v9963
      %10221 = vmatmul.mubr.bf16.gmra.mxu0 %v9836
      %v10222 = vpop.f32.mrf.mxu0
      %v10223 = vadd.f32 %v10001, %v10222
      %v10224 = vpop.f32.mrf.mxu0
      %v10225 = vpop.f32.mrf.mxu0
      %v10226 = vadd.f32 %v10001, %v10225
      %v10227 = vpop.f32.mrf.mxu0
      %10228 = vmatprep.mubr.bf16.mxu0 %v9966
      %10229 = vmatmul.mubr.bf16.gmra.mxu0 %v9839
      %v10230 = vpop.f32.mrf.mxu0
      %v10231 = vadd.f32 %v10001, %v10230
      %v10232 = vpop.f32.mrf.mxu0
      %v10233 = vpop.f32.mrf.mxu0
      %v10234 = vadd.f32 %v10001, %v10233
      %v10235 = vpop.f32.mrf.mxu0
      %10236 = vmatprep.mubr.bf16.mxu0 %v9969
      %10237 = vmatmul.mubr.bf16.gmra.mxu0 %v9842
      %v10238 = vpop.f32.mrf.mxu0
      %v10239 = vadd.f32 %v10001, %v10238
      %v10240 = vpop.f32.mrf.mxu0
      %v10241 = vpop.f32.mrf.mxu0
      %v10242 = vadd.f32 %v10001, %v10241
      %v10243 = vpop.f32.mrf.mxu0
      %10244 = vmatprep.mubr.bf16.mxu0 %v9972
      %10245 = vmatmul.mubr.bf16.gmra.mxu0 %v9845
      %v10246 = vpop.f32.mrf.mxu0
      %v10247 = vadd.f32 %v10001, %v10246
      %v10248 = vpop.f32.mrf.mxu0
      %v10249 = vpop.f32.mrf.mxu0
      %v10250 = vadd.f32 %v10001, %v10249
      %v10251 = vpop.f32.mrf.mxu0
      %10252 = vmatprep.mubr.bf16.mxu0 %v9975
      %10253 = vmatmul.mubr.bf16.gmra.mxu0 %v9848
      %v10254 = vpop.f32.mrf.mxu0
      %v10255 = vadd.f32 %v10001, %v10254
      %v10256 = vpop.f32.mrf.mxu0
      %v10257 = vpop.f32.mrf.mxu0
      %v10258 = vadd.f32 %v10001, %v10257
      %v10259 = vpop.f32.mrf.mxu0
      %10260 = vmatprep.mubr.bf16.mxu0 %v9978
      %10261 = vmatmul.mubr.bf16.gmra.mxu0 %v9851
      %v10262 = vpop.f32.mrf.mxu0
      %v10263 = vadd.f32 %v10001, %v10262
      %v10264 = vpop.f32.mrf.mxu0
      %v10265 = vpop.f32.mrf.mxu0
      %v10266 = vadd.f32 %v10001, %v10265
      %v10267 = vpop.f32.mrf.mxu0
      %10268 = vmatprep.mubr.bf16.mxu0 %v9981
      %10269 = vmatmul.mubr.bf16.gmra.mxu0 %v9854
      %v10270 = vpop.f32.mrf.mxu0
      %v10271 = vadd.f32 %v10001, %v10270
      %v10272 = vpop.f32.mrf.mxu0
      %v10273 = vpop.f32.mrf.mxu0
      %v10274 = vadd.f32 %v10001, %v10273
      %v10275 = vpop.f32.mrf.mxu0
      %10276 = vmatprep.mubr.bf16.mxu0 %v9984
      %10277 = vmatmul.mubr.bf16.gmra.mxu0 %v9857
      %v10278 = vpop.f32.mrf.mxu0
      %v10279 = vadd.f32 %v10001, %v10278
      %v10280 = vpop.f32.mrf.mxu0
      %v10281 = vpop.f32.mrf.mxu0
      %v10282 = vadd.f32 %v10001, %v10281
      %v10283 = vpop.f32.mrf.mxu0
      %10284 = vmatprep.mubr.bf16.mxu0 %v9987
      %10285 = vmatmul.mubr.bf16.gmra.mxu0 %v9860
      %v10286 = vpop.f32.mrf.mxu0
      %v10287 = vadd.f32 %v10001, %v10286
      %v10288 = vpop.f32.mrf.mxu0
      %v10289 = vpop.f32.mrf.mxu0
      %v10290 = vadd.f32 %v10001, %v10289
      %v10291 = vpop.f32.mrf.mxu0
      %10292 = vmatprep.mubr.bf16.mxu0 %v9990
      %10293 = vmatmul.mubr.bf16.gmra.mxu0 %v9863
      %v10294 = vpop.f32.mrf.mxu0
      %v10295 = vadd.f32 %v10001, %v10294
      %v10296 = vpop.f32.mrf.mxu0
      %v10297 = vpop.f32.mrf.mxu0
      %v10298 = vadd.f32 %v10001, %v10297
      %v10299 = vpop.f32.mrf.mxu0
      %10300 = vmatprep.mubr.bf16.mxu0 %v9993
      %10301 = vmatmul.mubr.bf16.gmra.mxu0 %v9866
      %v10302 = vpop.f32.mrf.mxu0
      %v10303 = vadd.f32 %v10001, %v10302
      %v10304 = vpop.f32.mrf.mxu0
      %v10305 = vpop.f32.mrf.mxu0
      %v10306 = vadd.f32 %v10001, %v10305
      %v10307 = vpop.f32.mrf.mxu0
      %10308 = vmatprep.mubr.bf16.mxu0 %v9995
      %10309 = vmatmul.mubr.bf16.gmra.mxu0 %v9869
      %v10310 = vpop.f32.mrf.mxu0
      %v10311 = vadd.f32 %v10001, %v10310
      %v10312 = vpop.f32.mrf.mxu0
      %v10313 = vpop.f32.mrf.mxu0
      %v10314 = vadd.f32 %v10001, %v10313
      %v10315 = vpop.f32.mrf.mxu0
      %10316 = vdwg.mxu0
      %10317 = vmatprep.subr.bf16.mxu0 0
      %10318 = vmatpush1.bf16.msra.mxu0 0
      %10319 = vmatprep.subr.bf16.mxu0 0
      %10320 = vmatpush1.bf16.msra.mxu0 0
      %10321 = vmatprep.subr.bf16.mxu0 0
      %10322 = vmatpush1.bf16.msra.mxu0 0
      %10323 = vmatprep.subr.bf16.mxu0 0
      %10324 = vmatpush1.bf16.msra.mxu0 0
      %10325 = vmatprep.subr.bf16.mxu0 0
      %10326 = vmatpush1.bf16.msra.mxu0 0
      %10327 = vmatprep.subr.bf16.mxu0 0
      %10328 = vmatpush1.bf16.msra.mxu0 0
      %10329 = vmatprep.subr.bf16.mxu0 0
      %10330 = vmatpush1.bf16.msra.mxu0 %v10092
      %10331 = vmatprep.subr.bf16.mxu0 0
      %10332 = vmatpush1.bf16.msra.mxu0 %v10091
      %10333 = vmatprep.subr.bf16.mxu0 0
      %10334 = vmatpush2.bf16.msra.mxu0 0
      %10335 = vmatprep.subr.bf16.mxu0 0
      %10336 = vmatpush2.bf16.msra.mxu0 0
      %10337 = vmatprep.subr.bf16.mxu0 0
      %10338 = vmatpush2.bf16.msra.mxu0 0
      %10339 = vmatprep.subr.bf16.mxu0 0
      %10340 = vmatpush2.bf16.msra.mxu0 0
      %10341 = vmatprep.subr.bf16.mxu0 0
      %10342 = vmatpush2.bf16.msra.mxu0 0
      %10343 = vmatprep.subr.bf16.mxu0 0
      %10344 = vmatpush2.bf16.msra.mxu0 0
      %10345 = vmatprep.subr.bf16.mxu0 0
      %10346 = vmatpush2.bf16.msra.mxu0 0
      %10347 = vmatprep.subr.bf16.mxu0 0
      %10348 = vmatpush2.bf16.msra.mxu0 0
      %10349 = vmatprep.mubr.bf16.mxu0 0
      %10350 = vmatmul.mubr.bf16.gmra.mxu0 %v10112
      %v10351 = vpop.f32.mrf.mxu0
      %v10352 = vadd.f32 %v10191, %v10351
      %v10353 = vpop.f32.mrf.mxu0
      %v10354 = vpop.f32.mrf.mxu0
      %v10355 = vadd.f32 %v10194, %v10354
      %v10356 = vpop.f32.mrf.mxu0
      %10357 = vmatprep.mubr.bf16.mxu0 0
      %10358 = vmatmul.mubr.bf16.gmra.mxu0 %v10115
      %v10359 = vpop.f32.mrf.mxu0
      %v10360 = vadd.f32 %v10199, %v10359
      %v10361 = vpop.f32.mrf.mxu0
      %v10362 = vpop.f32.mrf.mxu0
      %v10363 = vadd.f32 %v10202, %v10362
      %v10364 = vpop.f32.mrf.mxu0
      %10365 = vmatprep.mubr.bf16.mxu0 0
      %10366 = vmatmul.mubr.bf16.gmra.mxu0 %v10118
      %v10367 = vpop.f32.mrf.mxu0
      %v10368 = vadd.f32 %v10207, %v10367
      %v10369 = vpop.f32.mrf.mxu0
      %v10370 = vpop.f32.mrf.mxu0
      %v10371 = vadd.f32 %v10210, %v10370
      %v10372 = vpop.f32.mrf.mxu0
      %10373 = vmatprep.mubr.bf16.mxu0 0
      %10374 = vmatmul.mubr.bf16.gmra.mxu0 %v10121
      %v10375 = vpop.f32.mrf.mxu0
      %v10376 = vadd.f32 %v10215, %v10375
      %v10377 = vpop.f32.mrf.mxu0
      %v10378 = vpop.f32.mrf.mxu0
      %v10379 = vadd.f32 %v10218, %v10378
      %v10380 = vpop.f32.mrf.mxu0
      %10381 = vmatprep.mubr.bf16.mxu0 0
      %10382 = vmatmul.mubr.bf16.gmra.mxu0 %v10124
      %v10383 = vpop.f32.mrf.mxu0
      %v10384 = vadd.f32 %v10223, %v10383
      %v10385 = vpop.f32.mrf.mxu0
      %v10386 = vpop.f32.mrf.mxu0
      %v10387 = vadd.f32 %v10226, %v10386
      %v10388 = vpop.f32.mrf.mxu0
      %10389 = vmatprep.mubr.bf16.mxu0 0
      %10390 = vmatmul.mubr.bf16.gmra.mxu0 %v10127
      %v10391 = vpop.f32.mrf.mxu0
      %v10392 = vadd.f32 %v10231, %v10391
      %v10393 = vpop.f32.mrf.mxu0
      %v10394 = vpop.f32.mrf.mxu0
      %v10395 = vadd.f32 %v10234, %v10394
      %v10396 = vpop.f32.mrf.mxu0
      %10397 = vmatprep.mubr.bf16.mxu0 0
      %10398 = vmatmul.mubr.bf16.gmra.mxu0 %v10130
      %v10399 = vpop.f32.mrf.mxu0
      %v10400 = vadd.f32 %v10239, %v10399
      %v10401 = vpop.f32.mrf.mxu0
      %v10402 = vpop.f32.mrf.mxu0
      %v10403 = vadd.f32 %v10242, %v10402
      %v10404 = vpop.f32.mrf.mxu0
      %10405 = vmatprep.mubr.bf16.mxu0 0
      %10406 = vmatmul.mubr.bf16.gmra.mxu0 %v10133
      %v10407 = vpop.f32.mrf.mxu0
      %v10408 = vadd.f32 %v10247, %v10407
      %v10409 = vpop.f32.mrf.mxu0
      %v10410 = vpop.f32.mrf.mxu0
      %v10411 = vadd.f32 %v10250, %v10410
      %v10412 = vpop.f32.mrf.mxu0
      %10413 = vmatprep.mubr.bf16.mxu0 0
      %10414 = vmatmul.mubr.bf16.gmra.mxu0 %v10136
      %v10415 = vpop.f32.mrf.mxu0
      %v10416 = vadd.f32 %v10255, %v10415
      %v10417 = vpop.f32.mrf.mxu0
      %v10418 = vpop.f32.mrf.mxu0
      %v10419 = vadd.f32 %v10258, %v10418
      %v10420 = vpop.f32.mrf.mxu0
      %10421 = vmatprep.mubr.bf16.mxu0 0
      %10422 = vmatmul.mubr.bf16.gmra.mxu0 %v10139
      %v10423 = vpop.f32.mrf.mxu0
      %v10424 = vadd.f32 %v10263, %v10423
      %v10425 = vpop.f32.mrf.mxu0
      %v10426 = vpop.f32.mrf.mxu0
      %v10427 = vadd.f32 %v10266, %v10426
      %v10428 = vpop.f32.mrf.mxu0
      %10429 = vmatprep.mubr.bf16.mxu0 0
      %10430 = vmatmul.mubr.bf16.gmra.mxu0 %v10142
      %v10431 = vpop.f32.mrf.mxu0
      %v10432 = vadd.f32 %v10271, %v10431
      %v10433 = vpop.f32.mrf.mxu0
      %v10434 = vpop.f32.mrf.mxu0
      %v10435 = vadd.f32 %v10274, %v10434
      %v10436 = vpop.f32.mrf.mxu0
      %10437 = vmatprep.mubr.bf16.mxu0 0
      %10438 = vmatmul.mubr.bf16.gmra.mxu0 %v10145
      %v10439 = vpop.f32.mrf.mxu0
      %v10440 = vadd.f32 %v10279, %v10439
      %v10441 = vpop.f32.mrf.mxu0
      %v10442 = vpop.f32.mrf.mxu0
      %v10443 = vadd.f32 %v10282, %v10442
      %v10444 = vpop.f32.mrf.mxu0
      %10445 = vmatprep.mubr.bf16.mxu0 0
      %10446 = vmatmul.mubr.bf16.gmra.mxu0 %v10148
      %v10447 = vpop.f32.mrf.mxu0
      %v10448 = vadd.f32 %v10287, %v10447
      %v10449 = vpop.f32.mrf.mxu0
      %v10450 = vpop.f32.mrf.mxu0
      %v10451 = vadd.f32 %v10290, %v10450
      %v10452 = vpop.f32.mrf.mxu0
      %10453 = vmatprep.mubr.bf16.mxu0 0
      %10454 = vmatmul.mubr.bf16.gmra.mxu0 %v10151
      %v10455 = vpop.f32.mrf.mxu0
      %v10456 = vadd.f32 %v10295, %v10455
      %v10457 = vpop.f32.mrf.mxu0
      %v10458 = vpop.f32.mrf.mxu0
      %v10459 = vadd.f32 %v10298, %v10458
      %v10460 = vpop.f32.mrf.mxu0
      %10461 = vmatprep.mubr.bf16.mxu0 0
      %10462 = vmatmul.mubr.bf16.gmra.mxu0 %v10154
      %v10463 = vpop.f32.mrf.mxu0
      %v10464 = vadd.f32 %v10303, %v10463
      %v10465 = vpop.f32.mrf.mxu0
      %v10466 = vpop.f32.mrf.mxu0
      %v10467 = vadd.f32 %v10306, %v10466
      %v10468 = vpop.f32.mrf.mxu0
      %10469 = vmatprep.mubr.bf16.mxu0 0
      %10470 = vmatmul.mubr.bf16.gmra.mxu0 %v1488
      %v10471 = vpop.f32.mrf.mxu0
      %v10472 = vadd.f32 %v10311, %v10471
      %v10473 = vpop.f32.mrf.mxu0
      %v10474 = vpop.f32.mrf.mxu0
      %v10475 = vadd.f32 %v10314, %v10474
      %v10476 = vpop.f32.mrf.mxu0
      %10477 = vdwg.mxu0
      %v10478 = vadd.f32 %v7578, %v10352
      %v10479 = vadd.f32 %v7579, %v10355
      %v10480 = vadd.f32 %v7580, %v10360
      %v10481 = vadd.f32 %v7581, %v10363
      %v10482 = vadd.f32 %v7582, %v10368
      %v10483 = vadd.f32 %v7583, %v10371
      %v10484 = vadd.f32 %v7584, %v10376
      %v10485 = vadd.f32 %v7585, %v10379
      %v10486 = vadd.f32 %v7586, %v10384
      %v10487 = vadd.f32 %v7587, %v10387
      %v10488 = vadd.f32 %v7588, %v10392
      %v10489 = vadd.f32 %v7589, %v10395
      %v10490 = vadd.f32 %v7590, %v10400
      %v10491 = vadd.f32 %v7591, %v10403
      %v10492 = vadd.f32 %v7592, %v10408
      %v10493 = vadd.f32 %v7593, %v10411
      %v10494 = vadd.f32 %v7594, %v10416
      %v10495 = vadd.f32 %v7595, %v10419
      %v10496 = vadd.f32 %v7596, %v10424
      %v10497 = vadd.f32 %v7597, %v10427
      %v10498 = vadd.f32 %v7598, %v10432
      %v10499 = vadd.f32 %v7599, %v10435
      %v10500 = vadd.f32 %v7600, %v10440
      %v10501 = vadd.f32 %v7601, %v10443
      %v10502 = vadd.f32 %v7602, %v10448
      %v10503 = vadd.f32 %v7603, %v10451
      %v10504 = vadd.f32 %v7604, %v10456
      %v10505 = vadd.f32 %v7605, %v10459
      %v10506 = vadd.f32 %v7606, %v10464
      %v10507 = vadd.f32 %v7607, %v10467
      %v10508 = vadd.f32 %v7608, %v10472
      %v10509 = vadd.f32 %v7609, %v10475
      %v10510 = vpack.c.bf16 %v10479, %v10478
      %v10511 = vpack.c.bf16 %v10481, %v10480
      %v10512 = vpack.c.bf16 %v10483, %v10482
      %v10513 = vpack.c.bf16 %v10485, %v10484
      %v10514 = vpack.c.bf16 %v10487, %v10486
      %v10515 = vpack.c.bf16 %v10489, %v10488
      %v10516 = vpack.c.bf16 %v10491, %v10490
      %v10517 = vpack.c.bf16 %v10493, %v10492
      %v10518 = vpack.c.bf16 %v10495, %v10494
      %v10519 = vpack.c.bf16 %v10497, %v10496
      %v10520 = vpack.c.bf16 %v10499, %v10498
      %v10521 = vpack.c.bf16 %v10501, %v10500
      %v10522 = vpack.c.bf16 %v10503, %v10502
      %v10523 = vpack.c.bf16 %v10505, %v10504
      %v10524 = vpack.c.bf16 %v10507, %v10506
      %v10525 = vpack.c.bf16 %v10509, %v10508
      %v10527 = vshrl.u32 %v10510, 16
      %v10529 = vrot.slane %v10527, 7
      %v10530 = vshll.u32 %v10510, 16
      %v10532 = vor.u32 %v10529, %v10530
      %v10534 = vshrl.u32 %v10511, 16
      %v10536 = vrot.slane %v10534, 7
      %v10537 = vshll.u32 %v10511, 16
      %v10539 = vor.u32 %v10536, %v10537
      %v10541 = vshrl.u32 %v10512, 16
      %v10543 = vrot.slane %v10541, 7
      %v10544 = vshll.u32 %v10512, 16
      %v10546 = vor.u32 %v10543, %v10544
      %v10548 = vshrl.u32 %v10513, 16
      %v10550 = vrot.slane %v10548, 7
      %v10551 = vshll.u32 %v10513, 16
      %v10553 = vor.u32 %v10550, %v10551
      %v10555 = vshrl.u32 %v10514, 16
      %v10557 = vrot.slane %v10555, 7
      %v10558 = vshll.u32 %v10514, 16
      %v10560 = vor.u32 %v10557, %v10558
      %v10562 = vshrl.u32 %v10515, 16
      %v10564 = vrot.slane %v10562, 7
      %v10565 = vshll.u32 %v10515, 16
      %v10567 = vor.u32 %v10564, %v10565
      %v10569 = vshrl.u32 %v10516, 16
      %v10571 = vrot.slane %v10569, 7
      %v10572 = vshll.u32 %v10516, 16
      %v10574 = vor.u32 %v10571, %v10572
      %v10576 = vshrl.u32 %v10517, 16
      %v10578 = vrot.slane %v10576, 7
      %v10579 = vshll.u32 %v10517, 16
      %v10581 = vor.u32 %v10578, %v10579
      %v10583 = vshrl.u32 %v10518, 16
      %v10585 = vrot.slane %v10583, 7
      %v10586 = vshll.u32 %v10518, 16
      %v10588 = vor.u32 %v10585, %v10586
      %v10590 = vshrl.u32 %v10519, 16
      %v10592 = vrot.slane %v10590, 7
      %v10593 = vshll.u32 %v10519, 16
      %v10595 = vor.u32 %v10592, %v10593
      %v10597 = vshrl.u32 %v10520, 16
      %v10599 = vrot.slane %v10597, 7
      %v10600 = vshll.u32 %v10520, 16
      %v10602 = vor.u32 %v10599, %v10600
      %v10604 = vshrl.u32 %v10521, 16
      %v10606 = vrot.slane %v10604, 7
      %v10607 = vshll.u32 %v10521, 16
      %v10609 = vor.u32 %v10606, %v10607
      %v10611 = vshrl.u32 %v10522, 16
      %v10613 = vrot.slane %v10611, 7
      %v10614 = vshll.u32 %v10522, 16
      %v10616 = vor.u32 %v10613, %v10614
      %v10618 = vshrl.u32 %v10523, 16
      %v10620 = vrot.slane %v10618, 7
      %v10621 = vshll.u32 %v10523, 16
      %v10623 = vor.u32 %v10620, %v10621
      %v10625 = vshrl.u32 %v10524, 16
      %v10627 = vrot.slane %v10625, 7
      %v10628 = vshll.u32 %v10524, 16
      %v10630 = vor.u32 %v10627, %v10628
      %v10632 = vshrl.u32 %v10525, 16
      %v10634 = vrot.slane %v10632, 7
      %v10635 = vshll.u32 %v10525, 16
      %v10637 = vor.u32 %v10634, %v10635
      %v10670 = vsel %vm538, 0, %v10532
      %v10671 = vsel %vm538, 0, %v10539
      %v10672 = vsel %vm538, 0, %v10546
      %v10673 = vsel %vm538, 0, %v10553
      %v10674 = vsel %vm538, 0, %v10560
      %v10675 = vsel %vm538, 0, %v10567
      %v10676 = vsel %vm538, 0, %v10574
      %v10677 = vsel %vm538, 0, %v10581
      %v10678 = vsel %vm538, 0, %v10588
      %v10679 = vsel %vm538, 0, %v10595
      %v10680 = vsel %vm538, 0, %v10602
      %v10681 = vsel %vm538, 0, %v10609
      %v10682 = vsel %vm538, 0, %v10616
      %v10683 = vsel %vm538, 0, %v10623
      %v10684 = vsel %vm538, 0, %v10630
      %v10685 = vsel %vm538, 0, %v10637
      %v10686 = vsel %vm538, %v10529, 0
      %v10687 = vsel %vm538, %v10536, 0
      %v10688 = vsel %vm538, %v10543, 0
      %v10689 = vsel %vm538, %v10550, 0
      %v10690 = vsel %vm538, %v10557, 0
      %v10691 = vsel %vm538, %v10564, 0
      %v10692 = vsel %vm538, %v10571, 0
      %v10693 = vsel %vm538, %v10578, 0
      %v10694 = vsel %vm538, %v10585, 0
      %v10695 = vsel %vm538, %v10592, 0
      %v10696 = vsel %vm538, %v10599, 0
      %v10697 = vsel %vm538, %v10606, 0
      %v10698 = vsel %vm538, %v10613, 0
      %v10699 = vsel %vm538, %v10620, 0
      %v10700 = vsel %vm538, %v10627, 0
      %v10701 = vsel %vm538, %v10634, 0
      %v10702 = vld [vmem:[%s5] sm:$0xf]
      %v10703 = vld [vmem:[%s5 + $0x4] sm:$0xf]
      %v10704 = vld [vmem:[%s5 + $0x8] sm:$0xf]
      %v10705 = vld [vmem:[%s5 + $0xc] sm:$0xf]
      %v10706 = vld [vmem:[%s5 + $0x10] sm:$0xf]
      %v10707 = vld [vmem:[%s5 + $0x14] sm:$0xf]
      %v10708 = vld [vmem:[%s5 + $0x18] sm:$0xf]
      %v10709 = vld [vmem:[%s5 + $0x1c] sm:$0xf]
      %v10710 = vld [vmem:[%s5 + $0x20] sm:$0xf]
      %v10711 = vld [vmem:[%s5 + $0x24] sm:$0xf]
      %v10712 = vld [vmem:[%s5 + $0x28] sm:$0xf]
      %v10713 = vld [vmem:[%s5 + $0x2c] sm:$0xf]
      %v10714 = vld [vmem:[%s5 + $0x30] sm:$0xf]
      %v10715 = vld [vmem:[%s5 + $0x34] sm:$0xf]
      %v10716 = vld [vmem:[%s5 + $0x38] sm:$0xf]
      %v10717 = vld [vmem:[%s5 + $0x3c] sm:$0xf]
      %v10718 = vld [vmem:[%s5 + $0x40] sm:$0xf]
      %v10719 = vld [vmem:[%s5 + $0x44] sm:$0xf]
      %v10720 = vld [vmem:[%s5 + $0x48] sm:$0xf]
      %v10721 = vld [vmem:[%s5 + $0x4c] sm:$0xf]
      %v10722 = vld [vmem:[%s5 + $0x50] sm:$0xf]
      %v10723 = vld [vmem:[%s5 + $0x54] sm:$0xf]
      %v10724 = vld [vmem:[%s5 + $0x58] sm:$0xf]
      %v10725 = vld [vmem:[%s5 + $0x5c] sm:$0xf]
      %v10726 = vld [vmem:[%s5 + $0x60] sm:$0xf]
      %v10727 = vld [vmem:[%s5 + $0x64] sm:$0xf]
      %v10728 = vld [vmem:[%s5 + $0x68] sm:$0xf]
      %v10729 = vld [vmem:[%s5 + $0x6c] sm:$0xf]
      %v10730 = vld [vmem:[%s5 + $0x70] sm:$0xf]
      %v10731 = vld [vmem:[%s5 + $0x74] sm:$0xf]
      %v10732 = vld [vmem:[%s5 + $0x78] sm:$0xf]
      %v10733 = vld [vmem:[%s5 + $0x7c] sm:$0xf]
      %v10734 = vld [vmem:[%s5 + $0x80] sm:$0xf]
      %v10735 = vld [vmem:[%s5 + $0x84] sm:$0xf]
      %v10736 = vld [vmem:[%s5 + $0x88] sm:$0xf]
      %v10737 = vld [vmem:[%s5 + $0x8c] sm:$0xf]
      %v10738 = vld [vmem:[%s6] sm:$0x1]
      %v10740 = vshrl.u32 %v10670, 16
      %v10742 = vshll.u32 %v10670, 16
      %v10744 = vrot.slane %v10742, 1
      %v10745 = vor.u32 %v10740, %v10744
      %v10747 = vshll.u32 %v10686, 16
      %v10749 = vrot.slane %v10747, 1
      %v10750 = vsel %vm608, %v10745, %v10749
      %v10752 = vshrl.u32 %v10671, 16
      %v10754 = vshll.u32 %v10671, 16
      %v10756 = vrot.slane %v10754, 1
      %v10757 = vor.u32 %v10752, %v10756
      %v10759 = vshll.u32 %v10687, 16
      %v10761 = vrot.slane %v10759, 1
      %v10762 = vsel %vm608, %v10757, %v10761
      %v10764 = vshrl.u32 %v10672, 16
      %v10766 = vshll.u32 %v10672, 16
      %v10768 = vrot.slane %v10766, 1
      %v10769 = vor.u32 %v10764, %v10768
      %v10771 = vshll.u32 %v10688, 16
      %v10773 = vrot.slane %v10771, 1
      %v10774 = vsel %vm608, %v10769, %v10773
      %v10776 = vshrl.u32 %v10673, 16
      %v10778 = vshll.u32 %v10673, 16
      %v10780 = vrot.slane %v10778, 1
      %v10781 = vor.u32 %v10776, %v10780
      %v10783 = vshll.u32 %v10689, 16
      %v10785 = vrot.slane %v10783, 1
      %v10786 = vsel %vm608, %v10781, %v10785
      %v10788 = vshrl.u32 %v10674, 16
      %v10790 = vshll.u32 %v10674, 16
      %v10792 = vrot.slane %v10790, 1
      %v10793 = vor.u32 %v10788, %v10792
      %v10795 = vshll.u32 %v10690, 16
      %v10797 = vrot.slane %v10795, 1
      %v10798 = vsel %vm608, %v10793, %v10797
      %v10800 = vshrl.u32 %v10675, 16
      %v10802 = vshll.u32 %v10675, 16
      %v10804 = vrot.slane %v10802, 1
      %v10805 = vor.u32 %v10800, %v10804
      %v10807 = vshll.u32 %v10691, 16
      %v10809 = vrot.slane %v10807, 1
      %v10810 = vsel %vm608, %v10805, %v10809
      %v10812 = vshrl.u32 %v10676, 16
      %v10814 = vshll.u32 %v10676, 16
      %v10816 = vrot.slane %v10814, 1
      %v10817 = vor.u32 %v10812, %v10816
      %v10819 = vshll.u32 %v10692, 16
      %v10821 = vrot.slane %v10819, 1
      %v10822 = vsel %vm608, %v10817, %v10821
      %v10824 = vshrl.u32 %v10677, 16
      %v10826 = vshll.u32 %v10677, 16
      %v10828 = vrot.slane %v10826, 1
      %v10829 = vor.u32 %v10824, %v10828
      %v10831 = vshll.u32 %v10693, 16
      %v10833 = vrot.slane %v10831, 1
      %v10834 = vsel %vm608, %v10829, %v10833
      %v10836 = vshrl.u32 %v10678, 16
      %v10838 = vshll.u32 %v10678, 16
      %v10840 = vrot.slane %v10838, 1
      %v10841 = vor.u32 %v10836, %v10840
      %v10843 = vshll.u32 %v10694, 16
      %v10845 = vrot.slane %v10843, 1
      %v10846 = vsel %vm608, %v10841, %v10845
      %v10848 = vshrl.u32 %v10679, 16
      %v10850 = vshll.u32 %v10679, 16
      %v10852 = vrot.slane %v10850, 1
      %v10853 = vor.u32 %v10848, %v10852
      %v10855 = vshll.u32 %v10695, 16
      %v10857 = vrot.slane %v10855, 1
      %v10858 = vsel %vm608, %v10853, %v10857
      %v10860 = vshrl.u32 %v10680, 16
      %v10862 = vshll.u32 %v10680, 16
      %v10864 = vrot.slane %v10862, 1
      %v10865 = vor.u32 %v10860, %v10864
      %v10867 = vshll.u32 %v10696, 16
      %v10869 = vrot.slane %v10867, 1
      %v10870 = vsel %vm608, %v10865, %v10869
      %v10872 = vshrl.u32 %v10681, 16
      %v10874 = vshll.u32 %v10681, 16
      %v10876 = vrot.slane %v10874, 1
      %v10877 = vor.u32 %v10872, %v10876
      %v10879 = vshll.u32 %v10697, 16
      %v10881 = vrot.slane %v10879, 1
      %v10882 = vsel %vm608, %v10877, %v10881
      %v10884 = vshrl.u32 %v10682, 16
      %v10886 = vshll.u32 %v10682, 16
      %v10888 = vrot.slane %v10886, 1
      %v10889 = vor.u32 %v10884, %v10888
      %v10891 = vshll.u32 %v10698, 16
      %v10893 = vrot.slane %v10891, 1
      %v10894 = vsel %vm608, %v10889, %v10893
      %v10896 = vshrl.u32 %v10683, 16
      %v10898 = vshll.u32 %v10683, 16
      %v10900 = vrot.slane %v10898, 1
      %v10901 = vor.u32 %v10896, %v10900
      %v10903 = vshll.u32 %v10699, 16
      %v10905 = vrot.slane %v10903, 1
      %v10906 = vsel %vm608, %v10901, %v10905
      %v10908 = vshrl.u32 %v10684, 16
      %v10910 = vshll.u32 %v10684, 16
      %v10912 = vrot.slane %v10910, 1
      %v10913 = vor.u32 %v10908, %v10912
      %v10915 = vshll.u32 %v10700, 16
      %v10917 = vrot.slane %v10915, 1
      %v10918 = vsel %vm608, %v10913, %v10917
      %v10920 = vshrl.u32 %v10685, 16
      %v10922 = vshll.u32 %v10685, 16
      %v10924 = vrot.slane %v10922, 1
      %v10925 = vor.u32 %v10920, %v10924
      %v10927 = vshll.u32 %v10701, 16
      %v10929 = vrot.slane %v10927, 1
      %v10930 = vsel %vm608, %v10925, %v10929
      %v10963 = vrot.slane %v10670, 1
      %v10964 = vrot.slane %v10686, 1
      %v10965 = vsel %vm842, %v10963, %v10964
      %v10966 = vrot.slane %v10671, 1
      %v10967 = vrot.slane %v10687, 1
      %v10968 = vsel %vm842, %v10966, %v10967
      %v10969 = vrot.slane %v10672, 1
      %v10970 = vrot.slane %v10688, 1
      %v10971 = vsel %vm842, %v10969, %v10970
      %v10972 = vrot.slane %v10673, 1
      %v10973 = vrot.slane %v10689, 1
      %v10974 = vsel %vm842, %v10972, %v10973
      %v10975 = vrot.slane %v10674, 1
      %v10976 = vrot.slane %v10690, 1
      %v10977 = vsel %vm842, %v10975, %v10976
      %v10978 = vrot.slane %v10675, 1
      %v10979 = vrot.slane %v10691, 1
      %v10980 = vsel %vm842, %v10978, %v10979
      %v10981 = vrot.slane %v10676, 1
      %v10982 = vrot.slane %v10692, 1
      %v10983 = vsel %vm842, %v10981, %v10982
      %v10984 = vrot.slane %v10677, 1
      %v10985 = vrot.slane %v10693, 1
      %v10986 = vsel %vm842, %v10984, %v10985
      %v10987 = vrot.slane %v10678, 1
      %v10988 = vrot.slane %v10694, 1
      %v10989 = vsel %vm842, %v10987, %v10988
      %v10990 = vrot.slane %v10679, 1
      %v10991 = vrot.slane %v10695, 1
      %v10992 = vsel %vm842, %v10990, %v10991
      %v10993 = vrot.slane %v10680, 1
      %v10994 = vrot.slane %v10696, 1
      %v10995 = vsel %vm842, %v10993, %v10994
      %v10996 = vrot.slane %v10681, 1
      %v10997 = vrot.slane %v10697, 1
      %v10998 = vsel %vm842, %v10996, %v10997
      %v10999 = vrot.slane %v10682, 1
      %v11000 = vrot.slane %v10698, 1
      %v11001 = vsel %vm842, %v10999, %v11000
      %v11002 = vrot.slane %v10683, 1
      %v11003 = vrot.slane %v10699, 1
      %v11004 = vsel %vm842, %v11002, %v11003
      %v11005 = vrot.slane %v10684, 1
      %v11006 = vrot.slane %v10700, 1
      %v11007 = vsel %vm842, %v11005, %v11006
      %v11008 = vrot.slane %v10685, 1
      %v11009 = vrot.slane %v10701, 1
      %v11010 = vsel %vm842, %v11008, %v11009
      %11011 = vrot.lane.b32.xlu0 %v10750, 32
      %v11012 = vpop.permute.xlu0 %11011
      %11013 = vrot.lane.b32.xlu0 %v10762, 32
      %v11014 = vpop.permute.xlu0 %11013
      %11015 = vrot.lane.b32.xlu0 %v10774, 32
      %v11016 = vpop.permute.xlu0 %11015
      %11017 = vrot.lane.b32.xlu0 %v10786, 32
      %v11018 = vpop.permute.xlu0 %11017
      %11019 = vrot.lane.b32.xlu0 %v10798, 32
      %v11020 = vpop.permute.xlu0 %11019
      %11021 = vrot.lane.b32.xlu0 %v10810, 32
      %v11022 = vpop.permute.xlu0 %11021
      %11023 = vrot.lane.b32.xlu0 %v10822, 32
      %v11024 = vpop.permute.xlu0 %11023
      %11025 = vrot.lane.b32.xlu0 %v10834, 32
      %v11026 = vpop.permute.xlu0 %11025
      %11027 = vrot.lane.b32.xlu0 %v10846, 32
      %v11028 = vpop.permute.xlu0 %11027
      %11029 = vrot.lane.b32.xlu0 %v10858, 32
      %v11030 = vpop.permute.xlu0 %11029
      %11031 = vrot.lane.b32.xlu0 %v10870, 32
      %v11032 = vpop.permute.xlu0 %11031
      %11033 = vrot.lane.b32.xlu0 %v10882, 32
      %v11034 = vpop.permute.xlu0 %11033
      %11035 = vrot.lane.b32.xlu0 %v10894, 32
      %v11036 = vpop.permute.xlu0 %11035
      %11037 = vrot.lane.b32.xlu0 %v10906, 32
      %v11038 = vpop.permute.xlu0 %11037
      %11039 = vrot.lane.b32.xlu0 %v10918, 32
      %v11040 = vpop.permute.xlu0 %11039
      %11041 = vrot.lane.b32.xlu0 %v10965, 64
      %v11042 = vpop.permute.xlu0 %11041
      %11043 = vrot.lane.b32.xlu0 %v10968, 64
      %v11044 = vpop.permute.xlu0 %11043
      %11045 = vrot.lane.b32.xlu0 %v10971, 64
      %v11046 = vpop.permute.xlu0 %11045
      %11047 = vrot.lane.b32.xlu0 %v10974, 64
      %v11048 = vpop.permute.xlu0 %11047
      %11049 = vrot.lane.b32.xlu0 %v10977, 64
      %v11050 = vpop.permute.xlu0 %11049
      %11051 = vrot.lane.b32.xlu0 %v10980, 64
      %v11052 = vpop.permute.xlu0 %11051
      %11053 = vrot.lane.b32.xlu0 %v10983, 64
      %v11054 = vpop.permute.xlu0 %11053
      %11055 = vrot.lane.b32.xlu0 %v10986, 64
      %v11056 = vpop.permute.xlu0 %11055
      %11057 = vrot.lane.b32.xlu0 %v10989, 64
      %v11058 = vpop.permute.xlu0 %11057
      %11059 = vrot.lane.b32.xlu0 %v10992, 64
      %v11060 = vpop.permute.xlu0 %11059
      %11061 = vrot.lane.b32.xlu0 %v10995, 64
      %v11062 = vpop.permute.xlu0 %11061
      %11063 = vrot.lane.b32.xlu0 %v10998, 64
      %v11064 = vpop.permute.xlu0 %11063
      %11065 = vrot.lane.b32.xlu0 %v11001, 64
      %v11066 = vpop.permute.xlu0 %11065
      %11067 = vrot.lane.b32.xlu0 %v11004, 64
      %v11068 = vpop.permute.xlu0 %11067
      %11069 = vrot.lane.b32.xlu0 %v11007, 64
      %v11070 = vpop.permute.xlu0 %11069
      %11071 = vrot.lane.b32.xlu0 %v10670, 96
      %v11072 = vpop.permute.xlu0 %11071
      %11073 = vrot.lane.b32.xlu0 %v10671, 96
      %v11074 = vpop.permute.xlu0 %11073
      %11075 = vrot.lane.b32.xlu0 %v10672, 96
      %v11076 = vpop.permute.xlu0 %11075
      %11077 = vrot.lane.b32.xlu0 %v10673, 96
      %v11078 = vpop.permute.xlu0 %11077
      %11079 = vrot.lane.b32.xlu0 %v10674, 96
      %v11080 = vpop.permute.xlu0 %11079
      %11081 = vrot.lane.b32.xlu0 %v10675, 96
      %v11082 = vpop.permute.xlu0 %11081
      %11083 = vrot.lane.b32.xlu0 %v10676, 96
      %v11084 = vpop.permute.xlu0 %11083
      %11085 = vrot.lane.b32.xlu0 %v10677, 96
      %v11086 = vpop.permute.xlu0 %11085
      %11087 = vrot.lane.b32.xlu0 %v10678, 96
      %v11088 = vpop.permute.xlu0 %11087
      %11089 = vrot.lane.b32.xlu0 %v10679, 96
      %v11090 = vpop.permute.xlu0 %11089
      %11091 = vrot.lane.b32.xlu0 %v10680, 96
      %v11092 = vpop.permute.xlu0 %11091
      %11093 = vrot.lane.b32.xlu0 %v10681, 96
      %v11094 = vpop.permute.xlu0 %11093
      %11095 = vrot.lane.b32.xlu0 %v10682, 96
      %v11096 = vpop.permute.xlu0 %11095
      %11097 = vrot.lane.b32.xlu0 %v10683, 96
      %v11098 = vpop.permute.xlu0 %11097
      %11099 = vrot.lane.b32.xlu0 %v10684, 96
      %v11100 = vpop.permute.xlu0 %11099
      %11101 = vrot.lane.b32.xlu0 %v10685, 96
      %v11102 = vpop.permute.xlu0 %11101
      %11103 = vrot.lane.b32.xlu0 %v10965, 32
      %v11104 = vpop.permute.xlu0 %11103
      %11105 = vrot.lane.b32.xlu0 %v10968, 32
      %v11106 = vpop.permute.xlu0 %11105
      %11107 = vrot.lane.b32.xlu0 %v10971, 32
      %v11108 = vpop.permute.xlu0 %11107
      %11109 = vrot.lane.b32.xlu0 %v10974, 32
      %v11110 = vpop.permute.xlu0 %11109
      %11111 = vrot.lane.b32.xlu0 %v10977, 32
      %v11112 = vpop.permute.xlu0 %11111
      %11113 = vrot.lane.b32.xlu0 %v10980, 32
      %v11114 = vpop.permute.xlu0 %11113
      %11115 = vrot.lane.b32.xlu0 %v10983, 32
      %v11116 = vpop.permute.xlu0 %11115
      %11117 = vrot.lane.b32.xlu0 %v10986, 32
      %v11118 = vpop.permute.xlu0 %11117
      %11119 = vrot.lane.b32.xlu0 %v10989, 32
      %v11120 = vpop.permute.xlu0 %11119
      %11121 = vrot.lane.b32.xlu0 %v10992, 32
      %v11122 = vpop.permute.xlu0 %11121
      %11123 = vrot.lane.b32.xlu0 %v10995, 32
      %v11124 = vpop.permute.xlu0 %11123
      %11125 = vrot.lane.b32.xlu0 %v10998, 32
      %v11126 = vpop.permute.xlu0 %11125
      %11127 = vrot.lane.b32.xlu0 %v11001, 32
      %v11128 = vpop.permute.xlu0 %11127
      %11129 = vrot.lane.b32.xlu0 %v11004, 32
      %v11130 = vpop.permute.xlu0 %11129
      %11131 = vrot.lane.b32.xlu0 %v11007, 32
      %v11132 = vpop.permute.xlu0 %11131
      %11133 = vrot.lane.b32.xlu0 %v11010, 32
      %v11134 = vpop.permute.xlu0 %11133
      %11135 = vrot.lane.b32.xlu0 %v10671, 64
      %v11136 = vpop.permute.xlu0 %11135
      %11137 = vrot.lane.b32.xlu0 %v10672, 64
      %v11138 = vpop.permute.xlu0 %11137
      %11139 = vrot.lane.b32.xlu0 %v10673, 64
      %v11140 = vpop.permute.xlu0 %11139
      %11141 = vrot.lane.b32.xlu0 %v10674, 64
      %v11142 = vpop.permute.xlu0 %11141
      %11143 = vrot.lane.b32.xlu0 %v10675, 64
      %v11144 = vpop.permute.xlu0 %11143
      %11145 = vrot.lane.b32.xlu0 %v10676, 64
      %v11146 = vpop.permute.xlu0 %11145
      %11147 = vrot.lane.b32.xlu0 %v10677, 64
      %v11148 = vpop.permute.xlu0 %11147
      %11149 = vrot.lane.b32.xlu0 %v10678, 64
      %v11150 = vpop.permute.xlu0 %11149
      %11151 = vrot.lane.b32.xlu0 %v10679, 64
      %v11152 = vpop.permute.xlu0 %11151
      %11153 = vrot.lane.b32.xlu0 %v10680, 64
      %v11154 = vpop.permute.xlu0 %11153
      %11155 = vrot.lane.b32.xlu0 %v10681, 64
      %v11156 = vpop.permute.xlu0 %11155
      %11157 = vrot.lane.b32.xlu0 %v10682, 64
      %v11158 = vpop.permute.xlu0 %11157
      %11159 = vrot.lane.b32.xlu0 %v10683, 64
      %v11160 = vpop.permute.xlu0 %11159
      %11161 = vrot.lane.b32.xlu0 %v10684, 64
      %v11162 = vpop.permute.xlu0 %11161
      %11163 = vrot.lane.b32.xlu0 %v10685, 64
      %v11164 = vpop.permute.xlu0 %11163
      %11165 = vrot.lane.b32.xlu0 %v10762, 96
      %v11166 = vpop.permute.xlu0 %11165
      %11167 = vrot.lane.b32.xlu0 %v10774, 96
      %v11168 = vpop.permute.xlu0 %11167
      %11169 = vrot.lane.b32.xlu0 %v10786, 96
      %v11170 = vpop.permute.xlu0 %11169
      %11171 = vrot.lane.b32.xlu0 %v10798, 96
      %v11172 = vpop.permute.xlu0 %11171
      %11173 = vrot.lane.b32.xlu0 %v10810, 96
      %v11174 = vpop.permute.xlu0 %11173
      %11175 = vrot.lane.b32.xlu0 %v10822, 96
      %v11176 = vpop.permute.xlu0 %11175
      %11177 = vrot.lane.b32.xlu0 %v10834, 96
      %v11178 = vpop.permute.xlu0 %11177
      %11179 = vrot.lane.b32.xlu0 %v10846, 96
      %v11180 = vpop.permute.xlu0 %11179
      %11181 = vrot.lane.b32.xlu0 %v10858, 96
      %v11182 = vpop.permute.xlu0 %11181
      %11183 = vrot.lane.b32.xlu0 %v10870, 96
      %v11184 = vpop.permute.xlu0 %11183
      %11185 = vrot.lane.b32.xlu0 %v10882, 96
      %v11186 = vpop.permute.xlu0 %11185
      %11187 = vrot.lane.b32.xlu0 %v10894, 96
      %v11188 = vpop.permute.xlu0 %11187
      %11189 = vrot.lane.b32.xlu0 %v10906, 96
      %v11190 = vpop.permute.xlu0 %11189
      %11191 = vrot.lane.b32.xlu0 %v10918, 96
      %v11192 = vpop.permute.xlu0 %11191
      %11193 = vrot.lane.b32.xlu0 %v10930, 96
      %v11194 = vpop.permute.xlu0 %11193
      %v11196 = vsel %vm1085, %v10670, %v11012
      %v11198 = vsel %vm1085, %v10671, %v11014
      %v11200 = vsel %vm1085, %v10672, %v11016
      %v11202 = vsel %vm1085, %v10673, %v11018
      %v11204 = vsel %vm1085, %v10674, %v11020
      %v11206 = vsel %vm1085, %v10675, %v11022
      %v11208 = vsel %vm1085, %v10676, %v11024
      %v11210 = vsel %vm1085, %v10677, %v11026
      %v11212 = vsel %vm1085, %v10678, %v11028
      %v11214 = vsel %vm1085, %v10679, %v11030
      %v11216 = vsel %vm1085, %v10680, %v11032
      %v11218 = vsel %vm1085, %v10681, %v11034
      %v11220 = vsel %vm1085, %v10682, %v11036
      %v11222 = vsel %vm1085, %v10683, %v11038
      %v11224 = vsel %vm1085, %v10684, %v11040
      %v11226 = vsel %vm1118, %v11196, %v11042
      %v11228 = vsel %vm1118, %v11198, %v11044
      %v11230 = vsel %vm1118, %v11200, %v11046
      %v11232 = vsel %vm1118, %v11202, %v11048
      %v11234 = vsel %vm1118, %v11204, %v11050
      %v11236 = vsel %vm1118, %v11206, %v11052
      %v11238 = vsel %vm1118, %v11208, %v11054
      %v11240 = vsel %vm1118, %v11210, %v11056
      %v11242 = vsel %vm1118, %v11212, %v11058
      %v11244 = vsel %vm1118, %v11214, %v11060
      %v11246 = vsel %vm1118, %v11216, %v11062
      %v11248 = vsel %vm1118, %v11218, %v11064
      %v11250 = vsel %vm1118, %v11220, %v11066
      %v11252 = vsel %vm1118, %v11222, %v11068
      %v11254 = vsel %vm1118, %v11224, %v11070
      %v11256 = vsel %vm1151, %v1120, %v11072
      %v11259 = vsel %vm1151, %v11226, %v11074
      %v11262 = vsel %vm1151, %v11228, %v11076
      %v11265 = vsel %vm1151, %v11230, %v11078
      %v11268 = vsel %vm1151, %v11232, %v11080
      %v11271 = vsel %vm1151, %v11234, %v11082
      %v11274 = vsel %vm1151, %v11236, %v11084
      %v11277 = vsel %vm1151, %v11238, %v11086
      %v11280 = vsel %vm1151, %v11240, %v11088
      %v11283 = vsel %vm1151, %v11242, %v11090
      %v11286 = vsel %vm1151, %v11244, %v11092
      %v11289 = vsel %vm1151, %v11246, %v11094
      %v11292 = vsel %vm1151, %v11248, %v11096
      %v11295 = vsel %vm1151, %v11250, %v11098
      %v11298 = vsel %vm1151, %v11252, %v11100
      %v11301 = vsel %vm1151, %v11254, %v11102
      %v11305 = vsel %vm1085, %v10750, %v11104
      %v11308 = vsel %vm1085, %v10762, %v11106
      %v11311 = vsel %vm1085, %v10774, %v11108
      %v11314 = vsel %vm1085, %v10786, %v11110
      %v11317 = vsel %vm1085, %v10798, %v11112
      %v11320 = vsel %vm1085, %v10810, %v11114
      %v11323 = vsel %vm1085, %v10822, %v11116
      %v11326 = vsel %vm1085, %v10834, %v11118
      %v11329 = vsel %vm1085, %v10846, %v11120
      %v11332 = vsel %vm1085, %v10858, %v11122
      %v11335 = vsel %vm1085, %v10870, %v11124
      %v11338 = vsel %vm1085, %v10882, %v11126
      %v11341 = vsel %vm1085, %v10894, %v11128
      %v11344 = vsel %vm1085, %v10906, %v11130
      %v11347 = vsel %vm1085, %v10918, %v11132
      %v11350 = vsel %vm1085, %v10930, %v11134
      %v11352 = vsel %vm1118, %v11305, %v11136
      %v11354 = vsel %vm1118, %v11308, %v11138
      %v11356 = vsel %vm1118, %v11311, %v11140
      %v11358 = vsel %vm1118, %v11314, %v11142
      %v11360 = vsel %vm1118, %v11317, %v11144
      %v11362 = vsel %vm1118, %v11320, %v11146
      %v11364 = vsel %vm1118, %v11323, %v11148
      %v11366 = vsel %vm1118, %v11326, %v11150
      %v11368 = vsel %vm1118, %v11329, %v11152
      %v11370 = vsel %vm1118, %v11332, %v11154
      %v11372 = vsel %vm1118, %v11335, %v11156
      %v11374 = vsel %vm1118, %v11338, %v11158
      %v11376 = vsel %vm1118, %v11341, %v11160
      %v11378 = vsel %vm1118, %v11344, %v11162
      %v11380 = vsel %vm1118, %v11347, %v11164
      %v11381 = vsel %vm1118, %v11350, %v1052
      %v11383 = vsel %vm1151, %v11352, %v11166
      %v11386 = vsel %vm1151, %v11354, %v11168
      %v11389 = vsel %vm1151, %v11356, %v11170
      %v11392 = vsel %vm1151, %v11358, %v11172
      %v11395 = vsel %vm1151, %v11360, %v11174
      %v11398 = vsel %vm1151, %v11362, %v11176
      %v11401 = vsel %vm1151, %v11364, %v11178
      %v11404 = vsel %vm1151, %v11366, %v11180
      %v11407 = vsel %vm1151, %v11368, %v11182
      %v11410 = vsel %vm1151, %v11370, %v11184
      %v11413 = vsel %vm1151, %v11372, %v11186
      %v11416 = vsel %vm1151, %v11374, %v11188
      %v11419 = vsel %vm1151, %v11376, %v11190
      %v11422 = vsel %vm1151, %v11378, %v11192
      %v11425 = vsel %vm1151, %v11380, %v11194
      %v11427 = vsel %vm1151, %v11381, %v1084
      %v11430 = vlaneseq
      %v11431 = vshrl.u32 %v11430, 7
      %v11432 = vsub.s32 0, %v11431
      %v11433 = vrot.slane %v10738, %v11432
      %v11471 = vunpack.c.l.b16 %v10702
      %v11472 = vunpack.c.l.b16 %v10703
      %v11473 = vunpack.c.l.b16 %v10704
      %v11474 = vunpack.c.l.b16 %v10705
      %v11475 = vunpack.c.l.b16 %v10706
      %v11476 = vunpack.c.l.b16 %v10707
      %v11477 = vunpack.c.l.b16 %v10708
      %v11478 = vunpack.c.l.b16 %v10709
      %v11479 = vunpack.c.l.b16 %v10710
      %v11480 = vunpack.c.l.b16 %v10711
      %v11481 = vunpack.c.l.b16 %v10712
      %v11482 = vunpack.c.l.b16 %v10713
      %v11483 = vunpack.c.l.b16 %v10714
      %v11484 = vunpack.c.l.b16 %v10715
      %v11485 = vunpack.c.l.b16 %v10716
      %v11486 = vunpack.c.l.b16 %v10717
      %v11487 = vunpack.c.l.b16 %v10718
      %v11488 = vunpack.c.l.b16 %v10719
      %v11489 = vunpack.c.l.b16 %v10720
      %v11490 = vunpack.c.l.b16 %v10721
      %v11491 = vunpack.c.l.b16 %v10722
      %v11492 = vunpack.c.l.b16 %v10723
      %v11493 = vunpack.c.l.b16 %v10724
      %v11494 = vunpack.c.l.b16 %v10725
      %v11495 = vunpack.c.l.b16 %v10726
      %v11496 = vunpack.c.l.b16 %v10727
      %v11497 = vunpack.c.l.b16 %v10728
      %v11498 = vunpack.c.l.b16 %v10729
      %v11499 = vunpack.c.l.b16 %v10730
      %v11500 = vunpack.c.l.b16 %v10731
      %v11501 = vunpack.c.l.b16 %v10732
      %v11502 = vunpack.c.l.b16 %v10733
      %v11503 = vunpack.c.l.b16 %v10734
      %v11504 = vunpack.c.l.b16 %v10735
      %v11505 = vunpack.c.l.b16 %v10736
      %v11506 = vunpack.c.l.b16 %v10737
      %v11507 = vpack.c.b16 %v11472, %v11471
      %v11508 = vpack.c.b16 %v11474, %v11473
      %v11509 = vpack.c.b16 %v11476, %v11475
      %v11510 = vpack.c.b16 %v11478, %v11477
      %v11511 = vpack.c.b16 %v11480, %v11479
      %v11512 = vpack.c.b16 %v11482, %v11481
      %v11513 = vpack.c.b16 %v11484, %v11483
      %v11514 = vpack.c.b16 %v11486, %v11485
      %v11515 = vpack.c.b16 %v11488, %v11487
      %v11516 = vpack.c.b16 %v11490, %v11489
      %v11517 = vpack.c.b16 %v11492, %v11491
      %v11518 = vpack.c.b16 %v11494, %v11493
      %v11519 = vpack.c.b16 %v11496, %v11495
      %v11520 = vpack.c.b16 %v11498, %v11497
      %v11521 = vpack.c.b16 %v11500, %v11499
      %v11522 = vpack.c.b16 %v11502, %v11501
      %v11523 = vpack.c.b16 %v11504, %v11503
      %v11524 = vpack.c.b16 %v11506, %v11505
      %v11544 = vsel %vm1085, %v10968, 0
      %v11547 = vsel %vm1085, %v10971, 0
      %v11550 = vsel %vm1085, %v10974, 0
      %v11553 = vsel %vm1085, %v10977, 0
      %v11556 = vsel %vm1085, %v10980, 0
      %v11559 = vsel %vm1085, %v10983, 0
      %v11562 = vsel %vm1085, %v10986, 0
      %v11565 = vsel %vm1085, %v10989, 0
      %v11568 = vsel %vm1085, %v10992, 0
      %v11571 = vsel %vm1085, %v10995, 0
      %v11574 = vsel %vm1085, %v10998, 0
      %v11577 = vsel %vm1085, %v11001, 0
      %v11580 = vsel %vm1085, %v11004, 0
      %v11583 = vsel %vm1085, %v11007, 0
      %v11586 = vsel %vm1085, %v11010, 0
      %11588 = vmatprep.subr.bf16.mxu0 0
      %11589 = vmatpush1.bf16.msra.mxu0 %v11514
      %11590 = vmatprep.subr.bf16.mxu0 0
      %11591 = vmatpush1.bf16.msra.mxu0 %v11513
      %11592 = vmatprep.subr.bf16.mxu0 0
      %11593 = vmatpush1.bf16.msra.mxu0 %v11512
      %11594 = vmatprep.subr.bf16.mxu0 0
      %11595 = vmatpush1.bf16.msra.mxu0 %v11511
      %11596 = vmatprep.subr.bf16.mxu0 0
      %11597 = vmatpush1.bf16.msra.mxu0 %v11510
      %11598 = vmatprep.subr.bf16.mxu0 0
      %11599 = vmatpush1.bf16.msra.mxu0 %v11509
      %11600 = vmatprep.subr.bf16.mxu0 0
      %11601 = vmatpush1.bf16.msra.mxu0 %v11508
      %11602 = vmatprep.subr.bf16.mxu0 0
      %11603 = vmatpush1.bf16.msra.mxu0 %v11507
      %11604 = vmatprep.subr.bf16.mxu0 0
      %11605 = vmatpush2.bf16.msra.mxu0 %v11522
      %11606 = vmatprep.subr.bf16.mxu0 0
      %11607 = vmatpush2.bf16.msra.mxu0 %v11521
      %11608 = vmatprep.subr.bf16.mxu0 0
      %11609 = vmatpush2.bf16.msra.mxu0 %v11520
      %11610 = vmatprep.subr.bf16.mxu0 0
      %11611 = vmatpush2.bf16.msra.mxu0 %v11519
      %11612 = vmatprep.subr.bf16.mxu0 0
      %11613 = vmatpush2.bf16.msra.mxu0 %v11518
      %11614 = vmatprep.subr.bf16.mxu0 0
      %11615 = vmatpush2.bf16.msra.mxu0 %v11517
      %11616 = vmatprep.subr.bf16.mxu0 0
      %11617 = vmatpush2.bf16.msra.mxu0 %v11516
      %11618 = vmatprep.subr.bf16.mxu0 0
      %11619 = vmatpush2.bf16.msra.mxu0 %v11515
      %11620 = vmatprep.mubr.bf16.mxu0 %v11383
      %11621 = vmatmul.mubr.bf16.gmra.mxu0 %v11256
      %v11622 = vpop.f32.mrf.mxu0
      %v11623 = vadd.f32 %v11433, %v11622
      %v11624 = vpop.f32.mrf.mxu0
      %v11625 = vpop.f32.mrf.mxu0
      %v11626 = vadd.f32 %v11433, %v11625
      %v11627 = vpop.f32.mrf.mxu0
      %11628 = vmatprep.mubr.bf16.mxu0 %v11386
      %11629 = vmatmul.mubr.bf16.gmra.mxu0 %v11259
      %v11630 = vpop.f32.mrf.mxu0
      %v11631 = vadd.f32 %v11433, %v11630
      %v11632 = vpop.f32.mrf.mxu0
      %v11633 = vpop.f32.mrf.mxu0
      %v11634 = vadd.f32 %v11433, %v11633
      %v11635 = vpop.f32.mrf.mxu0
      %11636 = vmatprep.mubr.bf16.mxu0 %v11389
      %11637 = vmatmul.mubr.bf16.gmra.mxu0 %v11262
      %v11638 = vpop.f32.mrf.mxu0
      %v11639 = vadd.f32 %v11433, %v11638
      %v11640 = vpop.f32.mrf.mxu0
      %v11641 = vpop.f32.mrf.mxu0
      %v11642 = vadd.f32 %v11433, %v11641
      %v11643 = vpop.f32.mrf.mxu0
      %11644 = vmatprep.mubr.bf16.mxu0 %v11392
      %11645 = vmatmul.mubr.bf16.gmra.mxu0 %v11265
      %v11646 = vpop.f32.mrf.mxu0
      %v11647 = vadd.f32 %v11433, %v11646
      %v11648 = vpop.f32.mrf.mxu0
      %v11649 = vpop.f32.mrf.mxu0
      %v11650 = vadd.f32 %v11433, %v11649
      %v11651 = vpop.f32.mrf.mxu0
      %11652 = vmatprep.mubr.bf16.mxu0 %v11395
      %11653 = vmatmul.mubr.bf16.gmra.mxu0 %v11268
      %v11654 = vpop.f32.mrf.mxu0
      %v11655 = vadd.f32 %v11433, %v11654
      %v11656 = vpop.f32.mrf.mxu0
      %v11657 = vpop.f32.mrf.mxu0
      %v11658 = vadd.f32 %v11433, %v11657
      %v11659 = vpop.f32.mrf.mxu0
      %11660 = vmatprep.mubr.bf16.mxu0 %v11398
      %11661 = vmatmul.mubr.bf16.gmra.mxu0 %v11271
      %v11662 = vpop.f32.mrf.mxu0
      %v11663 = vadd.f32 %v11433, %v11662
      %v11664 = vpop.f32.mrf.mxu0
      %v11665 = vpop.f32.mrf.mxu0
      %v11666 = vadd.f32 %v11433, %v11665
      %v11667 = vpop.f32.mrf.mxu0
      %11668 = vmatprep.mubr.bf16.mxu0 %v11401
      %11669 = vmatmul.mubr.bf16.gmra.mxu0 %v11274
      %v11670 = vpop.f32.mrf.mxu0
      %v11671 = vadd.f32 %v11433, %v11670
      %v11672 = vpop.f32.mrf.mxu0
      %v11673 = vpop.f32.mrf.mxu0
      %v11674 = vadd.f32 %v11433, %v11673
      %v11675 = vpop.f32.mrf.mxu0
      %11676 = vmatprep.mubr.bf16.mxu0 %v11404
      %11677 = vmatmul.mubr.bf16.gmra.mxu0 %v11277
      %v11678 = vpop.f32.mrf.mxu0
      %v11679 = vadd.f32 %v11433, %v11678
      %v11680 = vpop.f32.mrf.mxu0
      %v11681 = vpop.f32.mrf.mxu0
      %v11682 = vadd.f32 %v11433, %v11681
      %v11683 = vpop.f32.mrf.mxu0
      %11684 = vmatprep.mubr.bf16.mxu0 %v11407
      %11685 = vmatmul.mubr.bf16.gmra.mxu0 %v11280
      %v11686 = vpop.f32.mrf.mxu0
      %v11687 = vadd.f32 %v11433, %v11686
      %v11688 = vpop.f32.mrf.mxu0
      %v11689 = vpop.f32.mrf.mxu0
      %v11690 = vadd.f32 %v11433, %v11689
      %v11691 = vpop.f32.mrf.mxu0
      %11692 = vmatprep.mubr.bf16.mxu0 %v11410
      %11693 = vmatmul.mubr.bf16.gmra.mxu0 %v11283
      %v11694 = vpop.f32.mrf.mxu0
      %v11695 = vadd.f32 %v11433, %v11694
      %v11696 = vpop.f32.mrf.mxu0
      %v11697 = vpop.f32.mrf.mxu0
      %v11698 = vadd.f32 %v11433, %v11697
      %v11699 = vpop.f32.mrf.mxu0
      %11700 = vmatprep.mubr.bf16.mxu0 %v11413
      %11701 = vmatmul.mubr.bf16.gmra.mxu0 %v11286
      %v11702 = vpop.f32.mrf.mxu0
      %v11703 = vadd.f32 %v11433, %v11702
      %v11704 = vpop.f32.mrf.mxu0
      %v11705 = vpop.f32.mrf.mxu0
      %v11706 = vadd.f32 %v11433, %v11705
      %v11707 = vpop.f32.mrf.mxu0
      %11708 = vmatprep.mubr.bf16.mxu0 %v11416
      %11709 = vmatmul.mubr.bf16.gmra.mxu0 %v11289
      %v11710 = vpop.f32.mrf.mxu0
      %v11711 = vadd.f32 %v11433, %v11710
      %v11712 = vpop.f32.mrf.mxu0
      %v11713 = vpop.f32.mrf.mxu0
      %v11714 = vadd.f32 %v11433, %v11713
      %v11715 = vpop.f32.mrf.mxu0
      %11716 = vmatprep.mubr.bf16.mxu0 %v11419
      %11717 = vmatmul.mubr.bf16.gmra.mxu0 %v11292
      %v11718 = vpop.f32.mrf.mxu0
      %v11719 = vadd.f32 %v11433, %v11718
      %v11720 = vpop.f32.mrf.mxu0
      %v11721 = vpop.f32.mrf.mxu0
      %v11722 = vadd.f32 %v11433, %v11721
      %v11723 = vpop.f32.mrf.mxu0
      %11724 = vmatprep.mubr.bf16.mxu0 %v11422
      %11725 = vmatmul.mubr.bf16.gmra.mxu0 %v11295
      %v11726 = vpop.f32.mrf.mxu0
      %v11727 = vadd.f32 %v11433, %v11726
      %v11728 = vpop.f32.mrf.mxu0
      %v11729 = vpop.f32.mrf.mxu0
      %v11730 = vadd.f32 %v11433, %v11729
      %v11731 = vpop.f32.mrf.mxu0
      %11732 = vmatprep.mubr.bf16.mxu0 %v11425
      %11733 = vmatmul.mubr.bf16.gmra.mxu0 %v11298
      %v11734 = vpop.f32.mrf.mxu0
      %v11735 = vadd.f32 %v11433, %v11734
      %v11736 = vpop.f32.mrf.mxu0
      %v11737 = vpop.f32.mrf.mxu0
      %v11738 = vadd.f32 %v11433, %v11737
      %v11739 = vpop.f32.mrf.mxu0
      %11740 = vmatprep.mubr.bf16.mxu0 %v11427
      %11741 = vmatmul.mubr.bf16.gmra.mxu0 %v11301
      %v11742 = vpop.f32.mrf.mxu0
      %v11743 = vadd.f32 %v11433, %v11742
      %v11744 = vpop.f32.mrf.mxu0
      %v11745 = vpop.f32.mrf.mxu0
      %v11746 = vadd.f32 %v11433, %v11745
      %v11747 = vpop.f32.mrf.mxu0
      %11748 = vdwg.mxu0
      %11749 = vmatprep.subr.bf16.mxu0 0
      %11750 = vmatpush1.bf16.msra.mxu0 0
      %11751 = vmatprep.subr.bf16.mxu0 0
      %11752 = vmatpush1.bf16.msra.mxu0 0
      %11753 = vmatprep.subr.bf16.mxu0 0
      %11754 = vmatpush1.bf16.msra.mxu0 0
      %11755 = vmatprep.subr.bf16.mxu0 0
      %11756 = vmatpush1.bf16.msra.mxu0 0
      %11757 = vmatprep.subr.bf16.mxu0 0
      %11758 = vmatpush1.bf16.msra.mxu0 0
      %11759 = vmatprep.subr.bf16.mxu0 0
      %11760 = vmatpush1.bf16.msra.mxu0 0
      %11761 = vmatprep.subr.bf16.mxu0 0
      %11762 = vmatpush1.bf16.msra.mxu0 %v11524
      %11763 = vmatprep.subr.bf16.mxu0 0
      %11764 = vmatpush1.bf16.msra.mxu0 %v11523
      %11765 = vmatprep.subr.bf16.mxu0 0
      %11766 = vmatpush2.bf16.msra.mxu0 0
      %11767 = vmatprep.subr.bf16.mxu0 0
      %11768 = vmatpush2.bf16.msra.mxu0 0
      %11769 = vmatprep.subr.bf16.mxu0 0
      %11770 = vmatpush2.bf16.msra.mxu0 0
      %11771 = vmatprep.subr.bf16.mxu0 0
      %11772 = vmatpush2.bf16.msra.mxu0 0
      %11773 = vmatprep.subr.bf16.mxu0 0
      %11774 = vmatpush2.bf16.msra.mxu0 0
      %11775 = vmatprep.subr.bf16.mxu0 0
      %11776 = vmatpush2.bf16.msra.mxu0 0
      %11777 = vmatprep.subr.bf16.mxu0 0
      %11778 = vmatpush2.bf16.msra.mxu0 0
      %11779 = vmatprep.subr.bf16.mxu0 0
      %11780 = vmatpush2.bf16.msra.mxu0 0
      %11781 = vmatprep.mubr.bf16.mxu0 0
      %11782 = vmatmul.mubr.bf16.gmra.mxu0 %v11544
      %v11783 = vpop.f32.mrf.mxu0
      %v11784 = vadd.f32 %v11623, %v11783
      %v11785 = vpop.f32.mrf.mxu0
      %v11786 = vpop.f32.mrf.mxu0
      %v11787 = vadd.f32 %v11626, %v11786
      %v11788 = vpop.f32.mrf.mxu0
      %11789 = vmatprep.mubr.bf16.mxu0 0
      %11790 = vmatmul.mubr.bf16.gmra.mxu0 %v11547
      %v11791 = vpop.f32.mrf.mxu0
      %v11792 = vadd.f32 %v11631, %v11791
      %v11793 = vpop.f32.mrf.mxu0
      %v11794 = vpop.f32.mrf.mxu0
      %v11795 = vadd.f32 %v11634, %v11794
      %v11796 = vpop.f32.mrf.mxu0
      %11797 = vmatprep.mubr.bf16.mxu0 0
      %11798 = vmatmul.mubr.bf16.gmra.mxu0 %v11550
      %v11799 = vpop.f32.mrf.mxu0
      %v11800 = vadd.f32 %v11639, %v11799
      %v11801 = vpop.f32.mrf.mxu0
      %v11802 = vpop.f32.mrf.mxu0
      %v11803 = vadd.f32 %v11642, %v11802
      %v11804 = vpop.f32.mrf.mxu0
      %11805 = vmatprep.mubr.bf16.mxu0 0
      %11806 = vmatmul.mubr.bf16.gmra.mxu0 %v11553
      %v11807 = vpop.f32.mrf.mxu0
      %v11808 = vadd.f32 %v11647, %v11807
      %v11809 = vpop.f32.mrf.mxu0
      %v11810 = vpop.f32.mrf.mxu0
      %v11811 = vadd.f32 %v11650, %v11810
      %v11812 = vpop.f32.mrf.mxu0
      %11813 = vmatprep.mubr.bf16.mxu0 0
      %11814 = vmatmul.mubr.bf16.gmra.mxu0 %v11556
      %v11815 = vpop.f32.mrf.mxu0
      %v11816 = vadd.f32 %v11655, %v11815
      %v11817 = vpop.f32.mrf.mxu0
      %v11818 = vpop.f32.mrf.mxu0
      %v11819 = vadd.f32 %v11658, %v11818
      %v11820 = vpop.f32.mrf.mxu0
      %11821 = vmatprep.mubr.bf16.mxu0 0
      %11822 = vmatmul.mubr.bf16.gmra.mxu0 %v11559
      %v11823 = vpop.f32.mrf.mxu0
      %v11824 = vadd.f32 %v11663, %v11823
      %v11825 = vpop.f32.mrf.mxu0
      %v11826 = vpop.f32.mrf.mxu0
      %v11827 = vadd.f32 %v11666, %v11826
      %v11828 = vpop.f32.mrf.mxu0
      %11829 = vmatprep.mubr.bf16.mxu0 0
      %11830 = vmatmul.mubr.bf16.gmra.mxu0 %v11562
      %v11831 = vpop.f32.mrf.mxu0
      %v11832 = vadd.f32 %v11671, %v11831
      %v11833 = vpop.f32.mrf.mxu0
      %v11834 = vpop.f32.mrf.mxu0
      %v11835 = vadd.f32 %v11674, %v11834
      %v11836 = vpop.f32.mrf.mxu0
      %11837 = vmatprep.mubr.bf16.mxu0 0
      %11838 = vmatmul.mubr.bf16.gmra.mxu0 %v11565
      %v11839 = vpop.f32.mrf.mxu0
      %v11840 = vadd.f32 %v11679, %v11839
      %v11841 = vpop.f32.mrf.mxu0
      %v11842 = vpop.f32.mrf.mxu0
      %v11843 = vadd.f32 %v11682, %v11842
      %v11844 = vpop.f32.mrf.mxu0
      %11845 = vmatprep.mubr.bf16.mxu0 0
      %11846 = vmatmul.mubr.bf16.gmra.mxu0 %v11568
      %v11847 = vpop.f32.mrf.mxu0
      %v11848 = vadd.f32 %v11687, %v11847
      %v11849 = vpop.f32.mrf.mxu0
      %v11850 = vpop.f32.mrf.mxu0
      %v11851 = vadd.f32 %v11690, %v11850
      %v11852 = vpop.f32.mrf.mxu0
      %11853 = vmatprep.mubr.bf16.mxu0 0
      %11854 = vmatmul.mubr.bf16.gmra.mxu0 %v11571
      %v11855 = vpop.f32.mrf.mxu0
      %v11856 = vadd.f32 %v11695, %v11855
      %v11857 = vpop.f32.mrf.mxu0
      %v11858 = vpop.f32.mrf.mxu0
      %v11859 = vadd.f32 %v11698, %v11858
      %v11860 = vpop.f32.mrf.mxu0
      %11861 = vmatprep.mubr.bf16.mxu0 0
      %11862 = vmatmul.mubr.bf16.gmra.mxu0 %v11574
      %v11863 = vpop.f32.mrf.mxu0
      %v11864 = vadd.f32 %v11703, %v11863
      %v11865 = vpop.f32.mrf.mxu0
      %v11866 = vpop.f32.mrf.mxu0
      %v11867 = vadd.f32 %v11706, %v11866
      %v11868 = vpop.f32.mrf.mxu0
      %11869 = vmatprep.mubr.bf16.mxu0 0
      %11870 = vmatmul.mubr.bf16.gmra.mxu0 %v11577
      %v11871 = vpop.f32.mrf.mxu0
      %v11872 = vadd.f32 %v11711, %v11871
      %v11873 = vpop.f32.mrf.mxu0
      %v11874 = vpop.f32.mrf.mxu0
      %v11875 = vadd.f32 %v11714, %v11874
      %v11876 = vpop.f32.mrf.mxu0
      %11877 = vmatprep.mubr.bf16.mxu0 0
      %11878 = vmatmul.mubr.bf16.gmra.mxu0 %v11580
      %v11879 = vpop.f32.mrf.mxu0
      %v11880 = vadd.f32 %v11719, %v11879
      %v11881 = vpop.f32.mrf.mxu0
      %v11882 = vpop.f32.mrf.mxu0
      %v11883 = vadd.f32 %v11722, %v11882
      %v11884 = vpop.f32.mrf.mxu0
      %11885 = vmatprep.mubr.bf16.mxu0 0
      %11886 = vmatmul.mubr.bf16.gmra.mxu0 %v11583
      %v11887 = vpop.f32.mrf.mxu0
      %v11888 = vadd.f32 %v11727, %v11887
      %v11889 = vpop.f32.mrf.mxu0
      %v11890 = vpop.f32.mrf.mxu0
      %v11891 = vadd.f32 %v11730, %v11890
      %v11892 = vpop.f32.mrf.mxu0
      %11893 = vmatprep.mubr.bf16.mxu0 0
      %11894 = vmatmul.mubr.bf16.gmra.mxu0 %v11586
      %v11895 = vpop.f32.mrf.mxu0
      %v11896 = vadd.f32 %v11735, %v11895
      %v11897 = vpop.f32.mrf.mxu0
      %v11898 = vpop.f32.mrf.mxu0
      %v11899 = vadd.f32 %v11738, %v11898
      %v11900 = vpop.f32.mrf.mxu0
      %11901 = vmatprep.mubr.bf16.mxu0 0
      %11902 = vmatmul.mubr.bf16.gmra.mxu0 %v1488
      %v11903 = vpop.f32.mrf.mxu0
      %v11904 = vadd.f32 %v11743, %v11903
      %v11905 = vpop.f32.mrf.mxu0
      %v11906 = vpop.f32.mrf.mxu0
      %v11907 = vadd.f32 %v11746, %v11906
      %v11908 = vpop.f32.mrf.mxu0
      %11909 = vdwg.mxu0
      %vm11910 = vcmask 23552
      %11911 = vst.msk [vmem:[%s278] sm:$0xff] %vm11910, %v11784
      %11912 = vst.msk [vmem:[%s278 + $0x8] sm:$0xff] %vm11910, %v11787
      %11913 = vst.msk [vmem:[%s278 + $0x10] sm:$0xff] %vm11910, %v11792
      %11914 = vst.msk [vmem:[%s278 + $0x18] sm:$0xff] %vm11910, %v11795
      %11915 = vst.msk [vmem:[%s278 + $0x20] sm:$0xff] %vm11910, %v11800
      %11916 = vst.msk [vmem:[%s278 + $0x28] sm:$0xff] %vm11910, %v11803
      %11917 = vst.msk [vmem:[%s278 + $0x30] sm:$0xff] %vm11910, %v11808
      %11918 = vst.msk [vmem:[%s278 + $0x38] sm:$0xff] %vm11910, %v11811
      %11919 = vst.msk [vmem:[%s278 + $0x40] sm:$0xff] %vm11910, %v11816
      %11920 = vst.msk [vmem:[%s278 + $0x48] sm:$0xff] %vm11910, %v11819
      %11921 = vst.msk [vmem:[%s278 + $0x50] sm:$0xff] %vm11910, %v11824
      %11922 = vst.msk [vmem:[%s278 + $0x58] sm:$0xff] %vm11910, %v11827
      %11923 = vst.msk [vmem:[%s278 + $0x60] sm:$0xff] %vm11910, %v11832
      %11924 = vst.msk [vmem:[%s278 + $0x68] sm:$0xff] %vm11910, %v11835
      %11925 = vst.msk [vmem:[%s278 + $0x70] sm:$0xff] %vm11910, %v11840
      %11926 = vst.msk [vmem:[%s278 + $0x78] sm:$0xff] %vm11910, %v11843
      %11927 = vst.msk [vmem:[%s278 + $0x80] sm:$0xff] %vm11910, %v11848
      %11928 = vst.msk [vmem:[%s278 + $0x88] sm:$0xff] %vm11910, %v11851
      %11929 = vst.msk [vmem:[%s278 + $0x90] sm:$0xff] %vm11910, %v11856
      %11930 = vst.msk [vmem:[%s278 + $0x98] sm:$0xff] %vm11910, %v11859
      %11931 = vst.msk [vmem:[%s278 + $0xa0] sm:$0xff] %vm11910, %v11864
      %11932 = vst.msk [vmem:[%s278 + $0xa8] sm:$0xff] %vm11910, %v11867
      %11933 = vst.msk [vmem:[%s278 + $0xb0] sm:$0xff] %vm11910, %v11872
      %11934 = vst.msk [vmem:[%s278 + $0xb8] sm:$0xff] %vm11910, %v11875
      %11935 = vst.msk [vmem:[%s278 + $0xc0] sm:$0xff] %vm11910, %v11880
      %11936 = vst.msk [vmem:[%s278 + $0xc8] sm:$0xff] %vm11910, %v11883
      %11937 = vst.msk [vmem:[%s278 + $0xd0] sm:$0xff] %vm11910, %v11888
      %11938 = vst.msk [vmem:[%s278 + $0xd8] sm:$0xff] %vm11910, %v11891
      %11939 = vst.msk [vmem:[%s278 + $0xe0] sm:$0xff] %vm11910, %v11896
      %11940 = vst.msk [vmem:[%s278 + $0xe8] sm:$0xff] %vm11910, %v11899
      %11941 = vst.msk [vmem:[%s278 + $0xf0] sm:$0xff] %vm11910, %v11904
      %11942 = vst.msk [vmem:[%s278 + $0xf8] sm:$0xff] %vm11910, %v11907
      %p11943 = scmp.lt.s32.totalorder %s18, 1
      %s11944 = scalar_select %p11943, %s18, 1
      %s11945 = smul.addr %s11944, 32
      %s11946 = smul.addr %s11945, 8
      %s11947 = scalar_lea.vmem %s7, %s11946
      // Predicated region
      $region49: #{feature_extractor.1} parent=47 // pred_check
        %p11948 = pneg %p188
      $region50: #{feature_extractor.1} parent=47 // pred_check_branch
        %11950 = sbr.rel (%p11948) target = $region52
      $region51: #{feature_extractor.1} parent=47 // pred_region
        _
      $region52: #{feature_extractor.1} parent=47 // pred_fallthru
        _
    $region48: #{feature_extractor.1} parent=5 // pred_fallthru
      _
    %p11951 = scmp.le.s32.totalorder 2, %s13
    // Predicated region
    $region53: #{feature_extractor.1} parent=5 // pred_check
      %p11952 = pneg %p11951
    $region54: #{feature_extractor.1} parent=5 // pred_check_branch
      %11954 = sbr.rel (%p11952) target = $region56
    $region55: #{feature_extractor.1} parent=5 // pred_region
      %s11955 = ssub.s32 %s13, 2
      // Predicated region
      $region57: #{feature_extractor.1} parent=55 // pred_check
        %p11956 = pneg %p194
      $region58: #{feature_extractor.1} parent=55 // pred_check_branch
        %11958 = sbr.rel (%p11956) target = $region60
      $region59: #{feature_extractor.1} parent=55 // pred_region
        %p11959 = scmp.lt.s32.totalorder %s19, 1
        %s11960 = scalar_select %p11959, %s19, 1
        %s11961 = smul.addr %s11960, 32
        %s11962 = smul.addr %s11961, 8
        %s11963 = scalar_lea.vmem %s7, %s11962
      $region60: #{feature_extractor.1} parent=55 // pred_fallthru
        _
    $region56: #{feature_extractor.1} parent=5 // pred_fallthru
      _
  $region6: #{feature_extractor.1} parent=0 // loop_footer
    %s17 = sadd.s32 1, %s13
  $region7: #{feature_extractor.1} parent=0 // loop_footer_branch
    %12 = sbr.rel target = $region3
  $region8: #{feature_extractor.1} parent=0 // loop_exit
    _

</llo_original>
